<compile_context>
chip_gen: v6e
topology: v6e:2x2x1
jax: 0.10.0
libtpu: 0.0.40
codegen_flags: <defaults>
</compile_context>

<pallas_src>
import math

import jax
import jax.numpy as jnp
import numpy as np
from jax.experimental import pallas as pl
from jax.experimental.pallas import tpu as pltpu

ECG_SAMP = 512
ECG_LEADS = 8
IN_FEATURES = ECG_SAMP * ECG_LEADS  # 4096
H1 = 512
H2 = 256
OUT = 1

MAX_TM = 256  # batch-tile rows for large batches


def _round_up(x, m):
    return ((x + m - 1) // m) * m


def _leaky_relu(x, slope=0.2):
    return jnp.where(x > 0, x, slope * x)


def discriminator_kernel(x_ref, w1_ref, b1_ref, w2_ref, b2_ref, w3_ref, b3_ref,
                         out_ref):
    # Layer 1: (tm, 4096) x (4096, 512) bf16 matmul, f32 accumulation on MXU.
    h1 = jnp.dot(x_ref[...].astype(jnp.bfloat16), w1_ref[...],
                 preferred_element_type=jnp.float32) + b1_ref[...]
    h1 = _leaky_relu(h1)                                              # (tm, 512) f32

    # Layer 2: (tm, 512) x (512, 256) bf16 matmul, f32 accumulation.
    h2 = jnp.dot(h1.astype(jnp.bfloat16), w2_ref[...],
                 preferred_element_type=jnp.float32) + b2_ref[...]
    h2 = _leaky_relu(h2)                                              # (tm, 256) f32

    # Layer 3 (N=1): VPU multiply + XLU lane reduction instead of an MXU pass.
    out = jnp.sum(h2 * w3_ref[...], axis=-1, keepdims=True) + b3_ref[...]
    out_ref[...] = out.astype(out_ref.dtype)                          # (tm, 1)


def discriminator_forward(img, params):
    """img: (B, 512, 8) float32 -> validity (B, 1) float32."""
    w1, b1, w2, b2, w3, b3 = params
    B = img.shape[0]
    x = img.reshape(B, -1).astype(jnp.float32)  # same semantics as torch view(B, -1)

    # Batch tile: small batches pad to a multiple of 8 sublanes; large batches
    # tile at 256 rows and shard across cores via the "parallel" grid axis
    # (megacore pays off once there are >= 2 tiles per core, W1 being resident).
    if B <= MAX_TM:
        tm = _round_up(B, 8)
    else:
        tm = MAX_TM
    b_pad = _round_up(B, tm)
    if b_pad != B:
        x = jnp.pad(x, ((0, b_pad - B), (0, 0)))

    n_m = b_pad // tm

    grid_spec = pltpu.PrefetchScalarGridSpec(
        num_scalar_prefetch=0,
        grid=(n_m,),
        in_specs=[
            pl.BlockSpec((tm, IN_FEATURES), lambda i: (i, 0)),   # x     (f32)
            pl.BlockSpec((IN_FEATURES, H1), lambda i: (0, 0)),   # w1    (bf16, resident)
            pl.BlockSpec((1, H1), lambda i: (0, 0)),             # b1    (f32)
            pl.BlockSpec((H1, H2), lambda i: (0, 0)),            # w2    (bf16, resident)
            pl.BlockSpec((1, H2), lambda i: (0, 0)),             # b2    (f32)
            pl.BlockSpec((1, H2), lambda i: (0, 0)),             # w3 row (f32)
            pl.BlockSpec((1, 1), lambda i: (0, 0)),              # b3    (f32)
        ],
        out_specs=pl.BlockSpec((tm, OUT), lambda i: (i, 0)),
    )

    out = pl.pallas_call(
        discriminator_kernel,
        out_shape=jax.ShapeDtypeStruct((b_pad, OUT), jnp.float32),
        grid_spec=grid_spec,
        compiler_params=pltpu.CompilerParams(
            dimension_semantics=("parallel",),
            # Explicit limit so the resident-W1 layout (~17 MiB peak at
            # tm=256, incl. double buffers) also fits v5e's default scope.
            vmem_limit_bytes=32 * 1024 * 1024,
        ),
    )(x, w1, b1, w2, b2, w3, b3)

    return out[:B]


def init_params(key):
    """Deterministic init mimicking PyTorch nn.Linear (uniform +/- 1/sqrt(fan_in)).

    W1, W2 are stored as bfloat16 (in_features, out_features); W3 is stored as a
    lane-dense (1, 256) f32 row for the in-kernel VPU reduction.
    """
    keys = jax.random.split(key, 6)

    def linear(kw, kb, fan_in, fan_out, w_dtype=jnp.float32):
        bound = 1.0 / math.sqrt(fan_in)
        w = jax.random.uniform(kw, (fan_in, fan_out), jnp.float32, -bound, bound)
        b = jax.random.uniform(kb, (1, fan_out), jnp.float32, -bound, bound)
        return w.astype(w_dtype), b

    w1, b1 = linear(keys[0], keys[1], IN_FEATURES, H1, jnp.bfloat16)
    w2, b2 = linear(keys[2], keys[3], H1, H2, jnp.bfloat16)
    w3_col, b3 = linear(keys[4], keys[5], H2, OUT)        # (256, 1), (1, 1)
    w3 = w3_col.reshape(1, H2)                            # lane-dense row
    return (w1, b1, w2, b2, w3, b3)


def _numpy_reference(img, params):
    """Pure-numpy reference mirroring the kernel's bf16-weight / f32-accumulate math."""
    w1, b1, w2, b2, w3, b3 = params
    B = img.shape[0]
    x = np.asarray(img.reshape(B, -1), np.float32)
    x_bf = np.asarray(jnp.asarray(x).astype(jnp.bfloat16).astype(jnp.float32))
    w1f = np.asarray(w1.astype(jnp.float32))
    w2f = np.asarray(w2.astype(jnp.float32))

    def leaky(v):
        return np.where(v > 0, v, 0.2 * v)

    h1 = leaky(x_bf @ w1f + np.asarray(b1))
    h1_bf = np.asarray(jnp.asarray(h1).astype(jnp.bfloat16).astype(jnp.float32))
    h2 = leaky(h1_bf @ w2f + np.asarray(b2))
    return h2 @ np.asarray(w3).T + np.asarray(b3)


if __name__ == "__main__":
    key = jax.random.PRNGKey(0)
    pkey, xkey1, xkey2 = jax.random.split(key, 3)

    params = init_params(pkey)

    # Small batch (B=2): single 8-row tile, exercises padding of the batch axis.
    B1 = 2
    img1 = jax.random.normal(xkey1, (B1, ECG_SAMP, ECG_LEADS), jnp.float32)
    val1 = jax.block_until_ready(discriminator_forward(img1, params))
    ref1 = _numpy_reference(img1, params)
    assert val1.shape == (B1, OUT)
    assert np.allclose(np.asarray(val1), ref1, atol=2e-3, rtol=2e-3), \
        np.max(np.abs(np.asarray(val1) - ref1))

    # Larger batch (B=300): two 256-row tiles on the "parallel" grid axis, with
    # 212 padded rows sliced off; checks the multi-tile / resident-W1 path.
    B2 = 300
    img2 = jax.random.normal(xkey2, (B2, ECG_SAMP, ECG_LEADS), jnp.float32)
    val2 = jax.block_until_ready(discriminator_forward(img2, params))
    ref2 = _numpy_reference(img2, params)
    assert val2.shape == (B2, OUT)
    assert np.allclose(np.asarray(val2), ref2, atol=2e-3, rtol=2e-3), \
        np.max(np.abs(np.asarray(val2) - ref2))

    print("KERNEL_OK")
</pallas_src>

<mosaic_0001>
module attributes {stable_mosaic.version = 11 : i64} {
  func.func @discriminator_kernel(%arg0: i32, %arg1: memref<8x4096xf32, #tpu.memory_space<vmem>>, %arg2: memref<4096x512xbf16, #tpu.memory_space<vmem>>, %arg3: memref<1x512xf32, #tpu.memory_space<vmem>>, %arg4: memref<512x256xbf16, #tpu.memory_space<vmem>>, %arg5: memref<1x256xf32, #tpu.memory_space<vmem>>, %arg6: memref<1x256xf32, #tpu.memory_space<vmem>>, %arg7: memref<1x1xf32, #tpu.memory_space<vmem>>, %arg8: memref<8x1xf32, #tpu.memory_space<vmem>>) attributes {dimension_semantics = [#tpu.dimension_semantics<parallel>], iteration_bounds = array<i64: 1>, scalar_prefetch = 0 : i64, scratch_operands = 0 : i64, tpu.core_type = #tpu.core_type<tc>, window_params = [{transform_indices = @transform_0, window_bounds = array<i64: 8, 4096>}, {pipeline_mode = #tpu.pipeline_mode<synchronous>, transform_indices = @transform_1, window_bounds = array<i64: 4096, 512>}, {pipeline_mode = #tpu.pipeline_mode<synchronous>, transform_indices = @transform_2, window_bounds = array<i64: 1, 512>}, {pipeline_mode = #tpu.pipeline_mode<synchronous>, transform_indices = @transform_3, window_bounds = array<i64: 512, 256>}, {pipeline_mode = #tpu.pipeline_mode<synchronous>, transform_indices = @transform_4, window_bounds = array<i64: 1, 256>}, {pipeline_mode = #tpu.pipeline_mode<synchronous>, transform_indices = @transform_5, window_bounds = array<i64: 1, 256>}, {pipeline_mode = #tpu.pipeline_mode<synchronous>, transform_indices = @transform_6, window_bounds = array<i64: 1, 1>}, {transform_indices = @transform_7, window_bounds = array<i64: 8, 1>}]} {
    %c0 = arith.constant 0 : index
    %c0_0 = arith.constant 0 : index
    %0 = vector.load %arg1[%c0, %c0_0] : memref<8x4096xf32, #tpu.memory_space<vmem>>, vector<8x4096xf32>
    %1 = arith.truncf %0 : vector<8x4096xf32> to vector<8x4096xbf16>
    %c0_1 = arith.constant 0 : index
    %c0_2 = arith.constant 0 : index
    %2 = vector.load %arg2[%c0_1, %c0_2] : memref<4096x512xbf16, #tpu.memory_space<vmem>>, vector<4096x512xbf16>
    %cst = arith.constant dense<0.000000e+00> : vector<8x512xf32>
    %3 = tpu.matmul %1, %2, %cst {dimension_numbers = #tpu.dot_dimension_numbers<[1], [0], [0], [1], [0, 0, 1, 1], [], []>} : vector<8x4096xbf16>, vector<4096x512xbf16>, vector<8x512xf32> -> vector<8x512xf32>
    %c0_3 = arith.constant 0 : index
    %c0_4 = arith.constant 0 : index
    %4 = vector.load %arg3[%c0_3, %c0_4] : memref<1x512xf32, #tpu.memory_space<vmem>>, vector<1x512xf32>
    %5 = vector.broadcast %4 : vector<1x512xf32> to vector<8x512xf32>
    %6 = arith.addf %3, %5 : vector<8x512xf32>
    %cst_5 = arith.constant 0.000000e+00 : f32
    %7 = vector.broadcast %cst_5 : f32 to vector<8x512xf32>
    %8 = arith.cmpf ogt, %6, %7 : vector<8x512xf32>
    %cst_6 = arith.constant 2.000000e-01 : f32
    %9 = vector.broadcast %cst_6 : f32 to vector<8x512xf32>
    %10 = arith.mulf %9, %6 : vector<8x512xf32>
    %11 = arith.select %8, %6, %10 : vector<8x512xi1>, vector<8x512xf32>
    %12 = arith.truncf %11 : vector<8x512xf32> to vector<8x512xbf16>
    %c0_7 = arith.constant 0 : index
    %c0_8 = arith.constant 0 : index
    %13 = vector.load %arg4[%c0_7, %c0_8] : memref<512x256xbf16, #tpu.memory_space<vmem>>, vector<512x256xbf16>
    %cst_9 = arith.constant dense<0.000000e+00> : vector<8x256xf32>
    %14 = tpu.matmul %12, %13, %cst_9 {dimension_numbers = #tpu.dot_dimension_numbers<[1], [0], [0], [1], [0, 0, 1, 1], [], []>} : vector<8x512xbf16>, vector<512x256xbf16>, vector<8x256xf32> -> vector<8x256xf32>
    %c0_10 = arith.constant 0 : index
    %c0_11 = arith.constant 0 : index
    %15 = vector.load %arg5[%c0_10, %c0_11] : memref<1x256xf32, #tpu.memory_space<vmem>>, vector<1x256xf32>
    %16 = vector.broadcast %15 : vector<1x256xf32> to vector<8x256xf32>
    %17 = arith.addf %14, %16 : vector<8x256xf32>
    %cst_12 = arith.constant 0.000000e+00 : f32
    %18 = vector.broadcast %cst_12 : f32 to vector<8x256xf32>
    %19 = arith.cmpf ogt, %17, %18 : vector<8x256xf32>
    %cst_13 = arith.constant 2.000000e-01 : f32
    %20 = vector.broadcast %cst_13 : f32 to vector<8x256xf32>
    %21 = arith.mulf %20, %17 : vector<8x256xf32>
    %22 = arith.select %19, %17, %21 : vector<8x256xi1>, vector<8x256xf32>
    %c0_14 = arith.constant 0 : index
    %c0_15 = arith.constant 0 : index
    %23 = vector.load %arg6[%c0_14, %c0_15] : memref<1x256xf32, #tpu.memory_space<vmem>>, vector<1x256xf32>
    %24 = vector.broadcast %23 : vector<1x256xf32> to vector<8x256xf32>
    %25 = arith.mulf %22, %24 : vector<8x256xf32>
    %cst_16 = arith.constant dense<0.000000e+00> : vector<8xf32>
    %26 = vector.multi_reduction <add>, %25, %cst_16 [1] : vector<8x256xf32> to vector<8xf32>
    %27 = vector.shape_cast %26 : vector<8xf32> to vector<8x1xf32>
    %c0_17 = arith.constant 0 : index
    %c0_18 = arith.constant 0 : index
    %28 = vector.load %arg7[%c0_17, %c0_18] : memref<1x1xf32, #tpu.memory_space<vmem>>, vector<1x1xf32>
    %29 = vector.broadcast %28 : vector<1x1xf32> to vector<8x1xf32>
    %30 = arith.addf %27, %29 : vector<8x1xf32>
    %c0_19 = arith.constant 0 : index
    %c0_20 = arith.constant 0 : index
    %31 = vector.load %arg8[%c0_19, %c0_20] : memref<8x1xf32, #tpu.memory_space<vmem>>, vector<8x1xf32>
    tpu.vector_store %arg8[%c0_19, %c0_20], %30 {strides = array<i32>} : memref<8x1xf32, #tpu.memory_space<vmem>>, vector<8x1xf32>,
    return
  }
  func.func @transform_0(%arg0: i32) -> (i32, i32) {
    %c0_i32 = arith.constant 0 : i32
    %c0_i32_0 = arith.constant 0 : i32
    return %arg0, %c0_i32 : i32, i32
  }
  func.func @transform_1(%arg0: i32) -> (i32, i32) {
    %c0_i32 = arith.constant 0 : i32
    %c0_i32_0 = arith.constant 0 : i32
    %c0_i32_1 = arith.constant 0 : i32
    return %c0_i32, %c0_i32_0 : i32, i32
  }
  func.func @transform_2(%arg0: i32) -> (i32, i32) {
    %c0_i32 = arith.constant 0 : i32
    %c0_i32_0 = arith.constant 0 : i32
    %c0_i32_1 = arith.constant 0 : i32
    return %c0_i32, %c0_i32_0 : i32, i32
  }
  func.func @transform_3(%arg0: i32) -> (i32, i32) {
    %c0_i32 = arith.constant 0 : i32
    %c0_i32_0 = arith.constant 0 : i32
    %c0_i32_1 = arith.constant 0 : i32
    return %c0_i32, %c0_i32_0 : i32, i32
  }
  func.func @transform_4(%arg0: i32) -> (i32, i32) {
    %c0_i32 = arith.constant 0 : i32
    %c0_i32_0 = arith.constant 0 : i32
    %c0_i32_1 = arith.constant 0 : i32
    return %c0_i32, %c0_i32_0 : i32, i32
  }
  func.func @transform_5(%arg0: i32) -> (i32, i32) {
    %c0_i32 = arith.constant 0 : i32
    %c0_i32_0 = arith.constant 0 : i32
    %c0_i32_1 = arith.constant 0 : i32
    return %c0_i32, %c0_i32_0 : i32, i32
  }
  func.func @transform_6(%arg0: i32) -> (i32, i32) {
    %c0_i32 = arith.constant 0 : i32
    %c0_i32_0 = arith.constant 0 : i32
    %c0_i32_1 = arith.constant 0 : i32
    return %c0_i32, %c0_i32_0 : i32, i32
  }
  func.func @transform_7(%arg0: i32) -> (i32, i32) {
    %c0_i32 = arith.constant 0 : i32
    %c0_i32_0 = arith.constant 0 : i32
    return %arg0, %c0_i32 : i32, i32
  }
}

</mosaic_0001>

<llo_original>
// kernel: tpu_custom_call.1
$region0: #{tpu_custom_call.1}
  #allocation0 [shape = 'u32[]', space=smem, size = 0x4, offset = 0x4, fixed_abs, tag = 'smem constant byte address 0x4 - core index']
  #allocation1 [shape = 'u32[144,128]{1,0:T(1,128)}', space=vmem, size = 0x12000, scoped, tag = 'internal scratch']
  #allocation2 [shape = 'f32[1,1]{1,0:T(1,128)S(1)}', space=vmem, size = 0x200, scoped, tag = 'scoped memory for tpu_custom_call.1']
  %s0 = inlined_call_operand.hbm [shape: f32[8,4096], index: 0, kind: input, shape index: {}]
  %s1 = inlined_call_operand.hbm [shape: bf16[4096,512], index: 1, kind: input, shape index: {}]
  %s2 = inlined_call_operand.hbm [shape: f32[1,512], index: 2, kind: input, shape index: {}]
  %s3 = inlined_call_operand.hbm [shape: bf16[512,256], index: 3, kind: input, shape index: {}]
  %s4 = inlined_call_operand.hbm [shape: f32[1,256], index: 4, kind: input, shape index: {}]
  %s5 = inlined_call_operand.hbm [shape: f32[1,256], index: 5, kind: input, shape index: {}]
  %s6 = inlined_call_operand.<no memory space> [shape: f32[1,1], index: 6, kind: input, shape index: {}]
  %s7 = inlined_call_operand.vmem [shape: f32[8,1], index: 7, kind: output, shape index: {}]
  %s8 = sld [smem:[#allocation0]]
  $region62: #{tpu_custom_call.1} parent=0
    _
  %s10 = ssub.s32 1, %s8
  %s11 = scalar_select 0, %s10, %s8
  %v12 = vstv %s6
  %13 = vst [vmem:[#allocation2] sm:$0x1] %v12
  $region1: #{tpu_custom_call.1} parent=0
    #allocation3 [shape = 'u8[131072]{0}', space=vmem, size = 0x20000, scoped, tag = 'input window, operand 0, single buffered']
    #allocation4 [shape = 's32[1]{0}', space=sflag, size = 0x4, scoped, tag = 'scoped memory for tpu_custom_call.1']
    #allocation5 [shape = 'u8[4194304]{0}', space=vmem, size = 0x400000, scoped, tag = 'input window, operand 1, single buffered']
    #allocation6 [shape = 's32[1]{0}', space=sflag, size = 0x4, scoped, tag = 'scoped memory for tpu_custom_call.1']
    #allocation7 [shape = 'u8[2048]{0}', space=vmem, size = 0x800, scoped, tag = 'input window, operand 2, single buffered']
    #allocation8 [shape = 'u8[262144]{0}', space=vmem, size = 0x40000, scoped, tag = 'input window, operand 3, single buffered']
    #allocation9 [shape = 's32[1]{0}', space=sflag, size = 0x4, scoped, tag = 'scoped memory for tpu_custom_call.1']
    #allocation10 [shape = 'u8[1024]{0}', space=vmem, size = 0x400, scoped, tag = 'input window, operand 4, single buffered']
    #allocation11 [shape = 'u8[1024]{0}', space=vmem, size = 0x400, scoped, tag = 'input window, operand 5, single buffered']
    #allocation12 [shape = 's32[1]{0}', space=sflag, size = 0x4, scoped, tag = 'scoped memory for tpu_custom_call.1']
    %14 = vsyncpa [#allocation4], 0
    %15 = vsyncpa [#allocation6], 0
    %16 = vsyncpa [#allocation9], 0
    %17 = vsyncpa [#allocation12], 0
    // Predicated region
    $region2: #{tpu_custom_call.1} parent=1 // pred_check
      _
    $region3: #{tpu_custom_call.1} parent=1 // pred_check_branch
      %19 = sbr.rel (0) target = $region5
    $region4: #{tpu_custom_call.1} parent=1 // pred_region
      %s21 = ssub.s32 4096, 4096
      %22 = vsyncadd [#allocation4], %s21
      %s24 = sshll.u32 [#allocation3], 4
      %s25 = int_to_ptr.vmem [resolvable:$true] %s24
      %27 = dma.hbm_to_vmem [thread:$0]  %s0, 4096, %s25, [#allocation4]
    $region5: #{tpu_custom_call.1} parent=1 // pred_fallthru
      _
    // Predicated region
    $region6: #{tpu_custom_call.1} parent=1 // pred_check
      _
    $region7: #{tpu_custom_call.1} parent=1 // pred_check_branch
      %29 = sbr.rel (0) target = $region9
    $region8: #{tpu_custom_call.1} parent=1 // pred_region
      %s31 = ssub.s32 131072, 131072
      %32 = vsyncadd [#allocation6], %s31
      %s33 = sshll.u32 [#allocation5], 4
      %s34 = int_to_ptr.vmem [resolvable:$true] %s33
      %39 = dma.hbm_to_vmem [thread:$0]  %s1, 131072, %s34, [#allocation6], 256, 256, 16
    $region9: #{tpu_custom_call.1} parent=1 // pred_fallthru
      _
    // Predicated region
    $region10: #{tpu_custom_call.1} parent=1 // pred_check
      _
    $region11: #{tpu_custom_call.1} parent=1 // pred_check_branch
      %41 = sbr.rel (0) target = $region13
    $region12: #{tpu_custom_call.1} parent=1 // pred_region
      %s43 = ssub.s32 64, 64
      %44 = vsyncadd [#allocation6], %s43
      %s46 = sshll.u32 [#allocation7], 4
      %s47 = int_to_ptr.vmem [resolvable:$true] %s46
      %49 = dma.hbm_to_vmem [thread:$0]  %s2, 64, %s47, [#allocation6]
    $region13: #{tpu_custom_call.1} parent=1 // pred_fallthru
      _
    // Predicated region
    $region14: #{tpu_custom_call.1} parent=1 // pred_check
      _
    $region15: #{tpu_custom_call.1} parent=1 // pred_check_branch
      %51 = sbr.rel (0) target = $region17
    $region16: #{tpu_custom_call.1} parent=1 // pred_region
      %s53 = ssub.s32 8192, 8192
      %54 = vsyncadd [#allocation9], %s53
      %s55 = sshll.u32 [#allocation8], 4
      %s56 = int_to_ptr.vmem [resolvable:$true] %s55
      %61 = dma.hbm_to_vmem [thread:$0]  %s3, 8192, %s56, [#allocation9], 128, 128, 8
    $region17: #{tpu_custom_call.1} parent=1 // pred_fallthru
      _
    // Predicated region
    $region18: #{tpu_custom_call.1} parent=1 // pred_check
      _
    $region19: #{tpu_custom_call.1} parent=1 // pred_check_branch
      %63 = sbr.rel (0) target = $region21
    $region20: #{tpu_custom_call.1} parent=1 // pred_region
      %s65 = ssub.s32 32, 32
      %66 = vsyncadd [#allocation9], %s65
      %s68 = sshll.u32 [#allocation10], 4
      %s69 = int_to_ptr.vmem [resolvable:$true] %s68
      %71 = dma.hbm_to_vmem [thread:$0]  %s4, 32, %s69, [#allocation9]
    $region21: #{tpu_custom_call.1} parent=1 // pred_fallthru
      _
    // Predicated region
    $region22: #{tpu_custom_call.1} parent=1 // pred_check
      _
    $region23: #{tpu_custom_call.1} parent=1 // pred_check_branch
      %73 = sbr.rel (0) target = $region25
    $region24: #{tpu_custom_call.1} parent=1 // pred_region
      %s75 = ssub.s32 32, 32
      %76 = vsyncadd [#allocation12], %s75
      %s78 = sshll.u32 [#allocation11], 4
      %s79 = int_to_ptr.vmem [resolvable:$true] %s78
      %81 = dma.hbm_to_vmem [thread:$0]  %s5, 32, %s79, [#allocation12]
    $region25: #{tpu_custom_call.1} parent=1 // pred_fallthru
      _
    // Predicated region
    $region26: #{tpu_custom_call.1} parent=1 // pred_check
      _
    $region27: #{tpu_custom_call.1} parent=1 // pred_check_branch
      %83 = sbr.rel (0) target = $region29
    $region28: #{tpu_custom_call.1} parent=1 // pred_region
      _
    $region29: #{tpu_custom_call.1} parent=1 // pred_fallthru
      _
    // Predicated region
    $region30: #{tpu_custom_call.1} parent=1 // pred_check
      _
    $region31: #{tpu_custom_call.1} parent=1 // pred_check_branch
      %85 = sbr.rel (0) target = $region33
    $region32: #{tpu_custom_call.1} parent=1 // pred_region
      %86 = dma.done [#allocation4], 4096
    $region33: #{tpu_custom_call.1} parent=1 // pred_fallthru
      _
    // Predicated region
    $region34: #{tpu_custom_call.1} parent=1 // pred_check
      _
    $region35: #{tpu_custom_call.1} parent=1 // pred_check_branch
      %88 = sbr.rel (0) target = $region37
    $region36: #{tpu_custom_call.1} parent=1 // pred_region
      %89 = dma.done [#allocation6], 131072
    $region37: #{tpu_custom_call.1} parent=1 // pred_fallthru
      _
    // Predicated region
    $region38: #{tpu_custom_call.1} parent=1 // pred_check
      _
    $region39: #{tpu_custom_call.1} parent=1 // pred_check_branch
      %91 = sbr.rel (0) target = $region41
    $region40: #{tpu_custom_call.1} parent=1 // pred_region
      %92 = dma.done [#allocation6], 64
    $region41: #{tpu_custom_call.1} parent=1 // pred_fallthru
      _
    // Predicated region
    $region42: #{tpu_custom_call.1} parent=1 // pred_check
      _
    $region43: #{tpu_custom_call.1} parent=1 // pred_check_branch
      %94 = sbr.rel (0) target = $region45
    $region44: #{tpu_custom_call.1} parent=1 // pred_region
      %95 = dma.done [#allocation9], 8192
    $region45: #{tpu_custom_call.1} parent=1 // pred_fallthru
      _
    // Predicated region
    $region46: #{tpu_custom_call.1} parent=1 // pred_check
      _
    $region47: #{tpu_custom_call.1} parent=1 // pred_check_branch
      %97 = sbr.rel (0) target = $region49
    $region48: #{tpu_custom_call.1} parent=1 // pred_region
      %98 = dma.done [#allocation9], 32
    $region49: #{tpu_custom_call.1} parent=1 // pred_fallthru
      _
    // Predicated region
    $region50: #{tpu_custom_call.1} parent=1 // pred_check
      _
    $region51: #{tpu_custom_call.1} parent=1 // pred_check_branch
      %100 = sbr.rel (0) target = $region53
    $region52: #{tpu_custom_call.1} parent=1 // pred_region
      %101 = dma.done [#allocation12], 32
    $region53: #{tpu_custom_call.1} parent=1 // pred_fallthru
      _
    %v102 = vld [vmem:[#allocation3] sm:$0xff]
    %v103 = vld [vmem:[#allocation3 + $0x8] sm:$0xff]
    %v104 = vld [vmem:[#allocation3 + $0x10] sm:$0xff]
    %v105 = vld [vmem:[#allocation3 + $0x18] sm:$0xff]
    %v106 = vld [vmem:[#allocation3 + $0x20] sm:$0xff]
    %v107 = vld [vmem:[#allocation3 + $0x28] sm:$0xff]
    %v108 = vld [vmem:[#allocation3 + $0x30] sm:$0xff]
    %v109 = vld [vmem:[#allocation3 + $0x38] sm:$0xff]
    %v110 = vld [vmem:[#allocation3 + $0x40] sm:$0xff]
    %v111 = vld [vmem:[#allocation3 + $0x48] sm:$0xff]
    %v112 = vld [vmem:[#allocation3 + $0x50] sm:$0xff]
    %v113 = vld [vmem:[#allocation3 + $0x58] sm:$0xff]
    %v114 = vld [vmem:[#allocation3 + $0x60] sm:$0xff]
    %v115 = vld [vmem:[#allocation3 + $0x68] sm:$0xff]
    %v116 = vld [vmem:[#allocation3 + $0x70] sm:$0xff]
    %v117 = vld [vmem:[#allocation3 + $0x78] sm:$0xff]
    %v118 = vld [vmem:[#allocation3 + $0x80] sm:$0xff]
    %v119 = vld [vmem:[#allocation3 + $0x88] sm:$0xff]
    %v120 = vld [vmem:[#allocation3 + $0x90] sm:$0xff]
    %v121 = vld [vmem:[#allocation3 + $0x98] sm:$0xff]
    %v122 = vld [vmem:[#allocation3 + $0xa0] sm:$0xff]
    %v123 = vld [vmem:[#allocation3 + $0xa8] sm:$0xff]
    %v124 = vld [vmem:[#allocation3 + $0xb0] sm:$0xff]
    %v125 = vld [vmem:[#allocation3 + $0xb8] sm:$0xff]
    %v126 = vld [vmem:[#allocation3 + $0xc0] sm:$0xff]
    %v127 = vld [vmem:[#allocation3 + $0xc8] sm:$0xff]
    %v128 = vld [vmem:[#allocation3 + $0xd0] sm:$0xff]
    %v129 = vld [vmem:[#allocation3 + $0xd8] sm:$0xff]
    %v130 = vld [vmem:[#allocation3 + $0xe0] sm:$0xff]
    %v131 = vld [vmem:[#allocation3 + $0xe8] sm:$0xff]
    %v132 = vld [vmem:[#allocation3 + $0xf0] sm:$0xff]
    %v133 = vld [vmem:[#allocation3 + $0xf8] sm:$0xff]
    %v134 = vpack.c.bf16 %v102, %v102
    %v135 = vpack.c.bf16 %v103, %v103
    %v136 = vpack.c.bf16 %v104, %v104
    %v137 = vpack.c.bf16 %v105, %v105
    %v138 = vpack.c.bf16 %v106, %v106
    %v139 = vpack.c.bf16 %v107, %v107
    %v140 = vpack.c.bf16 %v108, %v108
    %v141 = vpack.c.bf16 %v109, %v109
    %v142 = vpack.c.bf16 %v110, %v110
    %v143 = vpack.c.bf16 %v111, %v111
    %v144 = vpack.c.bf16 %v112, %v112
    %v145 = vpack.c.bf16 %v113, %v113
    %v146 = vpack.c.bf16 %v114, %v114
    %v147 = vpack.c.bf16 %v115, %v115
    %v148 = vpack.c.bf16 %v116, %v116
    %v149 = vpack.c.bf16 %v117, %v117
    %v150 = vpack.c.bf16 %v118, %v118
    %v151 = vpack.c.bf16 %v119, %v119
    %v152 = vpack.c.bf16 %v120, %v120
    %v153 = vpack.c.bf16 %v121, %v121
    %v154 = vpack.c.bf16 %v122, %v122
    %v155 = vpack.c.bf16 %v123, %v123
    %v156 = vpack.c.bf16 %v124, %v124
    %v157 = vpack.c.bf16 %v125, %v125
    %v158 = vpack.c.bf16 %v126, %v126
    %v159 = vpack.c.bf16 %v127, %v127
    %v160 = vpack.c.bf16 %v128, %v128
    %v161 = vpack.c.bf16 %v129, %v129
    %v162 = vpack.c.bf16 %v130, %v130
    %v163 = vpack.c.bf16 %v131, %v131
    %v164 = vpack.c.bf16 %v132, %v132
    %v165 = vpack.c.bf16 %v133, %v133
    %v166 = vld [vmem:[#allocation5] sm:$0xff]
    %v167 = vld [vmem:[#allocation5 + $0x8] sm:$0xff]
    %v168 = vld [vmem:[#allocation5 + $0x10] sm:$0xff]
    %v169 = vld [vmem:[#allocation5 + $0x18] sm:$0xff]
    %v170 = vld [vmem:[#allocation5 + $0x20] sm:$0xff]
    %v171 = vld [vmem:[#allocation5 + $0x28] sm:$0xff]
    %v172 = vld [vmem:[#allocation5 + $0x30] sm:$0xff]
    %v173 = vld [vmem:[#allocation5 + $0x38] sm:$0xff]
    %v174 = vld [vmem:[#allocation5 + $0x40] sm:$0xff]
    %v175 = vld [vmem:[#allocation5 + $0x48] sm:$0xff]
    %v176 = vld [vmem:[#allocation5 + $0x50] sm:$0xff]
    %v177 = vld [vmem:[#allocation5 + $0x58] sm:$0xff]
    %v178 = vld [vmem:[#allocation5 + $0x60] sm:$0xff]
    %v179 = vld [vmem:[#allocation5 + $0x68] sm:$0xff]
    %v180 = vld [vmem:[#allocation5 + $0x70] sm:$0xff]
    %v181 = vld [vmem:[#allocation5 + $0x78] sm:$0xff]
    %v182 = vld [vmem:[#allocation5 + $0x80] sm:$0xff]
    %v183 = vld [vmem:[#allocation5 + $0x88] sm:$0xff]
    %v184 = vld [vmem:[#allocation5 + $0x90] sm:$0xff]
    %v185 = vld [vmem:[#allocation5 + $0x98] sm:$0xff]
    %v186 = vld [vmem:[#allocation5 + $0xa0] sm:$0xff]
    %v187 = vld [vmem:[#allocation5 + $0xa8] sm:$0xff]
    %v188 = vld [vmem:[#allocation5 + $0xb0] sm:$0xff]
    %v189 = vld [vmem:[#allocation5 + $0xb8] sm:$0xff]
    %v190 = vld [vmem:[#allocation5 + $0xc0] sm:$0xff]
    %v191 = vld [vmem:[#allocation5 + $0xc8] sm:$0xff]
    %v192 = vld [vmem:[#allocation5 + $0xd0] sm:$0xff]
    %v193 = vld [vmem:[#allocation5 + $0xd8] sm:$0xff]
    %v194 = vld [vmem:[#allocation5 + $0xe0] sm:$0xff]
    %v195 = vld [vmem:[#allocation5 + $0xe8] sm:$0xff]
    %v196 = vld [vmem:[#allocation5 + $0xf0] sm:$0xff]
    %v197 = vld [vmem:[#allocation5 + $0xf8] sm:$0xff]
    %v198 = vld [vmem:[#allocation5 + $0x100] sm:$0xff]
    %v199 = vld [vmem:[#allocation5 + $0x108] sm:$0xff]
    %v200 = vld [vmem:[#allocation5 + $0x110] sm:$0xff]
    %v201 = vld [vmem:[#allocation5 + $0x118] sm:$0xff]
    %v202 = vld [vmem:[#allocation5 + $0x120] sm:$0xff]
    %v203 = vld [vmem:[#allocation5 + $0x128] sm:$0xff]
    %v204 = vld [vmem:[#allocation5 + $0x130] sm:$0xff]
    %v205 = vld [vmem:[#allocation5 + $0x138] sm:$0xff]
    %v206 = vld [vmem:[#allocation5 + $0x140] sm:$0xff]
    %v207 = vld [vmem:[#allocation5 + $0x148] sm:$0xff]
    %v208 = vld [vmem:[#allocation5 + $0x150] sm:$0xff]
    %v209 = vld [vmem:[#allocation5 + $0x158] sm:$0xff]
    %v210 = vld [vmem:[#allocation5 + $0x160] sm:$0xff]
    %v211 = vld [vmem:[#allocation5 + $0x168] sm:$0xff]
    %v212 = vld [vmem:[#allocation5 + $0x170] sm:$0xff]
    %v213 = vld [vmem:[#allocation5 + $0x178] sm:$0xff]
    %v214 = vld [vmem:[#allocation5 + $0x180] sm:$0xff]
    %v215 = vld [vmem:[#allocation5 + $0x188] sm:$0xff]
    %v216 = vld [vmem:[#allocation5 + $0x190] sm:$0xff]
    %v217 = vld [vmem:[#allocation5 + $0x198] sm:$0xff]
    %v218 = vld [vmem:[#allocation5 + $0x1a0] sm:$0xff]
    %v219 = vld [vmem:[#allocation5 + $0x1a8] sm:$0xff]
    %v220 = vld [vmem:[#allocation5 + $0x1b0] sm:$0xff]
    %v221 = vld [vmem:[#allocation5 + $0x1b8] sm:$0xff]
    %v222 = vld [vmem:[#allocation5 + $0x1c0] sm:$0xff]
    %v223 = vld [vmem:[#allocation5 + $0x1c8] sm:$0xff]
    %v224 = vld [vmem:[#allocation5 + $0x1d0] sm:$0xff]
    %v225 = vld [vmem:[#allocation5 + $0x1d8] sm:$0xff]
    %v226 = vld [vmem:[#allocation5 + $0x1e0] sm:$0xff]
    %v227 = vld [vmem:[#allocation5 + $0x1e8] sm:$0xff]
    %v228 = vld [vmem:[#allocation5 + $0x1f0] sm:$0xff]
    %v229 = vld [vmem:[#allocation5 + $0x1f8] sm:$0xff]
    %v230 = vld [vmem:[#allocation5 + $0x200] sm:$0xff]
    %v231 = vld [vmem:[#allocation5 + $0x208] sm:$0xff]
    %v232 = vld [vmem:[#allocation5 + $0x210] sm:$0xff]
    %v233 = vld [vmem:[#allocation5 + $0x218] sm:$0xff]
    %v234 = vld [vmem:[#allocation5 + $0x220] sm:$0xff]
    %v235 = vld [vmem:[#allocation5 + $0x228] sm:$0xff]
    %v236 = vld [vmem:[#allocation5 + $0x230] sm:$0xff]
    %v237 = vld [vmem:[#allocation5 + $0x238] sm:$0xff]
    %v238 = vld [vmem:[#allocation5 + $0x240] sm:$0xff]
    %v239 = vld [vmem:[#allocation5 + $0x248] sm:$0xff]
    %v240 = vld [vmem:[#allocation5 + $0x250] sm:$0xff]
    %v241 = vld [vmem:[#allocation5 + $0x258] sm:$0xff]
    %v242 = vld [vmem:[#allocation5 + $0x260] sm:$0xff]
    %v243 = vld [vmem:[#allocation5 + $0x268] sm:$0xff]
    %v244 = vld [vmem:[#allocation5 + $0x270] sm:$0xff]
    %v245 = vld [vmem:[#allocation5 + $0x278] sm:$0xff]
    %v246 = vld [vmem:[#allocation5 + $0x280] sm:$0xff]
    %v247 = vld [vmem:[#allocation5 + $0x288] sm:$0xff]
    %v248 = vld [vmem:[#allocation5 + $0x290] sm:$0xff]
    %v249 = vld [vmem:[#allocation5 + $0x298] sm:$0xff]
    %v250 = vld [vmem:[#allocation5 + $0x2a0] sm:$0xff]
    %v251 = vld [vmem:[#allocation5 + $0x2a8] sm:$0xff]
    %v252 = vld [vmem:[#allocation5 + $0x2b0] sm:$0xff]
    %v253 = vld [vmem:[#allocation5 + $0x2b8] sm:$0xff]
    %v254 = vld [vmem:[#allocation5 + $0x2c0] sm:$0xff]
    %v255 = vld [vmem:[#allocation5 + $0x2c8] sm:$0xff]
    %v256 = vld [vmem:[#allocation5 + $0x2d0] sm:$0xff]
    %v257 = vld [vmem:[#allocation5 + $0x2d8] sm:$0xff]
    %v258 = vld [vmem:[#allocation5 + $0x2e0] sm:$0xff]
    %v259 = vld [vmem:[#allocation5 + $0x2e8] sm:$0xff]
    %v260 = vld [vmem:[#allocation5 + $0x2f0] sm:$0xff]
    %v261 = vld [vmem:[#allocation5 + $0x2f8] sm:$0xff]
    %v262 = vld [vmem:[#allocation5 + $0x300] sm:$0xff]
    %v263 = vld [vmem:[#allocation5 + $0x308] sm:$0xff]
    %v264 = vld [vmem:[#allocation5 + $0x310] sm:$0xff]
    %v265 = vld [vmem:[#allocation5 + $0x318] sm:$0xff]
    %v266 = vld [vmem:[#allocation5 + $0x320] sm:$0xff]
    %v267 = vld [vmem:[#allocation5 + $0x328] sm:$0xff]
    %v268 = vld [vmem:[#allocation5 + $0x330] sm:$0xff]
    %v269 = vld [vmem:[#allocation5 + $0x338] sm:$0xff]
    %v270 = vld [vmem:[#allocation5 + $0x340] sm:$0xff]
    %v271 = vld [vmem:[#allocation5 + $0x348] sm:$0xff]
    %v272 = vld [vmem:[#allocation5 + $0x350] sm:$0xff]
    %v273 = vld [vmem:[#allocation5 + $0x358] sm:$0xff]
    %v274 = vld [vmem:[#allocation5 + $0x360] sm:$0xff]
    %v275 = vld [vmem:[#allocation5 + $0x368] sm:$0xff]
    %v276 = vld [vmem:[#allocation5 + $0x370] sm:$0xff]
    %v277 = vld [vmem:[#allocation5 + $0x378] sm:$0xff]
    %v278 = vld [vmem:[#allocation5 + $0x380] sm:$0xff]
    %v279 = vld [vmem:[#allocation5 + $0x388] sm:$0xff]
    %v280 = vld [vmem:[#allocation5 + $0x390] sm:$0xff]
    %v281 = vld [vmem:[#allocation5 + $0x398] sm:$0xff]
    %v282 = vld [vmem:[#allocation5 + $0x3a0] sm:$0xff]
    %v283 = vld [vmem:[#allocation5 + $0x3a8] sm:$0xff]
    %v284 = vld [vmem:[#allocation5 + $0x3b0] sm:$0xff]
    %v285 = vld [vmem:[#allocation5 + $0x3b8] sm:$0xff]
    %v286 = vld [vmem:[#allocation5 + $0x3c0] sm:$0xff]
    %v287 = vld [vmem:[#allocation5 + $0x3c8] sm:$0xff]
    %v288 = vld [vmem:[#allocation5 + $0x3d0] sm:$0xff]
    %v289 = vld [vmem:[#allocation5 + $0x3d8] sm:$0xff]
    %v290 = vld [vmem:[#allocation5 + $0x3e0] sm:$0xff]
    %v291 = vld [vmem:[#allocation5 + $0x3e8] sm:$0xff]
    %v292 = vld [vmem:[#allocation5 + $0x3f0] sm:$0xff]
    %v293 = vld [vmem:[#allocation5 + $0x3f8] sm:$0xff]
    %v294 = vld [vmem:[#allocation5 + $0x400] sm:$0xff]
    %v295 = vld [vmem:[#allocation5 + $0x408] sm:$0xff]
    %v296 = vld [vmem:[#allocation5 + $0x410] sm:$0xff]
    %v297 = vld [vmem:[#allocation5 + $0x418] sm:$0xff]
    %v298 = vld [vmem:[#allocation5 + $0x420] sm:$0xff]
    %v299 = vld [vmem:[#allocation5 + $0x428] sm:$0xff]
    %v300 = vld [vmem:[#allocation5 + $0x430] sm:$0xff]
    %v301 = vld [vmem:[#allocation5 + $0x438] sm:$0xff]
    %v302 = vld [vmem:[#allocation5 + $0x440] sm:$0xff]
    %v303 = vld [vmem:[#allocation5 + $0x448] sm:$0xff]
    %v304 = vld [vmem:[#allocation5 + $0x450] sm:$0xff]
    %v305 = vld [vmem:[#allocation5 + $0x458] sm:$0xff]
    %v306 = vld [vmem:[#allocation5 + $0x460] sm:$0xff]
    %v307 = vld [vmem:[#allocation5 + $0x468] sm:$0xff]
    %v308 = vld [vmem:[#allocation5 + $0x470] sm:$0xff]
    %v309 = vld [vmem:[#allocation5 + $0x478] sm:$0xff]
    %v310 = vld [vmem:[#allocation5 + $0x480] sm:$0xff]
    %v311 = vld [vmem:[#allocation5 + $0x488] sm:$0xff]
    %v312 = vld [vmem:[#allocation5 + $0x490] sm:$0xff]
    %v313 = vld [vmem:[#allocation5 + $0x498] sm:$0xff]
    %v314 = vld [vmem:[#allocation5 + $0x4a0] sm:$0xff]
    %v315 = vld [vmem:[#allocation5 + $0x4a8] sm:$0xff]
    %v316 = vld [vmem:[#allocation5 + $0x4b0] sm:$0xff]
    %v317 = vld [vmem:[#allocation5 + $0x4b8] sm:$0xff]
    %v318 = vld [vmem:[#allocation5 + $0x4c0] sm:$0xff]
    %v319 = vld [vmem:[#allocation5 + $0x4c8] sm:$0xff]
    %v320 = vld [vmem:[#allocation5 + $0x4d0] sm:$0xff]
    %v321 = vld [vmem:[#allocation5 + $0x4d8] sm:$0xff]
    %v322 = vld [vmem:[#allocation5 + $0x4e0] sm:$0xff]
    %v323 = vld [vmem:[#allocation5 + $0x4e8] sm:$0xff]
    %v324 = vld [vmem:[#allocation5 + $0x4f0] sm:$0xff]
    %v325 = vld [vmem:[#allocation5 + $0x4f8] sm:$0xff]
    %v326 = vld [vmem:[#allocation5 + $0x500] sm:$0xff]
    %v327 = vld [vmem:[#allocation5 + $0x508] sm:$0xff]
    %v328 = vld [vmem:[#allocation5 + $0x510] sm:$0xff]
    %v329 = vld [vmem:[#allocation5 + $0x518] sm:$0xff]
    %v330 = vld [vmem:[#allocation5 + $0x520] sm:$0xff]
    %v331 = vld [vmem:[#allocation5 + $0x528] sm:$0xff]
    %v332 = vld [vmem:[#allocation5 + $0x530] sm:$0xff]
    %v333 = vld [vmem:[#allocation5 + $0x538] sm:$0xff]
    %v334 = vld [vmem:[#allocation5 + $0x540] sm:$0xff]
    %v335 = vld [vmem:[#allocation5 + $0x548] sm:$0xff]
    %v336 = vld [vmem:[#allocation5 + $0x550] sm:$0xff]
    %v337 = vld [vmem:[#allocation5 + $0x558] sm:$0xff]
    %v338 = vld [vmem:[#allocation5 + $0x560] sm:$0xff]
    %v339 = vld [vmem:[#allocation5 + $0x568] sm:$0xff]
    %v340 = vld [vmem:[#allocation5 + $0x570] sm:$0xff]
    %v341 = vld [vmem:[#allocation5 + $0x578] sm:$0xff]
    %v342 = vld [vmem:[#allocation5 + $0x580] sm:$0xff]
    %v343 = vld [vmem:[#allocation5 + $0x588] sm:$0xff]
    %v344 = vld [vmem:[#allocation5 + $0x590] sm:$0xff]
    %v345 = vld [vmem:[#allocation5 + $0x598] sm:$0xff]
    %v346 = vld [vmem:[#allocation5 + $0x5a0] sm:$0xff]
    %v347 = vld [vmem:[#allocation5 + $0x5a8] sm:$0xff]
    %v348 = vld [vmem:[#allocation5 + $0x5b0] sm:$0xff]
    %v349 = vld [vmem:[#allocation5 + $0x5b8] sm:$0xff]
    %v350 = vld [vmem:[#allocation5 + $0x5c0] sm:$0xff]
    %v351 = vld [vmem:[#allocation5 + $0x5c8] sm:$0xff]
    %v352 = vld [vmem:[#allocation5 + $0x5d0] sm:$0xff]
    %v353 = vld [vmem:[#allocation5 + $0x5d8] sm:$0xff]
    %v354 = vld [vmem:[#allocation5 + $0x5e0] sm:$0xff]
    %v355 = vld [vmem:[#allocation5 + $0x5e8] sm:$0xff]
    %v356 = vld [vmem:[#allocation5 + $0x5f0] sm:$0xff]
    %v357 = vld [vmem:[#allocation5 + $0x5f8] sm:$0xff]
    %v358 = vld [vmem:[#allocation5 + $0x600] sm:$0xff]
    %v359 = vld [vmem:[#allocation5 + $0x608] sm:$0xff]
    %v360 = vld [vmem:[#allocation5 + $0x610] sm:$0xff]
    %v361 = vld [vmem:[#allocation5 + $0x618] sm:$0xff]
    %v362 = vld [vmem:[#allocation5 + $0x620] sm:$0xff]
    %v363 = vld [vmem:[#allocation5 + $0x628] sm:$0xff]
    %v364 = vld [vmem:[#allocation5 + $0x630] sm:$0xff]
    %v365 = vld [vmem:[#allocation5 + $0x638] sm:$0xff]
    %v366 = vld [vmem:[#allocation5 + $0x640] sm:$0xff]
    %v367 = vld [vmem:[#allocation5 + $0x648] sm:$0xff]
    %v368 = vld [vmem:[#allocation5 + $0x650] sm:$0xff]
    %v369 = vld [vmem:[#allocation5 + $0x658] sm:$0xff]
    %v370 = vld [vmem:[#allocation5 + $0x660] sm:$0xff]
    %v371 = vld [vmem:[#allocation5 + $0x668] sm:$0xff]
    %v372 = vld [vmem:[#allocation5 + $0x670] sm:$0xff]
    %v373 = vld [vmem:[#allocation5 + $0x678] sm:$0xff]
    %v374 = vld [vmem:[#allocation5 + $0x680] sm:$0xff]
    %v375 = vld [vmem:[#allocation5 + $0x688] sm:$0xff]
    %v376 = vld [vmem:[#allocation5 + $0x690] sm:$0xff]
    %v377 = vld [vmem:[#allocation5 + $0x698] sm:$0xff]
    %v378 = vld [vmem:[#allocation5 + $0x6a0] sm:$0xff]
    %v379 = vld [vmem:[#allocation5 + $0x6a8] sm:$0xff]
    %v380 = vld [vmem:[#allocation5 + $0x6b0] sm:$0xff]
    %v381 = vld [vmem:[#allocation5 + $0x6b8] sm:$0xff]
    %v382 = vld [vmem:[#allocation5 + $0x6c0] sm:$0xff]
    %v383 = vld [vmem:[#allocation5 + $0x6c8] sm:$0xff]
    %v384 = vld [vmem:[#allocation5 + $0x6d0] sm:$0xff]
    %v385 = vld [vmem:[#allocation5 + $0x6d8] sm:$0xff]
    %v386 = vld [vmem:[#allocation5 + $0x6e0] sm:$0xff]
    %v387 = vld [vmem:[#allocation5 + $0x6e8] sm:$0xff]
    %v388 = vld [vmem:[#allocation5 + $0x6f0] sm:$0xff]
    %v389 = vld [vmem:[#allocation5 + $0x6f8] sm:$0xff]
    %v390 = vld [vmem:[#allocation5 + $0x700] sm:$0xff]
    %v391 = vld [vmem:[#allocation5 + $0x708] sm:$0xff]
    %v392 = vld [vmem:[#allocation5 + $0x710] sm:$0xff]
    %v393 = vld [vmem:[#allocation5 + $0x718] sm:$0xff]
    %v394 = vld [vmem:[#allocation5 + $0x720] sm:$0xff]
    %v395 = vld [vmem:[#allocation5 + $0x728] sm:$0xff]
    %v396 = vld [vmem:[#allocation5 + $0x730] sm:$0xff]
    %v397 = vld [vmem:[#allocation5 + $0x738] sm:$0xff]
    %v398 = vld [vmem:[#allocation5 + $0x740] sm:$0xff]
    %v399 = vld [vmem:[#allocation5 + $0x748] sm:$0xff]
    %v400 = vld [vmem:[#allocation5 + $0x750] sm:$0xff]
    %v401 = vld [vmem:[#allocation5 + $0x758] sm:$0xff]
    %v402 = vld [vmem:[#allocation5 + $0x760] sm:$0xff]
    %v403 = vld [vmem:[#allocation5 + $0x768] sm:$0xff]
    %v404 = vld [vmem:[#allocation5 + $0x770] sm:$0xff]
    %v405 = vld [vmem:[#allocation5 + $0x778] sm:$0xff]
    %v406 = vld [vmem:[#allocation5 + $0x780] sm:$0xff]
    %v407 = vld [vmem:[#allocation5 + $0x788] sm:$0xff]
    %v408 = vld [vmem:[#allocation5 + $0x790] sm:$0xff]
    %v409 = vld [vmem:[#allocation5 + $0x798] sm:$0xff]
    %v410 = vld [vmem:[#allocation5 + $0x7a0] sm:$0xff]
    %v411 = vld [vmem:[#allocation5 + $0x7a8] sm:$0xff]
    %v412 = vld [vmem:[#allocation5 + $0x7b0] sm:$0xff]
    %v413 = vld [vmem:[#allocation5 + $0x7b8] sm:$0xff]
    %v414 = vld [vmem:[#allocation5 + $0x7c0] sm:$0xff]
    %v415 = vld [vmem:[#allocation5 + $0x7c8] sm:$0xff]
    %v416 = vld [vmem:[#allocation5 + $0x7d0] sm:$0xff]
    %v417 = vld [vmem:[#allocation5 + $0x7d8] sm:$0xff]
    %v418 = vld [vmem:[#allocation5 + $0x7e0] sm:$0xff]
    %v419 = vld [vmem:[#allocation5 + $0x7e8] sm:$0xff]
    %v420 = vld [vmem:[#allocation5 + $0x7f0] sm:$0xff]
    %v421 = vld [vmem:[#allocation5 + $0x7f8] sm:$0xff]
    %v422 = vld [vmem:[#allocation5 + $0x800] sm:$0xff]
    %v423 = vld [vmem:[#allocation5 + $0x808] sm:$0xff]
    %v424 = vld [vmem:[#allocation5 + $0x810] sm:$0xff]
    %v425 = vld [vmem:[#allocation5 + $0x818] sm:$0xff]
    %v426 = vld [vmem:[#allocation5 + $0x820] sm:$0xff]
    %v427 = vld [vmem:[#allocation5 + $0x828] sm:$0xff]
    %v428 = vld [vmem:[#allocation5 + $0x830] sm:$0xff]
    %v429 = vld [vmem:[#allocation5 + $0x838] sm:$0xff]
    %v430 = vld [vmem:[#allocation5 + $0x840] sm:$0xff]
    %v431 = vld [vmem:[#allocation5 + $0x848] sm:$0xff]
    %v432 = vld [vmem:[#allocation5 + $0x850] sm:$0xff]
    %v433 = vld [vmem:[#allocation5 + $0x858] sm:$0xff]
    %v434 = vld [vmem:[#allocation5 + $0x860] sm:$0xff]
    %v435 = vld [vmem:[#allocation5 + $0x868] sm:$0xff]
    %v436 = vld [vmem:[#allocation5 + $0x870] sm:$0xff]
    %v437 = vld [vmem:[#allocation5 + $0x878] sm:$0xff]
    %v438 = vld [vmem:[#allocation5 + $0x880] sm:$0xff]
    %v439 = vld [vmem:[#allocation5 + $0x888] sm:$0xff]
    %v440 = vld [vmem:[#allocation5 + $0x890] sm:$0xff]
    %v441 = vld [vmem:[#allocation5 + $0x898] sm:$0xff]
    %v442 = vld [vmem:[#allocation5 + $0x8a0] sm:$0xff]
    %v443 = vld [vmem:[#allocation5 + $0x8a8] sm:$0xff]
    %v444 = vld [vmem:[#allocation5 + $0x8b0] sm:$0xff]
    %v445 = vld [vmem:[#allocation5 + $0x8b8] sm:$0xff]
    %v446 = vld [vmem:[#allocation5 + $0x8c0] sm:$0xff]
    %v447 = vld [vmem:[#allocation5 + $0x8c8] sm:$0xff]
    %v448 = vld [vmem:[#allocation5 + $0x8d0] sm:$0xff]
    %v449 = vld [vmem:[#allocation5 + $0x8d8] sm:$0xff]
    %v450 = vld [vmem:[#allocation5 + $0x8e0] sm:$0xff]
    %v451 = vld [vmem:[#allocation5 + $0x8e8] sm:$0xff]
    %v452 = vld [vmem:[#allocation5 + $0x8f0] sm:$0xff]
    %v453 = vld [vmem:[#allocation5 + $0x8f8] sm:$0xff]
    %v454 = vld [vmem:[#allocation5 + $0x900] sm:$0xff]
    %v455 = vld [vmem:[#allocation5 + $0x908] sm:$0xff]
    %v456 = vld [vmem:[#allocation5 + $0x910] sm:$0xff]
    %v457 = vld [vmem:[#allocation5 + $0x918] sm:$0xff]
    %v458 = vld [vmem:[#allocation5 + $0x920] sm:$0xff]
    %v459 = vld [vmem:[#allocation5 + $0x928] sm:$0xff]
    %v460 = vld [vmem:[#allocation5 + $0x930] sm:$0xff]
    %v461 = vld [vmem:[#allocation5 + $0x938] sm:$0xff]
    %v462 = vld [vmem:[#allocation5 + $0x940] sm:$0xff]
    %v463 = vld [vmem:[#allocation5 + $0x948] sm:$0xff]
    %v464 = vld [vmem:[#allocation5 + $0x950] sm:$0xff]
    %v465 = vld [vmem:[#allocation5 + $0x958] sm:$0xff]
    %v466 = vld [vmem:[#allocation5 + $0x960] sm:$0xff]
    %v467 = vld [vmem:[#allocation5 + $0x968] sm:$0xff]
    %v468 = vld [vmem:[#allocation5 + $0x970] sm:$0xff]
    %v469 = vld [vmem:[#allocation5 + $0x978] sm:$0xff]
    %v470 = vld [vmem:[#allocation5 + $0x980] sm:$0xff]
    %v471 = vld [vmem:[#allocation5 + $0x988] sm:$0xff]
    %v472 = vld [vmem:[#allocation5 + $0x990] sm:$0xff]
    %v473 = vld [vmem:[#allocation5 + $0x998] sm:$0xff]
    %v474 = vld [vmem:[#allocation5 + $0x9a0] sm:$0xff]
    %v475 = vld [vmem:[#allocation5 + $0x9a8] sm:$0xff]
    %v476 = vld [vmem:[#allocation5 + $0x9b0] sm:$0xff]
    %v477 = vld [vmem:[#allocation5 + $0x9b8] sm:$0xff]
    %v478 = vld [vmem:[#allocation5 + $0x9c0] sm:$0xff]
    %v479 = vld [vmem:[#allocation5 + $0x9c8] sm:$0xff]
    %v480 = vld [vmem:[#allocation5 + $0x9d0] sm:$0xff]
    %v481 = vld [vmem:[#allocation5 + $0x9d8] sm:$0xff]
    %v482 = vld [vmem:[#allocation5 + $0x9e0] sm:$0xff]
    %v483 = vld [vmem:[#allocation5 + $0x9e8] sm:$0xff]
    %v484 = vld [vmem:[#allocation5 + $0x9f0] sm:$0xff]
    %v485 = vld [vmem:[#allocation5 + $0x9f8] sm:$0xff]
    %v486 = vld [vmem:[#allocation5 + $0xa00] sm:$0xff]
    %v487 = vld [vmem:[#allocation5 + $0xa08] sm:$0xff]
    %v488 = vld [vmem:[#allocation5 + $0xa10] sm:$0xff]
    %v489 = vld [vmem:[#allocation5 + $0xa18] sm:$0xff]
    %v490 = vld [vmem:[#allocation5 + $0xa20] sm:$0xff]
    %v491 = vld [vmem:[#allocation5 + $0xa28] sm:$0xff]
    %v492 = vld [vmem:[#allocation5 + $0xa30] sm:$0xff]
    %v493 = vld [vmem:[#allocation5 + $0xa38] sm:$0xff]
    %v494 = vld [vmem:[#allocation5 + $0xa40] sm:$0xff]
    %v495 = vld [vmem:[#allocation5 + $0xa48] sm:$0xff]
    %v496 = vld [vmem:[#allocation5 + $0xa50] sm:$0xff]
    %v497 = vld [vmem:[#allocation5 + $0xa58] sm:$0xff]
    %v498 = vld [vmem:[#allocation5 + $0xa60] sm:$0xff]
    %v499 = vld [vmem:[#allocation5 + $0xa68] sm:$0xff]
    %v500 = vld [vmem:[#allocation5 + $0xa70] sm:$0xff]
    %v501 = vld [vmem:[#allocation5 + $0xa78] sm:$0xff]
    %v502 = vld [vmem:[#allocation5 + $0xa80] sm:$0xff]
    %v503 = vld [vmem:[#allocation5 + $0xa88] sm:$0xff]
    %v504 = vld [vmem:[#allocation5 + $0xa90] sm:$0xff]
    %v505 = vld [vmem:[#allocation5 + $0xa98] sm:$0xff]
    %v506 = vld [vmem:[#allocation5 + $0xaa0] sm:$0xff]
    %v507 = vld [vmem:[#allocation5 + $0xaa8] sm:$0xff]
    %v508 = vld [vmem:[#allocation5 + $0xab0] sm:$0xff]
    %v509 = vld [vmem:[#allocation5 + $0xab8] sm:$0xff]
    %v510 = vld [vmem:[#allocation5 + $0xac0] sm:$0xff]
    %v511 = vld [vmem:[#allocation5 + $0xac8] sm:$0xff]
    %v512 = vld [vmem:[#allocation5 + $0xad0] sm:$0xff]
    %v513 = vld [vmem:[#allocation5 + $0xad8] sm:$0xff]
    %v514 = vld [vmem:[#allocation5 + $0xae0] sm:$0xff]
    %v515 = vld [vmem:[#allocation5 + $0xae8] sm:$0xff]
    %v516 = vld [vmem:[#allocation5 + $0xaf0] sm:$0xff]
    %v517 = vld [vmem:[#allocation5 + $0xaf8] sm:$0xff]
    %v518 = vld [vmem:[#allocation5 + $0xb00] sm:$0xff]
    %v519 = vld [vmem:[#allocation5 + $0xb08] sm:$0xff]
    %v520 = vld [vmem:[#allocation5 + $0xb10] sm:$0xff]
    %v521 = vld [vmem:[#allocation5 + $0xb18] sm:$0xff]
    %v522 = vld [vmem:[#allocation5 + $0xb20] sm:$0xff]
    %v523 = vld [vmem:[#allocation5 + $0xb28] sm:$0xff]
    %v524 = vld [vmem:[#allocation5 + $0xb30] sm:$0xff]
    %v525 = vld [vmem:[#allocation5 + $0xb38] sm:$0xff]
    %v526 = vld [vmem:[#allocation5 + $0xb40] sm:$0xff]
    %v527 = vld [vmem:[#allocation5 + $0xb48] sm:$0xff]
    %v528 = vld [vmem:[#allocation5 + $0xb50] sm:$0xff]
    %v529 = vld [vmem:[#allocation5 + $0xb58] sm:$0xff]
    %v530 = vld [vmem:[#allocation5 + $0xb60] sm:$0xff]
    %v531 = vld [vmem:[#allocation5 + $0xb68] sm:$0xff]
    %v532 = vld [vmem:[#allocation5 + $0xb70] sm:$0xff]
    %v533 = vld [vmem:[#allocation5 + $0xb78] sm:$0xff]
    %v534 = vld [vmem:[#allocation5 + $0xb80] sm:$0xff]
    %v535 = vld [vmem:[#allocation5 + $0xb88] sm:$0xff]
    %v536 = vld [vmem:[#allocation5 + $0xb90] sm:$0xff]
    %v537 = vld [vmem:[#allocation5 + $0xb98] sm:$0xff]
    %v538 = vld [vmem:[#allocation5 + $0xba0] sm:$0xff]
    %v539 = vld [vmem:[#allocation5 + $0xba8] sm:$0xff]
    %v540 = vld [vmem:[#allocation5 + $0xbb0] sm:$0xff]
    %v541 = vld [vmem:[#allocation5 + $0xbb8] sm:$0xff]
    %v542 = vld [vmem:[#allocation5 + $0xbc0] sm:$0xff]
    %v543 = vld [vmem:[#allocation5 + $0xbc8] sm:$0xff]
    %v544 = vld [vmem:[#allocation5 + $0xbd0] sm:$0xff]
    %v545 = vld [vmem:[#allocation5 + $0xbd8] sm:$0xff]
    %v546 = vld [vmem:[#allocation5 + $0xbe0] sm:$0xff]
    %v547 = vld [vmem:[#allocation5 + $0xbe8] sm:$0xff]
    %v548 = vld [vmem:[#allocation5 + $0xbf0] sm:$0xff]
    %v549 = vld [vmem:[#allocation5 + $0xbf8] sm:$0xff]
    %v550 = vld [vmem:[#allocation5 + $0xc00] sm:$0xff]
    %v551 = vld [vmem:[#allocation5 + $0xc08] sm:$0xff]
    %v552 = vld [vmem:[#allocation5 + $0xc10] sm:$0xff]
    %v553 = vld [vmem:[#allocation5 + $0xc18] sm:$0xff]
    %v554 = vld [vmem:[#allocation5 + $0xc20] sm:$0xff]
    %v555 = vld [vmem:[#allocation5 + $0xc28] sm:$0xff]
    %v556 = vld [vmem:[#allocation5 + $0xc30] sm:$0xff]
    %v557 = vld [vmem:[#allocation5 + $0xc38] sm:$0xff]
    %v558 = vld [vmem:[#allocation5 + $0xc40] sm:$0xff]
    %v559 = vld [vmem:[#allocation5 + $0xc48] sm:$0xff]
    %v560 = vld [vmem:[#allocation5 + $0xc50] sm:$0xff]
    %v561 = vld [vmem:[#allocation5 + $0xc58] sm:$0xff]
    %v562 = vld [vmem:[#allocation5 + $0xc60] sm:$0xff]
    %v563 = vld [vmem:[#allocation5 + $0xc68] sm:$0xff]
    %v564 = vld [vmem:[#allocation5 + $0xc70] sm:$0xff]
    %v565 = vld [vmem:[#allocation5 + $0xc78] sm:$0xff]
    %v566 = vld [vmem:[#allocation5 + $0xc80] sm:$0xff]
    %v567 = vld [vmem:[#allocation5 + $0xc88] sm:$0xff]
    %v568 = vld [vmem:[#allocation5 + $0xc90] sm:$0xff]
    %v569 = vld [vmem:[#allocation5 + $0xc98] sm:$0xff]
    %v570 = vld [vmem:[#allocation5 + $0xca0] sm:$0xff]
    %v571 = vld [vmem:[#allocation5 + $0xca8] sm:$0xff]
    %v572 = vld [vmem:[#allocation5 + $0xcb0] sm:$0xff]
    %v573 = vld [vmem:[#allocation5 + $0xcb8] sm:$0xff]
    %v574 = vld [vmem:[#allocation5 + $0xcc0] sm:$0xff]
    %v575 = vld [vmem:[#allocation5 + $0xcc8] sm:$0xff]
    %v576 = vld [vmem:[#allocation5 + $0xcd0] sm:$0xff]
    %v577 = vld [vmem:[#allocation5 + $0xcd8] sm:$0xff]
    %v578 = vld [vmem:[#allocation5 + $0xce0] sm:$0xff]
    %v579 = vld [vmem:[#allocation5 + $0xce8] sm:$0xff]
    %v580 = vld [vmem:[#allocation5 + $0xcf0] sm:$0xff]
    %v581 = vld [vmem:[#allocation5 + $0xcf8] sm:$0xff]
    %v582 = vld [vmem:[#allocation5 + $0xd00] sm:$0xff]
    %v583 = vld [vmem:[#allocation5 + $0xd08] sm:$0xff]
    %v584 = vld [vmem:[#allocation5 + $0xd10] sm:$0xff]
    %v585 = vld [vmem:[#allocation5 + $0xd18] sm:$0xff]
    %v586 = vld [vmem:[#allocation5 + $0xd20] sm:$0xff]
    %v587 = vld [vmem:[#allocation5 + $0xd28] sm:$0xff]
    %v588 = vld [vmem:[#allocation5 + $0xd30] sm:$0xff]
    %v589 = vld [vmem:[#allocation5 + $0xd38] sm:$0xff]
    %v590 = vld [vmem:[#allocation5 + $0xd40] sm:$0xff]
    %v591 = vld [vmem:[#allocation5 + $0xd48] sm:$0xff]
    %v592 = vld [vmem:[#allocation5 + $0xd50] sm:$0xff]
    %v593 = vld [vmem:[#allocation5 + $0xd58] sm:$0xff]
    %v594 = vld [vmem:[#allocation5 + $0xd60] sm:$0xff]
    %v595 = vld [vmem:[#allocation5 + $0xd68] sm:$0xff]
    %v596 = vld [vmem:[#allocation5 + $0xd70] sm:$0xff]
    %v597 = vld [vmem:[#allocation5 + $0xd78] sm:$0xff]
    %v598 = vld [vmem:[#allocation5 + $0xd80] sm:$0xff]
    %v599 = vld [vmem:[#allocation5 + $0xd88] sm:$0xff]
    %v600 = vld [vmem:[#allocation5 + $0xd90] sm:$0xff]
    %v601 = vld [vmem:[#allocation5 + $0xd98] sm:$0xff]
    %v602 = vld [vmem:[#allocation5 + $0xda0] sm:$0xff]
    %v603 = vld [vmem:[#allocation5 + $0xda8] sm:$0xff]
    %v604 = vld [vmem:[#allocation5 + $0xdb0] sm:$0xff]
    %v605 = vld [vmem:[#allocation5 + $0xdb8] sm:$0xff]
    %v606 = vld [vmem:[#allocation5 + $0xdc0] sm:$0xff]
    %v607 = vld [vmem:[#allocation5 + $0xdc8] sm:$0xff]
    %v608 = vld [vmem:[#allocation5 + $0xdd0] sm:$0xff]
    %v609 = vld [vmem:[#allocation5 + $0xdd8] sm:$0xff]
    %v610 = vld [vmem:[#allocation5 + $0xde0] sm:$0xff]
    %v611 = vld [vmem:[#allocation5 + $0xde8] sm:$0xff]
    %v612 = vld [vmem:[#allocation5 + $0xdf0] sm:$0xff]
    %v613 = vld [vmem:[#allocation5 + $0xdf8] sm:$0xff]
    %v614 = vld [vmem:[#allocation5 + $0xe00] sm:$0xff]
    %v615 = vld [vmem:[#allocation5 + $0xe08] sm:$0xff]
    %v616 = vld [vmem:[#allocation5 + $0xe10] sm:$0xff]
    %v617 = vld [vmem:[#allocation5 + $0xe18] sm:$0xff]
    %v618 = vld [vmem:[#allocation5 + $0xe20] sm:$0xff]
    %v619 = vld [vmem:[#allocation5 + $0xe28] sm:$0xff]
    %v620 = vld [vmem:[#allocation5 + $0xe30] sm:$0xff]
    %v621 = vld [vmem:[#allocation5 + $0xe38] sm:$0xff]
    %v622 = vld [vmem:[#allocation5 + $0xe40] sm:$0xff]
    %v623 = vld [vmem:[#allocation5 + $0xe48] sm:$0xff]
    %v624 = vld [vmem:[#allocation5 + $0xe50] sm:$0xff]
    %v625 = vld [vmem:[#allocation5 + $0xe58] sm:$0xff]
    %v626 = vld [vmem:[#allocation5 + $0xe60] sm:$0xff]
    %v627 = vld [vmem:[#allocation5 + $0xe68] sm:$0xff]
    %v628 = vld [vmem:[#allocation5 + $0xe70] sm:$0xff]
    %v629 = vld [vmem:[#allocation5 + $0xe78] sm:$0xff]
    %v630 = vld [vmem:[#allocation5 + $0xe80] sm:$0xff]
    %v631 = vld [vmem:[#allocation5 + $0xe88] sm:$0xff]
    %v632 = vld [vmem:[#allocation5 + $0xe90] sm:$0xff]
    %v633 = vld [vmem:[#allocation5 + $0xe98] sm:$0xff]
    %v634 = vld [vmem:[#allocation5 + $0xea0] sm:$0xff]
    %v635 = vld [vmem:[#allocation5 + $0xea8] sm:$0xff]
    %v636 = vld [vmem:[#allocation5 + $0xeb0] sm:$0xff]
    %v637 = vld [vmem:[#allocation5 + $0xeb8] sm:$0xff]
    %v638 = vld [vmem:[#allocation5 + $0xec0] sm:$0xff]
    %v639 = vld [vmem:[#allocation5 + $0xec8] sm:$0xff]
    %v640 = vld [vmem:[#allocation5 + $0xed0] sm:$0xff]
    %v641 = vld [vmem:[#allocation5 + $0xed8] sm:$0xff]
    %v642 = vld [vmem:[#allocation5 + $0xee0] sm:$0xff]
    %v643 = vld [vmem:[#allocation5 + $0xee8] sm:$0xff]
    %v644 = vld [vmem:[#allocation5 + $0xef0] sm:$0xff]
    %v645 = vld [vmem:[#allocation5 + $0xef8] sm:$0xff]
    %v646 = vld [vmem:[#allocation5 + $0xf00] sm:$0xff]
    %v647 = vld [vmem:[#allocation5 + $0xf08] sm:$0xff]
    %v648 = vld [vmem:[#allocation5 + $0xf10] sm:$0xff]
    %v649 = vld [vmem:[#allocation5 + $0xf18] sm:$0xff]
    %v650 = vld [vmem:[#allocation5 + $0xf20] sm:$0xff]
    %v651 = vld [vmem:[#allocation5 + $0xf28] sm:$0xff]
    %v652 = vld [vmem:[#allocation5 + $0xf30] sm:$0xff]
    %v653 = vld [vmem:[#allocation5 + $0xf38] sm:$0xff]
    %v654 = vld [vmem:[#allocation5 + $0xf40] sm:$0xff]
    %v655 = vld [vmem:[#allocation5 + $0xf48] sm:$0xff]
    %v656 = vld [vmem:[#allocation5 + $0xf50] sm:$0xff]
    %v657 = vld [vmem:[#allocation5 + $0xf58] sm:$0xff]
    %v658 = vld [vmem:[#allocation5 + $0xf60] sm:$0xff]
    %v659 = vld [vmem:[#allocation5 + $0xf68] sm:$0xff]
    %v660 = vld [vmem:[#allocation5 + $0xf70] sm:$0xff]
    %v661 = vld [vmem:[#allocation5 + $0xf78] sm:$0xff]
    %v662 = vld [vmem:[#allocation5 + $0xf80] sm:$0xff]
    %v663 = vld [vmem:[#allocation5 + $0xf88] sm:$0xff]
    %v664 = vld [vmem:[#allocation5 + $0xf90] sm:$0xff]
    %v665 = vld [vmem:[#allocation5 + $0xf98] sm:$0xff]
    %v666 = vld [vmem:[#allocation5 + $0xfa0] sm:$0xff]
    %v667 = vld [vmem:[#allocation5 + $0xfa8] sm:$0xff]
    %v668 = vld [vmem:[#allocation5 + $0xfb0] sm:$0xff]
    %v669 = vld [vmem:[#allocation5 + $0xfb8] sm:$0xff]
    %v670 = vld [vmem:[#allocation5 + $0xfc0] sm:$0xff]
    %v671 = vld [vmem:[#allocation5 + $0xfc8] sm:$0xff]
    %v672 = vld [vmem:[#allocation5 + $0xfd0] sm:$0xff]
    %v673 = vld [vmem:[#allocation5 + $0xfd8] sm:$0xff]
    %v674 = vld [vmem:[#allocation5 + $0xfe0] sm:$0xff]
    %v675 = vld [vmem:[#allocation5 + $0xfe8] sm:$0xff]
    %v676 = vld [vmem:[#allocation5 + $0xff0] sm:$0xff]
    %v677 = vld [vmem:[#allocation5 + $0xff8] sm:$0xff]
    %v678 = vld [vmem:[#allocation5 + $0x1000] sm:$0xff]
    %v679 = vld [vmem:[#allocation5 + $0x1008] sm:$0xff]
    %v680 = vld [vmem:[#allocation5 + $0x1010] sm:$0xff]
    %v681 = vld [vmem:[#allocation5 + $0x1018] sm:$0xff]
    %v682 = vld [vmem:[#allocation5 + $0x1020] sm:$0xff]
    %v683 = vld [vmem:[#allocation5 + $0x1028] sm:$0xff]
    %v684 = vld [vmem:[#allocation5 + $0x1030] sm:$0xff]
    %v685 = vld [vmem:[#allocation5 + $0x1038] sm:$0xff]
    %v686 = vld [vmem:[#allocation5 + $0x1040] sm:$0xff]
    %v687 = vld [vmem:[#allocation5 + $0x1048] sm:$0xff]
    %v688 = vld [vmem:[#allocation5 + $0x1050] sm:$0xff]
    %v689 = vld [vmem:[#allocation5 + $0x1058] sm:$0xff]
    %v690 = vld [vmem:[#allocation5 + $0x1060] sm:$0xff]
    %v691 = vld [vmem:[#allocation5 + $0x1068] sm:$0xff]
    %v692 = vld [vmem:[#allocation5 + $0x1070] sm:$0xff]
    %v693 = vld [vmem:[#allocation5 + $0x1078] sm:$0xff]
    %v694 = vld [vmem:[#allocation5 + $0x1080] sm:$0xff]
    %v695 = vld [vmem:[#allocation5 + $0x1088] sm:$0xff]
    %v696 = vld [vmem:[#allocation5 + $0x1090] sm:$0xff]
    %v697 = vld [vmem:[#allocation5 + $0x1098] sm:$0xff]
    %v698 = vld [vmem:[#allocation5 + $0x10a0] sm:$0xff]
    %v699 = vld [vmem:[#allocation5 + $0x10a8] sm:$0xff]
    %v700 = vld [vmem:[#allocation5 + $0x10b0] sm:$0xff]
    %v701 = vld [vmem:[#allocation5 + $0x10b8] sm:$0xff]
    %v702 = vld [vmem:[#allocation5 + $0x10c0] sm:$0xff]
    %v703 = vld [vmem:[#allocation5 + $0x10c8] sm:$0xff]
    %v704 = vld [vmem:[#allocation5 + $0x10d0] sm:$0xff]
    %v705 = vld [vmem:[#allocation5 + $0x10d8] sm:$0xff]
    %v706 = vld [vmem:[#allocation5 + $0x10e0] sm:$0xff]
    %v707 = vld [vmem:[#allocation5 + $0x10e8] sm:$0xff]
    %v708 = vld [vmem:[#allocation5 + $0x10f0] sm:$0xff]
    %v709 = vld [vmem:[#allocation5 + $0x10f8] sm:$0xff]
    %v710 = vld [vmem:[#allocation5 + $0x1100] sm:$0xff]
    %v711 = vld [vmem:[#allocation5 + $0x1108] sm:$0xff]
    %v712 = vld [vmem:[#allocation5 + $0x1110] sm:$0xff]
    %v713 = vld [vmem:[#allocation5 + $0x1118] sm:$0xff]
    %v714 = vld [vmem:[#allocation5 + $0x1120] sm:$0xff]
    %v715 = vld [vmem:[#allocation5 + $0x1128] sm:$0xff]
    %v716 = vld [vmem:[#allocation5 + $0x1130] sm:$0xff]
    %v717 = vld [vmem:[#allocation5 + $0x1138] sm:$0xff]
    %v718 = vld [vmem:[#allocation5 + $0x1140] sm:$0xff]
    %v719 = vld [vmem:[#allocation5 + $0x1148] sm:$0xff]
    %v720 = vld [vmem:[#allocation5 + $0x1150] sm:$0xff]
    %v721 = vld [vmem:[#allocation5 + $0x1158] sm:$0xff]
    %v722 = vld [vmem:[#allocation5 + $0x1160] sm:$0xff]
    %v723 = vld [vmem:[#allocation5 + $0x1168] sm:$0xff]
    %v724 = vld [vmem:[#allocation5 + $0x1170] sm:$0xff]
    %v725 = vld [vmem:[#allocation5 + $0x1178] sm:$0xff]
    %v726 = vld [vmem:[#allocation5 + $0x1180] sm:$0xff]
    %v727 = vld [vmem:[#allocation5 + $0x1188] sm:$0xff]
    %v728 = vld [vmem:[#allocation5 + $0x1190] sm:$0xff]
    %v729 = vld [vmem:[#allocation5 + $0x1198] sm:$0xff]
    %v730 = vld [vmem:[#allocation5 + $0x11a0] sm:$0xff]
    %v731 = vld [vmem:[#allocation5 + $0x11a8] sm:$0xff]
    %v732 = vld [vmem:[#allocation5 + $0x11b0] sm:$0xff]
    %v733 = vld [vmem:[#allocation5 + $0x11b8] sm:$0xff]
    %v734 = vld [vmem:[#allocation5 + $0x11c0] sm:$0xff]
    %v735 = vld [vmem:[#allocation5 + $0x11c8] sm:$0xff]
    %v736 = vld [vmem:[#allocation5 + $0x11d0] sm:$0xff]
    %v737 = vld [vmem:[#allocation5 + $0x11d8] sm:$0xff]
    %v738 = vld [vmem:[#allocation5 + $0x11e0] sm:$0xff]
    %v739 = vld [vmem:[#allocation5 + $0x11e8] sm:$0xff]
    %v740 = vld [vmem:[#allocation5 + $0x11f0] sm:$0xff]
    %v741 = vld [vmem:[#allocation5 + $0x11f8] sm:$0xff]
    %v742 = vld [vmem:[#allocation5 + $0x1200] sm:$0xff]
    %v743 = vld [vmem:[#allocation5 + $0x1208] sm:$0xff]
    %v744 = vld [vmem:[#allocation5 + $0x1210] sm:$0xff]
    %v745 = vld [vmem:[#allocation5 + $0x1218] sm:$0xff]
    %v746 = vld [vmem:[#allocation5 + $0x1220] sm:$0xff]
    %v747 = vld [vmem:[#allocation5 + $0x1228] sm:$0xff]
    %v748 = vld [vmem:[#allocation5 + $0x1230] sm:$0xff]
    %v749 = vld [vmem:[#allocation5 + $0x1238] sm:$0xff]
    %v750 = vld [vmem:[#allocation5 + $0x1240] sm:$0xff]
    %v751 = vld [vmem:[#allocation5 + $0x1248] sm:$0xff]
    %v752 = vld [vmem:[#allocation5 + $0x1250] sm:$0xff]
    %v753 = vld [vmem:[#allocation5 + $0x1258] sm:$0xff]
    %v754 = vld [vmem:[#allocation5 + $0x1260] sm:$0xff]
    %v755 = vld [vmem:[#allocation5 + $0x1268] sm:$0xff]
    %v756 = vld [vmem:[#allocation5 + $0x1270] sm:$0xff]
    %v757 = vld [vmem:[#allocation5 + $0x1278] sm:$0xff]
    %v758 = vld [vmem:[#allocation5 + $0x1280] sm:$0xff]
    %v759 = vld [vmem:[#allocation5 + $0x1288] sm:$0xff]
    %v760 = vld [vmem:[#allocation5 + $0x1290] sm:$0xff]
    %v761 = vld [vmem:[#allocation5 + $0x1298] sm:$0xff]
    %v762 = vld [vmem:[#allocation5 + $0x12a0] sm:$0xff]
    %v763 = vld [vmem:[#allocation5 + $0x12a8] sm:$0xff]
    %v764 = vld [vmem:[#allocation5 + $0x12b0] sm:$0xff]
    %v765 = vld [vmem:[#allocation5 + $0x12b8] sm:$0xff]
    %v766 = vld [vmem:[#allocation5 + $0x12c0] sm:$0xff]
    %v767 = vld [vmem:[#allocation5 + $0x12c8] sm:$0xff]
    %v768 = vld [vmem:[#allocation5 + $0x12d0] sm:$0xff]
    %v769 = vld [vmem:[#allocation5 + $0x12d8] sm:$0xff]
    %v770 = vld [vmem:[#allocation5 + $0x12e0] sm:$0xff]
    %v771 = vld [vmem:[#allocation5 + $0x12e8] sm:$0xff]
    %v772 = vld [vmem:[#allocation5 + $0x12f0] sm:$0xff]
    %v773 = vld [vmem:[#allocation5 + $0x12f8] sm:$0xff]
    %v774 = vld [vmem:[#allocation5 + $0x1300] sm:$0xff]
    %v775 = vld [vmem:[#allocation5 + $0x1308] sm:$0xff]
    %v776 = vld [vmem:[#allocation5 + $0x1310] sm:$0xff]
    %v777 = vld [vmem:[#allocation5 + $0x1318] sm:$0xff]
    %v778 = vld [vmem:[#allocation5 + $0x1320] sm:$0xff]
    %v779 = vld [vmem:[#allocation5 + $0x1328] sm:$0xff]
    %v780 = vld [vmem:[#allocation5 + $0x1330] sm:$0xff]
    %v781 = vld [vmem:[#allocation5 + $0x1338] sm:$0xff]
    %v782 = vld [vmem:[#allocation5 + $0x1340] sm:$0xff]
    %v783 = vld [vmem:[#allocation5 + $0x1348] sm:$0xff]
    %v784 = vld [vmem:[#allocation5 + $0x1350] sm:$0xff]
    %v785 = vld [vmem:[#allocation5 + $0x1358] sm:$0xff]
    %v786 = vld [vmem:[#allocation5 + $0x1360] sm:$0xff]
    %v787 = vld [vmem:[#allocation5 + $0x1368] sm:$0xff]
    %v788 = vld [vmem:[#allocation5 + $0x1370] sm:$0xff]
    %v789 = vld [vmem:[#allocation5 + $0x1378] sm:$0xff]
    %v790 = vld [vmem:[#allocation5 + $0x1380] sm:$0xff]
    %v791 = vld [vmem:[#allocation5 + $0x1388] sm:$0xff]
    %v792 = vld [vmem:[#allocation5 + $0x1390] sm:$0xff]
    %v793 = vld [vmem:[#allocation5 + $0x1398] sm:$0xff]
    %v794 = vld [vmem:[#allocation5 + $0x13a0] sm:$0xff]
    %v795 = vld [vmem:[#allocation5 + $0x13a8] sm:$0xff]
    %v796 = vld [vmem:[#allocation5 + $0x13b0] sm:$0xff]
    %v797 = vld [vmem:[#allocation5 + $0x13b8] sm:$0xff]
    %v798 = vld [vmem:[#allocation5 + $0x13c0] sm:$0xff]
    %v799 = vld [vmem:[#allocation5 + $0x13c8] sm:$0xff]
    %v800 = vld [vmem:[#allocation5 + $0x13d0] sm:$0xff]
    %v801 = vld [vmem:[#allocation5 + $0x13d8] sm:$0xff]
    %v802 = vld [vmem:[#allocation5 + $0x13e0] sm:$0xff]
    %v803 = vld [vmem:[#allocation5 + $0x13e8] sm:$0xff]
    %v804 = vld [vmem:[#allocation5 + $0x13f0] sm:$0xff]
    %v805 = vld [vmem:[#allocation5 + $0x13f8] sm:$0xff]
    %v806 = vld [vmem:[#allocation5 + $0x1400] sm:$0xff]
    %v807 = vld [vmem:[#allocation5 + $0x1408] sm:$0xff]
    %v808 = vld [vmem:[#allocation5 + $0x1410] sm:$0xff]
    %v809 = vld [vmem:[#allocation5 + $0x1418] sm:$0xff]
    %v810 = vld [vmem:[#allocation5 + $0x1420] sm:$0xff]
    %v811 = vld [vmem:[#allocation5 + $0x1428] sm:$0xff]
    %v812 = vld [vmem:[#allocation5 + $0x1430] sm:$0xff]
    %v813 = vld [vmem:[#allocation5 + $0x1438] sm:$0xff]
    %v814 = vld [vmem:[#allocation5 + $0x1440] sm:$0xff]
    %v815 = vld [vmem:[#allocation5 + $0x1448] sm:$0xff]
    %v816 = vld [vmem:[#allocation5 + $0x1450] sm:$0xff]
    %v817 = vld [vmem:[#allocation5 + $0x1458] sm:$0xff]
    %v818 = vld [vmem:[#allocation5 + $0x1460] sm:$0xff]
    %v819 = vld [vmem:[#allocation5 + $0x1468] sm:$0xff]
    %v820 = vld [vmem:[#allocation5 + $0x1470] sm:$0xff]
    %v821 = vld [vmem:[#allocation5 + $0x1478] sm:$0xff]
    %v822 = vld [vmem:[#allocation5 + $0x1480] sm:$0xff]
    %v823 = vld [vmem:[#allocation5 + $0x1488] sm:$0xff]
    %v824 = vld [vmem:[#allocation5 + $0x1490] sm:$0xff]
    %v825 = vld [vmem:[#allocation5 + $0x1498] sm:$0xff]
    %v826 = vld [vmem:[#allocation5 + $0x14a0] sm:$0xff]
    %v827 = vld [vmem:[#allocation5 + $0x14a8] sm:$0xff]
    %v828 = vld [vmem:[#allocation5 + $0x14b0] sm:$0xff]
    %v829 = vld [vmem:[#allocation5 + $0x14b8] sm:$0xff]
    %v830 = vld [vmem:[#allocation5 + $0x14c0] sm:$0xff]
    %v831 = vld [vmem:[#allocation5 + $0x14c8] sm:$0xff]
    %v832 = vld [vmem:[#allocation5 + $0x14d0] sm:$0xff]
    %v833 = vld [vmem:[#allocation5 + $0x14d8] sm:$0xff]
    %v834 = vld [vmem:[#allocation5 + $0x14e0] sm:$0xff]
    %v835 = vld [vmem:[#allocation5 + $0x14e8] sm:$0xff]
    %v836 = vld [vmem:[#allocation5 + $0x14f0] sm:$0xff]
    %v837 = vld [vmem:[#allocation5 + $0x14f8] sm:$0xff]
    %v838 = vld [vmem:[#allocation5 + $0x1500] sm:$0xff]
    %v839 = vld [vmem:[#allocation5 + $0x1508] sm:$0xff]
    %v840 = vld [vmem:[#allocation5 + $0x1510] sm:$0xff]
    %v841 = vld [vmem:[#allocation5 + $0x1518] sm:$0xff]
    %v842 = vld [vmem:[#allocation5 + $0x1520] sm:$0xff]
    %v843 = vld [vmem:[#allocation5 + $0x1528] sm:$0xff]
    %v844 = vld [vmem:[#allocation5 + $0x1530] sm:$0xff]
    %v845 = vld [vmem:[#allocation5 + $0x1538] sm:$0xff]
    %v846 = vld [vmem:[#allocation5 + $0x1540] sm:$0xff]
    %v847 = vld [vmem:[#allocation5 + $0x1548] sm:$0xff]
    %v848 = vld [vmem:[#allocation5 + $0x1550] sm:$0xff]
    %v849 = vld [vmem:[#allocation5 + $0x1558] sm:$0xff]
    %v850 = vld [vmem:[#allocation5 + $0x1560] sm:$0xff]
    %v851 = vld [vmem:[#allocation5 + $0x1568] sm:$0xff]
    %v852 = vld [vmem:[#allocation5 + $0x1570] sm:$0xff]
    %v853 = vld [vmem:[#allocation5 + $0x1578] sm:$0xff]
    %v854 = vld [vmem:[#allocation5 + $0x1580] sm:$0xff]
    %v855 = vld [vmem:[#allocation5 + $0x1588] sm:$0xff]
    %v856 = vld [vmem:[#allocation5 + $0x1590] sm:$0xff]
    %v857 = vld [vmem:[#allocation5 + $0x1598] sm:$0xff]
    %v858 = vld [vmem:[#allocation5 + $0x15a0] sm:$0xff]
    %v859 = vld [vmem:[#allocation5 + $0x15a8] sm:$0xff]
    %v860 = vld [vmem:[#allocation5 + $0x15b0] sm:$0xff]
    %v861 = vld [vmem:[#allocation5 + $0x15b8] sm:$0xff]
    %v862 = vld [vmem:[#allocation5 + $0x15c0] sm:$0xff]
    %v863 = vld [vmem:[#allocation5 + $0x15c8] sm:$0xff]
    %v864 = vld [vmem:[#allocation5 + $0x15d0] sm:$0xff]
    %v865 = vld [vmem:[#allocation5 + $0x15d8] sm:$0xff]
    %v866 = vld [vmem:[#allocation5 + $0x15e0] sm:$0xff]
    %v867 = vld [vmem:[#allocation5 + $0x15e8] sm:$0xff]
    %v868 = vld [vmem:[#allocation5 + $0x15f0] sm:$0xff]
    %v869 = vld [vmem:[#allocation5 + $0x15f8] sm:$0xff]
    %v870 = vld [vmem:[#allocation5 + $0x1600] sm:$0xff]
    %v871 = vld [vmem:[#allocation5 + $0x1608] sm:$0xff]
    %v872 = vld [vmem:[#allocation5 + $0x1610] sm:$0xff]
    %v873 = vld [vmem:[#allocation5 + $0x1618] sm:$0xff]
    %v874 = vld [vmem:[#allocation5 + $0x1620] sm:$0xff]
    %v875 = vld [vmem:[#allocation5 + $0x1628] sm:$0xff]
    %v876 = vld [vmem:[#allocation5 + $0x1630] sm:$0xff]
    %v877 = vld [vmem:[#allocation5 + $0x1638] sm:$0xff]
    %v878 = vld [vmem:[#allocation5 + $0x1640] sm:$0xff]
    %v879 = vld [vmem:[#allocation5 + $0x1648] sm:$0xff]
    %v880 = vld [vmem:[#allocation5 + $0x1650] sm:$0xff]
    %v881 = vld [vmem:[#allocation5 + $0x1658] sm:$0xff]
    %v882 = vld [vmem:[#allocation5 + $0x1660] sm:$0xff]
    %v883 = vld [vmem:[#allocation5 + $0x1668] sm:$0xff]
    %v884 = vld [vmem:[#allocation5 + $0x1670] sm:$0xff]
    %v885 = vld [vmem:[#allocation5 + $0x1678] sm:$0xff]
    %v886 = vld [vmem:[#allocation5 + $0x1680] sm:$0xff]
    %v887 = vld [vmem:[#allocation5 + $0x1688] sm:$0xff]
    %v888 = vld [vmem:[#allocation5 + $0x1690] sm:$0xff]
    %v889 = vld [vmem:[#allocation5 + $0x1698] sm:$0xff]
    %v890 = vld [vmem:[#allocation5 + $0x16a0] sm:$0xff]
    %v891 = vld [vmem:[#allocation5 + $0x16a8] sm:$0xff]
    %v892 = vld [vmem:[#allocation5 + $0x16b0] sm:$0xff]
    %v893 = vld [vmem:[#allocation5 + $0x16b8] sm:$0xff]
    %v894 = vld [vmem:[#allocation5 + $0x16c0] sm:$0xff]
    %v895 = vld [vmem:[#allocation5 + $0x16c8] sm:$0xff]
    %v896 = vld [vmem:[#allocation5 + $0x16d0] sm:$0xff]
    %v897 = vld [vmem:[#allocation5 + $0x16d8] sm:$0xff]
    %v898 = vld [vmem:[#allocation5 + $0x16e0] sm:$0xff]
    %v899 = vld [vmem:[#allocation5 + $0x16e8] sm:$0xff]
    %v900 = vld [vmem:[#allocation5 + $0x16f0] sm:$0xff]
    %v901 = vld [vmem:[#allocation5 + $0x16f8] sm:$0xff]
    %v902 = vld [vmem:[#allocation5 + $0x1700] sm:$0xff]
    %v903 = vld [vmem:[#allocation5 + $0x1708] sm:$0xff]
    %v904 = vld [vmem:[#allocation5 + $0x1710] sm:$0xff]
    %v905 = vld [vmem:[#allocation5 + $0x1718] sm:$0xff]
    %v906 = vld [vmem:[#allocation5 + $0x1720] sm:$0xff]
    %v907 = vld [vmem:[#allocation5 + $0x1728] sm:$0xff]
    %v908 = vld [vmem:[#allocation5 + $0x1730] sm:$0xff]
    %v909 = vld [vmem:[#allocation5 + $0x1738] sm:$0xff]
    %v910 = vld [vmem:[#allocation5 + $0x1740] sm:$0xff]
    %v911 = vld [vmem:[#allocation5 + $0x1748] sm:$0xff]
    %v912 = vld [vmem:[#allocation5 + $0x1750] sm:$0xff]
    %v913 = vld [vmem:[#allocation5 + $0x1758] sm:$0xff]
    %v914 = vld [vmem:[#allocation5 + $0x1760] sm:$0xff]
    %v915 = vld [vmem:[#allocation5 + $0x1768] sm:$0xff]
    %v916 = vld [vmem:[#allocation5 + $0x1770] sm:$0xff]
    %v917 = vld [vmem:[#allocation5 + $0x1778] sm:$0xff]
    %v918 = vld [vmem:[#allocation5 + $0x1780] sm:$0xff]
    %v919 = vld [vmem:[#allocation5 + $0x1788] sm:$0xff]
    %v920 = vld [vmem:[#allocation5 + $0x1790] sm:$0xff]
    %v921 = vld [vmem:[#allocation5 + $0x1798] sm:$0xff]
    %v922 = vld [vmem:[#allocation5 + $0x17a0] sm:$0xff]
    %v923 = vld [vmem:[#allocation5 + $0x17a8] sm:$0xff]
    %v924 = vld [vmem:[#allocation5 + $0x17b0] sm:$0xff]
    %v925 = vld [vmem:[#allocation5 + $0x17b8] sm:$0xff]
    %v926 = vld [vmem:[#allocation5 + $0x17c0] sm:$0xff]
    %v927 = vld [vmem:[#allocation5 + $0x17c8] sm:$0xff]
    %v928 = vld [vmem:[#allocation5 + $0x17d0] sm:$0xff]
    %v929 = vld [vmem:[#allocation5 + $0x17d8] sm:$0xff]
    %v930 = vld [vmem:[#allocation5 + $0x17e0] sm:$0xff]
    %v931 = vld [vmem:[#allocation5 + $0x17e8] sm:$0xff]
    %v932 = vld [vmem:[#allocation5 + $0x17f0] sm:$0xff]
    %v933 = vld [vmem:[#allocation5 + $0x17f8] sm:$0xff]
    %v934 = vld [vmem:[#allocation5 + $0x1800] sm:$0xff]
    %v935 = vld [vmem:[#allocation5 + $0x1808] sm:$0xff]
    %v936 = vld [vmem:[#allocation5 + $0x1810] sm:$0xff]
    %v937 = vld [vmem:[#allocation5 + $0x1818] sm:$0xff]
    %v938 = vld [vmem:[#allocation5 + $0x1820] sm:$0xff]
    %v939 = vld [vmem:[#allocation5 + $0x1828] sm:$0xff]
    %v940 = vld [vmem:[#allocation5 + $0x1830] sm:$0xff]
    %v941 = vld [vmem:[#allocation5 + $0x1838] sm:$0xff]
    %v942 = vld [vmem:[#allocation5 + $0x1840] sm:$0xff]
    %v943 = vld [vmem:[#allocation5 + $0x1848] sm:$0xff]
    %v944 = vld [vmem:[#allocation5 + $0x1850] sm:$0xff]
    %v945 = vld [vmem:[#allocation5 + $0x1858] sm:$0xff]
    %v946 = vld [vmem:[#allocation5 + $0x1860] sm:$0xff]
    %v947 = vld [vmem:[#allocation5 + $0x1868] sm:$0xff]
    %v948 = vld [vmem:[#allocation5 + $0x1870] sm:$0xff]
    %v949 = vld [vmem:[#allocation5 + $0x1878] sm:$0xff]
    %v950 = vld [vmem:[#allocation5 + $0x1880] sm:$0xff]
    %v951 = vld [vmem:[#allocation5 + $0x1888] sm:$0xff]
    %v952 = vld [vmem:[#allocation5 + $0x1890] sm:$0xff]
    %v953 = vld [vmem:[#allocation5 + $0x1898] sm:$0xff]
    %v954 = vld [vmem:[#allocation5 + $0x18a0] sm:$0xff]
    %v955 = vld [vmem:[#allocation5 + $0x18a8] sm:$0xff]
    %v956 = vld [vmem:[#allocation5 + $0x18b0] sm:$0xff]
    %v957 = vld [vmem:[#allocation5 + $0x18b8] sm:$0xff]
    %v958 = vld [vmem:[#allocation5 + $0x18c0] sm:$0xff]
    %v959 = vld [vmem:[#allocation5 + $0x18c8] sm:$0xff]
    %v960 = vld [vmem:[#allocation5 + $0x18d0] sm:$0xff]
    %v961 = vld [vmem:[#allocation5 + $0x18d8] sm:$0xff]
    %v962 = vld [vmem:[#allocation5 + $0x18e0] sm:$0xff]
    %v963 = vld [vmem:[#allocation5 + $0x18e8] sm:$0xff]
    %v964 = vld [vmem:[#allocation5 + $0x18f0] sm:$0xff]
    %v965 = vld [vmem:[#allocation5 + $0x18f8] sm:$0xff]
    %v966 = vld [vmem:[#allocation5 + $0x1900] sm:$0xff]
    %v967 = vld [vmem:[#allocation5 + $0x1908] sm:$0xff]
    %v968 = vld [vmem:[#allocation5 + $0x1910] sm:$0xff]
    %v969 = vld [vmem:[#allocation5 + $0x1918] sm:$0xff]
    %v970 = vld [vmem:[#allocation5 + $0x1920] sm:$0xff]
    %v971 = vld [vmem:[#allocation5 + $0x1928] sm:$0xff]
    %v972 = vld [vmem:[#allocation5 + $0x1930] sm:$0xff]
    %v973 = vld [vmem:[#allocation5 + $0x1938] sm:$0xff]
    %v974 = vld [vmem:[#allocation5 + $0x1940] sm:$0xff]
    %v975 = vld [vmem:[#allocation5 + $0x1948] sm:$0xff]
    %v976 = vld [vmem:[#allocation5 + $0x1950] sm:$0xff]
    %v977 = vld [vmem:[#allocation5 + $0x1958] sm:$0xff]
    %v978 = vld [vmem:[#allocation5 + $0x1960] sm:$0xff]
    %v979 = vld [vmem:[#allocation5 + $0x1968] sm:$0xff]
    %v980 = vld [vmem:[#allocation5 + $0x1970] sm:$0xff]
    %v981 = vld [vmem:[#allocation5 + $0x1978] sm:$0xff]
    %v982 = vld [vmem:[#allocation5 + $0x1980] sm:$0xff]
    %v983 = vld [vmem:[#allocation5 + $0x1988] sm:$0xff]
    %v984 = vld [vmem:[#allocation5 + $0x1990] sm:$0xff]
    %v985 = vld [vmem:[#allocation5 + $0x1998] sm:$0xff]
    %v986 = vld [vmem:[#allocation5 + $0x19a0] sm:$0xff]
    %v987 = vld [vmem:[#allocation5 + $0x19a8] sm:$0xff]
    %v988 = vld [vmem:[#allocation5 + $0x19b0] sm:$0xff]
    %v989 = vld [vmem:[#allocation5 + $0x19b8] sm:$0xff]
    %v990 = vld [vmem:[#allocation5 + $0x19c0] sm:$0xff]
    %v991 = vld [vmem:[#allocation5 + $0x19c8] sm:$0xff]
    %v992 = vld [vmem:[#allocation5 + $0x19d0] sm:$0xff]
    %v993 = vld [vmem:[#allocation5 + $0x19d8] sm:$0xff]
    %v994 = vld [vmem:[#allocation5 + $0x19e0] sm:$0xff]
    %v995 = vld [vmem:[#allocation5 + $0x19e8] sm:$0xff]
    %v996 = vld [vmem:[#allocation5 + $0x19f0] sm:$0xff]
    %v997 = vld [vmem:[#allocation5 + $0x19f8] sm:$0xff]
    %v998 = vld [vmem:[#allocation5 + $0x1a00] sm:$0xff]
    %v999 = vld [vmem:[#allocation5 + $0x1a08] sm:$0xff]
    %v1000 = vld [vmem:[#allocation5 + $0x1a10] sm:$0xff]
    %v1001 = vld [vmem:[#allocation5 + $0x1a18] sm:$0xff]
    %v1002 = vld [vmem:[#allocation5 + $0x1a20] sm:$0xff]
    %v1003 = vld [vmem:[#allocation5 + $0x1a28] sm:$0xff]
    %v1004 = vld [vmem:[#allocation5 + $0x1a30] sm:$0xff]
    %v1005 = vld [vmem:[#allocation5 + $0x1a38] sm:$0xff]
    %v1006 = vld [vmem:[#allocation5 + $0x1a40] sm:$0xff]
    %v1007 = vld [vmem:[#allocation5 + $0x1a48] sm:$0xff]
    %v1008 = vld [vmem:[#allocation5 + $0x1a50] sm:$0xff]
    %v1009 = vld [vmem:[#allocation5 + $0x1a58] sm:$0xff]
    %v1010 = vld [vmem:[#allocation5 + $0x1a60] sm:$0xff]
    %v1011 = vld [vmem:[#allocation5 + $0x1a68] sm:$0xff]
    %v1012 = vld [vmem:[#allocation5 + $0x1a70] sm:$0xff]
    %v1013 = vld [vmem:[#allocation5 + $0x1a78] sm:$0xff]
    %v1014 = vld [vmem:[#allocation5 + $0x1a80] sm:$0xff]
    %v1015 = vld [vmem:[#allocation5 + $0x1a88] sm:$0xff]
    %v1016 = vld [vmem:[#allocation5 + $0x1a90] sm:$0xff]
    %v1017 = vld [vmem:[#allocation5 + $0x1a98] sm:$0xff]
    %v1018 = vld [vmem:[#allocation5 + $0x1aa0] sm:$0xff]
    %v1019 = vld [vmem:[#allocation5 + $0x1aa8] sm:$0xff]
    %v1020 = vld [vmem:[#allocation5 + $0x1ab0] sm:$0xff]
    %v1021 = vld [vmem:[#allocation5 + $0x1ab8] sm:$0xff]
    %v1022 = vld [vmem:[#allocation5 + $0x1ac0] sm:$0xff]
    %v1023 = vld [vmem:[#allocation5 + $0x1ac8] sm:$0xff]
    %v1024 = vld [vmem:[#allocation5 + $0x1ad0] sm:$0xff]
    %v1025 = vld [vmem:[#allocation5 + $0x1ad8] sm:$0xff]
    %v1026 = vld [vmem:[#allocation5 + $0x1ae0] sm:$0xff]
    %v1027 = vld [vmem:[#allocation5 + $0x1ae8] sm:$0xff]
    %v1028 = vld [vmem:[#allocation5 + $0x1af0] sm:$0xff]
    %v1029 = vld [vmem:[#allocation5 + $0x1af8] sm:$0xff]
    %v1030 = vld [vmem:[#allocation5 + $0x1b00] sm:$0xff]
    %v1031 = vld [vmem:[#allocation5 + $0x1b08] sm:$0xff]
    %v1032 = vld [vmem:[#allocation5 + $0x1b10] sm:$0xff]
    %v1033 = vld [vmem:[#allocation5 + $0x1b18] sm:$0xff]
    %v1034 = vld [vmem:[#allocation5 + $0x1b20] sm:$0xff]
    %v1035 = vld [vmem:[#allocation5 + $0x1b28] sm:$0xff]
    %v1036 = vld [vmem:[#allocation5 + $0x1b30] sm:$0xff]
    %v1037 = vld [vmem:[#allocation5 + $0x1b38] sm:$0xff]
    %v1038 = vld [vmem:[#allocation5 + $0x1b40] sm:$0xff]
    %v1039 = vld [vmem:[#allocation5 + $0x1b48] sm:$0xff]
    %v1040 = vld [vmem:[#allocation5 + $0x1b50] sm:$0xff]
    %v1041 = vld [vmem:[#allocation5 + $0x1b58] sm:$0xff]
    %v1042 = vld [vmem:[#allocation5 + $0x1b60] sm:$0xff]
    %v1043 = vld [vmem:[#allocation5 + $0x1b68] sm:$0xff]
    %v1044 = vld [vmem:[#allocation5 + $0x1b70] sm:$0xff]
    %v1045 = vld [vmem:[#allocation5 + $0x1b78] sm:$0xff]
    %v1046 = vld [vmem:[#allocation5 + $0x1b80] sm:$0xff]
    %v1047 = vld [vmem:[#allocation5 + $0x1b88] sm:$0xff]
    %v1048 = vld [vmem:[#allocation5 + $0x1b90] sm:$0xff]
    %v1049 = vld [vmem:[#allocation5 + $0x1b98] sm:$0xff]
    %v1050 = vld [vmem:[#allocation5 + $0x1ba0] sm:$0xff]
    %v1051 = vld [vmem:[#allocation5 + $0x1ba8] sm:$0xff]
    %v1052 = vld [vmem:[#allocation5 + $0x1bb0] sm:$0xff]
    %v1053 = vld [vmem:[#allocation5 + $0x1bb8] sm:$0xff]
    %v1054 = vld [vmem:[#allocation5 + $0x1bc0] sm:$0xff]
    %v1055 = vld [vmem:[#allocation5 + $0x1bc8] sm:$0xff]
    %v1056 = vld [vmem:[#allocation5 + $0x1bd0] sm:$0xff]
    %v1057 = vld [vmem:[#allocation5 + $0x1bd8] sm:$0xff]
    %v1058 = vld [vmem:[#allocation5 + $0x1be0] sm:$0xff]
    %v1059 = vld [vmem:[#allocation5 + $0x1be8] sm:$0xff]
    %v1060 = vld [vmem:[#allocation5 + $0x1bf0] sm:$0xff]
    %v1061 = vld [vmem:[#allocation5 + $0x1bf8] sm:$0xff]
    %v1062 = vld [vmem:[#allocation5 + $0x1c00] sm:$0xff]
    %v1063 = vld [vmem:[#allocation5 + $0x1c08] sm:$0xff]
    %v1064 = vld [vmem:[#allocation5 + $0x1c10] sm:$0xff]
    %v1065 = vld [vmem:[#allocation5 + $0x1c18] sm:$0xff]
    %v1066 = vld [vmem:[#allocation5 + $0x1c20] sm:$0xff]
    %v1067 = vld [vmem:[#allocation5 + $0x1c28] sm:$0xff]
    %v1068 = vld [vmem:[#allocation5 + $0x1c30] sm:$0xff]
    %v1069 = vld [vmem:[#allocation5 + $0x1c38] sm:$0xff]
    %v1070 = vld [vmem:[#allocation5 + $0x1c40] sm:$0xff]
    %v1071 = vld [vmem:[#allocation5 + $0x1c48] sm:$0xff]
    %v1072 = vld [vmem:[#allocation5 + $0x1c50] sm:$0xff]
    %v1073 = vld [vmem:[#allocation5 + $0x1c58] sm:$0xff]
    %v1074 = vld [vmem:[#allocation5 + $0x1c60] sm:$0xff]
    %v1075 = vld [vmem:[#allocation5 + $0x1c68] sm:$0xff]
    %v1076 = vld [vmem:[#allocation5 + $0x1c70] sm:$0xff]
    %v1077 = vld [vmem:[#allocation5 + $0x1c78] sm:$0xff]
    %v1078 = vld [vmem:[#allocation5 + $0x1c80] sm:$0xff]
    %v1079 = vld [vmem:[#allocation5 + $0x1c88] sm:$0xff]
    %v1080 = vld [vmem:[#allocation5 + $0x1c90] sm:$0xff]
    %v1081 = vld [vmem:[#allocation5 + $0x1c98] sm:$0xff]
    %v1082 = vld [vmem:[#allocation5 + $0x1ca0] sm:$0xff]
    %v1083 = vld [vmem:[#allocation5 + $0x1ca8] sm:$0xff]
    %v1084 = vld [vmem:[#allocation5 + $0x1cb0] sm:$0xff]
    %v1085 = vld [vmem:[#allocation5 + $0x1cb8] sm:$0xff]
    %v1086 = vld [vmem:[#allocation5 + $0x1cc0] sm:$0xff]
    %v1087 = vld [vmem:[#allocation5 + $0x1cc8] sm:$0xff]
    %v1088 = vld [vmem:[#allocation5 + $0x1cd0] sm:$0xff]
    %v1089 = vld [vmem:[#allocation5 + $0x1cd8] sm:$0xff]
    %v1090 = vld [vmem:[#allocation5 + $0x1ce0] sm:$0xff]
    %v1091 = vld [vmem:[#allocation5 + $0x1ce8] sm:$0xff]
    %v1092 = vld [vmem:[#allocation5 + $0x1cf0] sm:$0xff]
    %v1093 = vld [vmem:[#allocation5 + $0x1cf8] sm:$0xff]
    %v1094 = vld [vmem:[#allocation5 + $0x1d00] sm:$0xff]
    %v1095 = vld [vmem:[#allocation5 + $0x1d08] sm:$0xff]
    %v1096 = vld [vmem:[#allocation5 + $0x1d10] sm:$0xff]
    %v1097 = vld [vmem:[#allocation5 + $0x1d18] sm:$0xff]
    %v1098 = vld [vmem:[#allocation5 + $0x1d20] sm:$0xff]
    %v1099 = vld [vmem:[#allocation5 + $0x1d28] sm:$0xff]
    %v1100 = vld [vmem:[#allocation5 + $0x1d30] sm:$0xff]
    %v1101 = vld [vmem:[#allocation5 + $0x1d38] sm:$0xff]
    %v1102 = vld [vmem:[#allocation5 + $0x1d40] sm:$0xff]
    %v1103 = vld [vmem:[#allocation5 + $0x1d48] sm:$0xff]
    %v1104 = vld [vmem:[#allocation5 + $0x1d50] sm:$0xff]
    %v1105 = vld [vmem:[#allocation5 + $0x1d58] sm:$0xff]
    %v1106 = vld [vmem:[#allocation5 + $0x1d60] sm:$0xff]
    %v1107 = vld [vmem:[#allocation5 + $0x1d68] sm:$0xff]
    %v1108 = vld [vmem:[#allocation5 + $0x1d70] sm:$0xff]
    %v1109 = vld [vmem:[#allocation5 + $0x1d78] sm:$0xff]
    %v1110 = vld [vmem:[#allocation5 + $0x1d80] sm:$0xff]
    %v1111 = vld [vmem:[#allocation5 + $0x1d88] sm:$0xff]
    %v1112 = vld [vmem:[#allocation5 + $0x1d90] sm:$0xff]
    %v1113 = vld [vmem:[#allocation5 + $0x1d98] sm:$0xff]
    %v1114 = vld [vmem:[#allocation5 + $0x1da0] sm:$0xff]
    %v1115 = vld [vmem:[#allocation5 + $0x1da8] sm:$0xff]
    %v1116 = vld [vmem:[#allocation5 + $0x1db0] sm:$0xff]
    %v1117 = vld [vmem:[#allocation5 + $0x1db8] sm:$0xff]
    %v1118 = vld [vmem:[#allocation5 + $0x1dc0] sm:$0xff]
    %v1119 = vld [vmem:[#allocation5 + $0x1dc8] sm:$0xff]
    %v1120 = vld [vmem:[#allocation5 + $0x1dd0] sm:$0xff]
    %v1121 = vld [vmem:[#allocation5 + $0x1dd8] sm:$0xff]
    %v1122 = vld [vmem:[#allocation5 + $0x1de0] sm:$0xff]
    %v1123 = vld [vmem:[#allocation5 + $0x1de8] sm:$0xff]
    %v1124 = vld [vmem:[#allocation5 + $0x1df0] sm:$0xff]
    %v1125 = vld [vmem:[#allocation5 + $0x1df8] sm:$0xff]
    %v1126 = vld [vmem:[#allocation5 + $0x1e00] sm:$0xff]
    %v1127 = vld [vmem:[#allocation5 + $0x1e08] sm:$0xff]
    %v1128 = vld [vmem:[#allocation5 + $0x1e10] sm:$0xff]
    %v1129 = vld [vmem:[#allocation5 + $0x1e18] sm:$0xff]
    %v1130 = vld [vmem:[#allocation5 + $0x1e20] sm:$0xff]
    %v1131 = vld [vmem:[#allocation5 + $0x1e28] sm:$0xff]
    %v1132 = vld [vmem:[#allocation5 + $0x1e30] sm:$0xff]
    %v1133 = vld [vmem:[#allocation5 + $0x1e38] sm:$0xff]
    %v1134 = vld [vmem:[#allocation5 + $0x1e40] sm:$0xff]
    %v1135 = vld [vmem:[#allocation5 + $0x1e48] sm:$0xff]
    %v1136 = vld [vmem:[#allocation5 + $0x1e50] sm:$0xff]
    %v1137 = vld [vmem:[#allocation5 + $0x1e58] sm:$0xff]
    %v1138 = vld [vmem:[#allocation5 + $0x1e60] sm:$0xff]
    %v1139 = vld [vmem:[#allocation5 + $0x1e68] sm:$0xff]
    %v1140 = vld [vmem:[#allocation5 + $0x1e70] sm:$0xff]
    %v1141 = vld [vmem:[#allocation5 + $0x1e78] sm:$0xff]
    %v1142 = vld [vmem:[#allocation5 + $0x1e80] sm:$0xff]
    %v1143 = vld [vmem:[#allocation5 + $0x1e88] sm:$0xff]
    %v1144 = vld [vmem:[#allocation5 + $0x1e90] sm:$0xff]
    %v1145 = vld [vmem:[#allocation5 + $0x1e98] sm:$0xff]
    %v1146 = vld [vmem:[#allocation5 + $0x1ea0] sm:$0xff]
    %v1147 = vld [vmem:[#allocation5 + $0x1ea8] sm:$0xff]
    %v1148 = vld [vmem:[#allocation5 + $0x1eb0] sm:$0xff]
    %v1149 = vld [vmem:[#allocation5 + $0x1eb8] sm:$0xff]
    %v1150 = vld [vmem:[#allocation5 + $0x1ec0] sm:$0xff]
    %v1151 = vld [vmem:[#allocation5 + $0x1ec8] sm:$0xff]
    %v1152 = vld [vmem:[#allocation5 + $0x1ed0] sm:$0xff]
    %v1153 = vld [vmem:[#allocation5 + $0x1ed8] sm:$0xff]
    %v1154 = vld [vmem:[#allocation5 + $0x1ee0] sm:$0xff]
    %v1155 = vld [vmem:[#allocation5 + $0x1ee8] sm:$0xff]
    %v1156 = vld [vmem:[#allocation5 + $0x1ef0] sm:$0xff]
    %v1157 = vld [vmem:[#allocation5 + $0x1ef8] sm:$0xff]
    %v1158 = vld [vmem:[#allocation5 + $0x1f00] sm:$0xff]
    %v1159 = vld [vmem:[#allocation5 + $0x1f08] sm:$0xff]
    %v1160 = vld [vmem:[#allocation5 + $0x1f10] sm:$0xff]
    %v1161 = vld [vmem:[#allocation5 + $0x1f18] sm:$0xff]
    %v1162 = vld [vmem:[#allocation5 + $0x1f20] sm:$0xff]
    %v1163 = vld [vmem:[#allocation5 + $0x1f28] sm:$0xff]
    %v1164 = vld [vmem:[#allocation5 + $0x1f30] sm:$0xff]
    %v1165 = vld [vmem:[#allocation5 + $0x1f38] sm:$0xff]
    %v1166 = vld [vmem:[#allocation5 + $0x1f40] sm:$0xff]
    %v1167 = vld [vmem:[#allocation5 + $0x1f48] sm:$0xff]
    %v1168 = vld [vmem:[#allocation5 + $0x1f50] sm:$0xff]
    %v1169 = vld [vmem:[#allocation5 + $0x1f58] sm:$0xff]
    %v1170 = vld [vmem:[#allocation5 + $0x1f60] sm:$0xff]
    %v1171 = vld [vmem:[#allocation5 + $0x1f68] sm:$0xff]
    %v1172 = vld [vmem:[#allocation5 + $0x1f70] sm:$0xff]
    %v1173 = vld [vmem:[#allocation5 + $0x1f78] sm:$0xff]
    %v1174 = vld [vmem:[#allocation5 + $0x1f80] sm:$0xff]
    %v1175 = vld [vmem:[#allocation5 + $0x1f88] sm:$0xff]
    %v1176 = vld [vmem:[#allocation5 + $0x1f90] sm:$0xff]
    %v1177 = vld [vmem:[#allocation5 + $0x1f98] sm:$0xff]
    %v1178 = vld [vmem:[#allocation5 + $0x1fa0] sm:$0xff]
    %v1179 = vld [vmem:[#allocation5 + $0x1fa8] sm:$0xff]
    %v1180 = vld [vmem:[#allocation5 + $0x1fb0] sm:$0xff]
    %v1181 = vld [vmem:[#allocation5 + $0x1fb8] sm:$0xff]
    %v1182 = vld [vmem:[#allocation5 + $0x1fc0] sm:$0xff]
    %v1183 = vld [vmem:[#allocation5 + $0x1fc8] sm:$0xff]
    %v1184 = vld [vmem:[#allocation5 + $0x1fd0] sm:$0xff]
    %v1185 = vld [vmem:[#allocation5 + $0x1fd8] sm:$0xff]
    %v1186 = vld [vmem:[#allocation5 + $0x1fe0] sm:$0xff]
    %v1187 = vld [vmem:[#allocation5 + $0x1fe8] sm:$0xff]
    %v1188 = vld [vmem:[#allocation5 + $0x1ff0] sm:$0xff]
    %v1189 = vld [vmem:[#allocation5 + $0x1ff8] sm:$0xff]
    %v1190 = vld [vmem:[#allocation7] sm:$0xf]
    %v1192 = vlaneseq
    %v1193 = vshrl.u32 %v1192, 7
    %v1194 = vsub.s32 0, %v1193
    %v1195 = vrot.slane %v1190, %v1194
    %v1196 = vlaneseq
    %v1197 = vshrl.u32 %v1196, 7
    %v1198 = vsub.s32 1, %v1197
    %v1199 = vrot.slane %v1190, %v1198
    %v1200 = vlaneseq
    %v1201 = vshrl.u32 %v1200, 7
    %v1202 = vsub.s32 2, %v1201
    %v1203 = vrot.slane %v1190, %v1202
    %v1204 = vlaneseq
    %v1205 = vshrl.u32 %v1204, 7
    %v1206 = vsub.s32 3, %v1205
    %v1207 = vrot.slane %v1190, %v1206
    %v2236 = vunpack.c.l.b16 %v166
    %v2237 = vunpack.c.h.b16 %v166
    %v2238 = vunpack.c.l.b16 %v167
    %v2239 = vunpack.c.h.b16 %v167
    %v2240 = vunpack.c.l.b16 %v168
    %v2241 = vunpack.c.h.b16 %v168
    %v2242 = vunpack.c.l.b16 %v169
    %v2243 = vunpack.c.h.b16 %v169
    %v2244 = vunpack.c.l.b16 %v170
    %v2245 = vunpack.c.h.b16 %v170
    %v2246 = vunpack.c.l.b16 %v171
    %v2247 = vunpack.c.h.b16 %v171
    %v2248 = vunpack.c.l.b16 %v172
    %v2249 = vunpack.c.h.b16 %v172
    %v2250 = vunpack.c.l.b16 %v173
    %v2251 = vunpack.c.h.b16 %v173
    %v2252 = vunpack.c.l.b16 %v174
    %v2253 = vunpack.c.h.b16 %v174
    %v2254 = vunpack.c.l.b16 %v175
    %v2255 = vunpack.c.h.b16 %v175
    %v2256 = vunpack.c.l.b16 %v176
    %v2257 = vunpack.c.h.b16 %v176
    %v2258 = vunpack.c.l.b16 %v177
    %v2259 = vunpack.c.h.b16 %v177
    %v2260 = vunpack.c.l.b16 %v178
    %v2261 = vunpack.c.h.b16 %v178
    %v2262 = vunpack.c.l.b16 %v179
    %v2263 = vunpack.c.h.b16 %v179
    %v2264 = vunpack.c.l.b16 %v180
    %v2265 = vunpack.c.h.b16 %v180
    %v2266 = vunpack.c.l.b16 %v181
    %v2267 = vunpack.c.h.b16 %v181
    %v2268 = vunpack.c.l.b16 %v182
    %v2269 = vunpack.c.h.b16 %v182
    %v2270 = vunpack.c.l.b16 %v183
    %v2271 = vunpack.c.h.b16 %v183
    %v2272 = vunpack.c.l.b16 %v184
    %v2273 = vunpack.c.h.b16 %v184
    %v2274 = vunpack.c.l.b16 %v185
    %v2275 = vunpack.c.h.b16 %v185
    %v2276 = vunpack.c.l.b16 %v186
    %v2277 = vunpack.c.h.b16 %v186
    %v2278 = vunpack.c.l.b16 %v187
    %v2279 = vunpack.c.h.b16 %v187
    %v2280 = vunpack.c.l.b16 %v188
    %v2281 = vunpack.c.h.b16 %v188
    %v2282 = vunpack.c.l.b16 %v189
    %v2283 = vunpack.c.h.b16 %v189
    %v2284 = vunpack.c.l.b16 %v190
    %v2285 = vunpack.c.h.b16 %v190
    %v2286 = vunpack.c.l.b16 %v191
    %v2287 = vunpack.c.h.b16 %v191
    %v2288 = vunpack.c.l.b16 %v192
    %v2289 = vunpack.c.h.b16 %v192
    %v2290 = vunpack.c.l.b16 %v193
    %v2291 = vunpack.c.h.b16 %v193
    %v2292 = vunpack.c.l.b16 %v194
    %v2293 = vunpack.c.h.b16 %v194
    %v2294 = vunpack.c.l.b16 %v195
    %v2295 = vunpack.c.h.b16 %v195
    %v2296 = vunpack.c.l.b16 %v196
    %v2297 = vunpack.c.h.b16 %v196
    %v2298 = vunpack.c.l.b16 %v197
    %v2299 = vunpack.c.h.b16 %v197
    %v2300 = vunpack.c.l.b16 %v198
    %v2301 = vunpack.c.h.b16 %v198
    %v2302 = vunpack.c.l.b16 %v199
    %v2303 = vunpack.c.h.b16 %v199
    %v2304 = vunpack.c.l.b16 %v200
    %v2305 = vunpack.c.h.b16 %v200
    %v2306 = vunpack.c.l.b16 %v201
    %v2307 = vunpack.c.h.b16 %v201
    %v2308 = vunpack.c.l.b16 %v202
    %v2309 = vunpack.c.h.b16 %v202
    %v2310 = vunpack.c.l.b16 %v203
    %v2311 = vunpack.c.h.b16 %v203
    %v2312 = vunpack.c.l.b16 %v204
    %v2313 = vunpack.c.h.b16 %v204
    %v2314 = vunpack.c.l.b16 %v205
    %v2315 = vunpack.c.h.b16 %v205
    %v2316 = vunpack.c.l.b16 %v206
    %v2317 = vunpack.c.h.b16 %v206
    %v2318 = vunpack.c.l.b16 %v207
    %v2319 = vunpack.c.h.b16 %v207
    %v2320 = vunpack.c.l.b16 %v208
    %v2321 = vunpack.c.h.b16 %v208
    %v2322 = vunpack.c.l.b16 %v209
    %v2323 = vunpack.c.h.b16 %v209
    %v2324 = vunpack.c.l.b16 %v210
    %v2325 = vunpack.c.h.b16 %v210
    %v2326 = vunpack.c.l.b16 %v211
    %v2327 = vunpack.c.h.b16 %v211
    %v2328 = vunpack.c.l.b16 %v212
    %v2329 = vunpack.c.h.b16 %v212
    %v2330 = vunpack.c.l.b16 %v213
    %v2331 = vunpack.c.h.b16 %v213
    %v2332 = vunpack.c.l.b16 %v214
    %v2333 = vunpack.c.h.b16 %v214
    %v2334 = vunpack.c.l.b16 %v215
    %v2335 = vunpack.c.h.b16 %v215
    %v2336 = vunpack.c.l.b16 %v216
    %v2337 = vunpack.c.h.b16 %v216
    %v2338 = vunpack.c.l.b16 %v217
    %v2339 = vunpack.c.h.b16 %v217
    %v2340 = vunpack.c.l.b16 %v218
    %v2341 = vunpack.c.h.b16 %v218
    %v2342 = vunpack.c.l.b16 %v219
    %v2343 = vunpack.c.h.b16 %v219
    %v2344 = vunpack.c.l.b16 %v220
    %v2345 = vunpack.c.h.b16 %v220
    %v2346 = vunpack.c.l.b16 %v221
    %v2347 = vunpack.c.h.b16 %v221
    %v2348 = vunpack.c.l.b16 %v222
    %v2349 = vunpack.c.h.b16 %v222
    %v2350 = vunpack.c.l.b16 %v223
    %v2351 = vunpack.c.h.b16 %v223
    %v2352 = vunpack.c.l.b16 %v224
    %v2353 = vunpack.c.h.b16 %v224
    %v2354 = vunpack.c.l.b16 %v225
    %v2355 = vunpack.c.h.b16 %v225
    %v2356 = vunpack.c.l.b16 %v226
    %v2357 = vunpack.c.h.b16 %v226
    %v2358 = vunpack.c.l.b16 %v227
    %v2359 = vunpack.c.h.b16 %v227
    %v2360 = vunpack.c.l.b16 %v228
    %v2361 = vunpack.c.h.b16 %v228
    %v2362 = vunpack.c.l.b16 %v229
    %v2363 = vunpack.c.h.b16 %v229
    %v2364 = vunpack.c.l.b16 %v230
    %v2365 = vunpack.c.h.b16 %v230
    %v2366 = vunpack.c.l.b16 %v231
    %v2367 = vunpack.c.h.b16 %v231
    %v2368 = vunpack.c.l.b16 %v232
    %v2369 = vunpack.c.h.b16 %v232
    %v2370 = vunpack.c.l.b16 %v233
    %v2371 = vunpack.c.h.b16 %v233
    %v2372 = vunpack.c.l.b16 %v234
    %v2373 = vunpack.c.h.b16 %v234
    %v2374 = vunpack.c.l.b16 %v235
    %v2375 = vunpack.c.h.b16 %v235
    %v2376 = vunpack.c.l.b16 %v236
    %v2377 = vunpack.c.h.b16 %v236
    %v2378 = vunpack.c.l.b16 %v237
    %v2379 = vunpack.c.h.b16 %v237
    %v2380 = vunpack.c.l.b16 %v238
    %v2381 = vunpack.c.h.b16 %v238
    %v2382 = vunpack.c.l.b16 %v239
    %v2383 = vunpack.c.h.b16 %v239
    %v2384 = vunpack.c.l.b16 %v240
    %v2385 = vunpack.c.h.b16 %v240
    %v2386 = vunpack.c.l.b16 %v241
    %v2387 = vunpack.c.h.b16 %v241
    %v2388 = vunpack.c.l.b16 %v242
    %v2389 = vunpack.c.h.b16 %v242
    %v2390 = vunpack.c.l.b16 %v243
    %v2391 = vunpack.c.h.b16 %v243
    %v2392 = vunpack.c.l.b16 %v244
    %v2393 = vunpack.c.h.b16 %v244
    %v2394 = vunpack.c.l.b16 %v245
    %v2395 = vunpack.c.h.b16 %v245
    %v2396 = vunpack.c.l.b16 %v246
    %v2397 = vunpack.c.h.b16 %v246
    %v2398 = vunpack.c.l.b16 %v247
    %v2399 = vunpack.c.h.b16 %v247
    %v2400 = vunpack.c.l.b16 %v248
    %v2401 = vunpack.c.h.b16 %v248
    %v2402 = vunpack.c.l.b16 %v249
    %v2403 = vunpack.c.h.b16 %v249
    %v2404 = vunpack.c.l.b16 %v250
    %v2405 = vunpack.c.h.b16 %v250
    %v2406 = vunpack.c.l.b16 %v251
    %v2407 = vunpack.c.h.b16 %v251
    %v2408 = vunpack.c.l.b16 %v252
    %v2409 = vunpack.c.h.b16 %v252
    %v2410 = vunpack.c.l.b16 %v253
    %v2411 = vunpack.c.h.b16 %v253
    %v2412 = vunpack.c.l.b16 %v254
    %v2413 = vunpack.c.h.b16 %v254
    %v2414 = vunpack.c.l.b16 %v255
    %v2415 = vunpack.c.h.b16 %v255
    %v2416 = vunpack.c.l.b16 %v256
    %v2417 = vunpack.c.h.b16 %v256
    %v2418 = vunpack.c.l.b16 %v257
    %v2419 = vunpack.c.h.b16 %v257
    %v2420 = vunpack.c.l.b16 %v258
    %v2421 = vunpack.c.h.b16 %v258
    %v2422 = vunpack.c.l.b16 %v259
    %v2423 = vunpack.c.h.b16 %v259
    %v2424 = vunpack.c.l.b16 %v260
    %v2425 = vunpack.c.h.b16 %v260
    %v2426 = vunpack.c.l.b16 %v261
    %v2427 = vunpack.c.h.b16 %v261
    %v2428 = vunpack.c.l.b16 %v262
    %v2429 = vunpack.c.h.b16 %v262
    %v2430 = vunpack.c.l.b16 %v263
    %v2431 = vunpack.c.h.b16 %v263
    %v2432 = vunpack.c.l.b16 %v264
    %v2433 = vunpack.c.h.b16 %v264
    %v2434 = vunpack.c.l.b16 %v265
    %v2435 = vunpack.c.h.b16 %v265
    %v2436 = vunpack.c.l.b16 %v266
    %v2437 = vunpack.c.h.b16 %v266
    %v2438 = vunpack.c.l.b16 %v267
    %v2439 = vunpack.c.h.b16 %v267
    %v2440 = vunpack.c.l.b16 %v268
    %v2441 = vunpack.c.h.b16 %v268
    %v2442 = vunpack.c.l.b16 %v269
    %v2443 = vunpack.c.h.b16 %v269
    %v2444 = vunpack.c.l.b16 %v270
    %v2445 = vunpack.c.h.b16 %v270
    %v2446 = vunpack.c.l.b16 %v271
    %v2447 = vunpack.c.h.b16 %v271
    %v2448 = vunpack.c.l.b16 %v272
    %v2449 = vunpack.c.h.b16 %v272
    %v2450 = vunpack.c.l.b16 %v273
    %v2451 = vunpack.c.h.b16 %v273
    %v2452 = vunpack.c.l.b16 %v274
    %v2453 = vunpack.c.h.b16 %v274
    %v2454 = vunpack.c.l.b16 %v275
    %v2455 = vunpack.c.h.b16 %v275
    %v2456 = vunpack.c.l.b16 %v276
    %v2457 = vunpack.c.h.b16 %v276
    %v2458 = vunpack.c.l.b16 %v277
    %v2459 = vunpack.c.h.b16 %v277
    %v2460 = vunpack.c.l.b16 %v278
    %v2461 = vunpack.c.h.b16 %v278
    %v2462 = vunpack.c.l.b16 %v279
    %v2463 = vunpack.c.h.b16 %v279
    %v2464 = vunpack.c.l.b16 %v280
    %v2465 = vunpack.c.h.b16 %v280
    %v2466 = vunpack.c.l.b16 %v281
    %v2467 = vunpack.c.h.b16 %v281
    %v2468 = vunpack.c.l.b16 %v282
    %v2469 = vunpack.c.h.b16 %v282
    %v2470 = vunpack.c.l.b16 %v283
    %v2471 = vunpack.c.h.b16 %v283
    %v2472 = vunpack.c.l.b16 %v284
    %v2473 = vunpack.c.h.b16 %v284
    %v2474 = vunpack.c.l.b16 %v285
    %v2475 = vunpack.c.h.b16 %v285
    %v2476 = vunpack.c.l.b16 %v286
    %v2477 = vunpack.c.h.b16 %v286
    %v2478 = vunpack.c.l.b16 %v287
    %v2479 = vunpack.c.h.b16 %v287
    %v2480 = vunpack.c.l.b16 %v288
    %v2481 = vunpack.c.h.b16 %v288
    %v2482 = vunpack.c.l.b16 %v289
    %v2483 = vunpack.c.h.b16 %v289
    %v2484 = vunpack.c.l.b16 %v290
    %v2485 = vunpack.c.h.b16 %v290
    %v2486 = vunpack.c.l.b16 %v291
    %v2487 = vunpack.c.h.b16 %v291
    %v2488 = vunpack.c.l.b16 %v292
    %v2489 = vunpack.c.h.b16 %v292
    %v2490 = vunpack.c.l.b16 %v293
    %v2491 = vunpack.c.h.b16 %v293
    %v2492 = vunpack.c.l.b16 %v294
    %v2493 = vunpack.c.h.b16 %v294
    %v2494 = vunpack.c.l.b16 %v295
    %v2495 = vunpack.c.h.b16 %v295
    %v2496 = vunpack.c.l.b16 %v296
    %v2497 = vunpack.c.h.b16 %v296
    %v2498 = vunpack.c.l.b16 %v297
    %v2499 = vunpack.c.h.b16 %v297
    %v2500 = vunpack.c.l.b16 %v298
    %v2501 = vunpack.c.h.b16 %v298
    %v2502 = vunpack.c.l.b16 %v299
    %v2503 = vunpack.c.h.b16 %v299
    %v2504 = vunpack.c.l.b16 %v300
    %v2505 = vunpack.c.h.b16 %v300
    %v2506 = vunpack.c.l.b16 %v301
    %v2507 = vunpack.c.h.b16 %v301
    %v2508 = vunpack.c.l.b16 %v302
    %v2509 = vunpack.c.h.b16 %v302
    %v2510 = vunpack.c.l.b16 %v303
    %v2511 = vunpack.c.h.b16 %v303
    %v2512 = vunpack.c.l.b16 %v304
    %v2513 = vunpack.c.h.b16 %v304
    %v2514 = vunpack.c.l.b16 %v305
    %v2515 = vunpack.c.h.b16 %v305
    %v2516 = vunpack.c.l.b16 %v306
    %v2517 = vunpack.c.h.b16 %v306
    %v2518 = vunpack.c.l.b16 %v307
    %v2519 = vunpack.c.h.b16 %v307
    %v2520 = vunpack.c.l.b16 %v308
    %v2521 = vunpack.c.h.b16 %v308
    %v2522 = vunpack.c.l.b16 %v309
    %v2523 = vunpack.c.h.b16 %v309
    %v2524 = vunpack.c.l.b16 %v310
    %v2525 = vunpack.c.h.b16 %v310
    %v2526 = vunpack.c.l.b16 %v311
    %v2527 = vunpack.c.h.b16 %v311
    %v2528 = vunpack.c.l.b16 %v312
    %v2529 = vunpack.c.h.b16 %v312
    %v2530 = vunpack.c.l.b16 %v313
    %v2531 = vunpack.c.h.b16 %v313
    %v2532 = vunpack.c.l.b16 %v314
    %v2533 = vunpack.c.h.b16 %v314
    %v2534 = vunpack.c.l.b16 %v315
    %v2535 = vunpack.c.h.b16 %v315
    %v2536 = vunpack.c.l.b16 %v316
    %v2537 = vunpack.c.h.b16 %v316
    %v2538 = vunpack.c.l.b16 %v317
    %v2539 = vunpack.c.h.b16 %v317
    %v2540 = vunpack.c.l.b16 %v318
    %v2541 = vunpack.c.h.b16 %v318
    %v2542 = vunpack.c.l.b16 %v319
    %v2543 = vunpack.c.h.b16 %v319
    %v2544 = vunpack.c.l.b16 %v320
    %v2545 = vunpack.c.h.b16 %v320
    %v2546 = vunpack.c.l.b16 %v321
    %v2547 = vunpack.c.h.b16 %v321
    %v2548 = vunpack.c.l.b16 %v322
    %v2549 = vunpack.c.h.b16 %v322
    %v2550 = vunpack.c.l.b16 %v323
    %v2551 = vunpack.c.h.b16 %v323
    %v2552 = vunpack.c.l.b16 %v324
    %v2553 = vunpack.c.h.b16 %v324
    %v2554 = vunpack.c.l.b16 %v325
    %v2555 = vunpack.c.h.b16 %v325
    %v2556 = vunpack.c.l.b16 %v326
    %v2557 = vunpack.c.h.b16 %v326
    %v2558 = vunpack.c.l.b16 %v327
    %v2559 = vunpack.c.h.b16 %v327
    %v2560 = vunpack.c.l.b16 %v328
    %v2561 = vunpack.c.h.b16 %v328
    %v2562 = vunpack.c.l.b16 %v329
    %v2563 = vunpack.c.h.b16 %v329
    %v2564 = vunpack.c.l.b16 %v330
    %v2565 = vunpack.c.h.b16 %v330
    %v2566 = vunpack.c.l.b16 %v331
    %v2567 = vunpack.c.h.b16 %v331
    %v2568 = vunpack.c.l.b16 %v332
    %v2569 = vunpack.c.h.b16 %v332
    %v2570 = vunpack.c.l.b16 %v333
    %v2571 = vunpack.c.h.b16 %v333
    %v2572 = vunpack.c.l.b16 %v334
    %v2573 = vunpack.c.h.b16 %v334
    %v2574 = vunpack.c.l.b16 %v335
    %v2575 = vunpack.c.h.b16 %v335
    %v2576 = vunpack.c.l.b16 %v336
    %v2577 = vunpack.c.h.b16 %v336
    %v2578 = vunpack.c.l.b16 %v337
    %v2579 = vunpack.c.h.b16 %v337
    %v2580 = vunpack.c.l.b16 %v338
    %v2581 = vunpack.c.h.b16 %v338
    %v2582 = vunpack.c.l.b16 %v339
    %v2583 = vunpack.c.h.b16 %v339
    %v2584 = vunpack.c.l.b16 %v340
    %v2585 = vunpack.c.h.b16 %v340
    %v2586 = vunpack.c.l.b16 %v341
    %v2587 = vunpack.c.h.b16 %v341
    %v2588 = vunpack.c.l.b16 %v342
    %v2589 = vunpack.c.h.b16 %v342
    %v2590 = vunpack.c.l.b16 %v343
    %v2591 = vunpack.c.h.b16 %v343
    %v2592 = vunpack.c.l.b16 %v344
    %v2593 = vunpack.c.h.b16 %v344
    %v2594 = vunpack.c.l.b16 %v345
    %v2595 = vunpack.c.h.b16 %v345
    %v2596 = vunpack.c.l.b16 %v346
    %v2597 = vunpack.c.h.b16 %v346
    %v2598 = vunpack.c.l.b16 %v347
    %v2599 = vunpack.c.h.b16 %v347
    %v2600 = vunpack.c.l.b16 %v348
    %v2601 = vunpack.c.h.b16 %v348
    %v2602 = vunpack.c.l.b16 %v349
    %v2603 = vunpack.c.h.b16 %v349
    %v2604 = vunpack.c.l.b16 %v350
    %v2605 = vunpack.c.h.b16 %v350
    %v2606 = vunpack.c.l.b16 %v351
    %v2607 = vunpack.c.h.b16 %v351
    %v2608 = vunpack.c.l.b16 %v352
    %v2609 = vunpack.c.h.b16 %v352
    %v2610 = vunpack.c.l.b16 %v353
    %v2611 = vunpack.c.h.b16 %v353
    %v2612 = vunpack.c.l.b16 %v354
    %v2613 = vunpack.c.h.b16 %v354
    %v2614 = vunpack.c.l.b16 %v355
    %v2615 = vunpack.c.h.b16 %v355
    %v2616 = vunpack.c.l.b16 %v356
    %v2617 = vunpack.c.h.b16 %v356
    %v2618 = vunpack.c.l.b16 %v357
    %v2619 = vunpack.c.h.b16 %v357
    %v2620 = vunpack.c.l.b16 %v358
    %v2621 = vunpack.c.h.b16 %v358
    %v2622 = vunpack.c.l.b16 %v359
    %v2623 = vunpack.c.h.b16 %v359
    %v2624 = vunpack.c.l.b16 %v360
    %v2625 = vunpack.c.h.b16 %v360
    %v2626 = vunpack.c.l.b16 %v361
    %v2627 = vunpack.c.h.b16 %v361
    %v2628 = vunpack.c.l.b16 %v362
    %v2629 = vunpack.c.h.b16 %v362
    %v2630 = vunpack.c.l.b16 %v363
    %v2631 = vunpack.c.h.b16 %v363
    %v2632 = vunpack.c.l.b16 %v364
    %v2633 = vunpack.c.h.b16 %v364
    %v2634 = vunpack.c.l.b16 %v365
    %v2635 = vunpack.c.h.b16 %v365
    %v2636 = vunpack.c.l.b16 %v366
    %v2637 = vunpack.c.h.b16 %v366
    %v2638 = vunpack.c.l.b16 %v367
    %v2639 = vunpack.c.h.b16 %v367
    %v2640 = vunpack.c.l.b16 %v368
    %v2641 = vunpack.c.h.b16 %v368
    %v2642 = vunpack.c.l.b16 %v369
    %v2643 = vunpack.c.h.b16 %v369
    %v2644 = vunpack.c.l.b16 %v370
    %v2645 = vunpack.c.h.b16 %v370
    %v2646 = vunpack.c.l.b16 %v371
    %v2647 = vunpack.c.h.b16 %v371
    %v2648 = vunpack.c.l.b16 %v372
    %v2649 = vunpack.c.h.b16 %v372
    %v2650 = vunpack.c.l.b16 %v373
    %v2651 = vunpack.c.h.b16 %v373
    %v2652 = vunpack.c.l.b16 %v374
    %v2653 = vunpack.c.h.b16 %v374
    %v2654 = vunpack.c.l.b16 %v375
    %v2655 = vunpack.c.h.b16 %v375
    %v2656 = vunpack.c.l.b16 %v376
    %v2657 = vunpack.c.h.b16 %v376
    %v2658 = vunpack.c.l.b16 %v377
    %v2659 = vunpack.c.h.b16 %v377
    %v2660 = vunpack.c.l.b16 %v378
    %v2661 = vunpack.c.h.b16 %v378
    %v2662 = vunpack.c.l.b16 %v379
    %v2663 = vunpack.c.h.b16 %v379
    %v2664 = vunpack.c.l.b16 %v380
    %v2665 = vunpack.c.h.b16 %v380
    %v2666 = vunpack.c.l.b16 %v381
    %v2667 = vunpack.c.h.b16 %v381
    %v2668 = vunpack.c.l.b16 %v382
    %v2669 = vunpack.c.h.b16 %v382
    %v2670 = vunpack.c.l.b16 %v383
    %v2671 = vunpack.c.h.b16 %v383
    %v2672 = vunpack.c.l.b16 %v384
    %v2673 = vunpack.c.h.b16 %v384
    %v2674 = vunpack.c.l.b16 %v385
    %v2675 = vunpack.c.h.b16 %v385
    %v2676 = vunpack.c.l.b16 %v386
    %v2677 = vunpack.c.h.b16 %v386
    %v2678 = vunpack.c.l.b16 %v387
    %v2679 = vunpack.c.h.b16 %v387
    %v2680 = vunpack.c.l.b16 %v388
    %v2681 = vunpack.c.h.b16 %v388
    %v2682 = vunpack.c.l.b16 %v389
    %v2683 = vunpack.c.h.b16 %v389
    %v2684 = vunpack.c.l.b16 %v390
    %v2685 = vunpack.c.h.b16 %v390
    %v2686 = vunpack.c.l.b16 %v391
    %v2687 = vunpack.c.h.b16 %v391
    %v2688 = vunpack.c.l.b16 %v392
    %v2689 = vunpack.c.h.b16 %v392
    %v2690 = vunpack.c.l.b16 %v393
    %v2691 = vunpack.c.h.b16 %v393
    %v2692 = vunpack.c.l.b16 %v394
    %v2693 = vunpack.c.h.b16 %v394
    %v2694 = vunpack.c.l.b16 %v395
    %v2695 = vunpack.c.h.b16 %v395
    %v2696 = vunpack.c.l.b16 %v396
    %v2697 = vunpack.c.h.b16 %v396
    %v2698 = vunpack.c.l.b16 %v397
    %v2699 = vunpack.c.h.b16 %v397
    %v2700 = vunpack.c.l.b16 %v398
    %v2701 = vunpack.c.h.b16 %v398
    %v2702 = vunpack.c.l.b16 %v399
    %v2703 = vunpack.c.h.b16 %v399
    %v2704 = vunpack.c.l.b16 %v400
    %v2705 = vunpack.c.h.b16 %v400
    %v2706 = vunpack.c.l.b16 %v401
    %v2707 = vunpack.c.h.b16 %v401
    %v2708 = vunpack.c.l.b16 %v402
    %v2709 = vunpack.c.h.b16 %v402
    %v2710 = vunpack.c.l.b16 %v403
    %v2711 = vunpack.c.h.b16 %v403
    %v2712 = vunpack.c.l.b16 %v404
    %v2713 = vunpack.c.h.b16 %v404
    %v2714 = vunpack.c.l.b16 %v405
    %v2715 = vunpack.c.h.b16 %v405
    %v2716 = vunpack.c.l.b16 %v406
    %v2717 = vunpack.c.h.b16 %v406
    %v2718 = vunpack.c.l.b16 %v407
    %v2719 = vunpack.c.h.b16 %v407
    %v2720 = vunpack.c.l.b16 %v408
    %v2721 = vunpack.c.h.b16 %v408
    %v2722 = vunpack.c.l.b16 %v409
    %v2723 = vunpack.c.h.b16 %v409
    %v2724 = vunpack.c.l.b16 %v410
    %v2725 = vunpack.c.h.b16 %v410
    %v2726 = vunpack.c.l.b16 %v411
    %v2727 = vunpack.c.h.b16 %v411
    %v2728 = vunpack.c.l.b16 %v412
    %v2729 = vunpack.c.h.b16 %v412
    %v2730 = vunpack.c.l.b16 %v413
    %v2731 = vunpack.c.h.b16 %v413
    %v2732 = vunpack.c.l.b16 %v414
    %v2733 = vunpack.c.h.b16 %v414
    %v2734 = vunpack.c.l.b16 %v415
    %v2735 = vunpack.c.h.b16 %v415
    %v2736 = vunpack.c.l.b16 %v416
    %v2737 = vunpack.c.h.b16 %v416
    %v2738 = vunpack.c.l.b16 %v417
    %v2739 = vunpack.c.h.b16 %v417
    %v2740 = vunpack.c.l.b16 %v418
    %v2741 = vunpack.c.h.b16 %v418
    %v2742 = vunpack.c.l.b16 %v419
    %v2743 = vunpack.c.h.b16 %v419
    %v2744 = vunpack.c.l.b16 %v420
    %v2745 = vunpack.c.h.b16 %v420
    %v2746 = vunpack.c.l.b16 %v421
    %v2747 = vunpack.c.h.b16 %v421
    %v2748 = vunpack.c.l.b16 %v422
    %v2749 = vunpack.c.h.b16 %v422
    %v2750 = vunpack.c.l.b16 %v423
    %v2751 = vunpack.c.h.b16 %v423
    %v2752 = vunpack.c.l.b16 %v424
    %v2753 = vunpack.c.h.b16 %v424
    %v2754 = vunpack.c.l.b16 %v425
    %v2755 = vunpack.c.h.b16 %v425
    %v2756 = vunpack.c.l.b16 %v426
    %v2757 = vunpack.c.h.b16 %v426
    %v2758 = vunpack.c.l.b16 %v427
    %v2759 = vunpack.c.h.b16 %v427
    %v2760 = vunpack.c.l.b16 %v428
    %v2761 = vunpack.c.h.b16 %v428
    %v2762 = vunpack.c.l.b16 %v429
    %v2763 = vunpack.c.h.b16 %v429
    %v2764 = vunpack.c.l.b16 %v430
    %v2765 = vunpack.c.h.b16 %v430
    %v2766 = vunpack.c.l.b16 %v431
    %v2767 = vunpack.c.h.b16 %v431
    %v2768 = vunpack.c.l.b16 %v432
    %v2769 = vunpack.c.h.b16 %v432
    %v2770 = vunpack.c.l.b16 %v433
    %v2771 = vunpack.c.h.b16 %v433
    %v2772 = vunpack.c.l.b16 %v434
    %v2773 = vunpack.c.h.b16 %v434
    %v2774 = vunpack.c.l.b16 %v435
    %v2775 = vunpack.c.h.b16 %v435
    %v2776 = vunpack.c.l.b16 %v436
    %v2777 = vunpack.c.h.b16 %v436
    %v2778 = vunpack.c.l.b16 %v437
    %v2779 = vunpack.c.h.b16 %v437
    %v2780 = vunpack.c.l.b16 %v438
    %v2781 = vunpack.c.h.b16 %v438
    %v2782 = vunpack.c.l.b16 %v439
    %v2783 = vunpack.c.h.b16 %v439
    %v2784 = vunpack.c.l.b16 %v440
    %v2785 = vunpack.c.h.b16 %v440
    %v2786 = vunpack.c.l.b16 %v441
    %v2787 = vunpack.c.h.b16 %v441
    %v2788 = vunpack.c.l.b16 %v442
    %v2789 = vunpack.c.h.b16 %v442
    %v2790 = vunpack.c.l.b16 %v443
    %v2791 = vunpack.c.h.b16 %v443
    %v2792 = vunpack.c.l.b16 %v444
    %v2793 = vunpack.c.h.b16 %v444
    %v2794 = vunpack.c.l.b16 %v445
    %v2795 = vunpack.c.h.b16 %v445
    %v2796 = vunpack.c.l.b16 %v446
    %v2797 = vunpack.c.h.b16 %v446
    %v2798 = vunpack.c.l.b16 %v447
    %v2799 = vunpack.c.h.b16 %v447
    %v2800 = vunpack.c.l.b16 %v448
    %v2801 = vunpack.c.h.b16 %v448
    %v2802 = vunpack.c.l.b16 %v449
    %v2803 = vunpack.c.h.b16 %v449
    %v2804 = vunpack.c.l.b16 %v450
    %v2805 = vunpack.c.h.b16 %v450
    %v2806 = vunpack.c.l.b16 %v451
    %v2807 = vunpack.c.h.b16 %v451
    %v2808 = vunpack.c.l.b16 %v452
    %v2809 = vunpack.c.h.b16 %v452
    %v2810 = vunpack.c.l.b16 %v453
    %v2811 = vunpack.c.h.b16 %v453
    %v2812 = vunpack.c.l.b16 %v454
    %v2813 = vunpack.c.h.b16 %v454
    %v2814 = vunpack.c.l.b16 %v455
    %v2815 = vunpack.c.h.b16 %v455
    %v2816 = vunpack.c.l.b16 %v456
    %v2817 = vunpack.c.h.b16 %v456
    %v2818 = vunpack.c.l.b16 %v457
    %v2819 = vunpack.c.h.b16 %v457
    %v2820 = vunpack.c.l.b16 %v458
    %v2821 = vunpack.c.h.b16 %v458
    %v2822 = vunpack.c.l.b16 %v459
    %v2823 = vunpack.c.h.b16 %v459
    %v2824 = vunpack.c.l.b16 %v460
    %v2825 = vunpack.c.h.b16 %v460
    %v2826 = vunpack.c.l.b16 %v461
    %v2827 = vunpack.c.h.b16 %v461
    %v2828 = vunpack.c.l.b16 %v462
    %v2829 = vunpack.c.h.b16 %v462
    %v2830 = vunpack.c.l.b16 %v463
    %v2831 = vunpack.c.h.b16 %v463
    %v2832 = vunpack.c.l.b16 %v464
    %v2833 = vunpack.c.h.b16 %v464
    %v2834 = vunpack.c.l.b16 %v465
    %v2835 = vunpack.c.h.b16 %v465
    %v2836 = vunpack.c.l.b16 %v466
    %v2837 = vunpack.c.h.b16 %v466
    %v2838 = vunpack.c.l.b16 %v467
    %v2839 = vunpack.c.h.b16 %v467
    %v2840 = vunpack.c.l.b16 %v468
    %v2841 = vunpack.c.h.b16 %v468
    %v2842 = vunpack.c.l.b16 %v469
    %v2843 = vunpack.c.h.b16 %v469
    %v2844 = vunpack.c.l.b16 %v470
    %v2845 = vunpack.c.h.b16 %v470
    %v2846 = vunpack.c.l.b16 %v471
    %v2847 = vunpack.c.h.b16 %v471
    %v2848 = vunpack.c.l.b16 %v472
    %v2849 = vunpack.c.h.b16 %v472
    %v2850 = vunpack.c.l.b16 %v473
    %v2851 = vunpack.c.h.b16 %v473
    %v2852 = vunpack.c.l.b16 %v474
    %v2853 = vunpack.c.h.b16 %v474
    %v2854 = vunpack.c.l.b16 %v475
    %v2855 = vunpack.c.h.b16 %v475
    %v2856 = vunpack.c.l.b16 %v476
    %v2857 = vunpack.c.h.b16 %v476
    %v2858 = vunpack.c.l.b16 %v477
    %v2859 = vunpack.c.h.b16 %v477
    %v2860 = vunpack.c.l.b16 %v478
    %v2861 = vunpack.c.h.b16 %v478
    %v2862 = vunpack.c.l.b16 %v479
    %v2863 = vunpack.c.h.b16 %v479
    %v2864 = vunpack.c.l.b16 %v480
    %v2865 = vunpack.c.h.b16 %v480
    %v2866 = vunpack.c.l.b16 %v481
    %v2867 = vunpack.c.h.b16 %v481
    %v2868 = vunpack.c.l.b16 %v482
    %v2869 = vunpack.c.h.b16 %v482
    %v2870 = vunpack.c.l.b16 %v483
    %v2871 = vunpack.c.h.b16 %v483
    %v2872 = vunpack.c.l.b16 %v484
    %v2873 = vunpack.c.h.b16 %v484
    %v2874 = vunpack.c.l.b16 %v485
    %v2875 = vunpack.c.h.b16 %v485
    %v2876 = vunpack.c.l.b16 %v486
    %v2877 = vunpack.c.h.b16 %v486
    %v2878 = vunpack.c.l.b16 %v487
    %v2879 = vunpack.c.h.b16 %v487
    %v2880 = vunpack.c.l.b16 %v488
    %v2881 = vunpack.c.h.b16 %v488
    %v2882 = vunpack.c.l.b16 %v489
    %v2883 = vunpack.c.h.b16 %v489
    %v2884 = vunpack.c.l.b16 %v490
    %v2885 = vunpack.c.h.b16 %v490
    %v2886 = vunpack.c.l.b16 %v491
    %v2887 = vunpack.c.h.b16 %v491
    %v2888 = vunpack.c.l.b16 %v492
    %v2889 = vunpack.c.h.b16 %v492
    %v2890 = vunpack.c.l.b16 %v493
    %v2891 = vunpack.c.h.b16 %v493
    %v2892 = vunpack.c.l.b16 %v494
    %v2893 = vunpack.c.h.b16 %v494
    %v2894 = vunpack.c.l.b16 %v495
    %v2895 = vunpack.c.h.b16 %v495
    %v2896 = vunpack.c.l.b16 %v496
    %v2897 = vunpack.c.h.b16 %v496
    %v2898 = vunpack.c.l.b16 %v497
    %v2899 = vunpack.c.h.b16 %v497
    %v2900 = vunpack.c.l.b16 %v498
    %v2901 = vunpack.c.h.b16 %v498
    %v2902 = vunpack.c.l.b16 %v499
    %v2903 = vunpack.c.h.b16 %v499
    %v2904 = vunpack.c.l.b16 %v500
    %v2905 = vunpack.c.h.b16 %v500
    %v2906 = vunpack.c.l.b16 %v501
    %v2907 = vunpack.c.h.b16 %v501
    %v2908 = vunpack.c.l.b16 %v502
    %v2909 = vunpack.c.h.b16 %v502
    %v2910 = vunpack.c.l.b16 %v503
    %v2911 = vunpack.c.h.b16 %v503
    %v2912 = vunpack.c.l.b16 %v504
    %v2913 = vunpack.c.h.b16 %v504
    %v2914 = vunpack.c.l.b16 %v505
    %v2915 = vunpack.c.h.b16 %v505
    %v2916 = vunpack.c.l.b16 %v506
    %v2917 = vunpack.c.h.b16 %v506
    %v2918 = vunpack.c.l.b16 %v507
    %v2919 = vunpack.c.h.b16 %v507
    %v2920 = vunpack.c.l.b16 %v508
    %v2921 = vunpack.c.h.b16 %v508
    %v2922 = vunpack.c.l.b16 %v509
    %v2923 = vunpack.c.h.b16 %v509
    %v2924 = vunpack.c.l.b16 %v510
    %v2925 = vunpack.c.h.b16 %v510
    %v2926 = vunpack.c.l.b16 %v511
    %v2927 = vunpack.c.h.b16 %v511
    %v2928 = vunpack.c.l.b16 %v512
    %v2929 = vunpack.c.h.b16 %v512
    %v2930 = vunpack.c.l.b16 %v513
    %v2931 = vunpack.c.h.b16 %v513
    %v2932 = vunpack.c.l.b16 %v514
    %v2933 = vunpack.c.h.b16 %v514
    %v2934 = vunpack.c.l.b16 %v515
    %v2935 = vunpack.c.h.b16 %v515
    %v2936 = vunpack.c.l.b16 %v516
    %v2937 = vunpack.c.h.b16 %v516
    %v2938 = vunpack.c.l.b16 %v517
    %v2939 = vunpack.c.h.b16 %v517
    %v2940 = vunpack.c.l.b16 %v518
    %v2941 = vunpack.c.h.b16 %v518
    %v2942 = vunpack.c.l.b16 %v519
    %v2943 = vunpack.c.h.b16 %v519
    %v2944 = vunpack.c.l.b16 %v520
    %v2945 = vunpack.c.h.b16 %v520
    %v2946 = vunpack.c.l.b16 %v521
    %v2947 = vunpack.c.h.b16 %v521
    %v2948 = vunpack.c.l.b16 %v522
    %v2949 = vunpack.c.h.b16 %v522
    %v2950 = vunpack.c.l.b16 %v523
    %v2951 = vunpack.c.h.b16 %v523
    %v2952 = vunpack.c.l.b16 %v524
    %v2953 = vunpack.c.h.b16 %v524
    %v2954 = vunpack.c.l.b16 %v525
    %v2955 = vunpack.c.h.b16 %v525
    %v2956 = vunpack.c.l.b16 %v526
    %v2957 = vunpack.c.h.b16 %v526
    %v2958 = vunpack.c.l.b16 %v527
    %v2959 = vunpack.c.h.b16 %v527
    %v2960 = vunpack.c.l.b16 %v528
    %v2961 = vunpack.c.h.b16 %v528
    %v2962 = vunpack.c.l.b16 %v529
    %v2963 = vunpack.c.h.b16 %v529
    %v2964 = vunpack.c.l.b16 %v530
    %v2965 = vunpack.c.h.b16 %v530
    %v2966 = vunpack.c.l.b16 %v531
    %v2967 = vunpack.c.h.b16 %v531
    %v2968 = vunpack.c.l.b16 %v532
    %v2969 = vunpack.c.h.b16 %v532
    %v2970 = vunpack.c.l.b16 %v533
    %v2971 = vunpack.c.h.b16 %v533
    %v2972 = vunpack.c.l.b16 %v534
    %v2973 = vunpack.c.h.b16 %v534
    %v2974 = vunpack.c.l.b16 %v535
    %v2975 = vunpack.c.h.b16 %v535
    %v2976 = vunpack.c.l.b16 %v536
    %v2977 = vunpack.c.h.b16 %v536
    %v2978 = vunpack.c.l.b16 %v537
    %v2979 = vunpack.c.h.b16 %v537
    %v2980 = vunpack.c.l.b16 %v538
    %v2981 = vunpack.c.h.b16 %v538
    %v2982 = vunpack.c.l.b16 %v539
    %v2983 = vunpack.c.h.b16 %v539
    %v2984 = vunpack.c.l.b16 %v540
    %v2985 = vunpack.c.h.b16 %v540
    %v2986 = vunpack.c.l.b16 %v541
    %v2987 = vunpack.c.h.b16 %v541
    %v2988 = vunpack.c.l.b16 %v542
    %v2989 = vunpack.c.h.b16 %v542
    %v2990 = vunpack.c.l.b16 %v543
    %v2991 = vunpack.c.h.b16 %v543
    %v2992 = vunpack.c.l.b16 %v544
    %v2993 = vunpack.c.h.b16 %v544
    %v2994 = vunpack.c.l.b16 %v545
    %v2995 = vunpack.c.h.b16 %v545
    %v2996 = vunpack.c.l.b16 %v546
    %v2997 = vunpack.c.h.b16 %v546
    %v2998 = vunpack.c.l.b16 %v547
    %v2999 = vunpack.c.h.b16 %v547
    %v3000 = vunpack.c.l.b16 %v548
    %v3001 = vunpack.c.h.b16 %v548
    %v3002 = vunpack.c.l.b16 %v549
    %v3003 = vunpack.c.h.b16 %v549
    %v3004 = vunpack.c.l.b16 %v550
    %v3005 = vunpack.c.h.b16 %v550
    %v3006 = vunpack.c.l.b16 %v551
    %v3007 = vunpack.c.h.b16 %v551
    %v3008 = vunpack.c.l.b16 %v552
    %v3009 = vunpack.c.h.b16 %v552
    %v3010 = vunpack.c.l.b16 %v553
    %v3011 = vunpack.c.h.b16 %v553
    %v3012 = vunpack.c.l.b16 %v554
    %v3013 = vunpack.c.h.b16 %v554
    %v3014 = vunpack.c.l.b16 %v555
    %v3015 = vunpack.c.h.b16 %v555
    %v3016 = vunpack.c.l.b16 %v556
    %v3017 = vunpack.c.h.b16 %v556
    %v3018 = vunpack.c.l.b16 %v557
    %v3019 = vunpack.c.h.b16 %v557
    %v3020 = vunpack.c.l.b16 %v558
    %v3021 = vunpack.c.h.b16 %v558
    %v3022 = vunpack.c.l.b16 %v559
    %v3023 = vunpack.c.h.b16 %v559
    %v3024 = vunpack.c.l.b16 %v560
    %v3025 = vunpack.c.h.b16 %v560
    %v3026 = vunpack.c.l.b16 %v561
    %v3027 = vunpack.c.h.b16 %v561
    %v3028 = vunpack.c.l.b16 %v562
    %v3029 = vunpack.c.h.b16 %v562
    %v3030 = vunpack.c.l.b16 %v563
    %v3031 = vunpack.c.h.b16 %v563
    %v3032 = vunpack.c.l.b16 %v564
    %v3033 = vunpack.c.h.b16 %v564
    %v3034 = vunpack.c.l.b16 %v565
    %v3035 = vunpack.c.h.b16 %v565
    %v3036 = vunpack.c.l.b16 %v566
    %v3037 = vunpack.c.h.b16 %v566
    %v3038 = vunpack.c.l.b16 %v567
    %v3039 = vunpack.c.h.b16 %v567
    %v3040 = vunpack.c.l.b16 %v568
    %v3041 = vunpack.c.h.b16 %v568
    %v3042 = vunpack.c.l.b16 %v569
    %v3043 = vunpack.c.h.b16 %v569
    %v3044 = vunpack.c.l.b16 %v570
    %v3045 = vunpack.c.h.b16 %v570
    %v3046 = vunpack.c.l.b16 %v571
    %v3047 = vunpack.c.h.b16 %v571
    %v3048 = vunpack.c.l.b16 %v572
    %v3049 = vunpack.c.h.b16 %v572
    %v3050 = vunpack.c.l.b16 %v573
    %v3051 = vunpack.c.h.b16 %v573
    %v3052 = vunpack.c.l.b16 %v574
    %v3053 = vunpack.c.h.b16 %v574
    %v3054 = vunpack.c.l.b16 %v575
    %v3055 = vunpack.c.h.b16 %v575
    %v3056 = vunpack.c.l.b16 %v576
    %v3057 = vunpack.c.h.b16 %v576
    %v3058 = vunpack.c.l.b16 %v577
    %v3059 = vunpack.c.h.b16 %v577
    %v3060 = vunpack.c.l.b16 %v578
    %v3061 = vunpack.c.h.b16 %v578
    %v3062 = vunpack.c.l.b16 %v579
    %v3063 = vunpack.c.h.b16 %v579
    %v3064 = vunpack.c.l.b16 %v580
    %v3065 = vunpack.c.h.b16 %v580
    %v3066 = vunpack.c.l.b16 %v581
    %v3067 = vunpack.c.h.b16 %v581
    %v3068 = vunpack.c.l.b16 %v582
    %v3069 = vunpack.c.h.b16 %v582
    %v3070 = vunpack.c.l.b16 %v583
    %v3071 = vunpack.c.h.b16 %v583
    %v3072 = vunpack.c.l.b16 %v584
    %v3073 = vunpack.c.h.b16 %v584
    %v3074 = vunpack.c.l.b16 %v585
    %v3075 = vunpack.c.h.b16 %v585
    %v3076 = vunpack.c.l.b16 %v586
    %v3077 = vunpack.c.h.b16 %v586
    %v3078 = vunpack.c.l.b16 %v587
    %v3079 = vunpack.c.h.b16 %v587
    %v3080 = vunpack.c.l.b16 %v588
    %v3081 = vunpack.c.h.b16 %v588
    %v3082 = vunpack.c.l.b16 %v589
    %v3083 = vunpack.c.h.b16 %v589
    %v3084 = vunpack.c.l.b16 %v590
    %v3085 = vunpack.c.h.b16 %v590
    %v3086 = vunpack.c.l.b16 %v591
    %v3087 = vunpack.c.h.b16 %v591
    %v3088 = vunpack.c.l.b16 %v592
    %v3089 = vunpack.c.h.b16 %v592
    %v3090 = vunpack.c.l.b16 %v593
    %v3091 = vunpack.c.h.b16 %v593
    %v3092 = vunpack.c.l.b16 %v594
    %v3093 = vunpack.c.h.b16 %v594
    %v3094 = vunpack.c.l.b16 %v595
    %v3095 = vunpack.c.h.b16 %v595
    %v3096 = vunpack.c.l.b16 %v596
    %v3097 = vunpack.c.h.b16 %v596
    %v3098 = vunpack.c.l.b16 %v597
    %v3099 = vunpack.c.h.b16 %v597
    %v3100 = vunpack.c.l.b16 %v598
    %v3101 = vunpack.c.h.b16 %v598
    %v3102 = vunpack.c.l.b16 %v599
    %v3103 = vunpack.c.h.b16 %v599
    %v3104 = vunpack.c.l.b16 %v600
    %v3105 = vunpack.c.h.b16 %v600
    %v3106 = vunpack.c.l.b16 %v601
    %v3107 = vunpack.c.h.b16 %v601
    %v3108 = vunpack.c.l.b16 %v602
    %v3109 = vunpack.c.h.b16 %v602
    %v3110 = vunpack.c.l.b16 %v603
    %v3111 = vunpack.c.h.b16 %v603
    %v3112 = vunpack.c.l.b16 %v604
    %v3113 = vunpack.c.h.b16 %v604
    %v3114 = vunpack.c.l.b16 %v605
    %v3115 = vunpack.c.h.b16 %v605
    %v3116 = vunpack.c.l.b16 %v606
    %v3117 = vunpack.c.h.b16 %v606
    %v3118 = vunpack.c.l.b16 %v607
    %v3119 = vunpack.c.h.b16 %v607
    %v3120 = vunpack.c.l.b16 %v608
    %v3121 = vunpack.c.h.b16 %v608
    %v3122 = vunpack.c.l.b16 %v609
    %v3123 = vunpack.c.h.b16 %v609
    %v3124 = vunpack.c.l.b16 %v610
    %v3125 = vunpack.c.h.b16 %v610
    %v3126 = vunpack.c.l.b16 %v611
    %v3127 = vunpack.c.h.b16 %v611
    %v3128 = vunpack.c.l.b16 %v612
    %v3129 = vunpack.c.h.b16 %v612
    %v3130 = vunpack.c.l.b16 %v613
    %v3131 = vunpack.c.h.b16 %v613
    %v3132 = vunpack.c.l.b16 %v614
    %v3133 = vunpack.c.h.b16 %v614
    %v3134 = vunpack.c.l.b16 %v615
    %v3135 = vunpack.c.h.b16 %v615
    %v3136 = vunpack.c.l.b16 %v616
    %v3137 = vunpack.c.h.b16 %v616
    %v3138 = vunpack.c.l.b16 %v617
    %v3139 = vunpack.c.h.b16 %v617
    %v3140 = vunpack.c.l.b16 %v618
    %v3141 = vunpack.c.h.b16 %v618
    %v3142 = vunpack.c.l.b16 %v619
    %v3143 = vunpack.c.h.b16 %v619
    %v3144 = vunpack.c.l.b16 %v620
    %v3145 = vunpack.c.h.b16 %v620
    %v3146 = vunpack.c.l.b16 %v621
    %v3147 = vunpack.c.h.b16 %v621
    %v3148 = vunpack.c.l.b16 %v622
    %v3149 = vunpack.c.h.b16 %v622
    %v3150 = vunpack.c.l.b16 %v623
    %v3151 = vunpack.c.h.b16 %v623
    %v3152 = vunpack.c.l.b16 %v624
    %v3153 = vunpack.c.h.b16 %v624
    %v3154 = vunpack.c.l.b16 %v625
    %v3155 = vunpack.c.h.b16 %v625
    %v3156 = vunpack.c.l.b16 %v626
    %v3157 = vunpack.c.h.b16 %v626
    %v3158 = vunpack.c.l.b16 %v627
    %v3159 = vunpack.c.h.b16 %v627
    %v3160 = vunpack.c.l.b16 %v628
    %v3161 = vunpack.c.h.b16 %v628
    %v3162 = vunpack.c.l.b16 %v629
    %v3163 = vunpack.c.h.b16 %v629
    %v3164 = vunpack.c.l.b16 %v630
    %v3165 = vunpack.c.h.b16 %v630
    %v3166 = vunpack.c.l.b16 %v631
    %v3167 = vunpack.c.h.b16 %v631
    %v3168 = vunpack.c.l.b16 %v632
    %v3169 = vunpack.c.h.b16 %v632
    %v3170 = vunpack.c.l.b16 %v633
    %v3171 = vunpack.c.h.b16 %v633
    %v3172 = vunpack.c.l.b16 %v634
    %v3173 = vunpack.c.h.b16 %v634
    %v3174 = vunpack.c.l.b16 %v635
    %v3175 = vunpack.c.h.b16 %v635
    %v3176 = vunpack.c.l.b16 %v636
    %v3177 = vunpack.c.h.b16 %v636
    %v3178 = vunpack.c.l.b16 %v637
    %v3179 = vunpack.c.h.b16 %v637
    %v3180 = vunpack.c.l.b16 %v638
    %v3181 = vunpack.c.h.b16 %v638
    %v3182 = vunpack.c.l.b16 %v639
    %v3183 = vunpack.c.h.b16 %v639
    %v3184 = vunpack.c.l.b16 %v640
    %v3185 = vunpack.c.h.b16 %v640
    %v3186 = vunpack.c.l.b16 %v641
    %v3187 = vunpack.c.h.b16 %v641
    %v3188 = vunpack.c.l.b16 %v642
    %v3189 = vunpack.c.h.b16 %v642
    %v3190 = vunpack.c.l.b16 %v643
    %v3191 = vunpack.c.h.b16 %v643
    %v3192 = vunpack.c.l.b16 %v644
    %v3193 = vunpack.c.h.b16 %v644
    %v3194 = vunpack.c.l.b16 %v645
    %v3195 = vunpack.c.h.b16 %v645
    %v3196 = vunpack.c.l.b16 %v646
    %v3197 = vunpack.c.h.b16 %v646
    %v3198 = vunpack.c.l.b16 %v647
    %v3199 = vunpack.c.h.b16 %v647
    %v3200 = vunpack.c.l.b16 %v648
    %v3201 = vunpack.c.h.b16 %v648
    %v3202 = vunpack.c.l.b16 %v649
    %v3203 = vunpack.c.h.b16 %v649
    %v3204 = vunpack.c.l.b16 %v650
    %v3205 = vunpack.c.h.b16 %v650
    %v3206 = vunpack.c.l.b16 %v651
    %v3207 = vunpack.c.h.b16 %v651
    %v3208 = vunpack.c.l.b16 %v652
    %v3209 = vunpack.c.h.b16 %v652
    %v3210 = vunpack.c.l.b16 %v653
    %v3211 = vunpack.c.h.b16 %v653
    %v3212 = vunpack.c.l.b16 %v654
    %v3213 = vunpack.c.h.b16 %v654
    %v3214 = vunpack.c.l.b16 %v655
    %v3215 = vunpack.c.h.b16 %v655
    %v3216 = vunpack.c.l.b16 %v656
    %v3217 = vunpack.c.h.b16 %v656
    %v3218 = vunpack.c.l.b16 %v657
    %v3219 = vunpack.c.h.b16 %v657
    %v3220 = vunpack.c.l.b16 %v658
    %v3221 = vunpack.c.h.b16 %v658
    %v3222 = vunpack.c.l.b16 %v659
    %v3223 = vunpack.c.h.b16 %v659
    %v3224 = vunpack.c.l.b16 %v660
    %v3225 = vunpack.c.h.b16 %v660
    %v3226 = vunpack.c.l.b16 %v661
    %v3227 = vunpack.c.h.b16 %v661
    %v3228 = vunpack.c.l.b16 %v662
    %v3229 = vunpack.c.h.b16 %v662
    %v3230 = vunpack.c.l.b16 %v663
    %v3231 = vunpack.c.h.b16 %v663
    %v3232 = vunpack.c.l.b16 %v664
    %v3233 = vunpack.c.h.b16 %v664
    %v3234 = vunpack.c.l.b16 %v665
    %v3235 = vunpack.c.h.b16 %v665
    %v3236 = vunpack.c.l.b16 %v666
    %v3237 = vunpack.c.h.b16 %v666
    %v3238 = vunpack.c.l.b16 %v667
    %v3239 = vunpack.c.h.b16 %v667
    %v3240 = vunpack.c.l.b16 %v668
    %v3241 = vunpack.c.h.b16 %v668
    %v3242 = vunpack.c.l.b16 %v669
    %v3243 = vunpack.c.h.b16 %v669
    %v3244 = vunpack.c.l.b16 %v670
    %v3245 = vunpack.c.h.b16 %v670
    %v3246 = vunpack.c.l.b16 %v671
    %v3247 = vunpack.c.h.b16 %v671
    %v3248 = vunpack.c.l.b16 %v672
    %v3249 = vunpack.c.h.b16 %v672
    %v3250 = vunpack.c.l.b16 %v673
    %v3251 = vunpack.c.h.b16 %v673
    %v3252 = vunpack.c.l.b16 %v674
    %v3253 = vunpack.c.h.b16 %v674
    %v3254 = vunpack.c.l.b16 %v675
    %v3255 = vunpack.c.h.b16 %v675
    %v3256 = vunpack.c.l.b16 %v676
    %v3257 = vunpack.c.h.b16 %v676
    %v3258 = vunpack.c.l.b16 %v677
    %v3259 = vunpack.c.h.b16 %v677
    %v3260 = vunpack.c.l.b16 %v678
    %v3261 = vunpack.c.h.b16 %v678
    %v3262 = vunpack.c.l.b16 %v679
    %v3263 = vunpack.c.h.b16 %v679
    %v3264 = vunpack.c.l.b16 %v680
    %v3265 = vunpack.c.h.b16 %v680
    %v3266 = vunpack.c.l.b16 %v681
    %v3267 = vunpack.c.h.b16 %v681
    %v3268 = vunpack.c.l.b16 %v682
    %v3269 = vunpack.c.h.b16 %v682
    %v3270 = vunpack.c.l.b16 %v683
    %v3271 = vunpack.c.h.b16 %v683
    %v3272 = vunpack.c.l.b16 %v684
    %v3273 = vunpack.c.h.b16 %v684
    %v3274 = vunpack.c.l.b16 %v685
    %v3275 = vunpack.c.h.b16 %v685
    %v3276 = vunpack.c.l.b16 %v686
    %v3277 = vunpack.c.h.b16 %v686
    %v3278 = vunpack.c.l.b16 %v687
    %v3279 = vunpack.c.h.b16 %v687
    %v3280 = vunpack.c.l.b16 %v688
    %v3281 = vunpack.c.h.b16 %v688
    %v3282 = vunpack.c.l.b16 %v689
    %v3283 = vunpack.c.h.b16 %v689
    %v3284 = vunpack.c.l.b16 %v690
    %v3285 = vunpack.c.h.b16 %v690
    %v3286 = vunpack.c.l.b16 %v691
    %v3287 = vunpack.c.h.b16 %v691
    %v3288 = vunpack.c.l.b16 %v692
    %v3289 = vunpack.c.h.b16 %v692
    %v3290 = vunpack.c.l.b16 %v693
    %v3291 = vunpack.c.h.b16 %v693
    %v3292 = vunpack.c.l.b16 %v694
    %v3293 = vunpack.c.h.b16 %v694
    %v3294 = vunpack.c.l.b16 %v695
    %v3295 = vunpack.c.h.b16 %v695
    %v3296 = vunpack.c.l.b16 %v696
    %v3297 = vunpack.c.h.b16 %v696
    %v3298 = vunpack.c.l.b16 %v697
    %v3299 = vunpack.c.h.b16 %v697
    %v3300 = vunpack.c.l.b16 %v698
    %v3301 = vunpack.c.h.b16 %v698
    %v3302 = vunpack.c.l.b16 %v699
    %v3303 = vunpack.c.h.b16 %v699
    %v3304 = vunpack.c.l.b16 %v700
    %v3305 = vunpack.c.h.b16 %v700
    %v3306 = vunpack.c.l.b16 %v701
    %v3307 = vunpack.c.h.b16 %v701
    %v3308 = vunpack.c.l.b16 %v702
    %v3309 = vunpack.c.h.b16 %v702
    %v3310 = vunpack.c.l.b16 %v703
    %v3311 = vunpack.c.h.b16 %v703
    %v3312 = vunpack.c.l.b16 %v704
    %v3313 = vunpack.c.h.b16 %v704
    %v3314 = vunpack.c.l.b16 %v705
    %v3315 = vunpack.c.h.b16 %v705
    %v3316 = vunpack.c.l.b16 %v706
    %v3317 = vunpack.c.h.b16 %v706
    %v3318 = vunpack.c.l.b16 %v707
    %v3319 = vunpack.c.h.b16 %v707
    %v3320 = vunpack.c.l.b16 %v708
    %v3321 = vunpack.c.h.b16 %v708
    %v3322 = vunpack.c.l.b16 %v709
    %v3323 = vunpack.c.h.b16 %v709
    %v3324 = vunpack.c.l.b16 %v710
    %v3325 = vunpack.c.h.b16 %v710
    %v3326 = vunpack.c.l.b16 %v711
    %v3327 = vunpack.c.h.b16 %v711
    %v3328 = vunpack.c.l.b16 %v712
    %v3329 = vunpack.c.h.b16 %v712
    %v3330 = vunpack.c.l.b16 %v713
    %v3331 = vunpack.c.h.b16 %v713
    %v3332 = vunpack.c.l.b16 %v714
    %v3333 = vunpack.c.h.b16 %v714
    %v3334 = vunpack.c.l.b16 %v715
    %v3335 = vunpack.c.h.b16 %v715
    %v3336 = vunpack.c.l.b16 %v716
    %v3337 = vunpack.c.h.b16 %v716
    %v3338 = vunpack.c.l.b16 %v717
    %v3339 = vunpack.c.h.b16 %v717
    %v3340 = vunpack.c.l.b16 %v718
    %v3341 = vunpack.c.h.b16 %v718
    %v3342 = vunpack.c.l.b16 %v719
    %v3343 = vunpack.c.h.b16 %v719
    %v3344 = vunpack.c.l.b16 %v720
    %v3345 = vunpack.c.h.b16 %v720
    %v3346 = vunpack.c.l.b16 %v721
    %v3347 = vunpack.c.h.b16 %v721
    %v3348 = vunpack.c.l.b16 %v722
    %v3349 = vunpack.c.h.b16 %v722
    %v3350 = vunpack.c.l.b16 %v723
    %v3351 = vunpack.c.h.b16 %v723
    %v3352 = vunpack.c.l.b16 %v724
    %v3353 = vunpack.c.h.b16 %v724
    %v3354 = vunpack.c.l.b16 %v725
    %v3355 = vunpack.c.h.b16 %v725
    %v3356 = vunpack.c.l.b16 %v726
    %v3357 = vunpack.c.h.b16 %v726
    %v3358 = vunpack.c.l.b16 %v727
    %v3359 = vunpack.c.h.b16 %v727
    %v3360 = vunpack.c.l.b16 %v728
    %v3361 = vunpack.c.h.b16 %v728
    %v3362 = vunpack.c.l.b16 %v729
    %v3363 = vunpack.c.h.b16 %v729
    %v3364 = vunpack.c.l.b16 %v730
    %v3365 = vunpack.c.h.b16 %v730
    %v3366 = vunpack.c.l.b16 %v731
    %v3367 = vunpack.c.h.b16 %v731
    %v3368 = vunpack.c.l.b16 %v732
    %v3369 = vunpack.c.h.b16 %v732
    %v3370 = vunpack.c.l.b16 %v733
    %v3371 = vunpack.c.h.b16 %v733
    %v3372 = vunpack.c.l.b16 %v734
    %v3373 = vunpack.c.h.b16 %v734
    %v3374 = vunpack.c.l.b16 %v735
    %v3375 = vunpack.c.h.b16 %v735
    %v3376 = vunpack.c.l.b16 %v736
    %v3377 = vunpack.c.h.b16 %v736
    %v3378 = vunpack.c.l.b16 %v737
    %v3379 = vunpack.c.h.b16 %v737
    %v3380 = vunpack.c.l.b16 %v738
    %v3381 = vunpack.c.h.b16 %v738
    %v3382 = vunpack.c.l.b16 %v739
    %v3383 = vunpack.c.h.b16 %v739
    %v3384 = vunpack.c.l.b16 %v740
    %v3385 = vunpack.c.h.b16 %v740
    %v3386 = vunpack.c.l.b16 %v741
    %v3387 = vunpack.c.h.b16 %v741
    %v3388 = vunpack.c.l.b16 %v742
    %v3389 = vunpack.c.h.b16 %v742
    %v3390 = vunpack.c.l.b16 %v743
    %v3391 = vunpack.c.h.b16 %v743
    %v3392 = vunpack.c.l.b16 %v744
    %v3393 = vunpack.c.h.b16 %v744
    %v3394 = vunpack.c.l.b16 %v745
    %v3395 = vunpack.c.h.b16 %v745
    %v3396 = vunpack.c.l.b16 %v746
    %v3397 = vunpack.c.h.b16 %v746
    %v3398 = vunpack.c.l.b16 %v747
    %v3399 = vunpack.c.h.b16 %v747
    %v3400 = vunpack.c.l.b16 %v748
    %v3401 = vunpack.c.h.b16 %v748
    %v3402 = vunpack.c.l.b16 %v749
    %v3403 = vunpack.c.h.b16 %v749
    %v3404 = vunpack.c.l.b16 %v750
    %v3405 = vunpack.c.h.b16 %v750
    %v3406 = vunpack.c.l.b16 %v751
    %v3407 = vunpack.c.h.b16 %v751
    %v3408 = vunpack.c.l.b16 %v752
    %v3409 = vunpack.c.h.b16 %v752
    %v3410 = vunpack.c.l.b16 %v753
    %v3411 = vunpack.c.h.b16 %v753
    %v3412 = vunpack.c.l.b16 %v754
    %v3413 = vunpack.c.h.b16 %v754
    %v3414 = vunpack.c.l.b16 %v755
    %v3415 = vunpack.c.h.b16 %v755
    %v3416 = vunpack.c.l.b16 %v756
    %v3417 = vunpack.c.h.b16 %v756
    %v3418 = vunpack.c.l.b16 %v757
    %v3419 = vunpack.c.h.b16 %v757
    %v3420 = vunpack.c.l.b16 %v758
    %v3421 = vunpack.c.h.b16 %v758
    %v3422 = vunpack.c.l.b16 %v759
    %v3423 = vunpack.c.h.b16 %v759
    %v3424 = vunpack.c.l.b16 %v760
    %v3425 = vunpack.c.h.b16 %v760
    %v3426 = vunpack.c.l.b16 %v761
    %v3427 = vunpack.c.h.b16 %v761
    %v3428 = vunpack.c.l.b16 %v762
    %v3429 = vunpack.c.h.b16 %v762
    %v3430 = vunpack.c.l.b16 %v763
    %v3431 = vunpack.c.h.b16 %v763
    %v3432 = vunpack.c.l.b16 %v764
    %v3433 = vunpack.c.h.b16 %v764
    %v3434 = vunpack.c.l.b16 %v765
    %v3435 = vunpack.c.h.b16 %v765
    %v3436 = vunpack.c.l.b16 %v766
    %v3437 = vunpack.c.h.b16 %v766
    %v3438 = vunpack.c.l.b16 %v767
    %v3439 = vunpack.c.h.b16 %v767
    %v3440 = vunpack.c.l.b16 %v768
    %v3441 = vunpack.c.h.b16 %v768
    %v3442 = vunpack.c.l.b16 %v769
    %v3443 = vunpack.c.h.b16 %v769
    %v3444 = vunpack.c.l.b16 %v770
    %v3445 = vunpack.c.h.b16 %v770
    %v3446 = vunpack.c.l.b16 %v771
    %v3447 = vunpack.c.h.b16 %v771
    %v3448 = vunpack.c.l.b16 %v772
    %v3449 = vunpack.c.h.b16 %v772
    %v3450 = vunpack.c.l.b16 %v773
    %v3451 = vunpack.c.h.b16 %v773
    %v3452 = vunpack.c.l.b16 %v774
    %v3453 = vunpack.c.h.b16 %v774
    %v3454 = vunpack.c.l.b16 %v775
    %v3455 = vunpack.c.h.b16 %v775
    %v3456 = vunpack.c.l.b16 %v776
    %v3457 = vunpack.c.h.b16 %v776
    %v3458 = vunpack.c.l.b16 %v777
    %v3459 = vunpack.c.h.b16 %v777
    %v3460 = vunpack.c.l.b16 %v778
    %v3461 = vunpack.c.h.b16 %v778
    %v3462 = vunpack.c.l.b16 %v779
    %v3463 = vunpack.c.h.b16 %v779
    %v3464 = vunpack.c.l.b16 %v780
    %v3465 = vunpack.c.h.b16 %v780
    %v3466 = vunpack.c.l.b16 %v781
    %v3467 = vunpack.c.h.b16 %v781
    %v3468 = vunpack.c.l.b16 %v782
    %v3469 = vunpack.c.h.b16 %v782
    %v3470 = vunpack.c.l.b16 %v783
    %v3471 = vunpack.c.h.b16 %v783
    %v3472 = vunpack.c.l.b16 %v784
    %v3473 = vunpack.c.h.b16 %v784
    %v3474 = vunpack.c.l.b16 %v785
    %v3475 = vunpack.c.h.b16 %v785
    %v3476 = vunpack.c.l.b16 %v786
    %v3477 = vunpack.c.h.b16 %v786
    %v3478 = vunpack.c.l.b16 %v787
    %v3479 = vunpack.c.h.b16 %v787
    %v3480 = vunpack.c.l.b16 %v788
    %v3481 = vunpack.c.h.b16 %v788
    %v3482 = vunpack.c.l.b16 %v789
    %v3483 = vunpack.c.h.b16 %v789
    %v3484 = vunpack.c.l.b16 %v790
    %v3485 = vunpack.c.h.b16 %v790
    %v3486 = vunpack.c.l.b16 %v791
    %v3487 = vunpack.c.h.b16 %v791
    %v3488 = vunpack.c.l.b16 %v792
    %v3489 = vunpack.c.h.b16 %v792
    %v3490 = vunpack.c.l.b16 %v793
    %v3491 = vunpack.c.h.b16 %v793
    %v3492 = vunpack.c.l.b16 %v794
    %v3493 = vunpack.c.h.b16 %v794
    %v3494 = vunpack.c.l.b16 %v795
    %v3495 = vunpack.c.h.b16 %v795
    %v3496 = vunpack.c.l.b16 %v796
    %v3497 = vunpack.c.h.b16 %v796
    %v3498 = vunpack.c.l.b16 %v797
    %v3499 = vunpack.c.h.b16 %v797
    %v3500 = vunpack.c.l.b16 %v798
    %v3501 = vunpack.c.h.b16 %v798
    %v3502 = vunpack.c.l.b16 %v799
    %v3503 = vunpack.c.h.b16 %v799
    %v3504 = vunpack.c.l.b16 %v800
    %v3505 = vunpack.c.h.b16 %v800
    %v3506 = vunpack.c.l.b16 %v801
    %v3507 = vunpack.c.h.b16 %v801
    %v3508 = vunpack.c.l.b16 %v802
    %v3509 = vunpack.c.h.b16 %v802
    %v3510 = vunpack.c.l.b16 %v803
    %v3511 = vunpack.c.h.b16 %v803
    %v3512 = vunpack.c.l.b16 %v804
    %v3513 = vunpack.c.h.b16 %v804
    %v3514 = vunpack.c.l.b16 %v805
    %v3515 = vunpack.c.h.b16 %v805
    %v3516 = vunpack.c.l.b16 %v806
    %v3517 = vunpack.c.h.b16 %v806
    %v3518 = vunpack.c.l.b16 %v807
    %v3519 = vunpack.c.h.b16 %v807
    %v3520 = vunpack.c.l.b16 %v808
    %v3521 = vunpack.c.h.b16 %v808
    %v3522 = vunpack.c.l.b16 %v809
    %v3523 = vunpack.c.h.b16 %v809
    %v3524 = vunpack.c.l.b16 %v810
    %v3525 = vunpack.c.h.b16 %v810
    %v3526 = vunpack.c.l.b16 %v811
    %v3527 = vunpack.c.h.b16 %v811
    %v3528 = vunpack.c.l.b16 %v812
    %v3529 = vunpack.c.h.b16 %v812
    %v3530 = vunpack.c.l.b16 %v813
    %v3531 = vunpack.c.h.b16 %v813
    %v3532 = vunpack.c.l.b16 %v814
    %v3533 = vunpack.c.h.b16 %v814
    %v3534 = vunpack.c.l.b16 %v815
    %v3535 = vunpack.c.h.b16 %v815
    %v3536 = vunpack.c.l.b16 %v816
    %v3537 = vunpack.c.h.b16 %v816
    %v3538 = vunpack.c.l.b16 %v817
    %v3539 = vunpack.c.h.b16 %v817
    %v3540 = vunpack.c.l.b16 %v818
    %v3541 = vunpack.c.h.b16 %v818
    %v3542 = vunpack.c.l.b16 %v819
    %v3543 = vunpack.c.h.b16 %v819
    %v3544 = vunpack.c.l.b16 %v820
    %v3545 = vunpack.c.h.b16 %v820
    %v3546 = vunpack.c.l.b16 %v821
    %v3547 = vunpack.c.h.b16 %v821
    %v3548 = vunpack.c.l.b16 %v822
    %v3549 = vunpack.c.h.b16 %v822
    %v3550 = vunpack.c.l.b16 %v823
    %v3551 = vunpack.c.h.b16 %v823
    %v3552 = vunpack.c.l.b16 %v824
    %v3553 = vunpack.c.h.b16 %v824
    %v3554 = vunpack.c.l.b16 %v825
    %v3555 = vunpack.c.h.b16 %v825
    %v3556 = vunpack.c.l.b16 %v826
    %v3557 = vunpack.c.h.b16 %v826
    %v3558 = vunpack.c.l.b16 %v827
    %v3559 = vunpack.c.h.b16 %v827
    %v3560 = vunpack.c.l.b16 %v828
    %v3561 = vunpack.c.h.b16 %v828
    %v3562 = vunpack.c.l.b16 %v829
    %v3563 = vunpack.c.h.b16 %v829
    %v3564 = vunpack.c.l.b16 %v830
    %v3565 = vunpack.c.h.b16 %v830
    %v3566 = vunpack.c.l.b16 %v831
    %v3567 = vunpack.c.h.b16 %v831
    %v3568 = vunpack.c.l.b16 %v832
    %v3569 = vunpack.c.h.b16 %v832
    %v3570 = vunpack.c.l.b16 %v833
    %v3571 = vunpack.c.h.b16 %v833
    %v3572 = vunpack.c.l.b16 %v834
    %v3573 = vunpack.c.h.b16 %v834
    %v3574 = vunpack.c.l.b16 %v835
    %v3575 = vunpack.c.h.b16 %v835
    %v3576 = vunpack.c.l.b16 %v836
    %v3577 = vunpack.c.h.b16 %v836
    %v3578 = vunpack.c.l.b16 %v837
    %v3579 = vunpack.c.h.b16 %v837
    %v3580 = vunpack.c.l.b16 %v838
    %v3581 = vunpack.c.h.b16 %v838
    %v3582 = vunpack.c.l.b16 %v839
    %v3583 = vunpack.c.h.b16 %v839
    %v3584 = vunpack.c.l.b16 %v840
    %v3585 = vunpack.c.h.b16 %v840
    %v3586 = vunpack.c.l.b16 %v841
    %v3587 = vunpack.c.h.b16 %v841
    %v3588 = vunpack.c.l.b16 %v842
    %v3589 = vunpack.c.h.b16 %v842
    %v3590 = vunpack.c.l.b16 %v843
    %v3591 = vunpack.c.h.b16 %v843
    %v3592 = vunpack.c.l.b16 %v844
    %v3593 = vunpack.c.h.b16 %v844
    %v3594 = vunpack.c.l.b16 %v845
    %v3595 = vunpack.c.h.b16 %v845
    %v3596 = vunpack.c.l.b16 %v846
    %v3597 = vunpack.c.h.b16 %v846
    %v3598 = vunpack.c.l.b16 %v847
    %v3599 = vunpack.c.h.b16 %v847
    %v3600 = vunpack.c.l.b16 %v848
    %v3601 = vunpack.c.h.b16 %v848
    %v3602 = vunpack.c.l.b16 %v849
    %v3603 = vunpack.c.h.b16 %v849
    %v3604 = vunpack.c.l.b16 %v850
    %v3605 = vunpack.c.h.b16 %v850
    %v3606 = vunpack.c.l.b16 %v851
    %v3607 = vunpack.c.h.b16 %v851
    %v3608 = vunpack.c.l.b16 %v852
    %v3609 = vunpack.c.h.b16 %v852
    %v3610 = vunpack.c.l.b16 %v853
    %v3611 = vunpack.c.h.b16 %v853
    %v3612 = vunpack.c.l.b16 %v854
    %v3613 = vunpack.c.h.b16 %v854
    %v3614 = vunpack.c.l.b16 %v855
    %v3615 = vunpack.c.h.b16 %v855
    %v3616 = vunpack.c.l.b16 %v856
    %v3617 = vunpack.c.h.b16 %v856
    %v3618 = vunpack.c.l.b16 %v857
    %v3619 = vunpack.c.h.b16 %v857
    %v3620 = vunpack.c.l.b16 %v858
    %v3621 = vunpack.c.h.b16 %v858
    %v3622 = vunpack.c.l.b16 %v859
    %v3623 = vunpack.c.h.b16 %v859
    %v3624 = vunpack.c.l.b16 %v860
    %v3625 = vunpack.c.h.b16 %v860
    %v3626 = vunpack.c.l.b16 %v861
    %v3627 = vunpack.c.h.b16 %v861
    %v3628 = vunpack.c.l.b16 %v862
    %v3629 = vunpack.c.h.b16 %v862
    %v3630 = vunpack.c.l.b16 %v863
    %v3631 = vunpack.c.h.b16 %v863
    %v3632 = vunpack.c.l.b16 %v864
    %v3633 = vunpack.c.h.b16 %v864
    %v3634 = vunpack.c.l.b16 %v865
    %v3635 = vunpack.c.h.b16 %v865
    %v3636 = vunpack.c.l.b16 %v866
    %v3637 = vunpack.c.h.b16 %v866
    %v3638 = vunpack.c.l.b16 %v867
    %v3639 = vunpack.c.h.b16 %v867
    %v3640 = vunpack.c.l.b16 %v868
    %v3641 = vunpack.c.h.b16 %v868
    %v3642 = vunpack.c.l.b16 %v869
    %v3643 = vunpack.c.h.b16 %v869
    %v3644 = vunpack.c.l.b16 %v870
    %v3645 = vunpack.c.h.b16 %v870
    %v3646 = vunpack.c.l.b16 %v871
    %v3647 = vunpack.c.h.b16 %v871
    %v3648 = vunpack.c.l.b16 %v872
    %v3649 = vunpack.c.h.b16 %v872
    %v3650 = vunpack.c.l.b16 %v873
    %v3651 = vunpack.c.h.b16 %v873
    %v3652 = vunpack.c.l.b16 %v874
    %v3653 = vunpack.c.h.b16 %v874
    %v3654 = vunpack.c.l.b16 %v875
    %v3655 = vunpack.c.h.b16 %v875
    %v3656 = vunpack.c.l.b16 %v876
    %v3657 = vunpack.c.h.b16 %v876
    %v3658 = vunpack.c.l.b16 %v877
    %v3659 = vunpack.c.h.b16 %v877
    %v3660 = vunpack.c.l.b16 %v878
    %v3661 = vunpack.c.h.b16 %v878
    %v3662 = vunpack.c.l.b16 %v879
    %v3663 = vunpack.c.h.b16 %v879
    %v3664 = vunpack.c.l.b16 %v880
    %v3665 = vunpack.c.h.b16 %v880
    %v3666 = vunpack.c.l.b16 %v881
    %v3667 = vunpack.c.h.b16 %v881
    %v3668 = vunpack.c.l.b16 %v882
    %v3669 = vunpack.c.h.b16 %v882
    %v3670 = vunpack.c.l.b16 %v883
    %v3671 = vunpack.c.h.b16 %v883
    %v3672 = vunpack.c.l.b16 %v884
    %v3673 = vunpack.c.h.b16 %v884
    %v3674 = vunpack.c.l.b16 %v885
    %v3675 = vunpack.c.h.b16 %v885
    %v3676 = vunpack.c.l.b16 %v886
    %v3677 = vunpack.c.h.b16 %v886
    %v3678 = vunpack.c.l.b16 %v887
    %v3679 = vunpack.c.h.b16 %v887
    %v3680 = vunpack.c.l.b16 %v888
    %v3681 = vunpack.c.h.b16 %v888
    %v3682 = vunpack.c.l.b16 %v889
    %v3683 = vunpack.c.h.b16 %v889
    %v3684 = vunpack.c.l.b16 %v890
    %v3685 = vunpack.c.h.b16 %v890
    %v3686 = vunpack.c.l.b16 %v891
    %v3687 = vunpack.c.h.b16 %v891
    %v3688 = vunpack.c.l.b16 %v892
    %v3689 = vunpack.c.h.b16 %v892
    %v3690 = vunpack.c.l.b16 %v893
    %v3691 = vunpack.c.h.b16 %v893
    %v3692 = vunpack.c.l.b16 %v894
    %v3693 = vunpack.c.h.b16 %v894
    %v3694 = vunpack.c.l.b16 %v895
    %v3695 = vunpack.c.h.b16 %v895
    %v3696 = vunpack.c.l.b16 %v896
    %v3697 = vunpack.c.h.b16 %v896
    %v3698 = vunpack.c.l.b16 %v897
    %v3699 = vunpack.c.h.b16 %v897
    %v3700 = vunpack.c.l.b16 %v898
    %v3701 = vunpack.c.h.b16 %v898
    %v3702 = vunpack.c.l.b16 %v899
    %v3703 = vunpack.c.h.b16 %v899
    %v3704 = vunpack.c.l.b16 %v900
    %v3705 = vunpack.c.h.b16 %v900
    %v3706 = vunpack.c.l.b16 %v901
    %v3707 = vunpack.c.h.b16 %v901
    %v3708 = vunpack.c.l.b16 %v902
    %v3709 = vunpack.c.h.b16 %v902
    %v3710 = vunpack.c.l.b16 %v903
    %v3711 = vunpack.c.h.b16 %v903
    %v3712 = vunpack.c.l.b16 %v904
    %v3713 = vunpack.c.h.b16 %v904
    %v3714 = vunpack.c.l.b16 %v905
    %v3715 = vunpack.c.h.b16 %v905
    %v3716 = vunpack.c.l.b16 %v906
    %v3717 = vunpack.c.h.b16 %v906
    %v3718 = vunpack.c.l.b16 %v907
    %v3719 = vunpack.c.h.b16 %v907
    %v3720 = vunpack.c.l.b16 %v908
    %v3721 = vunpack.c.h.b16 %v908
    %v3722 = vunpack.c.l.b16 %v909
    %v3723 = vunpack.c.h.b16 %v909
    %v3724 = vunpack.c.l.b16 %v910
    %v3725 = vunpack.c.h.b16 %v910
    %v3726 = vunpack.c.l.b16 %v911
    %v3727 = vunpack.c.h.b16 %v911
    %v3728 = vunpack.c.l.b16 %v912
    %v3729 = vunpack.c.h.b16 %v912
    %v3730 = vunpack.c.l.b16 %v913
    %v3731 = vunpack.c.h.b16 %v913
    %v3732 = vunpack.c.l.b16 %v914
    %v3733 = vunpack.c.h.b16 %v914
    %v3734 = vunpack.c.l.b16 %v915
    %v3735 = vunpack.c.h.b16 %v915
    %v3736 = vunpack.c.l.b16 %v916
    %v3737 = vunpack.c.h.b16 %v916
    %v3738 = vunpack.c.l.b16 %v917
    %v3739 = vunpack.c.h.b16 %v917
    %v3740 = vunpack.c.l.b16 %v918
    %v3741 = vunpack.c.h.b16 %v918
    %v3742 = vunpack.c.l.b16 %v919
    %v3743 = vunpack.c.h.b16 %v919
    %v3744 = vunpack.c.l.b16 %v920
    %v3745 = vunpack.c.h.b16 %v920
    %v3746 = vunpack.c.l.b16 %v921
    %v3747 = vunpack.c.h.b16 %v921
    %v3748 = vunpack.c.l.b16 %v922
    %v3749 = vunpack.c.h.b16 %v922
    %v3750 = vunpack.c.l.b16 %v923
    %v3751 = vunpack.c.h.b16 %v923
    %v3752 = vunpack.c.l.b16 %v924
    %v3753 = vunpack.c.h.b16 %v924
    %v3754 = vunpack.c.l.b16 %v925
    %v3755 = vunpack.c.h.b16 %v925
    %v3756 = vunpack.c.l.b16 %v926
    %v3757 = vunpack.c.h.b16 %v926
    %v3758 = vunpack.c.l.b16 %v927
    %v3759 = vunpack.c.h.b16 %v927
    %v3760 = vunpack.c.l.b16 %v928
    %v3761 = vunpack.c.h.b16 %v928
    %v3762 = vunpack.c.l.b16 %v929
    %v3763 = vunpack.c.h.b16 %v929
    %v3764 = vunpack.c.l.b16 %v930
    %v3765 = vunpack.c.h.b16 %v930
    %v3766 = vunpack.c.l.b16 %v931
    %v3767 = vunpack.c.h.b16 %v931
    %v3768 = vunpack.c.l.b16 %v932
    %v3769 = vunpack.c.h.b16 %v932
    %v3770 = vunpack.c.l.b16 %v933
    %v3771 = vunpack.c.h.b16 %v933
    %v3772 = vunpack.c.l.b16 %v934
    %v3773 = vunpack.c.h.b16 %v934
    %v3774 = vunpack.c.l.b16 %v935
    %v3775 = vunpack.c.h.b16 %v935
    %v3776 = vunpack.c.l.b16 %v936
    %v3777 = vunpack.c.h.b16 %v936
    %v3778 = vunpack.c.l.b16 %v937
    %v3779 = vunpack.c.h.b16 %v937
    %v3780 = vunpack.c.l.b16 %v938
    %v3781 = vunpack.c.h.b16 %v938
    %v3782 = vunpack.c.l.b16 %v939
    %v3783 = vunpack.c.h.b16 %v939
    %v3784 = vunpack.c.l.b16 %v940
    %v3785 = vunpack.c.h.b16 %v940
    %v3786 = vunpack.c.l.b16 %v941
    %v3787 = vunpack.c.h.b16 %v941
    %v3788 = vunpack.c.l.b16 %v942
    %v3789 = vunpack.c.h.b16 %v942
    %v3790 = vunpack.c.l.b16 %v943
    %v3791 = vunpack.c.h.b16 %v943
    %v3792 = vunpack.c.l.b16 %v944
    %v3793 = vunpack.c.h.b16 %v944
    %v3794 = vunpack.c.l.b16 %v945
    %v3795 = vunpack.c.h.b16 %v945
    %v3796 = vunpack.c.l.b16 %v946
    %v3797 = vunpack.c.h.b16 %v946
    %v3798 = vunpack.c.l.b16 %v947
    %v3799 = vunpack.c.h.b16 %v947
    %v3800 = vunpack.c.l.b16 %v948
    %v3801 = vunpack.c.h.b16 %v948
    %v3802 = vunpack.c.l.b16 %v949
    %v3803 = vunpack.c.h.b16 %v949
    %v3804 = vunpack.c.l.b16 %v950
    %v3805 = vunpack.c.h.b16 %v950
    %v3806 = vunpack.c.l.b16 %v951
    %v3807 = vunpack.c.h.b16 %v951
    %v3808 = vunpack.c.l.b16 %v952
    %v3809 = vunpack.c.h.b16 %v952
    %v3810 = vunpack.c.l.b16 %v953
    %v3811 = vunpack.c.h.b16 %v953
    %v3812 = vunpack.c.l.b16 %v954
    %v3813 = vunpack.c.h.b16 %v954
    %v3814 = vunpack.c.l.b16 %v955
    %v3815 = vunpack.c.h.b16 %v955
    %v3816 = vunpack.c.l.b16 %v956
    %v3817 = vunpack.c.h.b16 %v956
    %v3818 = vunpack.c.l.b16 %v957
    %v3819 = vunpack.c.h.b16 %v957
    %v3820 = vunpack.c.l.b16 %v958
    %v3821 = vunpack.c.h.b16 %v958
    %v3822 = vunpack.c.l.b16 %v959
    %v3823 = vunpack.c.h.b16 %v959
    %v3824 = vunpack.c.l.b16 %v960
    %v3825 = vunpack.c.h.b16 %v960
    %v3826 = vunpack.c.l.b16 %v961
    %v3827 = vunpack.c.h.b16 %v961
    %v3828 = vunpack.c.l.b16 %v962
    %v3829 = vunpack.c.h.b16 %v962
    %v3830 = vunpack.c.l.b16 %v963
    %v3831 = vunpack.c.h.b16 %v963
    %v3832 = vunpack.c.l.b16 %v964
    %v3833 = vunpack.c.h.b16 %v964
    %v3834 = vunpack.c.l.b16 %v965
    %v3835 = vunpack.c.h.b16 %v965
    %v3836 = vunpack.c.l.b16 %v966
    %v3837 = vunpack.c.h.b16 %v966
    %v3838 = vunpack.c.l.b16 %v967
    %v3839 = vunpack.c.h.b16 %v967
    %v3840 = vunpack.c.l.b16 %v968
    %v3841 = vunpack.c.h.b16 %v968
    %v3842 = vunpack.c.l.b16 %v969
    %v3843 = vunpack.c.h.b16 %v969
    %v3844 = vunpack.c.l.b16 %v970
    %v3845 = vunpack.c.h.b16 %v970
    %v3846 = vunpack.c.l.b16 %v971
    %v3847 = vunpack.c.h.b16 %v971
    %v3848 = vunpack.c.l.b16 %v972
    %v3849 = vunpack.c.h.b16 %v972
    %v3850 = vunpack.c.l.b16 %v973
    %v3851 = vunpack.c.h.b16 %v973
    %v3852 = vunpack.c.l.b16 %v974
    %v3853 = vunpack.c.h.b16 %v974
    %v3854 = vunpack.c.l.b16 %v975
    %v3855 = vunpack.c.h.b16 %v975
    %v3856 = vunpack.c.l.b16 %v976
    %v3857 = vunpack.c.h.b16 %v976
    %v3858 = vunpack.c.l.b16 %v977
    %v3859 = vunpack.c.h.b16 %v977
    %v3860 = vunpack.c.l.b16 %v978
    %v3861 = vunpack.c.h.b16 %v978
    %v3862 = vunpack.c.l.b16 %v979
    %v3863 = vunpack.c.h.b16 %v979
    %v3864 = vunpack.c.l.b16 %v980
    %v3865 = vunpack.c.h.b16 %v980
    %v3866 = vunpack.c.l.b16 %v981
    %v3867 = vunpack.c.h.b16 %v981
    %v3868 = vunpack.c.l.b16 %v982
    %v3869 = vunpack.c.h.b16 %v982
    %v3870 = vunpack.c.l.b16 %v983
    %v3871 = vunpack.c.h.b16 %v983
    %v3872 = vunpack.c.l.b16 %v984
    %v3873 = vunpack.c.h.b16 %v984
    %v3874 = vunpack.c.l.b16 %v985
    %v3875 = vunpack.c.h.b16 %v985
    %v3876 = vunpack.c.l.b16 %v986
    %v3877 = vunpack.c.h.b16 %v986
    %v3878 = vunpack.c.l.b16 %v987
    %v3879 = vunpack.c.h.b16 %v987
    %v3880 = vunpack.c.l.b16 %v988
    %v3881 = vunpack.c.h.b16 %v988
    %v3882 = vunpack.c.l.b16 %v989
    %v3883 = vunpack.c.h.b16 %v989
    %v3884 = vunpack.c.l.b16 %v990
    %v3885 = vunpack.c.h.b16 %v990
    %v3886 = vunpack.c.l.b16 %v991
    %v3887 = vunpack.c.h.b16 %v991
    %v3888 = vunpack.c.l.b16 %v992
    %v3889 = vunpack.c.h.b16 %v992
    %v3890 = vunpack.c.l.b16 %v993
    %v3891 = vunpack.c.h.b16 %v993
    %v3892 = vunpack.c.l.b16 %v994
    %v3893 = vunpack.c.h.b16 %v994
    %v3894 = vunpack.c.l.b16 %v995
    %v3895 = vunpack.c.h.b16 %v995
    %v3896 = vunpack.c.l.b16 %v996
    %v3897 = vunpack.c.h.b16 %v996
    %v3898 = vunpack.c.l.b16 %v997
    %v3899 = vunpack.c.h.b16 %v997
    %v3900 = vunpack.c.l.b16 %v998
    %v3901 = vunpack.c.h.b16 %v998
    %v3902 = vunpack.c.l.b16 %v999
    %v3903 = vunpack.c.h.b16 %v999
    %v3904 = vunpack.c.l.b16 %v1000
    %v3905 = vunpack.c.h.b16 %v1000
    %v3906 = vunpack.c.l.b16 %v1001
    %v3907 = vunpack.c.h.b16 %v1001
    %v3908 = vunpack.c.l.b16 %v1002
    %v3909 = vunpack.c.h.b16 %v1002
    %v3910 = vunpack.c.l.b16 %v1003
    %v3911 = vunpack.c.h.b16 %v1003
    %v3912 = vunpack.c.l.b16 %v1004
    %v3913 = vunpack.c.h.b16 %v1004
    %v3914 = vunpack.c.l.b16 %v1005
    %v3915 = vunpack.c.h.b16 %v1005
    %v3916 = vunpack.c.l.b16 %v1006
    %v3917 = vunpack.c.h.b16 %v1006
    %v3918 = vunpack.c.l.b16 %v1007
    %v3919 = vunpack.c.h.b16 %v1007
    %v3920 = vunpack.c.l.b16 %v1008
    %v3921 = vunpack.c.h.b16 %v1008
    %v3922 = vunpack.c.l.b16 %v1009
    %v3923 = vunpack.c.h.b16 %v1009
    %v3924 = vunpack.c.l.b16 %v1010
    %v3925 = vunpack.c.h.b16 %v1010
    %v3926 = vunpack.c.l.b16 %v1011
    %v3927 = vunpack.c.h.b16 %v1011
    %v3928 = vunpack.c.l.b16 %v1012
    %v3929 = vunpack.c.h.b16 %v1012
    %v3930 = vunpack.c.l.b16 %v1013
    %v3931 = vunpack.c.h.b16 %v1013
    %v3932 = vunpack.c.l.b16 %v1014
    %v3933 = vunpack.c.h.b16 %v1014
    %v3934 = vunpack.c.l.b16 %v1015
    %v3935 = vunpack.c.h.b16 %v1015
    %v3936 = vunpack.c.l.b16 %v1016
    %v3937 = vunpack.c.h.b16 %v1016
    %v3938 = vunpack.c.l.b16 %v1017
    %v3939 = vunpack.c.h.b16 %v1017
    %v3940 = vunpack.c.l.b16 %v1018
    %v3941 = vunpack.c.h.b16 %v1018
    %v3942 = vunpack.c.l.b16 %v1019
    %v3943 = vunpack.c.h.b16 %v1019
    %v3944 = vunpack.c.l.b16 %v1020
    %v3945 = vunpack.c.h.b16 %v1020
    %v3946 = vunpack.c.l.b16 %v1021
    %v3947 = vunpack.c.h.b16 %v1021
    %v3948 = vunpack.c.l.b16 %v1022
    %v3949 = vunpack.c.h.b16 %v1022
    %v3950 = vunpack.c.l.b16 %v1023
    %v3951 = vunpack.c.h.b16 %v1023
    %v3952 = vunpack.c.l.b16 %v1024
    %v3953 = vunpack.c.h.b16 %v1024
    %v3954 = vunpack.c.l.b16 %v1025
    %v3955 = vunpack.c.h.b16 %v1025
    %v3956 = vunpack.c.l.b16 %v1026
    %v3957 = vunpack.c.h.b16 %v1026
    %v3958 = vunpack.c.l.b16 %v1027
    %v3959 = vunpack.c.h.b16 %v1027
    %v3960 = vunpack.c.l.b16 %v1028
    %v3961 = vunpack.c.h.b16 %v1028
    %v3962 = vunpack.c.l.b16 %v1029
    %v3963 = vunpack.c.h.b16 %v1029
    %v3964 = vunpack.c.l.b16 %v1030
    %v3965 = vunpack.c.h.b16 %v1030
    %v3966 = vunpack.c.l.b16 %v1031
    %v3967 = vunpack.c.h.b16 %v1031
    %v3968 = vunpack.c.l.b16 %v1032
    %v3969 = vunpack.c.h.b16 %v1032
    %v3970 = vunpack.c.l.b16 %v1033
    %v3971 = vunpack.c.h.b16 %v1033
    %v3972 = vunpack.c.l.b16 %v1034
    %v3973 = vunpack.c.h.b16 %v1034
    %v3974 = vunpack.c.l.b16 %v1035
    %v3975 = vunpack.c.h.b16 %v1035
    %v3976 = vunpack.c.l.b16 %v1036
    %v3977 = vunpack.c.h.b16 %v1036
    %v3978 = vunpack.c.l.b16 %v1037
    %v3979 = vunpack.c.h.b16 %v1037
    %v3980 = vunpack.c.l.b16 %v1038
    %v3981 = vunpack.c.h.b16 %v1038
    %v3982 = vunpack.c.l.b16 %v1039
    %v3983 = vunpack.c.h.b16 %v1039
    %v3984 = vunpack.c.l.b16 %v1040
    %v3985 = vunpack.c.h.b16 %v1040
    %v3986 = vunpack.c.l.b16 %v1041
    %v3987 = vunpack.c.h.b16 %v1041
    %v3988 = vunpack.c.l.b16 %v1042
    %v3989 = vunpack.c.h.b16 %v1042
    %v3990 = vunpack.c.l.b16 %v1043
    %v3991 = vunpack.c.h.b16 %v1043
    %v3992 = vunpack.c.l.b16 %v1044
    %v3993 = vunpack.c.h.b16 %v1044
    %v3994 = vunpack.c.l.b16 %v1045
    %v3995 = vunpack.c.h.b16 %v1045
    %v3996 = vunpack.c.l.b16 %v1046
    %v3997 = vunpack.c.h.b16 %v1046
    %v3998 = vunpack.c.l.b16 %v1047
    %v3999 = vunpack.c.h.b16 %v1047
    %v4000 = vunpack.c.l.b16 %v1048
    %v4001 = vunpack.c.h.b16 %v1048
    %v4002 = vunpack.c.l.b16 %v1049
    %v4003 = vunpack.c.h.b16 %v1049
    %v4004 = vunpack.c.l.b16 %v1050
    %v4005 = vunpack.c.h.b16 %v1050
    %v4006 = vunpack.c.l.b16 %v1051
    %v4007 = vunpack.c.h.b16 %v1051
    %v4008 = vunpack.c.l.b16 %v1052
    %v4009 = vunpack.c.h.b16 %v1052
    %v4010 = vunpack.c.l.b16 %v1053
    %v4011 = vunpack.c.h.b16 %v1053
    %v4012 = vunpack.c.l.b16 %v1054
    %v4013 = vunpack.c.h.b16 %v1054
    %v4014 = vunpack.c.l.b16 %v1055
    %v4015 = vunpack.c.h.b16 %v1055
    %v4016 = vunpack.c.l.b16 %v1056
    %v4017 = vunpack.c.h.b16 %v1056
    %v4018 = vunpack.c.l.b16 %v1057
    %v4019 = vunpack.c.h.b16 %v1057
    %v4020 = vunpack.c.l.b16 %v1058
    %v4021 = vunpack.c.h.b16 %v1058
    %v4022 = vunpack.c.l.b16 %v1059
    %v4023 = vunpack.c.h.b16 %v1059
    %v4024 = vunpack.c.l.b16 %v1060
    %v4025 = vunpack.c.h.b16 %v1060
    %v4026 = vunpack.c.l.b16 %v1061
    %v4027 = vunpack.c.h.b16 %v1061
    %v4028 = vunpack.c.l.b16 %v1062
    %v4029 = vunpack.c.h.b16 %v1062
    %v4030 = vunpack.c.l.b16 %v1063
    %v4031 = vunpack.c.h.b16 %v1063
    %v4032 = vunpack.c.l.b16 %v1064
    %v4033 = vunpack.c.h.b16 %v1064
    %v4034 = vunpack.c.l.b16 %v1065
    %v4035 = vunpack.c.h.b16 %v1065
    %v4036 = vunpack.c.l.b16 %v1066
    %v4037 = vunpack.c.h.b16 %v1066
    %v4038 = vunpack.c.l.b16 %v1067
    %v4039 = vunpack.c.h.b16 %v1067
    %v4040 = vunpack.c.l.b16 %v1068
    %v4041 = vunpack.c.h.b16 %v1068
    %v4042 = vunpack.c.l.b16 %v1069
    %v4043 = vunpack.c.h.b16 %v1069
    %v4044 = vunpack.c.l.b16 %v1070
    %v4045 = vunpack.c.h.b16 %v1070
    %v4046 = vunpack.c.l.b16 %v1071
    %v4047 = vunpack.c.h.b16 %v1071
    %v4048 = vunpack.c.l.b16 %v1072
    %v4049 = vunpack.c.h.b16 %v1072
    %v4050 = vunpack.c.l.b16 %v1073
    %v4051 = vunpack.c.h.b16 %v1073
    %v4052 = vunpack.c.l.b16 %v1074
    %v4053 = vunpack.c.h.b16 %v1074
    %v4054 = vunpack.c.l.b16 %v1075
    %v4055 = vunpack.c.h.b16 %v1075
    %v4056 = vunpack.c.l.b16 %v1076
    %v4057 = vunpack.c.h.b16 %v1076
    %v4058 = vunpack.c.l.b16 %v1077
    %v4059 = vunpack.c.h.b16 %v1077
    %v4060 = vunpack.c.l.b16 %v1078
    %v4061 = vunpack.c.h.b16 %v1078
    %v4062 = vunpack.c.l.b16 %v1079
    %v4063 = vunpack.c.h.b16 %v1079
    %v4064 = vunpack.c.l.b16 %v1080
    %v4065 = vunpack.c.h.b16 %v1080
    %v4066 = vunpack.c.l.b16 %v1081
    %v4067 = vunpack.c.h.b16 %v1081
    %v4068 = vunpack.c.l.b16 %v1082
    %v4069 = vunpack.c.h.b16 %v1082
    %v4070 = vunpack.c.l.b16 %v1083
    %v4071 = vunpack.c.h.b16 %v1083
    %v4072 = vunpack.c.l.b16 %v1084
    %v4073 = vunpack.c.h.b16 %v1084
    %v4074 = vunpack.c.l.b16 %v1085
    %v4075 = vunpack.c.h.b16 %v1085
    %v4076 = vunpack.c.l.b16 %v1086
    %v4077 = vunpack.c.h.b16 %v1086
    %v4078 = vunpack.c.l.b16 %v1087
    %v4079 = vunpack.c.h.b16 %v1087
    %v4080 = vunpack.c.l.b16 %v1088
    %v4081 = vunpack.c.h.b16 %v1088
    %v4082 = vunpack.c.l.b16 %v1089
    %v4083 = vunpack.c.h.b16 %v1089
    %v4084 = vunpack.c.l.b16 %v1090
    %v4085 = vunpack.c.h.b16 %v1090
    %v4086 = vunpack.c.l.b16 %v1091
    %v4087 = vunpack.c.h.b16 %v1091
    %v4088 = vunpack.c.l.b16 %v1092
    %v4089 = vunpack.c.h.b16 %v1092
    %v4090 = vunpack.c.l.b16 %v1093
    %v4091 = vunpack.c.h.b16 %v1093
    %v4092 = vunpack.c.l.b16 %v1094
    %v4093 = vunpack.c.h.b16 %v1094
    %v4094 = vunpack.c.l.b16 %v1095
    %v4095 = vunpack.c.h.b16 %v1095
    %v4096 = vunpack.c.l.b16 %v1096
    %v4097 = vunpack.c.h.b16 %v1096
    %v4098 = vunpack.c.l.b16 %v1097
    %v4099 = vunpack.c.h.b16 %v1097
    %v4100 = vunpack.c.l.b16 %v1098
    %v4101 = vunpack.c.h.b16 %v1098
    %v4102 = vunpack.c.l.b16 %v1099
    %v4103 = vunpack.c.h.b16 %v1099
    %v4104 = vunpack.c.l.b16 %v1100
    %v4105 = vunpack.c.h.b16 %v1100
    %v4106 = vunpack.c.l.b16 %v1101
    %v4107 = vunpack.c.h.b16 %v1101
    %v4108 = vunpack.c.l.b16 %v1102
    %v4109 = vunpack.c.h.b16 %v1102
    %v4110 = vunpack.c.l.b16 %v1103
    %v4111 = vunpack.c.h.b16 %v1103
    %v4112 = vunpack.c.l.b16 %v1104
    %v4113 = vunpack.c.h.b16 %v1104
    %v4114 = vunpack.c.l.b16 %v1105
    %v4115 = vunpack.c.h.b16 %v1105
    %v4116 = vunpack.c.l.b16 %v1106
    %v4117 = vunpack.c.h.b16 %v1106
    %v4118 = vunpack.c.l.b16 %v1107
    %v4119 = vunpack.c.h.b16 %v1107
    %v4120 = vunpack.c.l.b16 %v1108
    %v4121 = vunpack.c.h.b16 %v1108
    %v4122 = vunpack.c.l.b16 %v1109
    %v4123 = vunpack.c.h.b16 %v1109
    %v4124 = vunpack.c.l.b16 %v1110
    %v4125 = vunpack.c.h.b16 %v1110
    %v4126 = vunpack.c.l.b16 %v1111
    %v4127 = vunpack.c.h.b16 %v1111
    %v4128 = vunpack.c.l.b16 %v1112
    %v4129 = vunpack.c.h.b16 %v1112
    %v4130 = vunpack.c.l.b16 %v1113
    %v4131 = vunpack.c.h.b16 %v1113
    %v4132 = vunpack.c.l.b16 %v1114
    %v4133 = vunpack.c.h.b16 %v1114
    %v4134 = vunpack.c.l.b16 %v1115
    %v4135 = vunpack.c.h.b16 %v1115
    %v4136 = vunpack.c.l.b16 %v1116
    %v4137 = vunpack.c.h.b16 %v1116
    %v4138 = vunpack.c.l.b16 %v1117
    %v4139 = vunpack.c.h.b16 %v1117
    %v4140 = vunpack.c.l.b16 %v1118
    %v4141 = vunpack.c.h.b16 %v1118
    %v4142 = vunpack.c.l.b16 %v1119
    %v4143 = vunpack.c.h.b16 %v1119
    %v4144 = vunpack.c.l.b16 %v1120
    %v4145 = vunpack.c.h.b16 %v1120
    %v4146 = vunpack.c.l.b16 %v1121
    %v4147 = vunpack.c.h.b16 %v1121
    %v4148 = vunpack.c.l.b16 %v1122
    %v4149 = vunpack.c.h.b16 %v1122
    %v4150 = vunpack.c.l.b16 %v1123
    %v4151 = vunpack.c.h.b16 %v1123
    %v4152 = vunpack.c.l.b16 %v1124
    %v4153 = vunpack.c.h.b16 %v1124
    %v4154 = vunpack.c.l.b16 %v1125
    %v4155 = vunpack.c.h.b16 %v1125
    %v4156 = vunpack.c.l.b16 %v1126
    %v4157 = vunpack.c.h.b16 %v1126
    %v4158 = vunpack.c.l.b16 %v1127
    %v4159 = vunpack.c.h.b16 %v1127
    %v4160 = vunpack.c.l.b16 %v1128
    %v4161 = vunpack.c.h.b16 %v1128
    %v4162 = vunpack.c.l.b16 %v1129
    %v4163 = vunpack.c.h.b16 %v1129
    %v4164 = vunpack.c.l.b16 %v1130
    %v4165 = vunpack.c.h.b16 %v1130
    %v4166 = vunpack.c.l.b16 %v1131
    %v4167 = vunpack.c.h.b16 %v1131
    %v4168 = vunpack.c.l.b16 %v1132
    %v4169 = vunpack.c.h.b16 %v1132
    %v4170 = vunpack.c.l.b16 %v1133
    %v4171 = vunpack.c.h.b16 %v1133
    %v4172 = vunpack.c.l.b16 %v1134
    %v4173 = vunpack.c.h.b16 %v1134
    %v4174 = vunpack.c.l.b16 %v1135
    %v4175 = vunpack.c.h.b16 %v1135
    %v4176 = vunpack.c.l.b16 %v1136
    %v4177 = vunpack.c.h.b16 %v1136
    %v4178 = vunpack.c.l.b16 %v1137
    %v4179 = vunpack.c.h.b16 %v1137
    %v4180 = vunpack.c.l.b16 %v1138
    %v4181 = vunpack.c.h.b16 %v1138
    %v4182 = vunpack.c.l.b16 %v1139
    %v4183 = vunpack.c.h.b16 %v1139
    %v4184 = vunpack.c.l.b16 %v1140
    %v4185 = vunpack.c.h.b16 %v1140
    %v4186 = vunpack.c.l.b16 %v1141
    %v4187 = vunpack.c.h.b16 %v1141
    %v4188 = vunpack.c.l.b16 %v1142
    %v4189 = vunpack.c.h.b16 %v1142
    %v4190 = vunpack.c.l.b16 %v1143
    %v4191 = vunpack.c.h.b16 %v1143
    %v4192 = vunpack.c.l.b16 %v1144
    %v4193 = vunpack.c.h.b16 %v1144
    %v4194 = vunpack.c.l.b16 %v1145
    %v4195 = vunpack.c.h.b16 %v1145
    %v4196 = vunpack.c.l.b16 %v1146
    %v4197 = vunpack.c.h.b16 %v1146
    %v4198 = vunpack.c.l.b16 %v1147
    %v4199 = vunpack.c.h.b16 %v1147
    %v4200 = vunpack.c.l.b16 %v1148
    %v4201 = vunpack.c.h.b16 %v1148
    %v4202 = vunpack.c.l.b16 %v1149
    %v4203 = vunpack.c.h.b16 %v1149
    %v4204 = vunpack.c.l.b16 %v1150
    %v4205 = vunpack.c.h.b16 %v1150
    %v4206 = vunpack.c.l.b16 %v1151
    %v4207 = vunpack.c.h.b16 %v1151
    %v4208 = vunpack.c.l.b16 %v1152
    %v4209 = vunpack.c.h.b16 %v1152
    %v4210 = vunpack.c.l.b16 %v1153
    %v4211 = vunpack.c.h.b16 %v1153
    %v4212 = vunpack.c.l.b16 %v1154
    %v4213 = vunpack.c.h.b16 %v1154
    %v4214 = vunpack.c.l.b16 %v1155
    %v4215 = vunpack.c.h.b16 %v1155
    %v4216 = vunpack.c.l.b16 %v1156
    %v4217 = vunpack.c.h.b16 %v1156
    %v4218 = vunpack.c.l.b16 %v1157
    %v4219 = vunpack.c.h.b16 %v1157
    %v4220 = vunpack.c.l.b16 %v1158
    %v4221 = vunpack.c.h.b16 %v1158
    %v4222 = vunpack.c.l.b16 %v1159
    %v4223 = vunpack.c.h.b16 %v1159
    %v4224 = vunpack.c.l.b16 %v1160
    %v4225 = vunpack.c.h.b16 %v1160
    %v4226 = vunpack.c.l.b16 %v1161
    %v4227 = vunpack.c.h.b16 %v1161
    %v4228 = vunpack.c.l.b16 %v1162
    %v4229 = vunpack.c.h.b16 %v1162
    %v4230 = vunpack.c.l.b16 %v1163
    %v4231 = vunpack.c.h.b16 %v1163
    %v4232 = vunpack.c.l.b16 %v1164
    %v4233 = vunpack.c.h.b16 %v1164
    %v4234 = vunpack.c.l.b16 %v1165
    %v4235 = vunpack.c.h.b16 %v1165
    %v4236 = vunpack.c.l.b16 %v1166
    %v4237 = vunpack.c.h.b16 %v1166
    %v4238 = vunpack.c.l.b16 %v1167
    %v4239 = vunpack.c.h.b16 %v1167
    %v4240 = vunpack.c.l.b16 %v1168
    %v4241 = vunpack.c.h.b16 %v1168
    %v4242 = vunpack.c.l.b16 %v1169
    %v4243 = vunpack.c.h.b16 %v1169
    %v4244 = vunpack.c.l.b16 %v1170
    %v4245 = vunpack.c.h.b16 %v1170
    %v4246 = vunpack.c.l.b16 %v1171
    %v4247 = vunpack.c.h.b16 %v1171
    %v4248 = vunpack.c.l.b16 %v1172
    %v4249 = vunpack.c.h.b16 %v1172
    %v4250 = vunpack.c.l.b16 %v1173
    %v4251 = vunpack.c.h.b16 %v1173
    %v4252 = vunpack.c.l.b16 %v1174
    %v4253 = vunpack.c.h.b16 %v1174
    %v4254 = vunpack.c.l.b16 %v1175
    %v4255 = vunpack.c.h.b16 %v1175
    %v4256 = vunpack.c.l.b16 %v1176
    %v4257 = vunpack.c.h.b16 %v1176
    %v4258 = vunpack.c.l.b16 %v1177
    %v4259 = vunpack.c.h.b16 %v1177
    %v4260 = vunpack.c.l.b16 %v1178
    %v4261 = vunpack.c.h.b16 %v1178
    %v4262 = vunpack.c.l.b16 %v1179
    %v4263 = vunpack.c.h.b16 %v1179
    %v4264 = vunpack.c.l.b16 %v1180
    %v4265 = vunpack.c.h.b16 %v1180
    %v4266 = vunpack.c.l.b16 %v1181
    %v4267 = vunpack.c.h.b16 %v1181
    %v4268 = vunpack.c.l.b16 %v1182
    %v4269 = vunpack.c.h.b16 %v1182
    %v4270 = vunpack.c.l.b16 %v1183
    %v4271 = vunpack.c.h.b16 %v1183
    %v4272 = vunpack.c.l.b16 %v1184
    %v4273 = vunpack.c.h.b16 %v1184
    %v4274 = vunpack.c.l.b16 %v1185
    %v4275 = vunpack.c.h.b16 %v1185
    %v4276 = vunpack.c.l.b16 %v1186
    %v4277 = vunpack.c.h.b16 %v1186
    %v4278 = vunpack.c.l.b16 %v1187
    %v4279 = vunpack.c.h.b16 %v1187
    %v4280 = vunpack.c.l.b16 %v1188
    %v4281 = vunpack.c.h.b16 %v1188
    %v4282 = vunpack.c.l.b16 %v1189
    %v4283 = vunpack.c.h.b16 %v1189
    %v4284 = vpack.c.b16 %v2240, %v2236
    %v4285 = vpack.c.b16 %v2241, %v2237
    %v4286 = vpack.c.b16 %v2242, %v2238
    %v4287 = vpack.c.b16 %v2243, %v2239
    %v4288 = vpack.c.b16 %v2248, %v2244
    %v4289 = vpack.c.b16 %v2249, %v2245
    %v4290 = vpack.c.b16 %v2250, %v2246
    %v4291 = vpack.c.b16 %v2251, %v2247
    %v4292 = vpack.c.b16 %v2256, %v2252
    %v4293 = vpack.c.b16 %v2257, %v2253
    %v4294 = vpack.c.b16 %v2258, %v2254
    %v4295 = vpack.c.b16 %v2259, %v2255
    %v4296 = vpack.c.b16 %v2264, %v2260
    %v4297 = vpack.c.b16 %v2265, %v2261
    %v4298 = vpack.c.b16 %v2266, %v2262
    %v4299 = vpack.c.b16 %v2267, %v2263
    %v4300 = vpack.c.b16 %v2272, %v2268
    %v4301 = vpack.c.b16 %v2273, %v2269
    %v4302 = vpack.c.b16 %v2274, %v2270
    %v4303 = vpack.c.b16 %v2275, %v2271
    %v4304 = vpack.c.b16 %v2280, %v2276
    %v4305 = vpack.c.b16 %v2281, %v2277
    %v4306 = vpack.c.b16 %v2282, %v2278
    %v4307 = vpack.c.b16 %v2283, %v2279
    %v4308 = vpack.c.b16 %v2288, %v2284
    %v4309 = vpack.c.b16 %v2289, %v2285
    %v4310 = vpack.c.b16 %v2290, %v2286
    %v4311 = vpack.c.b16 %v2291, %v2287
    %v4312 = vpack.c.b16 %v2296, %v2292
    %v4313 = vpack.c.b16 %v2297, %v2293
    %v4314 = vpack.c.b16 %v2298, %v2294
    %v4315 = vpack.c.b16 %v2299, %v2295
    %v4316 = vpack.c.b16 %v2304, %v2300
    %v4317 = vpack.c.b16 %v2305, %v2301
    %v4318 = vpack.c.b16 %v2306, %v2302
    %v4319 = vpack.c.b16 %v2307, %v2303
    %v4320 = vpack.c.b16 %v2312, %v2308
    %v4321 = vpack.c.b16 %v2313, %v2309
    %v4322 = vpack.c.b16 %v2314, %v2310
    %v4323 = vpack.c.b16 %v2315, %v2311
    %v4324 = vpack.c.b16 %v2320, %v2316
    %v4325 = vpack.c.b16 %v2321, %v2317
    %v4326 = vpack.c.b16 %v2322, %v2318
    %v4327 = vpack.c.b16 %v2323, %v2319
    %v4328 = vpack.c.b16 %v2328, %v2324
    %v4329 = vpack.c.b16 %v2329, %v2325
    %v4330 = vpack.c.b16 %v2330, %v2326
    %v4331 = vpack.c.b16 %v2331, %v2327
    %v4332 = vpack.c.b16 %v2336, %v2332
    %v4333 = vpack.c.b16 %v2337, %v2333
    %v4334 = vpack.c.b16 %v2338, %v2334
    %v4335 = vpack.c.b16 %v2339, %v2335
    %v4336 = vpack.c.b16 %v2344, %v2340
    %v4337 = vpack.c.b16 %v2345, %v2341
    %v4338 = vpack.c.b16 %v2346, %v2342
    %v4339 = vpack.c.b16 %v2347, %v2343
    %v4340 = vpack.c.b16 %v2352, %v2348
    %v4341 = vpack.c.b16 %v2353, %v2349
    %v4342 = vpack.c.b16 %v2354, %v2350
    %v4343 = vpack.c.b16 %v2355, %v2351
    %v4344 = vpack.c.b16 %v2360, %v2356
    %v4345 = vpack.c.b16 %v2361, %v2357
    %v4346 = vpack.c.b16 %v2362, %v2358
    %v4347 = vpack.c.b16 %v2363, %v2359
    %v4348 = vpack.c.b16 %v2368, %v2364
    %v4349 = vpack.c.b16 %v2369, %v2365
    %v4350 = vpack.c.b16 %v2370, %v2366
    %v4351 = vpack.c.b16 %v2371, %v2367
    %v4352 = vpack.c.b16 %v2376, %v2372
    %v4353 = vpack.c.b16 %v2377, %v2373
    %v4354 = vpack.c.b16 %v2378, %v2374
    %v4355 = vpack.c.b16 %v2379, %v2375
    %v4356 = vpack.c.b16 %v2384, %v2380
    %v4357 = vpack.c.b16 %v2385, %v2381
    %v4358 = vpack.c.b16 %v2386, %v2382
    %v4359 = vpack.c.b16 %v2387, %v2383
    %v4360 = vpack.c.b16 %v2392, %v2388
    %v4361 = vpack.c.b16 %v2393, %v2389
    %v4362 = vpack.c.b16 %v2394, %v2390
    %v4363 = vpack.c.b16 %v2395, %v2391
    %v4364 = vpack.c.b16 %v2400, %v2396
    %v4365 = vpack.c.b16 %v2401, %v2397
    %v4366 = vpack.c.b16 %v2402, %v2398
    %v4367 = vpack.c.b16 %v2403, %v2399
    %v4368 = vpack.c.b16 %v2408, %v2404
    %v4369 = vpack.c.b16 %v2409, %v2405
    %v4370 = vpack.c.b16 %v2410, %v2406
    %v4371 = vpack.c.b16 %v2411, %v2407
    %v4372 = vpack.c.b16 %v2416, %v2412
    %v4373 = vpack.c.b16 %v2417, %v2413
    %v4374 = vpack.c.b16 %v2418, %v2414
    %v4375 = vpack.c.b16 %v2419, %v2415
    %v4376 = vpack.c.b16 %v2424, %v2420
    %v4377 = vpack.c.b16 %v2425, %v2421
    %v4378 = vpack.c.b16 %v2426, %v2422
    %v4379 = vpack.c.b16 %v2427, %v2423
    %v4380 = vpack.c.b16 %v2432, %v2428
    %v4381 = vpack.c.b16 %v2433, %v2429
    %v4382 = vpack.c.b16 %v2434, %v2430
    %v4383 = vpack.c.b16 %v2435, %v2431
    %v4384 = vpack.c.b16 %v2440, %v2436
    %v4385 = vpack.c.b16 %v2441, %v2437
    %v4386 = vpack.c.b16 %v2442, %v2438
    %v4387 = vpack.c.b16 %v2443, %v2439
    %v4388 = vpack.c.b16 %v2448, %v2444
    %v4389 = vpack.c.b16 %v2449, %v2445
    %v4390 = vpack.c.b16 %v2450, %v2446
    %v4391 = vpack.c.b16 %v2451, %v2447
    %v4392 = vpack.c.b16 %v2456, %v2452
    %v4393 = vpack.c.b16 %v2457, %v2453
    %v4394 = vpack.c.b16 %v2458, %v2454
    %v4395 = vpack.c.b16 %v2459, %v2455
    %v4396 = vpack.c.b16 %v2464, %v2460
    %v4397 = vpack.c.b16 %v2465, %v2461
    %v4398 = vpack.c.b16 %v2466, %v2462
    %v4399 = vpack.c.b16 %v2467, %v2463
    %v4400 = vpack.c.b16 %v2472, %v2468
    %v4401 = vpack.c.b16 %v2473, %v2469
    %v4402 = vpack.c.b16 %v2474, %v2470
    %v4403 = vpack.c.b16 %v2475, %v2471
    %v4404 = vpack.c.b16 %v2480, %v2476
    %v4405 = vpack.c.b16 %v2481, %v2477
    %v4406 = vpack.c.b16 %v2482, %v2478
    %v4407 = vpack.c.b16 %v2483, %v2479
    %v4408 = vpack.c.b16 %v2488, %v2484
    %v4409 = vpack.c.b16 %v2489, %v2485
    %v4410 = vpack.c.b16 %v2490, %v2486
    %v4411 = vpack.c.b16 %v2491, %v2487
    %v4412 = vpack.c.b16 %v2496, %v2492
    %v4413 = vpack.c.b16 %v2497, %v2493
    %v4414 = vpack.c.b16 %v2498, %v2494
    %v4415 = vpack.c.b16 %v2499, %v2495
    %v4416 = vpack.c.b16 %v2504, %v2500
    %v4417 = vpack.c.b16 %v2505, %v2501
    %v4418 = vpack.c.b16 %v2506, %v2502
    %v4419 = vpack.c.b16 %v2507, %v2503
    %v4420 = vpack.c.b16 %v2512, %v2508
    %v4421 = vpack.c.b16 %v2513, %v2509
    %v4422 = vpack.c.b16 %v2514, %v2510
    %v4423 = vpack.c.b16 %v2515, %v2511
    %v4424 = vpack.c.b16 %v2520, %v2516
    %v4425 = vpack.c.b16 %v2521, %v2517
    %v4426 = vpack.c.b16 %v2522, %v2518
    %v4427 = vpack.c.b16 %v2523, %v2519
    %v4428 = vpack.c.b16 %v2528, %v2524
    %v4429 = vpack.c.b16 %v2529, %v2525
    %v4430 = vpack.c.b16 %v2530, %v2526
    %v4431 = vpack.c.b16 %v2531, %v2527
    %v4432 = vpack.c.b16 %v2536, %v2532
    %v4433 = vpack.c.b16 %v2537, %v2533
    %v4434 = vpack.c.b16 %v2538, %v2534
    %v4435 = vpack.c.b16 %v2539, %v2535
    %v4436 = vpack.c.b16 %v2544, %v2540
    %v4437 = vpack.c.b16 %v2545, %v2541
    %v4438 = vpack.c.b16 %v2546, %v2542
    %v4439 = vpack.c.b16 %v2547, %v2543
    %v4440 = vpack.c.b16 %v2552, %v2548
    %v4441 = vpack.c.b16 %v2553, %v2549
    %v4442 = vpack.c.b16 %v2554, %v2550
    %v4443 = vpack.c.b16 %v2555, %v2551
    %v4444 = vpack.c.b16 %v2560, %v2556
    %v4445 = vpack.c.b16 %v2561, %v2557
    %v4446 = vpack.c.b16 %v2562, %v2558
    %v4447 = vpack.c.b16 %v2563, %v2559
    %v4448 = vpack.c.b16 %v2568, %v2564
    %v4449 = vpack.c.b16 %v2569, %v2565
    %v4450 = vpack.c.b16 %v2570, %v2566
    %v4451 = vpack.c.b16 %v2571, %v2567
    %v4452 = vpack.c.b16 %v2576, %v2572
    %v4453 = vpack.c.b16 %v2577, %v2573
    %v4454 = vpack.c.b16 %v2578, %v2574
    %v4455 = vpack.c.b16 %v2579, %v2575
    %v4456 = vpack.c.b16 %v2584, %v2580
    %v4457 = vpack.c.b16 %v2585, %v2581
    %v4458 = vpack.c.b16 %v2586, %v2582
    %v4459 = vpack.c.b16 %v2587, %v2583
    %v4460 = vpack.c.b16 %v2592, %v2588
    %v4461 = vpack.c.b16 %v2593, %v2589
    %v4462 = vpack.c.b16 %v2594, %v2590
    %v4463 = vpack.c.b16 %v2595, %v2591
    %v4464 = vpack.c.b16 %v2600, %v2596
    %v4465 = vpack.c.b16 %v2601, %v2597
    %v4466 = vpack.c.b16 %v2602, %v2598
    %v4467 = vpack.c.b16 %v2603, %v2599
    %v4468 = vpack.c.b16 %v2608, %v2604
    %v4469 = vpack.c.b16 %v2609, %v2605
    %v4470 = vpack.c.b16 %v2610, %v2606
    %v4471 = vpack.c.b16 %v2611, %v2607
    %v4472 = vpack.c.b16 %v2616, %v2612
    %v4473 = vpack.c.b16 %v2617, %v2613
    %v4474 = vpack.c.b16 %v2618, %v2614
    %v4475 = vpack.c.b16 %v2619, %v2615
    %v4476 = vpack.c.b16 %v2624, %v2620
    %v4477 = vpack.c.b16 %v2625, %v2621
    %v4478 = vpack.c.b16 %v2626, %v2622
    %v4479 = vpack.c.b16 %v2627, %v2623
    %v4480 = vpack.c.b16 %v2632, %v2628
    %v4481 = vpack.c.b16 %v2633, %v2629
    %v4482 = vpack.c.b16 %v2634, %v2630
    %v4483 = vpack.c.b16 %v2635, %v2631
    %v4484 = vpack.c.b16 %v2640, %v2636
    %v4485 = vpack.c.b16 %v2641, %v2637
    %v4486 = vpack.c.b16 %v2642, %v2638
    %v4487 = vpack.c.b16 %v2643, %v2639
    %v4488 = vpack.c.b16 %v2648, %v2644
    %v4489 = vpack.c.b16 %v2649, %v2645
    %v4490 = vpack.c.b16 %v2650, %v2646
    %v4491 = vpack.c.b16 %v2651, %v2647
    %v4492 = vpack.c.b16 %v2656, %v2652
    %v4493 = vpack.c.b16 %v2657, %v2653
    %v4494 = vpack.c.b16 %v2658, %v2654
    %v4495 = vpack.c.b16 %v2659, %v2655
    %v4496 = vpack.c.b16 %v2664, %v2660
    %v4497 = vpack.c.b16 %v2665, %v2661
    %v4498 = vpack.c.b16 %v2666, %v2662
    %v4499 = vpack.c.b16 %v2667, %v2663
    %v4500 = vpack.c.b16 %v2672, %v2668
    %v4501 = vpack.c.b16 %v2673, %v2669
    %v4502 = vpack.c.b16 %v2674, %v2670
    %v4503 = vpack.c.b16 %v2675, %v2671
    %v4504 = vpack.c.b16 %v2680, %v2676
    %v4505 = vpack.c.b16 %v2681, %v2677
    %v4506 = vpack.c.b16 %v2682, %v2678
    %v4507 = vpack.c.b16 %v2683, %v2679
    %v4508 = vpack.c.b16 %v2688, %v2684
    %v4509 = vpack.c.b16 %v2689, %v2685
    %v4510 = vpack.c.b16 %v2690, %v2686
    %v4511 = vpack.c.b16 %v2691, %v2687
    %v4512 = vpack.c.b16 %v2696, %v2692
    %v4513 = vpack.c.b16 %v2697, %v2693
    %v4514 = vpack.c.b16 %v2698, %v2694
    %v4515 = vpack.c.b16 %v2699, %v2695
    %v4516 = vpack.c.b16 %v2704, %v2700
    %v4517 = vpack.c.b16 %v2705, %v2701
    %v4518 = vpack.c.b16 %v2706, %v2702
    %v4519 = vpack.c.b16 %v2707, %v2703
    %v4520 = vpack.c.b16 %v2712, %v2708
    %v4521 = vpack.c.b16 %v2713, %v2709
    %v4522 = vpack.c.b16 %v2714, %v2710
    %v4523 = vpack.c.b16 %v2715, %v2711
    %v4524 = vpack.c.b16 %v2720, %v2716
    %v4525 = vpack.c.b16 %v2721, %v2717
    %v4526 = vpack.c.b16 %v2722, %v2718
    %v4527 = vpack.c.b16 %v2723, %v2719
    %v4528 = vpack.c.b16 %v2728, %v2724
    %v4529 = vpack.c.b16 %v2729, %v2725
    %v4530 = vpack.c.b16 %v2730, %v2726
    %v4531 = vpack.c.b16 %v2731, %v2727
    %v4532 = vpack.c.b16 %v2736, %v2732
    %v4533 = vpack.c.b16 %v2737, %v2733
    %v4534 = vpack.c.b16 %v2738, %v2734
    %v4535 = vpack.c.b16 %v2739, %v2735
    %v4536 = vpack.c.b16 %v2744, %v2740
    %v4537 = vpack.c.b16 %v2745, %v2741
    %v4538 = vpack.c.b16 %v2746, %v2742
    %v4539 = vpack.c.b16 %v2747, %v2743
    %v4540 = vpack.c.b16 %v2752, %v2748
    %v4541 = vpack.c.b16 %v2753, %v2749
    %v4542 = vpack.c.b16 %v2754, %v2750
    %v4543 = vpack.c.b16 %v2755, %v2751
    %v4544 = vpack.c.b16 %v2760, %v2756
    %v4545 = vpack.c.b16 %v2761, %v2757
    %v4546 = vpack.c.b16 %v2762, %v2758
    %v4547 = vpack.c.b16 %v2763, %v2759
    %v4548 = vpack.c.b16 %v2768, %v2764
    %v4549 = vpack.c.b16 %v2769, %v2765
    %v4550 = vpack.c.b16 %v2770, %v2766
    %v4551 = vpack.c.b16 %v2771, %v2767
    %v4552 = vpack.c.b16 %v2776, %v2772
    %v4553 = vpack.c.b16 %v2777, %v2773
    %v4554 = vpack.c.b16 %v2778, %v2774
    %v4555 = vpack.c.b16 %v2779, %v2775
    %v4556 = vpack.c.b16 %v2784, %v2780
    %v4557 = vpack.c.b16 %v2785, %v2781
    %v4558 = vpack.c.b16 %v2786, %v2782
    %v4559 = vpack.c.b16 %v2787, %v2783
    %v4560 = vpack.c.b16 %v2792, %v2788
    %v4561 = vpack.c.b16 %v2793, %v2789
    %v4562 = vpack.c.b16 %v2794, %v2790
    %v4563 = vpack.c.b16 %v2795, %v2791
    %v4564 = vpack.c.b16 %v2800, %v2796
    %v4565 = vpack.c.b16 %v2801, %v2797
    %v4566 = vpack.c.b16 %v2802, %v2798
    %v4567 = vpack.c.b16 %v2803, %v2799
    %v4568 = vpack.c.b16 %v2808, %v2804
    %v4569 = vpack.c.b16 %v2809, %v2805
    %v4570 = vpack.c.b16 %v2810, %v2806
    %v4571 = vpack.c.b16 %v2811, %v2807
    %v4572 = vpack.c.b16 %v2816, %v2812
    %v4573 = vpack.c.b16 %v2817, %v2813
    %v4574 = vpack.c.b16 %v2818, %v2814
    %v4575 = vpack.c.b16 %v2819, %v2815
    %v4576 = vpack.c.b16 %v2824, %v2820
    %v4577 = vpack.c.b16 %v2825, %v2821
    %v4578 = vpack.c.b16 %v2826, %v2822
    %v4579 = vpack.c.b16 %v2827, %v2823
    %v4580 = vpack.c.b16 %v2832, %v2828
    %v4581 = vpack.c.b16 %v2833, %v2829
    %v4582 = vpack.c.b16 %v2834, %v2830
    %v4583 = vpack.c.b16 %v2835, %v2831
    %v4584 = vpack.c.b16 %v2840, %v2836
    %v4585 = vpack.c.b16 %v2841, %v2837
    %v4586 = vpack.c.b16 %v2842, %v2838
    %v4587 = vpack.c.b16 %v2843, %v2839
    %v4588 = vpack.c.b16 %v2848, %v2844
    %v4589 = vpack.c.b16 %v2849, %v2845
    %v4590 = vpack.c.b16 %v2850, %v2846
    %v4591 = vpack.c.b16 %v2851, %v2847
    %v4592 = vpack.c.b16 %v2856, %v2852
    %v4593 = vpack.c.b16 %v2857, %v2853
    %v4594 = vpack.c.b16 %v2858, %v2854
    %v4595 = vpack.c.b16 %v2859, %v2855
    %v4596 = vpack.c.b16 %v2864, %v2860
    %v4597 = vpack.c.b16 %v2865, %v2861
    %v4598 = vpack.c.b16 %v2866, %v2862
    %v4599 = vpack.c.b16 %v2867, %v2863
    %v4600 = vpack.c.b16 %v2872, %v2868
    %v4601 = vpack.c.b16 %v2873, %v2869
    %v4602 = vpack.c.b16 %v2874, %v2870
    %v4603 = vpack.c.b16 %v2875, %v2871
    %v4604 = vpack.c.b16 %v2880, %v2876
    %v4605 = vpack.c.b16 %v2881, %v2877
    %v4606 = vpack.c.b16 %v2882, %v2878
    %v4607 = vpack.c.b16 %v2883, %v2879
    %v4608 = vpack.c.b16 %v2888, %v2884
    %v4609 = vpack.c.b16 %v2889, %v2885
    %v4610 = vpack.c.b16 %v2890, %v2886
    %v4611 = vpack.c.b16 %v2891, %v2887
    %v4612 = vpack.c.b16 %v2896, %v2892
    %v4613 = vpack.c.b16 %v2897, %v2893
    %v4614 = vpack.c.b16 %v2898, %v2894
    %v4615 = vpack.c.b16 %v2899, %v2895
    %v4616 = vpack.c.b16 %v2904, %v2900
    %v4617 = vpack.c.b16 %v2905, %v2901
    %v4618 = vpack.c.b16 %v2906, %v2902
    %v4619 = vpack.c.b16 %v2907, %v2903
    %v4620 = vpack.c.b16 %v2912, %v2908
    %v4621 = vpack.c.b16 %v2913, %v2909
    %v4622 = vpack.c.b16 %v2914, %v2910
    %v4623 = vpack.c.b16 %v2915, %v2911
    %v4624 = vpack.c.b16 %v2920, %v2916
    %v4625 = vpack.c.b16 %v2921, %v2917
    %v4626 = vpack.c.b16 %v2922, %v2918
    %v4627 = vpack.c.b16 %v2923, %v2919
    %v4628 = vpack.c.b16 %v2928, %v2924
    %v4629 = vpack.c.b16 %v2929, %v2925
    %v4630 = vpack.c.b16 %v2930, %v2926
    %v4631 = vpack.c.b16 %v2931, %v2927
    %v4632 = vpack.c.b16 %v2936, %v2932
    %v4633 = vpack.c.b16 %v2937, %v2933
    %v4634 = vpack.c.b16 %v2938, %v2934
    %v4635 = vpack.c.b16 %v2939, %v2935
    %v4636 = vpack.c.b16 %v2944, %v2940
    %v4637 = vpack.c.b16 %v2945, %v2941
    %v4638 = vpack.c.b16 %v2946, %v2942
    %v4639 = vpack.c.b16 %v2947, %v2943
    %v4640 = vpack.c.b16 %v2952, %v2948
    %v4641 = vpack.c.b16 %v2953, %v2949
    %v4642 = vpack.c.b16 %v2954, %v2950
    %v4643 = vpack.c.b16 %v2955, %v2951
    %v4644 = vpack.c.b16 %v2960, %v2956
    %v4645 = vpack.c.b16 %v2961, %v2957
    %v4646 = vpack.c.b16 %v2962, %v2958
    %v4647 = vpack.c.b16 %v2963, %v2959
    %v4648 = vpack.c.b16 %v2968, %v2964
    %v4649 = vpack.c.b16 %v2969, %v2965
    %v4650 = vpack.c.b16 %v2970, %v2966
    %v4651 = vpack.c.b16 %v2971, %v2967
    %v4652 = vpack.c.b16 %v2976, %v2972
    %v4653 = vpack.c.b16 %v2977, %v2973
    %v4654 = vpack.c.b16 %v2978, %v2974
    %v4655 = vpack.c.b16 %v2979, %v2975
    %v4656 = vpack.c.b16 %v2984, %v2980
    %v4657 = vpack.c.b16 %v2985, %v2981
    %v4658 = vpack.c.b16 %v2986, %v2982
    %v4659 = vpack.c.b16 %v2987, %v2983
    %v4660 = vpack.c.b16 %v2992, %v2988
    %v4661 = vpack.c.b16 %v2993, %v2989
    %v4662 = vpack.c.b16 %v2994, %v2990
    %v4663 = vpack.c.b16 %v2995, %v2991
    %v4664 = vpack.c.b16 %v3000, %v2996
    %v4665 = vpack.c.b16 %v3001, %v2997
    %v4666 = vpack.c.b16 %v3002, %v2998
    %v4667 = vpack.c.b16 %v3003, %v2999
    %v4668 = vpack.c.b16 %v3008, %v3004
    %v4669 = vpack.c.b16 %v3009, %v3005
    %v4670 = vpack.c.b16 %v3010, %v3006
    %v4671 = vpack.c.b16 %v3011, %v3007
    %v4672 = vpack.c.b16 %v3016, %v3012
    %v4673 = vpack.c.b16 %v3017, %v3013
    %v4674 = vpack.c.b16 %v3018, %v3014
    %v4675 = vpack.c.b16 %v3019, %v3015
    %v4676 = vpack.c.b16 %v3024, %v3020
    %v4677 = vpack.c.b16 %v3025, %v3021
    %v4678 = vpack.c.b16 %v3026, %v3022
    %v4679 = vpack.c.b16 %v3027, %v3023
    %v4680 = vpack.c.b16 %v3032, %v3028
    %v4681 = vpack.c.b16 %v3033, %v3029
    %v4682 = vpack.c.b16 %v3034, %v3030
    %v4683 = vpack.c.b16 %v3035, %v3031
    %v4684 = vpack.c.b16 %v3040, %v3036
    %v4685 = vpack.c.b16 %v3041, %v3037
    %v4686 = vpack.c.b16 %v3042, %v3038
    %v4687 = vpack.c.b16 %v3043, %v3039
    %v4688 = vpack.c.b16 %v3048, %v3044
    %v4689 = vpack.c.b16 %v3049, %v3045
    %v4690 = vpack.c.b16 %v3050, %v3046
    %v4691 = vpack.c.b16 %v3051, %v3047
    %v4692 = vpack.c.b16 %v3056, %v3052
    %v4693 = vpack.c.b16 %v3057, %v3053
    %v4694 = vpack.c.b16 %v3058, %v3054
    %v4695 = vpack.c.b16 %v3059, %v3055
    %v4696 = vpack.c.b16 %v3064, %v3060
    %v4697 = vpack.c.b16 %v3065, %v3061
    %v4698 = vpack.c.b16 %v3066, %v3062
    %v4699 = vpack.c.b16 %v3067, %v3063
    %v4700 = vpack.c.b16 %v3072, %v3068
    %v4701 = vpack.c.b16 %v3073, %v3069
    %v4702 = vpack.c.b16 %v3074, %v3070
    %v4703 = vpack.c.b16 %v3075, %v3071
    %v4704 = vpack.c.b16 %v3080, %v3076
    %v4705 = vpack.c.b16 %v3081, %v3077
    %v4706 = vpack.c.b16 %v3082, %v3078
    %v4707 = vpack.c.b16 %v3083, %v3079
    %v4708 = vpack.c.b16 %v3088, %v3084
    %v4709 = vpack.c.b16 %v3089, %v3085
    %v4710 = vpack.c.b16 %v3090, %v3086
    %v4711 = vpack.c.b16 %v3091, %v3087
    %v4712 = vpack.c.b16 %v3096, %v3092
    %v4713 = vpack.c.b16 %v3097, %v3093
    %v4714 = vpack.c.b16 %v3098, %v3094
    %v4715 = vpack.c.b16 %v3099, %v3095
    %v4716 = vpack.c.b16 %v3104, %v3100
    %v4717 = vpack.c.b16 %v3105, %v3101
    %v4718 = vpack.c.b16 %v3106, %v3102
    %v4719 = vpack.c.b16 %v3107, %v3103
    %v4720 = vpack.c.b16 %v3112, %v3108
    %v4721 = vpack.c.b16 %v3113, %v3109
    %v4722 = vpack.c.b16 %v3114, %v3110
    %v4723 = vpack.c.b16 %v3115, %v3111
    %v4724 = vpack.c.b16 %v3120, %v3116
    %v4725 = vpack.c.b16 %v3121, %v3117
    %v4726 = vpack.c.b16 %v3122, %v3118
    %v4727 = vpack.c.b16 %v3123, %v3119
    %v4728 = vpack.c.b16 %v3128, %v3124
    %v4729 = vpack.c.b16 %v3129, %v3125
    %v4730 = vpack.c.b16 %v3130, %v3126
    %v4731 = vpack.c.b16 %v3131, %v3127
    %v4732 = vpack.c.b16 %v3136, %v3132
    %v4733 = vpack.c.b16 %v3137, %v3133
    %v4734 = vpack.c.b16 %v3138, %v3134
    %v4735 = vpack.c.b16 %v3139, %v3135
    %v4736 = vpack.c.b16 %v3144, %v3140
    %v4737 = vpack.c.b16 %v3145, %v3141
    %v4738 = vpack.c.b16 %v3146, %v3142
    %v4739 = vpack.c.b16 %v3147, %v3143
    %v4740 = vpack.c.b16 %v3152, %v3148
    %v4741 = vpack.c.b16 %v3153, %v3149
    %v4742 = vpack.c.b16 %v3154, %v3150
    %v4743 = vpack.c.b16 %v3155, %v3151
    %v4744 = vpack.c.b16 %v3160, %v3156
    %v4745 = vpack.c.b16 %v3161, %v3157
    %v4746 = vpack.c.b16 %v3162, %v3158
    %v4747 = vpack.c.b16 %v3163, %v3159
    %v4748 = vpack.c.b16 %v3168, %v3164
    %v4749 = vpack.c.b16 %v3169, %v3165
    %v4750 = vpack.c.b16 %v3170, %v3166
    %v4751 = vpack.c.b16 %v3171, %v3167
    %v4752 = vpack.c.b16 %v3176, %v3172
    %v4753 = vpack.c.b16 %v3177, %v3173
    %v4754 = vpack.c.b16 %v3178, %v3174
    %v4755 = vpack.c.b16 %v3179, %v3175
    %v4756 = vpack.c.b16 %v3184, %v3180
    %v4757 = vpack.c.b16 %v3185, %v3181
    %v4758 = vpack.c.b16 %v3186, %v3182
    %v4759 = vpack.c.b16 %v3187, %v3183
    %v4760 = vpack.c.b16 %v3192, %v3188
    %v4761 = vpack.c.b16 %v3193, %v3189
    %v4762 = vpack.c.b16 %v3194, %v3190
    %v4763 = vpack.c.b16 %v3195, %v3191
    %v4764 = vpack.c.b16 %v3200, %v3196
    %v4765 = vpack.c.b16 %v3201, %v3197
    %v4766 = vpack.c.b16 %v3202, %v3198
    %v4767 = vpack.c.b16 %v3203, %v3199
    %v4768 = vpack.c.b16 %v3208, %v3204
    %v4769 = vpack.c.b16 %v3209, %v3205
    %v4770 = vpack.c.b16 %v3210, %v3206
    %v4771 = vpack.c.b16 %v3211, %v3207
    %v4772 = vpack.c.b16 %v3216, %v3212
    %v4773 = vpack.c.b16 %v3217, %v3213
    %v4774 = vpack.c.b16 %v3218, %v3214
    %v4775 = vpack.c.b16 %v3219, %v3215
    %v4776 = vpack.c.b16 %v3224, %v3220
    %v4777 = vpack.c.b16 %v3225, %v3221
    %v4778 = vpack.c.b16 %v3226, %v3222
    %v4779 = vpack.c.b16 %v3227, %v3223
    %v4780 = vpack.c.b16 %v3232, %v3228
    %v4781 = vpack.c.b16 %v3233, %v3229
    %v4782 = vpack.c.b16 %v3234, %v3230
    %v4783 = vpack.c.b16 %v3235, %v3231
    %v4784 = vpack.c.b16 %v3240, %v3236
    %v4785 = vpack.c.b16 %v3241, %v3237
    %v4786 = vpack.c.b16 %v3242, %v3238
    %v4787 = vpack.c.b16 %v3243, %v3239
    %v4788 = vpack.c.b16 %v3248, %v3244
    %v4789 = vpack.c.b16 %v3249, %v3245
    %v4790 = vpack.c.b16 %v3250, %v3246
    %v4791 = vpack.c.b16 %v3251, %v3247
    %v4792 = vpack.c.b16 %v3256, %v3252
    %v4793 = vpack.c.b16 %v3257, %v3253
    %v4794 = vpack.c.b16 %v3258, %v3254
    %v4795 = vpack.c.b16 %v3259, %v3255
    %v4796 = vpack.c.b16 %v3264, %v3260
    %v4797 = vpack.c.b16 %v3265, %v3261
    %v4798 = vpack.c.b16 %v3266, %v3262
    %v4799 = vpack.c.b16 %v3267, %v3263
    %v4800 = vpack.c.b16 %v3272, %v3268
    %v4801 = vpack.c.b16 %v3273, %v3269
    %v4802 = vpack.c.b16 %v3274, %v3270
    %v4803 = vpack.c.b16 %v3275, %v3271
    %v4804 = vpack.c.b16 %v3280, %v3276
    %v4805 = vpack.c.b16 %v3281, %v3277
    %v4806 = vpack.c.b16 %v3282, %v3278
    %v4807 = vpack.c.b16 %v3283, %v3279
    %v4808 = vpack.c.b16 %v3288, %v3284
    %v4809 = vpack.c.b16 %v3289, %v3285
    %v4810 = vpack.c.b16 %v3290, %v3286
    %v4811 = vpack.c.b16 %v3291, %v3287
    %v4812 = vpack.c.b16 %v3296, %v3292
    %v4813 = vpack.c.b16 %v3297, %v3293
    %v4814 = vpack.c.b16 %v3298, %v3294
    %v4815 = vpack.c.b16 %v3299, %v3295
    %v4816 = vpack.c.b16 %v3304, %v3300
    %v4817 = vpack.c.b16 %v3305, %v3301
    %v4818 = vpack.c.b16 %v3306, %v3302
    %v4819 = vpack.c.b16 %v3307, %v3303
    %v4820 = vpack.c.b16 %v3312, %v3308
    %v4821 = vpack.c.b16 %v3313, %v3309
    %v4822 = vpack.c.b16 %v3314, %v3310
    %v4823 = vpack.c.b16 %v3315, %v3311
    %v4824 = vpack.c.b16 %v3320, %v3316
    %v4825 = vpack.c.b16 %v3321, %v3317
    %v4826 = vpack.c.b16 %v3322, %v3318
    %v4827 = vpack.c.b16 %v3323, %v3319
    %v4828 = vpack.c.b16 %v3328, %v3324
    %v4829 = vpack.c.b16 %v3329, %v3325
    %v4830 = vpack.c.b16 %v3330, %v3326
    %v4831 = vpack.c.b16 %v3331, %v3327
    %v4832 = vpack.c.b16 %v3336, %v3332
    %v4833 = vpack.c.b16 %v3337, %v3333
    %v4834 = vpack.c.b16 %v3338, %v3334
    %v4835 = vpack.c.b16 %v3339, %v3335
    %v4836 = vpack.c.b16 %v3344, %v3340
    %v4837 = vpack.c.b16 %v3345, %v3341
    %v4838 = vpack.c.b16 %v3346, %v3342
    %v4839 = vpack.c.b16 %v3347, %v3343
    %v4840 = vpack.c.b16 %v3352, %v3348
    %v4841 = vpack.c.b16 %v3353, %v3349
    %v4842 = vpack.c.b16 %v3354, %v3350
    %v4843 = vpack.c.b16 %v3355, %v3351
    %v4844 = vpack.c.b16 %v3360, %v3356
    %v4845 = vpack.c.b16 %v3361, %v3357
    %v4846 = vpack.c.b16 %v3362, %v3358
    %v4847 = vpack.c.b16 %v3363, %v3359
    %v4848 = vpack.c.b16 %v3368, %v3364
    %v4849 = vpack.c.b16 %v3369, %v3365
    %v4850 = vpack.c.b16 %v3370, %v3366
    %v4851 = vpack.c.b16 %v3371, %v3367
    %v4852 = vpack.c.b16 %v3376, %v3372
    %v4853 = vpack.c.b16 %v3377, %v3373
    %v4854 = vpack.c.b16 %v3378, %v3374
    %v4855 = vpack.c.b16 %v3379, %v3375
    %v4856 = vpack.c.b16 %v3384, %v3380
    %v4857 = vpack.c.b16 %v3385, %v3381
    %v4858 = vpack.c.b16 %v3386, %v3382
    %v4859 = vpack.c.b16 %v3387, %v3383
    %v4860 = vpack.c.b16 %v3392, %v3388
    %v4861 = vpack.c.b16 %v3393, %v3389
    %v4862 = vpack.c.b16 %v3394, %v3390
    %v4863 = vpack.c.b16 %v3395, %v3391
    %v4864 = vpack.c.b16 %v3400, %v3396
    %v4865 = vpack.c.b16 %v3401, %v3397
    %v4866 = vpack.c.b16 %v3402, %v3398
    %v4867 = vpack.c.b16 %v3403, %v3399
    %v4868 = vpack.c.b16 %v3408, %v3404
    %v4869 = vpack.c.b16 %v3409, %v3405
    %v4870 = vpack.c.b16 %v3410, %v3406
    %v4871 = vpack.c.b16 %v3411, %v3407
    %v4872 = vpack.c.b16 %v3416, %v3412
    %v4873 = vpack.c.b16 %v3417, %v3413
    %v4874 = vpack.c.b16 %v3418, %v3414
    %v4875 = vpack.c.b16 %v3419, %v3415
    %v4876 = vpack.c.b16 %v3424, %v3420
    %v4877 = vpack.c.b16 %v3425, %v3421
    %v4878 = vpack.c.b16 %v3426, %v3422
    %v4879 = vpack.c.b16 %v3427, %v3423
    %v4880 = vpack.c.b16 %v3432, %v3428
    %v4881 = vpack.c.b16 %v3433, %v3429
    %v4882 = vpack.c.b16 %v3434, %v3430
    %v4883 = vpack.c.b16 %v3435, %v3431
    %v4884 = vpack.c.b16 %v3440, %v3436
    %v4885 = vpack.c.b16 %v3441, %v3437
    %v4886 = vpack.c.b16 %v3442, %v3438
    %v4887 = vpack.c.b16 %v3443, %v3439
    %v4888 = vpack.c.b16 %v3448, %v3444
    %v4889 = vpack.c.b16 %v3449, %v3445
    %v4890 = vpack.c.b16 %v3450, %v3446
    %v4891 = vpack.c.b16 %v3451, %v3447
    %v4892 = vpack.c.b16 %v3456, %v3452
    %v4893 = vpack.c.b16 %v3457, %v3453
    %v4894 = vpack.c.b16 %v3458, %v3454
    %v4895 = vpack.c.b16 %v3459, %v3455
    %v4896 = vpack.c.b16 %v3464, %v3460
    %v4897 = vpack.c.b16 %v3465, %v3461
    %v4898 = vpack.c.b16 %v3466, %v3462
    %v4899 = vpack.c.b16 %v3467, %v3463
    %v4900 = vpack.c.b16 %v3472, %v3468
    %v4901 = vpack.c.b16 %v3473, %v3469
    %v4902 = vpack.c.b16 %v3474, %v3470
    %v4903 = vpack.c.b16 %v3475, %v3471
    %v4904 = vpack.c.b16 %v3480, %v3476
    %v4905 = vpack.c.b16 %v3481, %v3477
    %v4906 = vpack.c.b16 %v3482, %v3478
    %v4907 = vpack.c.b16 %v3483, %v3479
    %v4908 = vpack.c.b16 %v3488, %v3484
    %v4909 = vpack.c.b16 %v3489, %v3485
    %v4910 = vpack.c.b16 %v3490, %v3486
    %v4911 = vpack.c.b16 %v3491, %v3487
    %v4912 = vpack.c.b16 %v3496, %v3492
    %v4913 = vpack.c.b16 %v3497, %v3493
    %v4914 = vpack.c.b16 %v3498, %v3494
    %v4915 = vpack.c.b16 %v3499, %v3495
    %v4916 = vpack.c.b16 %v3504, %v3500
    %v4917 = vpack.c.b16 %v3505, %v3501
    %v4918 = vpack.c.b16 %v3506, %v3502
    %v4919 = vpack.c.b16 %v3507, %v3503
    %v4920 = vpack.c.b16 %v3512, %v3508
    %v4921 = vpack.c.b16 %v3513, %v3509
    %v4922 = vpack.c.b16 %v3514, %v3510
    %v4923 = vpack.c.b16 %v3515, %v3511
    %v4924 = vpack.c.b16 %v3520, %v3516
    %v4925 = vpack.c.b16 %v3521, %v3517
    %v4926 = vpack.c.b16 %v3522, %v3518
    %v4927 = vpack.c.b16 %v3523, %v3519
    %v4928 = vpack.c.b16 %v3528, %v3524
    %v4929 = vpack.c.b16 %v3529, %v3525
    %v4930 = vpack.c.b16 %v3530, %v3526
    %v4931 = vpack.c.b16 %v3531, %v3527
    %v4932 = vpack.c.b16 %v3536, %v3532
    %v4933 = vpack.c.b16 %v3537, %v3533
    %v4934 = vpack.c.b16 %v3538, %v3534
    %v4935 = vpack.c.b16 %v3539, %v3535
    %v4936 = vpack.c.b16 %v3544, %v3540
    %v4937 = vpack.c.b16 %v3545, %v3541
    %v4938 = vpack.c.b16 %v3546, %v3542
    %v4939 = vpack.c.b16 %v3547, %v3543
    %v4940 = vpack.c.b16 %v3552, %v3548
    %v4941 = vpack.c.b16 %v3553, %v3549
    %v4942 = vpack.c.b16 %v3554, %v3550
    %v4943 = vpack.c.b16 %v3555, %v3551
    %v4944 = vpack.c.b16 %v3560, %v3556
    %v4945 = vpack.c.b16 %v3561, %v3557
    %v4946 = vpack.c.b16 %v3562, %v3558
    %v4947 = vpack.c.b16 %v3563, %v3559
    %v4948 = vpack.c.b16 %v3568, %v3564
    %v4949 = vpack.c.b16 %v3569, %v3565
    %v4950 = vpack.c.b16 %v3570, %v3566
    %v4951 = vpack.c.b16 %v3571, %v3567
    %v4952 = vpack.c.b16 %v3576, %v3572
    %v4953 = vpack.c.b16 %v3577, %v3573
    %v4954 = vpack.c.b16 %v3578, %v3574
    %v4955 = vpack.c.b16 %v3579, %v3575
    %v4956 = vpack.c.b16 %v3584, %v3580
    %v4957 = vpack.c.b16 %v3585, %v3581
    %v4958 = vpack.c.b16 %v3586, %v3582
    %v4959 = vpack.c.b16 %v3587, %v3583
    %v4960 = vpack.c.b16 %v3592, %v3588
    %v4961 = vpack.c.b16 %v3593, %v3589
    %v4962 = vpack.c.b16 %v3594, %v3590
    %v4963 = vpack.c.b16 %v3595, %v3591
    %v4964 = vpack.c.b16 %v3600, %v3596
    %v4965 = vpack.c.b16 %v3601, %v3597
    %v4966 = vpack.c.b16 %v3602, %v3598
    %v4967 = vpack.c.b16 %v3603, %v3599
    %v4968 = vpack.c.b16 %v3608, %v3604
    %v4969 = vpack.c.b16 %v3609, %v3605
    %v4970 = vpack.c.b16 %v3610, %v3606
    %v4971 = vpack.c.b16 %v3611, %v3607
    %v4972 = vpack.c.b16 %v3616, %v3612
    %v4973 = vpack.c.b16 %v3617, %v3613
    %v4974 = vpack.c.b16 %v3618, %v3614
    %v4975 = vpack.c.b16 %v3619, %v3615
    %v4976 = vpack.c.b16 %v3624, %v3620
    %v4977 = vpack.c.b16 %v3625, %v3621
    %v4978 = vpack.c.b16 %v3626, %v3622
    %v4979 = vpack.c.b16 %v3627, %v3623
    %v4980 = vpack.c.b16 %v3632, %v3628
    %v4981 = vpack.c.b16 %v3633, %v3629
    %v4982 = vpack.c.b16 %v3634, %v3630
    %v4983 = vpack.c.b16 %v3635, %v3631
    %v4984 = vpack.c.b16 %v3640, %v3636
    %v4985 = vpack.c.b16 %v3641, %v3637
    %v4986 = vpack.c.b16 %v3642, %v3638
    %v4987 = vpack.c.b16 %v3643, %v3639
    %v4988 = vpack.c.b16 %v3648, %v3644
    %v4989 = vpack.c.b16 %v3649, %v3645
    %v4990 = vpack.c.b16 %v3650, %v3646
    %v4991 = vpack.c.b16 %v3651, %v3647
    %v4992 = vpack.c.b16 %v3656, %v3652
    %v4993 = vpack.c.b16 %v3657, %v3653
    %v4994 = vpack.c.b16 %v3658, %v3654
    %v4995 = vpack.c.b16 %v3659, %v3655
    %v4996 = vpack.c.b16 %v3664, %v3660
    %v4997 = vpack.c.b16 %v3665, %v3661
    %v4998 = vpack.c.b16 %v3666, %v3662
    %v4999 = vpack.c.b16 %v3667, %v3663
    %v5000 = vpack.c.b16 %v3672, %v3668
    %v5001 = vpack.c.b16 %v3673, %v3669
    %v5002 = vpack.c.b16 %v3674, %v3670
    %v5003 = vpack.c.b16 %v3675, %v3671
    %v5004 = vpack.c.b16 %v3680, %v3676
    %v5005 = vpack.c.b16 %v3681, %v3677
    %v5006 = vpack.c.b16 %v3682, %v3678
    %v5007 = vpack.c.b16 %v3683, %v3679
    %v5008 = vpack.c.b16 %v3688, %v3684
    %v5009 = vpack.c.b16 %v3689, %v3685
    %v5010 = vpack.c.b16 %v3690, %v3686
    %v5011 = vpack.c.b16 %v3691, %v3687
    %v5012 = vpack.c.b16 %v3696, %v3692
    %v5013 = vpack.c.b16 %v3697, %v3693
    %v5014 = vpack.c.b16 %v3698, %v3694
    %v5015 = vpack.c.b16 %v3699, %v3695
    %v5016 = vpack.c.b16 %v3704, %v3700
    %v5017 = vpack.c.b16 %v3705, %v3701
    %v5018 = vpack.c.b16 %v3706, %v3702
    %v5019 = vpack.c.b16 %v3707, %v3703
    %v5020 = vpack.c.b16 %v3712, %v3708
    %v5021 = vpack.c.b16 %v3713, %v3709
    %v5022 = vpack.c.b16 %v3714, %v3710
    %v5023 = vpack.c.b16 %v3715, %v3711
    %v5024 = vpack.c.b16 %v3720, %v3716
    %v5025 = vpack.c.b16 %v3721, %v3717
    %v5026 = vpack.c.b16 %v3722, %v3718
    %v5027 = vpack.c.b16 %v3723, %v3719
    %v5028 = vpack.c.b16 %v3728, %v3724
    %v5029 = vpack.c.b16 %v3729, %v3725
    %v5030 = vpack.c.b16 %v3730, %v3726
    %v5031 = vpack.c.b16 %v3731, %v3727
    %v5032 = vpack.c.b16 %v3736, %v3732
    %v5033 = vpack.c.b16 %v3737, %v3733
    %v5034 = vpack.c.b16 %v3738, %v3734
    %v5035 = vpack.c.b16 %v3739, %v3735
    %v5036 = vpack.c.b16 %v3744, %v3740
    %v5037 = vpack.c.b16 %v3745, %v3741
    %v5038 = vpack.c.b16 %v3746, %v3742
    %v5039 = vpack.c.b16 %v3747, %v3743
    %v5040 = vpack.c.b16 %v3752, %v3748
    %v5041 = vpack.c.b16 %v3753, %v3749
    %v5042 = vpack.c.b16 %v3754, %v3750
    %v5043 = vpack.c.b16 %v3755, %v3751
    %v5044 = vpack.c.b16 %v3760, %v3756
    %v5045 = vpack.c.b16 %v3761, %v3757
    %v5046 = vpack.c.b16 %v3762, %v3758
    %v5047 = vpack.c.b16 %v3763, %v3759
    %v5048 = vpack.c.b16 %v3768, %v3764
    %v5049 = vpack.c.b16 %v3769, %v3765
    %v5050 = vpack.c.b16 %v3770, %v3766
    %v5051 = vpack.c.b16 %v3771, %v3767
    %v5052 = vpack.c.b16 %v3776, %v3772
    %v5053 = vpack.c.b16 %v3777, %v3773
    %v5054 = vpack.c.b16 %v3778, %v3774
    %v5055 = vpack.c.b16 %v3779, %v3775
    %v5056 = vpack.c.b16 %v3784, %v3780
    %v5057 = vpack.c.b16 %v3785, %v3781
    %v5058 = vpack.c.b16 %v3786, %v3782
    %v5059 = vpack.c.b16 %v3787, %v3783
    %v5060 = vpack.c.b16 %v3792, %v3788
    %v5061 = vpack.c.b16 %v3793, %v3789
    %v5062 = vpack.c.b16 %v3794, %v3790
    %v5063 = vpack.c.b16 %v3795, %v3791
    %v5064 = vpack.c.b16 %v3800, %v3796
    %v5065 = vpack.c.b16 %v3801, %v3797
    %v5066 = vpack.c.b16 %v3802, %v3798
    %v5067 = vpack.c.b16 %v3803, %v3799
    %v5068 = vpack.c.b16 %v3808, %v3804
    %v5069 = vpack.c.b16 %v3809, %v3805
    %v5070 = vpack.c.b16 %v3810, %v3806
    %v5071 = vpack.c.b16 %v3811, %v3807
    %v5072 = vpack.c.b16 %v3816, %v3812
    %v5073 = vpack.c.b16 %v3817, %v3813
    %v5074 = vpack.c.b16 %v3818, %v3814
    %v5075 = vpack.c.b16 %v3819, %v3815
    %v5076 = vpack.c.b16 %v3824, %v3820
    %v5077 = vpack.c.b16 %v3825, %v3821
    %v5078 = vpack.c.b16 %v3826, %v3822
    %v5079 = vpack.c.b16 %v3827, %v3823
    %v5080 = vpack.c.b16 %v3832, %v3828
    %v5081 = vpack.c.b16 %v3833, %v3829
    %v5082 = vpack.c.b16 %v3834, %v3830
    %v5083 = vpack.c.b16 %v3835, %v3831
    %v5084 = vpack.c.b16 %v3840, %v3836
    %v5085 = vpack.c.b16 %v3841, %v3837
    %v5086 = vpack.c.b16 %v3842, %v3838
    %v5087 = vpack.c.b16 %v3843, %v3839
    %v5088 = vpack.c.b16 %v3848, %v3844
    %v5089 = vpack.c.b16 %v3849, %v3845
    %v5090 = vpack.c.b16 %v3850, %v3846
    %v5091 = vpack.c.b16 %v3851, %v3847
    %v5092 = vpack.c.b16 %v3856, %v3852
    %v5093 = vpack.c.b16 %v3857, %v3853
    %v5094 = vpack.c.b16 %v3858, %v3854
    %v5095 = vpack.c.b16 %v3859, %v3855
    %v5096 = vpack.c.b16 %v3864, %v3860
    %v5097 = vpack.c.b16 %v3865, %v3861
    %v5098 = vpack.c.b16 %v3866, %v3862
    %v5099 = vpack.c.b16 %v3867, %v3863
    %v5100 = vpack.c.b16 %v3872, %v3868
    %v5101 = vpack.c.b16 %v3873, %v3869
    %v5102 = vpack.c.b16 %v3874, %v3870
    %v5103 = vpack.c.b16 %v3875, %v3871
    %v5104 = vpack.c.b16 %v3880, %v3876
    %v5105 = vpack.c.b16 %v3881, %v3877
    %v5106 = vpack.c.b16 %v3882, %v3878
    %v5107 = vpack.c.b16 %v3883, %v3879
    %v5108 = vpack.c.b16 %v3888, %v3884
    %v5109 = vpack.c.b16 %v3889, %v3885
    %v5110 = vpack.c.b16 %v3890, %v3886
    %v5111 = vpack.c.b16 %v3891, %v3887
    %v5112 = vpack.c.b16 %v3896, %v3892
    %v5113 = vpack.c.b16 %v3897, %v3893
    %v5114 = vpack.c.b16 %v3898, %v3894
    %v5115 = vpack.c.b16 %v3899, %v3895
    %v5116 = vpack.c.b16 %v3904, %v3900
    %v5117 = vpack.c.b16 %v3905, %v3901
    %v5118 = vpack.c.b16 %v3906, %v3902
    %v5119 = vpack.c.b16 %v3907, %v3903
    %v5120 = vpack.c.b16 %v3912, %v3908
    %v5121 = vpack.c.b16 %v3913, %v3909
    %v5122 = vpack.c.b16 %v3914, %v3910
    %v5123 = vpack.c.b16 %v3915, %v3911
    %v5124 = vpack.c.b16 %v3920, %v3916
    %v5125 = vpack.c.b16 %v3921, %v3917
    %v5126 = vpack.c.b16 %v3922, %v3918
    %v5127 = vpack.c.b16 %v3923, %v3919
    %v5128 = vpack.c.b16 %v3928, %v3924
    %v5129 = vpack.c.b16 %v3929, %v3925
    %v5130 = vpack.c.b16 %v3930, %v3926
    %v5131 = vpack.c.b16 %v3931, %v3927
    %v5132 = vpack.c.b16 %v3936, %v3932
    %v5133 = vpack.c.b16 %v3937, %v3933
    %v5134 = vpack.c.b16 %v3938, %v3934
    %v5135 = vpack.c.b16 %v3939, %v3935
    %v5136 = vpack.c.b16 %v3944, %v3940
    %v5137 = vpack.c.b16 %v3945, %v3941
    %v5138 = vpack.c.b16 %v3946, %v3942
    %v5139 = vpack.c.b16 %v3947, %v3943
    %v5140 = vpack.c.b16 %v3952, %v3948
    %v5141 = vpack.c.b16 %v3953, %v3949
    %v5142 = vpack.c.b16 %v3954, %v3950
    %v5143 = vpack.c.b16 %v3955, %v3951
    %v5144 = vpack.c.b16 %v3960, %v3956
    %v5145 = vpack.c.b16 %v3961, %v3957
    %v5146 = vpack.c.b16 %v3962, %v3958
    %v5147 = vpack.c.b16 %v3963, %v3959
    %v5148 = vpack.c.b16 %v3968, %v3964
    %v5149 = vpack.c.b16 %v3969, %v3965
    %v5150 = vpack.c.b16 %v3970, %v3966
    %v5151 = vpack.c.b16 %v3971, %v3967
    %v5152 = vpack.c.b16 %v3976, %v3972
    %v5153 = vpack.c.b16 %v3977, %v3973
    %v5154 = vpack.c.b16 %v3978, %v3974
    %v5155 = vpack.c.b16 %v3979, %v3975
    %v5156 = vpack.c.b16 %v3984, %v3980
    %v5157 = vpack.c.b16 %v3985, %v3981
    %v5158 = vpack.c.b16 %v3986, %v3982
    %v5159 = vpack.c.b16 %v3987, %v3983
    %v5160 = vpack.c.b16 %v3992, %v3988
    %v5161 = vpack.c.b16 %v3993, %v3989
    %v5162 = vpack.c.b16 %v3994, %v3990
    %v5163 = vpack.c.b16 %v3995, %v3991
    %v5164 = vpack.c.b16 %v4000, %v3996
    %v5165 = vpack.c.b16 %v4001, %v3997
    %v5166 = vpack.c.b16 %v4002, %v3998
    %v5167 = vpack.c.b16 %v4003, %v3999
    %v5168 = vpack.c.b16 %v4008, %v4004
    %v5169 = vpack.c.b16 %v4009, %v4005
    %v5170 = vpack.c.b16 %v4010, %v4006
    %v5171 = vpack.c.b16 %v4011, %v4007
    %v5172 = vpack.c.b16 %v4016, %v4012
    %v5173 = vpack.c.b16 %v4017, %v4013
    %v5174 = vpack.c.b16 %v4018, %v4014
    %v5175 = vpack.c.b16 %v4019, %v4015
    %v5176 = vpack.c.b16 %v4024, %v4020
    %v5177 = vpack.c.b16 %v4025, %v4021
    %v5178 = vpack.c.b16 %v4026, %v4022
    %v5179 = vpack.c.b16 %v4027, %v4023
    %v5180 = vpack.c.b16 %v4032, %v4028
    %v5181 = vpack.c.b16 %v4033, %v4029
    %v5182 = vpack.c.b16 %v4034, %v4030
    %v5183 = vpack.c.b16 %v4035, %v4031
    %v5184 = vpack.c.b16 %v4040, %v4036
    %v5185 = vpack.c.b16 %v4041, %v4037
    %v5186 = vpack.c.b16 %v4042, %v4038
    %v5187 = vpack.c.b16 %v4043, %v4039
    %v5188 = vpack.c.b16 %v4048, %v4044
    %v5189 = vpack.c.b16 %v4049, %v4045
    %v5190 = vpack.c.b16 %v4050, %v4046
    %v5191 = vpack.c.b16 %v4051, %v4047
    %v5192 = vpack.c.b16 %v4056, %v4052
    %v5193 = vpack.c.b16 %v4057, %v4053
    %v5194 = vpack.c.b16 %v4058, %v4054
    %v5195 = vpack.c.b16 %v4059, %v4055
    %v5196 = vpack.c.b16 %v4064, %v4060
    %v5197 = vpack.c.b16 %v4065, %v4061
    %v5198 = vpack.c.b16 %v4066, %v4062
    %v5199 = vpack.c.b16 %v4067, %v4063
    %v5200 = vpack.c.b16 %v4072, %v4068
    %v5201 = vpack.c.b16 %v4073, %v4069
    %v5202 = vpack.c.b16 %v4074, %v4070
    %v5203 = vpack.c.b16 %v4075, %v4071
    %v5204 = vpack.c.b16 %v4080, %v4076
    %v5205 = vpack.c.b16 %v4081, %v4077
    %v5206 = vpack.c.b16 %v4082, %v4078
    %v5207 = vpack.c.b16 %v4083, %v4079
    %v5208 = vpack.c.b16 %v4088, %v4084
    %v5209 = vpack.c.b16 %v4089, %v4085
    %v5210 = vpack.c.b16 %v4090, %v4086
    %v5211 = vpack.c.b16 %v4091, %v4087
    %v5212 = vpack.c.b16 %v4096, %v4092
    %v5213 = vpack.c.b16 %v4097, %v4093
    %v5214 = vpack.c.b16 %v4098, %v4094
    %v5215 = vpack.c.b16 %v4099, %v4095
    %v5216 = vpack.c.b16 %v4104, %v4100
    %v5217 = vpack.c.b16 %v4105, %v4101
    %v5218 = vpack.c.b16 %v4106, %v4102
    %v5219 = vpack.c.b16 %v4107, %v4103
    %v5220 = vpack.c.b16 %v4112, %v4108
    %v5221 = vpack.c.b16 %v4113, %v4109
    %v5222 = vpack.c.b16 %v4114, %v4110
    %v5223 = vpack.c.b16 %v4115, %v4111
    %v5224 = vpack.c.b16 %v4120, %v4116
    %v5225 = vpack.c.b16 %v4121, %v4117
    %v5226 = vpack.c.b16 %v4122, %v4118
    %v5227 = vpack.c.b16 %v4123, %v4119
    %v5228 = vpack.c.b16 %v4128, %v4124
    %v5229 = vpack.c.b16 %v4129, %v4125
    %v5230 = vpack.c.b16 %v4130, %v4126
    %v5231 = vpack.c.b16 %v4131, %v4127
    %v5232 = vpack.c.b16 %v4136, %v4132
    %v5233 = vpack.c.b16 %v4137, %v4133
    %v5234 = vpack.c.b16 %v4138, %v4134
    %v5235 = vpack.c.b16 %v4139, %v4135
    %v5236 = vpack.c.b16 %v4144, %v4140
    %v5237 = vpack.c.b16 %v4145, %v4141
    %v5238 = vpack.c.b16 %v4146, %v4142
    %v5239 = vpack.c.b16 %v4147, %v4143
    %v5240 = vpack.c.b16 %v4152, %v4148
    %v5241 = vpack.c.b16 %v4153, %v4149
    %v5242 = vpack.c.b16 %v4154, %v4150
    %v5243 = vpack.c.b16 %v4155, %v4151
    %v5244 = vpack.c.b16 %v4160, %v4156
    %v5245 = vpack.c.b16 %v4161, %v4157
    %v5246 = vpack.c.b16 %v4162, %v4158
    %v5247 = vpack.c.b16 %v4163, %v4159
    %v5248 = vpack.c.b16 %v4168, %v4164
    %v5249 = vpack.c.b16 %v4169, %v4165
    %v5250 = vpack.c.b16 %v4170, %v4166
    %v5251 = vpack.c.b16 %v4171, %v4167
    %v5252 = vpack.c.b16 %v4176, %v4172
    %v5253 = vpack.c.b16 %v4177, %v4173
    %v5254 = vpack.c.b16 %v4178, %v4174
    %v5255 = vpack.c.b16 %v4179, %v4175
    %v5256 = vpack.c.b16 %v4184, %v4180
    %v5257 = vpack.c.b16 %v4185, %v4181
    %v5258 = vpack.c.b16 %v4186, %v4182
    %v5259 = vpack.c.b16 %v4187, %v4183
    %v5260 = vpack.c.b16 %v4192, %v4188
    %v5261 = vpack.c.b16 %v4193, %v4189
    %v5262 = vpack.c.b16 %v4194, %v4190
    %v5263 = vpack.c.b16 %v4195, %v4191
    %v5264 = vpack.c.b16 %v4200, %v4196
    %v5265 = vpack.c.b16 %v4201, %v4197
    %v5266 = vpack.c.b16 %v4202, %v4198
    %v5267 = vpack.c.b16 %v4203, %v4199
    %v5268 = vpack.c.b16 %v4208, %v4204
    %v5269 = vpack.c.b16 %v4209, %v4205
    %v5270 = vpack.c.b16 %v4210, %v4206
    %v5271 = vpack.c.b16 %v4211, %v4207
    %v5272 = vpack.c.b16 %v4216, %v4212
    %v5273 = vpack.c.b16 %v4217, %v4213
    %v5274 = vpack.c.b16 %v4218, %v4214
    %v5275 = vpack.c.b16 %v4219, %v4215
    %v5276 = vpack.c.b16 %v4224, %v4220
    %v5277 = vpack.c.b16 %v4225, %v4221
    %v5278 = vpack.c.b16 %v4226, %v4222
    %v5279 = vpack.c.b16 %v4227, %v4223
    %v5280 = vpack.c.b16 %v4232, %v4228
    %v5281 = vpack.c.b16 %v4233, %v4229
    %v5282 = vpack.c.b16 %v4234, %v4230
    %v5283 = vpack.c.b16 %v4235, %v4231
    %v5284 = vpack.c.b16 %v4240, %v4236
    %v5285 = vpack.c.b16 %v4241, %v4237
    %v5286 = vpack.c.b16 %v4242, %v4238
    %v5287 = vpack.c.b16 %v4243, %v4239
    %v5288 = vpack.c.b16 %v4248, %v4244
    %v5289 = vpack.c.b16 %v4249, %v4245
    %v5290 = vpack.c.b16 %v4250, %v4246
    %v5291 = vpack.c.b16 %v4251, %v4247
    %v5292 = vpack.c.b16 %v4256, %v4252
    %v5293 = vpack.c.b16 %v4257, %v4253
    %v5294 = vpack.c.b16 %v4258, %v4254
    %v5295 = vpack.c.b16 %v4259, %v4255
    %v5296 = vpack.c.b16 %v4264, %v4260
    %v5297 = vpack.c.b16 %v4265, %v4261
    %v5298 = vpack.c.b16 %v4266, %v4262
    %v5299 = vpack.c.b16 %v4267, %v4263
    %v5300 = vpack.c.b16 %v4272, %v4268
    %v5301 = vpack.c.b16 %v4273, %v4269
    %v5302 = vpack.c.b16 %v4274, %v4270
    %v5303 = vpack.c.b16 %v4275, %v4271
    %v5304 = vpack.c.b16 %v4280, %v4276
    %v5305 = vpack.c.b16 %v4281, %v4277
    %v5306 = vpack.c.b16 %v4282, %v4278
    %v5307 = vpack.c.b16 %v4283, %v4279
    %6332 = vmatprep.subr.bf16.mxu0 %v4313
    %6333 = vmatpush1.bf16.msra.mxu0 %v4312
    %6334 = vmatprep.subr.bf16.mxu0 %v4309
    %6335 = vmatpush1.bf16.msra.mxu0 %v4308
    %6336 = vmatprep.subr.bf16.mxu0 %v4305
    %6337 = vmatpush1.bf16.msra.mxu0 %v4304
    %6338 = vmatprep.subr.bf16.mxu0 %v4301
    %6339 = vmatpush1.bf16.msra.mxu0 %v4300
    %6340 = vmatprep.subr.bf16.mxu0 %v4297
    %6341 = vmatpush1.bf16.msra.mxu0 %v4296
    %6342 = vmatprep.subr.bf16.mxu0 %v4293
    %6343 = vmatpush1.bf16.msra.mxu0 %v4292
    %6344 = vmatprep.subr.bf16.mxu0 %v4289
    %6345 = vmatpush1.bf16.msra.mxu0 %v4288
    %6346 = vmatprep.subr.bf16.mxu0 %v4285
    %6347 = vmatpush1.bf16.msra.mxu0 %v4284
    %6348 = vmatprep.subr.bf16.mxu0 %v4345
    %6349 = vmatpush2.bf16.msra.mxu0 %v4344
    %6350 = vmatprep.subr.bf16.mxu0 %v4341
    %6351 = vmatpush2.bf16.msra.mxu0 %v4340
    %6352 = vmatprep.subr.bf16.mxu0 %v4337
    %6353 = vmatpush2.bf16.msra.mxu0 %v4336
    %6354 = vmatprep.subr.bf16.mxu0 %v4333
    %6355 = vmatpush2.bf16.msra.mxu0 %v4332
    %6356 = vmatprep.subr.bf16.mxu0 %v4329
    %6357 = vmatpush2.bf16.msra.mxu0 %v4328
    %6358 = vmatprep.subr.bf16.mxu0 %v4325
    %6359 = vmatpush2.bf16.msra.mxu0 %v4324
    %6360 = vmatprep.subr.bf16.mxu0 %v4321
    %6361 = vmatpush2.bf16.msra.mxu0 %v4320
    %6362 = vmatprep.subr.bf16.mxu0 %v4317
    %6363 = vmatpush2.bf16.msra.mxu0 %v4316
    %6364 = vmatprep.mubr.bf16.mxu0 %v135
    %6365 = vmatmul.mubr.bf16.gmra.mxu0 %v134
    %v6366 = vpop.f32.mrf.mxu0
    %v6367 = vadd.f32 %v1195, %v6366
    %v6368 = vpop.f32.mrf.mxu0
    %v6369 = vadd.f32 %v1199, %v6368
    %v6370 = vpop.f32.mrf.mxu0
    %v6371 = vpop.f32.mrf.mxu0
    %6372 = vdwg.mxu0
    %6373 = vmatprep.subr.bf16.mxu0 %v4377
    %6374 = vmatpush1.bf16.msra.mxu0 %v4376
    %6375 = vmatprep.subr.bf16.mxu0 %v4373
    %6376 = vmatpush1.bf16.msra.mxu0 %v4372
    %6377 = vmatprep.subr.bf16.mxu0 %v4369
    %6378 = vmatpush1.bf16.msra.mxu0 %v4368
    %6379 = vmatprep.subr.bf16.mxu0 %v4365
    %6380 = vmatpush1.bf16.msra.mxu0 %v4364
    %6381 = vmatprep.subr.bf16.mxu0 %v4361
    %6382 = vmatpush1.bf16.msra.mxu0 %v4360
    %6383 = vmatprep.subr.bf16.mxu0 %v4357
    %6384 = vmatpush1.bf16.msra.mxu0 %v4356
    %6385 = vmatprep.subr.bf16.mxu0 %v4353
    %6386 = vmatpush1.bf16.msra.mxu0 %v4352
    %6387 = vmatprep.subr.bf16.mxu0 %v4349
    %6388 = vmatpush1.bf16.msra.mxu0 %v4348
    %6389 = vmatprep.subr.bf16.mxu0 %v4409
    %6390 = vmatpush2.bf16.msra.mxu0 %v4408
    %6391 = vmatprep.subr.bf16.mxu0 %v4405
    %6392 = vmatpush2.bf16.msra.mxu0 %v4404
    %6393 = vmatprep.subr.bf16.mxu0 %v4401
    %6394 = vmatpush2.bf16.msra.mxu0 %v4400
    %6395 = vmatprep.subr.bf16.mxu0 %v4397
    %6396 = vmatpush2.bf16.msra.mxu0 %v4396
    %6397 = vmatprep.subr.bf16.mxu0 %v4393
    %6398 = vmatpush2.bf16.msra.mxu0 %v4392
    %6399 = vmatprep.subr.bf16.mxu0 %v4389
    %6400 = vmatpush2.bf16.msra.mxu0 %v4388
    %6401 = vmatprep.subr.bf16.mxu0 %v4385
    %6402 = vmatpush2.bf16.msra.mxu0 %v4384
    %6403 = vmatprep.subr.bf16.mxu0 %v4381
    %6404 = vmatpush2.bf16.msra.mxu0 %v4380
    %6405 = vmatprep.mubr.bf16.mxu0 %v137
    %6406 = vmatmul.mubr.bf16.gmra.mxu0 %v136
    %v6407 = vpop.f32.mrf.mxu0
    %v6408 = vadd.f32 %v6367, %v6407
    %v6409 = vpop.f32.mrf.mxu0
    %v6410 = vadd.f32 %v6369, %v6409
    %v6411 = vpop.f32.mrf.mxu0
    %v6412 = vpop.f32.mrf.mxu0
    %6413 = vdwg.mxu0
    %6414 = vmatprep.subr.bf16.mxu0 %v4441
    %6415 = vmatpush1.bf16.msra.mxu0 %v4440
    %6416 = vmatprep.subr.bf16.mxu0 %v4437
    %6417 = vmatpush1.bf16.msra.mxu0 %v4436
    %6418 = vmatprep.subr.bf16.mxu0 %v4433
    %6419 = vmatpush1.bf16.msra.mxu0 %v4432
    %6420 = vmatprep.subr.bf16.mxu0 %v4429
    %6421 = vmatpush1.bf16.msra.mxu0 %v4428
    %6422 = vmatprep.subr.bf16.mxu0 %v4425
    %6423 = vmatpush1.bf16.msra.mxu0 %v4424
    %6424 = vmatprep.subr.bf16.mxu0 %v4421
    %6425 = vmatpush1.bf16.msra.mxu0 %v4420
    %6426 = vmatprep.subr.bf16.mxu0 %v4417
    %6427 = vmatpush1.bf16.msra.mxu0 %v4416
    %6428 = vmatprep.subr.bf16.mxu0 %v4413
    %6429 = vmatpush1.bf16.msra.mxu0 %v4412
    %6430 = vmatprep.subr.bf16.mxu0 %v4473
    %6431 = vmatpush2.bf16.msra.mxu0 %v4472
    %6432 = vmatprep.subr.bf16.mxu0 %v4469
    %6433 = vmatpush2.bf16.msra.mxu0 %v4468
    %6434 = vmatprep.subr.bf16.mxu0 %v4465
    %6435 = vmatpush2.bf16.msra.mxu0 %v4464
    %6436 = vmatprep.subr.bf16.mxu0 %v4461
    %6437 = vmatpush2.bf16.msra.mxu0 %v4460
    %6438 = vmatprep.subr.bf16.mxu0 %v4457
    %6439 = vmatpush2.bf16.msra.mxu0 %v4456
    %6440 = vmatprep.subr.bf16.mxu0 %v4453
    %6441 = vmatpush2.bf16.msra.mxu0 %v4452
    %6442 = vmatprep.subr.bf16.mxu0 %v4449
    %6443 = vmatpush2.bf16.msra.mxu0 %v4448
    %6444 = vmatprep.subr.bf16.mxu0 %v4445
    %6445 = vmatpush2.bf16.msra.mxu0 %v4444
    %6446 = vmatprep.mubr.bf16.mxu0 %v139
    %6447 = vmatmul.mubr.bf16.gmra.mxu0 %v138
    %v6448 = vpop.f32.mrf.mxu0
    %v6449 = vadd.f32 %v6408, %v6448
    %v6450 = vpop.f32.mrf.mxu0
    %v6451 = vadd.f32 %v6410, %v6450
    %v6452 = vpop.f32.mrf.mxu0
    %v6453 = vpop.f32.mrf.mxu0
    %6454 = vdwg.mxu0
    %6455 = vmatprep.subr.bf16.mxu0 %v4505
    %6456 = vmatpush1.bf16.msra.mxu0 %v4504
    %6457 = vmatprep.subr.bf16.mxu0 %v4501
    %6458 = vmatpush1.bf16.msra.mxu0 %v4500
    %6459 = vmatprep.subr.bf16.mxu0 %v4497
    %6460 = vmatpush1.bf16.msra.mxu0 %v4496
    %6461 = vmatprep.subr.bf16.mxu0 %v4493
    %6462 = vmatpush1.bf16.msra.mxu0 %v4492
    %6463 = vmatprep.subr.bf16.mxu0 %v4489
    %6464 = vmatpush1.bf16.msra.mxu0 %v4488
    %6465 = vmatprep.subr.bf16.mxu0 %v4485
    %6466 = vmatpush1.bf16.msra.mxu0 %v4484
    %6467 = vmatprep.subr.bf16.mxu0 %v4481
    %6468 = vmatpush1.bf16.msra.mxu0 %v4480
    %6469 = vmatprep.subr.bf16.mxu0 %v4477
    %6470 = vmatpush1.bf16.msra.mxu0 %v4476
    %6471 = vmatprep.subr.bf16.mxu0 %v4537
    %6472 = vmatpush2.bf16.msra.mxu0 %v4536
    %6473 = vmatprep.subr.bf16.mxu0 %v4533
    %6474 = vmatpush2.bf16.msra.mxu0 %v4532
    %6475 = vmatprep.subr.bf16.mxu0 %v4529
    %6476 = vmatpush2.bf16.msra.mxu0 %v4528
    %6477 = vmatprep.subr.bf16.mxu0 %v4525
    %6478 = vmatpush2.bf16.msra.mxu0 %v4524
    %6479 = vmatprep.subr.bf16.mxu0 %v4521
    %6480 = vmatpush2.bf16.msra.mxu0 %v4520
    %6481 = vmatprep.subr.bf16.mxu0 %v4517
    %6482 = vmatpush2.bf16.msra.mxu0 %v4516
    %6483 = vmatprep.subr.bf16.mxu0 %v4513
    %6484 = vmatpush2.bf16.msra.mxu0 %v4512
    %6485 = vmatprep.subr.bf16.mxu0 %v4509
    %6486 = vmatpush2.bf16.msra.mxu0 %v4508
    %6487 = vmatprep.mubr.bf16.mxu0 %v141
    %6488 = vmatmul.mubr.bf16.gmra.mxu0 %v140
    %v6489 = vpop.f32.mrf.mxu0
    %v6490 = vadd.f32 %v6449, %v6489
    %v6491 = vpop.f32.mrf.mxu0
    %v6492 = vadd.f32 %v6451, %v6491
    %v6493 = vpop.f32.mrf.mxu0
    %v6494 = vpop.f32.mrf.mxu0
    %6495 = vdwg.mxu0
    %6496 = vmatprep.subr.bf16.mxu0 %v4569
    %6497 = vmatpush1.bf16.msra.mxu0 %v4568
    %6498 = vmatprep.subr.bf16.mxu0 %v4565
    %6499 = vmatpush1.bf16.msra.mxu0 %v4564
    %6500 = vmatprep.subr.bf16.mxu0 %v4561
    %6501 = vmatpush1.bf16.msra.mxu0 %v4560
    %6502 = vmatprep.subr.bf16.mxu0 %v4557
    %6503 = vmatpush1.bf16.msra.mxu0 %v4556
    %6504 = vmatprep.subr.bf16.mxu0 %v4553
    %6505 = vmatpush1.bf16.msra.mxu0 %v4552
    %6506 = vmatprep.subr.bf16.mxu0 %v4549
    %6507 = vmatpush1.bf16.msra.mxu0 %v4548
    %6508 = vmatprep.subr.bf16.mxu0 %v4545
    %6509 = vmatpush1.bf16.msra.mxu0 %v4544
    %6510 = vmatprep.subr.bf16.mxu0 %v4541
    %6511 = vmatpush1.bf16.msra.mxu0 %v4540
    %6512 = vmatprep.subr.bf16.mxu0 %v4601
    %6513 = vmatpush2.bf16.msra.mxu0 %v4600
    %6514 = vmatprep.subr.bf16.mxu0 %v4597
    %6515 = vmatpush2.bf16.msra.mxu0 %v4596
    %6516 = vmatprep.subr.bf16.mxu0 %v4593
    %6517 = vmatpush2.bf16.msra.mxu0 %v4592
    %6518 = vmatprep.subr.bf16.mxu0 %v4589
    %6519 = vmatpush2.bf16.msra.mxu0 %v4588
    %6520 = vmatprep.subr.bf16.mxu0 %v4585
    %6521 = vmatpush2.bf16.msra.mxu0 %v4584
    %6522 = vmatprep.subr.bf16.mxu0 %v4581
    %6523 = vmatpush2.bf16.msra.mxu0 %v4580
    %6524 = vmatprep.subr.bf16.mxu0 %v4577
    %6525 = vmatpush2.bf16.msra.mxu0 %v4576
    %6526 = vmatprep.subr.bf16.mxu0 %v4573
    %6527 = vmatpush2.bf16.msra.mxu0 %v4572
    %6528 = vmatprep.mubr.bf16.mxu0 %v143
    %6529 = vmatmul.mubr.bf16.gmra.mxu0 %v142
    %v6530 = vpop.f32.mrf.mxu0
    %v6531 = vadd.f32 %v6490, %v6530
    %v6532 = vpop.f32.mrf.mxu0
    %v6533 = vadd.f32 %v6492, %v6532
    %v6534 = vpop.f32.mrf.mxu0
    %v6535 = vpop.f32.mrf.mxu0
    %6536 = vdwg.mxu0
    %6537 = vmatprep.subr.bf16.mxu0 %v4633
    %6538 = vmatpush1.bf16.msra.mxu0 %v4632
    %6539 = vmatprep.subr.bf16.mxu0 %v4629
    %6540 = vmatpush1.bf16.msra.mxu0 %v4628
    %6541 = vmatprep.subr.bf16.mxu0 %v4625
    %6542 = vmatpush1.bf16.msra.mxu0 %v4624
    %6543 = vmatprep.subr.bf16.mxu0 %v4621
    %6544 = vmatpush1.bf16.msra.mxu0 %v4620
    %6545 = vmatprep.subr.bf16.mxu0 %v4617
    %6546 = vmatpush1.bf16.msra.mxu0 %v4616
    %6547 = vmatprep.subr.bf16.mxu0 %v4613
    %6548 = vmatpush1.bf16.msra.mxu0 %v4612
    %6549 = vmatprep.subr.bf16.mxu0 %v4609
    %6550 = vmatpush1.bf16.msra.mxu0 %v4608
    %6551 = vmatprep.subr.bf16.mxu0 %v4605
    %6552 = vmatpush1.bf16.msra.mxu0 %v4604
    %6553 = vmatprep.subr.bf16.mxu0 %v4665
    %6554 = vmatpush2.bf16.msra.mxu0 %v4664
    %6555 = vmatprep.subr.bf16.mxu0 %v4661
    %6556 = vmatpush2.bf16.msra.mxu0 %v4660
    %6557 = vmatprep.subr.bf16.mxu0 %v4657
    %6558 = vmatpush2.bf16.msra.mxu0 %v4656
    %6559 = vmatprep.subr.bf16.mxu0 %v4653
    %6560 = vmatpush2.bf16.msra.mxu0 %v4652
    %6561 = vmatprep.subr.bf16.mxu0 %v4649
    %6562 = vmatpush2.bf16.msra.mxu0 %v4648
    %6563 = vmatprep.subr.bf16.mxu0 %v4645
    %6564 = vmatpush2.bf16.msra.mxu0 %v4644
    %6565 = vmatprep.subr.bf16.mxu0 %v4641
    %6566 = vmatpush2.bf16.msra.mxu0 %v4640
    %6567 = vmatprep.subr.bf16.mxu0 %v4637
    %6568 = vmatpush2.bf16.msra.mxu0 %v4636
    %6569 = vmatprep.mubr.bf16.mxu0 %v145
    %6570 = vmatmul.mubr.bf16.gmra.mxu0 %v144
    %v6571 = vpop.f32.mrf.mxu0
    %v6572 = vadd.f32 %v6531, %v6571
    %v6573 = vpop.f32.mrf.mxu0
    %v6574 = vadd.f32 %v6533, %v6573
    %v6575 = vpop.f32.mrf.mxu0
    %v6576 = vpop.f32.mrf.mxu0
    %6577 = vdwg.mxu0
    %6578 = vmatprep.subr.bf16.mxu0 %v4697
    %6579 = vmatpush1.bf16.msra.mxu0 %v4696
    %6580 = vmatprep.subr.bf16.mxu0 %v4693
    %6581 = vmatpush1.bf16.msra.mxu0 %v4692
    %6582 = vmatprep.subr.bf16.mxu0 %v4689
    %6583 = vmatpush1.bf16.msra.mxu0 %v4688
    %6584 = vmatprep.subr.bf16.mxu0 %v4685
    %6585 = vmatpush1.bf16.msra.mxu0 %v4684
    %6586 = vmatprep.subr.bf16.mxu0 %v4681
    %6587 = vmatpush1.bf16.msra.mxu0 %v4680
    %6588 = vmatprep.subr.bf16.mxu0 %v4677
    %6589 = vmatpush1.bf16.msra.mxu0 %v4676
    %6590 = vmatprep.subr.bf16.mxu0 %v4673
    %6591 = vmatpush1.bf16.msra.mxu0 %v4672
    %6592 = vmatprep.subr.bf16.mxu0 %v4669
    %6593 = vmatpush1.bf16.msra.mxu0 %v4668
    %6594 = vmatprep.subr.bf16.mxu0 %v4729
    %6595 = vmatpush2.bf16.msra.mxu0 %v4728
    %6596 = vmatprep.subr.bf16.mxu0 %v4725
    %6597 = vmatpush2.bf16.msra.mxu0 %v4724
    %6598 = vmatprep.subr.bf16.mxu0 %v4721
    %6599 = vmatpush2.bf16.msra.mxu0 %v4720
    %6600 = vmatprep.subr.bf16.mxu0 %v4717
    %6601 = vmatpush2.bf16.msra.mxu0 %v4716
    %6602 = vmatprep.subr.bf16.mxu0 %v4713
    %6603 = vmatpush2.bf16.msra.mxu0 %v4712
    %6604 = vmatprep.subr.bf16.mxu0 %v4709
    %6605 = vmatpush2.bf16.msra.mxu0 %v4708
    %6606 = vmatprep.subr.bf16.mxu0 %v4705
    %6607 = vmatpush2.bf16.msra.mxu0 %v4704
    %6608 = vmatprep.subr.bf16.mxu0 %v4701
    %6609 = vmatpush2.bf16.msra.mxu0 %v4700
    %6610 = vmatprep.mubr.bf16.mxu0 %v147
    %6611 = vmatmul.mubr.bf16.gmra.mxu0 %v146
    %v6612 = vpop.f32.mrf.mxu0
    %v6613 = vadd.f32 %v6572, %v6612
    %v6614 = vpop.f32.mrf.mxu0
    %v6615 = vadd.f32 %v6574, %v6614
    %v6616 = vpop.f32.mrf.mxu0
    %v6617 = vpop.f32.mrf.mxu0
    %6618 = vdwg.mxu0
    %6619 = vmatprep.subr.bf16.mxu0 %v4761
    %6620 = vmatpush1.bf16.msra.mxu0 %v4760
    %6621 = vmatprep.subr.bf16.mxu0 %v4757
    %6622 = vmatpush1.bf16.msra.mxu0 %v4756
    %6623 = vmatprep.subr.bf16.mxu0 %v4753
    %6624 = vmatpush1.bf16.msra.mxu0 %v4752
    %6625 = vmatprep.subr.bf16.mxu0 %v4749
    %6626 = vmatpush1.bf16.msra.mxu0 %v4748
    %6627 = vmatprep.subr.bf16.mxu0 %v4745
    %6628 = vmatpush1.bf16.msra.mxu0 %v4744
    %6629 = vmatprep.subr.bf16.mxu0 %v4741
    %6630 = vmatpush1.bf16.msra.mxu0 %v4740
    %6631 = vmatprep.subr.bf16.mxu0 %v4737
    %6632 = vmatpush1.bf16.msra.mxu0 %v4736
    %6633 = vmatprep.subr.bf16.mxu0 %v4733
    %6634 = vmatpush1.bf16.msra.mxu0 %v4732
    %6635 = vmatprep.subr.bf16.mxu0 %v4793
    %6636 = vmatpush2.bf16.msra.mxu0 %v4792
    %6637 = vmatprep.subr.bf16.mxu0 %v4789
    %6638 = vmatpush2.bf16.msra.mxu0 %v4788
    %6639 = vmatprep.subr.bf16.mxu0 %v4785
    %6640 = vmatpush2.bf16.msra.mxu0 %v4784
    %6641 = vmatprep.subr.bf16.mxu0 %v4781
    %6642 = vmatpush2.bf16.msra.mxu0 %v4780
    %6643 = vmatprep.subr.bf16.mxu0 %v4777
    %6644 = vmatpush2.bf16.msra.mxu0 %v4776
    %6645 = vmatprep.subr.bf16.mxu0 %v4773
    %6646 = vmatpush2.bf16.msra.mxu0 %v4772
    %6647 = vmatprep.subr.bf16.mxu0 %v4769
    %6648 = vmatpush2.bf16.msra.mxu0 %v4768
    %6649 = vmatprep.subr.bf16.mxu0 %v4765
    %6650 = vmatpush2.bf16.msra.mxu0 %v4764
    %6651 = vmatprep.mubr.bf16.mxu0 %v149
    %6652 = vmatmul.mubr.bf16.gmra.mxu0 %v148
    %v6653 = vpop.f32.mrf.mxu0
    %v6654 = vadd.f32 %v6613, %v6653
    %v6655 = vpop.f32.mrf.mxu0
    %v6656 = vadd.f32 %v6615, %v6655
    %v6657 = vpop.f32.mrf.mxu0
    %v6658 = vpop.f32.mrf.mxu0
    %6659 = vdwg.mxu0
    %6660 = vmatprep.subr.bf16.mxu0 %v4825
    %6661 = vmatpush1.bf16.msra.mxu0 %v4824
    %6662 = vmatprep.subr.bf16.mxu0 %v4821
    %6663 = vmatpush1.bf16.msra.mxu0 %v4820
    %6664 = vmatprep.subr.bf16.mxu0 %v4817
    %6665 = vmatpush1.bf16.msra.mxu0 %v4816
    %6666 = vmatprep.subr.bf16.mxu0 %v4813
    %6667 = vmatpush1.bf16.msra.mxu0 %v4812
    %6668 = vmatprep.subr.bf16.mxu0 %v4809
    %6669 = vmatpush1.bf16.msra.mxu0 %v4808
    %6670 = vmatprep.subr.bf16.mxu0 %v4805
    %6671 = vmatpush1.bf16.msra.mxu0 %v4804
    %6672 = vmatprep.subr.bf16.mxu0 %v4801
    %6673 = vmatpush1.bf16.msra.mxu0 %v4800
    %6674 = vmatprep.subr.bf16.mxu0 %v4797
    %6675 = vmatpush1.bf16.msra.mxu0 %v4796
    %6676 = vmatprep.subr.bf16.mxu0 %v4857
    %6677 = vmatpush2.bf16.msra.mxu0 %v4856
    %6678 = vmatprep.subr.bf16.mxu0 %v4853
    %6679 = vmatpush2.bf16.msra.mxu0 %v4852
    %6680 = vmatprep.subr.bf16.mxu0 %v4849
    %6681 = vmatpush2.bf16.msra.mxu0 %v4848
    %6682 = vmatprep.subr.bf16.mxu0 %v4845
    %6683 = vmatpush2.bf16.msra.mxu0 %v4844
    %6684 = vmatprep.subr.bf16.mxu0 %v4841
    %6685 = vmatpush2.bf16.msra.mxu0 %v4840
    %6686 = vmatprep.subr.bf16.mxu0 %v4837
    %6687 = vmatpush2.bf16.msra.mxu0 %v4836
    %6688 = vmatprep.subr.bf16.mxu0 %v4833
    %6689 = vmatpush2.bf16.msra.mxu0 %v4832
    %6690 = vmatprep.subr.bf16.mxu0 %v4829
    %6691 = vmatpush2.bf16.msra.mxu0 %v4828
    %6692 = vmatprep.mubr.bf16.mxu0 %v151
    %6693 = vmatmul.mubr.bf16.gmra.mxu0 %v150
    %v6694 = vpop.f32.mrf.mxu0
    %v6695 = vadd.f32 %v6654, %v6694
    %v6696 = vpop.f32.mrf.mxu0
    %v6697 = vadd.f32 %v6656, %v6696
    %v6698 = vpop.f32.mrf.mxu0
    %v6699 = vpop.f32.mrf.mxu0
    %6700 = vdwg.mxu0
    %6701 = vmatprep.subr.bf16.mxu0 %v4889
    %6702 = vmatpush1.bf16.msra.mxu0 %v4888
    %6703 = vmatprep.subr.bf16.mxu0 %v4885
    %6704 = vmatpush1.bf16.msra.mxu0 %v4884
    %6705 = vmatprep.subr.bf16.mxu0 %v4881
    %6706 = vmatpush1.bf16.msra.mxu0 %v4880
    %6707 = vmatprep.subr.bf16.mxu0 %v4877
    %6708 = vmatpush1.bf16.msra.mxu0 %v4876
    %6709 = vmatprep.subr.bf16.mxu0 %v4873
    %6710 = vmatpush1.bf16.msra.mxu0 %v4872
    %6711 = vmatprep.subr.bf16.mxu0 %v4869
    %6712 = vmatpush1.bf16.msra.mxu0 %v4868
    %6713 = vmatprep.subr.bf16.mxu0 %v4865
    %6714 = vmatpush1.bf16.msra.mxu0 %v4864
    %6715 = vmatprep.subr.bf16.mxu0 %v4861
    %6716 = vmatpush1.bf16.msra.mxu0 %v4860
    %6717 = vmatprep.subr.bf16.mxu0 %v4921
    %6718 = vmatpush2.bf16.msra.mxu0 %v4920
    %6719 = vmatprep.subr.bf16.mxu0 %v4917
    %6720 = vmatpush2.bf16.msra.mxu0 %v4916
    %6721 = vmatprep.subr.bf16.mxu0 %v4913
    %6722 = vmatpush2.bf16.msra.mxu0 %v4912
    %6723 = vmatprep.subr.bf16.mxu0 %v4909
    %6724 = vmatpush2.bf16.msra.mxu0 %v4908
    %6725 = vmatprep.subr.bf16.mxu0 %v4905
    %6726 = vmatpush2.bf16.msra.mxu0 %v4904
    %6727 = vmatprep.subr.bf16.mxu0 %v4901
    %6728 = vmatpush2.bf16.msra.mxu0 %v4900
    %6729 = vmatprep.subr.bf16.mxu0 %v4897
    %6730 = vmatpush2.bf16.msra.mxu0 %v4896
    %6731 = vmatprep.subr.bf16.mxu0 %v4893
    %6732 = vmatpush2.bf16.msra.mxu0 %v4892
    %6733 = vmatprep.mubr.bf16.mxu0 %v153
    %6734 = vmatmul.mubr.bf16.gmra.mxu0 %v152
    %v6735 = vpop.f32.mrf.mxu0
    %v6736 = vadd.f32 %v6695, %v6735
    %v6737 = vpop.f32.mrf.mxu0
    %v6738 = vadd.f32 %v6697, %v6737
    %v6739 = vpop.f32.mrf.mxu0
    %v6740 = vpop.f32.mrf.mxu0
    %6741 = vdwg.mxu0
    %6742 = vmatprep.subr.bf16.mxu0 %v4953
    %6743 = vmatpush1.bf16.msra.mxu0 %v4952
    %6744 = vmatprep.subr.bf16.mxu0 %v4949
    %6745 = vmatpush1.bf16.msra.mxu0 %v4948
    %6746 = vmatprep.subr.bf16.mxu0 %v4945
    %6747 = vmatpush1.bf16.msra.mxu0 %v4944
    %6748 = vmatprep.subr.bf16.mxu0 %v4941
    %6749 = vmatpush1.bf16.msra.mxu0 %v4940
    %6750 = vmatprep.subr.bf16.mxu0 %v4937
    %6751 = vmatpush1.bf16.msra.mxu0 %v4936
    %6752 = vmatprep.subr.bf16.mxu0 %v4933
    %6753 = vmatpush1.bf16.msra.mxu0 %v4932
    %6754 = vmatprep.subr.bf16.mxu0 %v4929
    %6755 = vmatpush1.bf16.msra.mxu0 %v4928
    %6756 = vmatprep.subr.bf16.mxu0 %v4925
    %6757 = vmatpush1.bf16.msra.mxu0 %v4924
    %6758 = vmatprep.subr.bf16.mxu0 %v4985
    %6759 = vmatpush2.bf16.msra.mxu0 %v4984
    %6760 = vmatprep.subr.bf16.mxu0 %v4981
    %6761 = vmatpush2.bf16.msra.mxu0 %v4980
    %6762 = vmatprep.subr.bf16.mxu0 %v4977
    %6763 = vmatpush2.bf16.msra.mxu0 %v4976
    %6764 = vmatprep.subr.bf16.mxu0 %v4973
    %6765 = vmatpush2.bf16.msra.mxu0 %v4972
    %6766 = vmatprep.subr.bf16.mxu0 %v4969
    %6767 = vmatpush2.bf16.msra.mxu0 %v4968
    %6768 = vmatprep.subr.bf16.mxu0 %v4965
    %6769 = vmatpush2.bf16.msra.mxu0 %v4964
    %6770 = vmatprep.subr.bf16.mxu0 %v4961
    %6771 = vmatpush2.bf16.msra.mxu0 %v4960
    %6772 = vmatprep.subr.bf16.mxu0 %v4957
    %6773 = vmatpush2.bf16.msra.mxu0 %v4956
    %6774 = vmatprep.mubr.bf16.mxu0 %v155
    %6775 = vmatmul.mubr.bf16.gmra.mxu0 %v154
    %v6776 = vpop.f32.mrf.mxu0
    %v6777 = vadd.f32 %v6736, %v6776
    %v6778 = vpop.f32.mrf.mxu0
    %v6779 = vadd.f32 %v6738, %v6778
    %v6780 = vpop.f32.mrf.mxu0
    %v6781 = vpop.f32.mrf.mxu0
    %6782 = vdwg.mxu0
    %6783 = vmatprep.subr.bf16.mxu0 %v5017
    %6784 = vmatpush1.bf16.msra.mxu0 %v5016
    %6785 = vmatprep.subr.bf16.mxu0 %v5013
    %6786 = vmatpush1.bf16.msra.mxu0 %v5012
    %6787 = vmatprep.subr.bf16.mxu0 %v5009
    %6788 = vmatpush1.bf16.msra.mxu0 %v5008
    %6789 = vmatprep.subr.bf16.mxu0 %v5005
    %6790 = vmatpush1.bf16.msra.mxu0 %v5004
    %6791 = vmatprep.subr.bf16.mxu0 %v5001
    %6792 = vmatpush1.bf16.msra.mxu0 %v5000
    %6793 = vmatprep.subr.bf16.mxu0 %v4997
    %6794 = vmatpush1.bf16.msra.mxu0 %v4996
    %6795 = vmatprep.subr.bf16.mxu0 %v4993
    %6796 = vmatpush1.bf16.msra.mxu0 %v4992
    %6797 = vmatprep.subr.bf16.mxu0 %v4989
    %6798 = vmatpush1.bf16.msra.mxu0 %v4988
    %6799 = vmatprep.subr.bf16.mxu0 %v5049
    %6800 = vmatpush2.bf16.msra.mxu0 %v5048
    %6801 = vmatprep.subr.bf16.mxu0 %v5045
    %6802 = vmatpush2.bf16.msra.mxu0 %v5044
    %6803 = vmatprep.subr.bf16.mxu0 %v5041
    %6804 = vmatpush2.bf16.msra.mxu0 %v5040
    %6805 = vmatprep.subr.bf16.mxu0 %v5037
    %6806 = vmatpush2.bf16.msra.mxu0 %v5036
    %6807 = vmatprep.subr.bf16.mxu0 %v5033
    %6808 = vmatpush2.bf16.msra.mxu0 %v5032
    %6809 = vmatprep.subr.bf16.mxu0 %v5029
    %6810 = vmatpush2.bf16.msra.mxu0 %v5028
    %6811 = vmatprep.subr.bf16.mxu0 %v5025
    %6812 = vmatpush2.bf16.msra.mxu0 %v5024
    %6813 = vmatprep.subr.bf16.mxu0 %v5021
    %6814 = vmatpush2.bf16.msra.mxu0 %v5020
    %6815 = vmatprep.mubr.bf16.mxu0 %v157
    %6816 = vmatmul.mubr.bf16.gmra.mxu0 %v156
    %v6817 = vpop.f32.mrf.mxu0
    %v6818 = vadd.f32 %v6777, %v6817
    %v6819 = vpop.f32.mrf.mxu0
    %v6820 = vadd.f32 %v6779, %v6819
    %v6821 = vpop.f32.mrf.mxu0
    %v6822 = vpop.f32.mrf.mxu0
    %6823 = vdwg.mxu0
    %6824 = vmatprep.subr.bf16.mxu0 %v5081
    %6825 = vmatpush1.bf16.msra.mxu0 %v5080
    %6826 = vmatprep.subr.bf16.mxu0 %v5077
    %6827 = vmatpush1.bf16.msra.mxu0 %v5076
    %6828 = vmatprep.subr.bf16.mxu0 %v5073
    %6829 = vmatpush1.bf16.msra.mxu0 %v5072
    %6830 = vmatprep.subr.bf16.mxu0 %v5069
    %6831 = vmatpush1.bf16.msra.mxu0 %v5068
    %6832 = vmatprep.subr.bf16.mxu0 %v5065
    %6833 = vmatpush1.bf16.msra.mxu0 %v5064
    %6834 = vmatprep.subr.bf16.mxu0 %v5061
    %6835 = vmatpush1.bf16.msra.mxu0 %v5060
    %6836 = vmatprep.subr.bf16.mxu0 %v5057
    %6837 = vmatpush1.bf16.msra.mxu0 %v5056
    %6838 = vmatprep.subr.bf16.mxu0 %v5053
    %6839 = vmatpush1.bf16.msra.mxu0 %v5052
    %6840 = vmatprep.subr.bf16.mxu0 %v5113
    %6841 = vmatpush2.bf16.msra.mxu0 %v5112
    %6842 = vmatprep.subr.bf16.mxu0 %v5109
    %6843 = vmatpush2.bf16.msra.mxu0 %v5108
    %6844 = vmatprep.subr.bf16.mxu0 %v5105
    %6845 = vmatpush2.bf16.msra.mxu0 %v5104
    %6846 = vmatprep.subr.bf16.mxu0 %v5101
    %6847 = vmatpush2.bf16.msra.mxu0 %v5100
    %6848 = vmatprep.subr.bf16.mxu0 %v5097
    %6849 = vmatpush2.bf16.msra.mxu0 %v5096
    %6850 = vmatprep.subr.bf16.mxu0 %v5093
    %6851 = vmatpush2.bf16.msra.mxu0 %v5092
    %6852 = vmatprep.subr.bf16.mxu0 %v5089
    %6853 = vmatpush2.bf16.msra.mxu0 %v5088
    %6854 = vmatprep.subr.bf16.mxu0 %v5085
    %6855 = vmatpush2.bf16.msra.mxu0 %v5084
    %6856 = vmatprep.mubr.bf16.mxu0 %v159
    %6857 = vmatmul.mubr.bf16.gmra.mxu0 %v158
    %v6858 = vpop.f32.mrf.mxu0
    %v6859 = vadd.f32 %v6818, %v6858
    %v6860 = vpop.f32.mrf.mxu0
    %v6861 = vadd.f32 %v6820, %v6860
    %v6862 = vpop.f32.mrf.mxu0
    %v6863 = vpop.f32.mrf.mxu0
    %6864 = vdwg.mxu0
    %6865 = vmatprep.subr.bf16.mxu0 %v5145
    %6866 = vmatpush1.bf16.msra.mxu0 %v5144
    %6867 = vmatprep.subr.bf16.mxu0 %v5141
    %6868 = vmatpush1.bf16.msra.mxu0 %v5140
    %6869 = vmatprep.subr.bf16.mxu0 %v5137
    %6870 = vmatpush1.bf16.msra.mxu0 %v5136
    %6871 = vmatprep.subr.bf16.mxu0 %v5133
    %6872 = vmatpush1.bf16.msra.mxu0 %v5132
    %6873 = vmatprep.subr.bf16.mxu0 %v5129
    %6874 = vmatpush1.bf16.msra.mxu0 %v5128
    %6875 = vmatprep.subr.bf16.mxu0 %v5125
    %6876 = vmatpush1.bf16.msra.mxu0 %v5124
    %6877 = vmatprep.subr.bf16.mxu0 %v5121
    %6878 = vmatpush1.bf16.msra.mxu0 %v5120
    %6879 = vmatprep.subr.bf16.mxu0 %v5117
    %6880 = vmatpush1.bf16.msra.mxu0 %v5116
    %6881 = vmatprep.subr.bf16.mxu0 %v5177
    %6882 = vmatpush2.bf16.msra.mxu0 %v5176
    %6883 = vmatprep.subr.bf16.mxu0 %v5173
    %6884 = vmatpush2.bf16.msra.mxu0 %v5172
    %6885 = vmatprep.subr.bf16.mxu0 %v5169
    %6886 = vmatpush2.bf16.msra.mxu0 %v5168
    %6887 = vmatprep.subr.bf16.mxu0 %v5165
    %6888 = vmatpush2.bf16.msra.mxu0 %v5164
    %6889 = vmatprep.subr.bf16.mxu0 %v5161
    %6890 = vmatpush2.bf16.msra.mxu0 %v5160
    %6891 = vmatprep.subr.bf16.mxu0 %v5157
    %6892 = vmatpush2.bf16.msra.mxu0 %v5156
    %6893 = vmatprep.subr.bf16.mxu0 %v5153
    %6894 = vmatpush2.bf16.msra.mxu0 %v5152
    %6895 = vmatprep.subr.bf16.mxu0 %v5149
    %6896 = vmatpush2.bf16.msra.mxu0 %v5148
    %6897 = vmatprep.mubr.bf16.mxu0 %v161
    %6898 = vmatmul.mubr.bf16.gmra.mxu0 %v160
    %v6899 = vpop.f32.mrf.mxu0
    %v6900 = vadd.f32 %v6859, %v6899
    %v6901 = vpop.f32.mrf.mxu0
    %v6902 = vadd.f32 %v6861, %v6901
    %v6903 = vpop.f32.mrf.mxu0
    %v6904 = vpop.f32.mrf.mxu0
    %6905 = vdwg.mxu0
    %6906 = vmatprep.subr.bf16.mxu0 %v5209
    %6907 = vmatpush1.bf16.msra.mxu0 %v5208
    %6908 = vmatprep.subr.bf16.mxu0 %v5205
    %6909 = vmatpush1.bf16.msra.mxu0 %v5204
    %6910 = vmatprep.subr.bf16.mxu0 %v5201
    %6911 = vmatpush1.bf16.msra.mxu0 %v5200
    %6912 = vmatprep.subr.bf16.mxu0 %v5197
    %6913 = vmatpush1.bf16.msra.mxu0 %v5196
    %6914 = vmatprep.subr.bf16.mxu0 %v5193
    %6915 = vmatpush1.bf16.msra.mxu0 %v5192
    %6916 = vmatprep.subr.bf16.mxu0 %v5189
    %6917 = vmatpush1.bf16.msra.mxu0 %v5188
    %6918 = vmatprep.subr.bf16.mxu0 %v5185
    %6919 = vmatpush1.bf16.msra.mxu0 %v5184
    %6920 = vmatprep.subr.bf16.mxu0 %v5181
    %6921 = vmatpush1.bf16.msra.mxu0 %v5180
    %6922 = vmatprep.subr.bf16.mxu0 %v5241
    %6923 = vmatpush2.bf16.msra.mxu0 %v5240
    %6924 = vmatprep.subr.bf16.mxu0 %v5237
    %6925 = vmatpush2.bf16.msra.mxu0 %v5236
    %6926 = vmatprep.subr.bf16.mxu0 %v5233
    %6927 = vmatpush2.bf16.msra.mxu0 %v5232
    %6928 = vmatprep.subr.bf16.mxu0 %v5229
    %6929 = vmatpush2.bf16.msra.mxu0 %v5228
    %6930 = vmatprep.subr.bf16.mxu0 %v5225
    %6931 = vmatpush2.bf16.msra.mxu0 %v5224
    %6932 = vmatprep.subr.bf16.mxu0 %v5221
    %6933 = vmatpush2.bf16.msra.mxu0 %v5220
    %6934 = vmatprep.subr.bf16.mxu0 %v5217
    %6935 = vmatpush2.bf16.msra.mxu0 %v5216
    %6936 = vmatprep.subr.bf16.mxu0 %v5213
    %6937 = vmatpush2.bf16.msra.mxu0 %v5212
    %6938 = vmatprep.mubr.bf16.mxu0 %v163
    %6939 = vmatmul.mubr.bf16.gmra.mxu0 %v162
    %v6940 = vpop.f32.mrf.mxu0
    %v6941 = vadd.f32 %v6900, %v6940
    %v6942 = vpop.f32.mrf.mxu0
    %v6943 = vadd.f32 %v6902, %v6942
    %v6944 = vpop.f32.mrf.mxu0
    %v6945 = vpop.f32.mrf.mxu0
    %6946 = vdwg.mxu0
    %6947 = vmatprep.subr.bf16.mxu0 %v5273
    %6948 = vmatpush1.bf16.msra.mxu0 %v5272
    %6949 = vmatprep.subr.bf16.mxu0 %v5269
    %6950 = vmatpush1.bf16.msra.mxu0 %v5268
    %6951 = vmatprep.subr.bf16.mxu0 %v5265
    %6952 = vmatpush1.bf16.msra.mxu0 %v5264
    %6953 = vmatprep.subr.bf16.mxu0 %v5261
    %6954 = vmatpush1.bf16.msra.mxu0 %v5260
    %6955 = vmatprep.subr.bf16.mxu0 %v5257
    %6956 = vmatpush1.bf16.msra.mxu0 %v5256
    %6957 = vmatprep.subr.bf16.mxu0 %v5253
    %6958 = vmatpush1.bf16.msra.mxu0 %v5252
    %6959 = vmatprep.subr.bf16.mxu0 %v5249
    %6960 = vmatpush1.bf16.msra.mxu0 %v5248
    %6961 = vmatprep.subr.bf16.mxu0 %v5245
    %6962 = vmatpush1.bf16.msra.mxu0 %v5244
    %6963 = vmatprep.subr.bf16.mxu0 %v5305
    %6964 = vmatpush2.bf16.msra.mxu0 %v5304
    %6965 = vmatprep.subr.bf16.mxu0 %v5301
    %6966 = vmatpush2.bf16.msra.mxu0 %v5300
    %6967 = vmatprep.subr.bf16.mxu0 %v5297
    %6968 = vmatpush2.bf16.msra.mxu0 %v5296
    %6969 = vmatprep.subr.bf16.mxu0 %v5293
    %6970 = vmatpush2.bf16.msra.mxu0 %v5292
    %6971 = vmatprep.subr.bf16.mxu0 %v5289
    %6972 = vmatpush2.bf16.msra.mxu0 %v5288
    %6973 = vmatprep.subr.bf16.mxu0 %v5285
    %6974 = vmatpush2.bf16.msra.mxu0 %v5284
    %6975 = vmatprep.subr.bf16.mxu0 %v5281
    %6976 = vmatpush2.bf16.msra.mxu0 %v5280
    %6977 = vmatprep.subr.bf16.mxu0 %v5277
    %6978 = vmatpush2.bf16.msra.mxu0 %v5276
    %6979 = vmatprep.mubr.bf16.mxu0 %v165
    %6980 = vmatmul.mubr.bf16.gmra.mxu0 %v164
    %v6981 = vpop.f32.mrf.mxu0
    %v6982 = vadd.f32 %v6941, %v6981
    %v6983 = vpop.f32.mrf.mxu0
    %v6984 = vadd.f32 %v6943, %v6983
    %v6985 = vpop.f32.mrf.mxu0
    %v6986 = vpop.f32.mrf.mxu0
    %6987 = vdwg.mxu0
    %6988 = vmatprep.subr.bf16.mxu0 %v4315
    %6989 = vmatpush1.bf16.msra.mxu0 %v4314
    %6990 = vmatprep.subr.bf16.mxu0 %v4311
    %6991 = vmatpush1.bf16.msra.mxu0 %v4310
    %6992 = vmatprep.subr.bf16.mxu0 %v4307
    %6993 = vmatpush1.bf16.msra.mxu0 %v4306
    %6994 = vmatprep.subr.bf16.mxu0 %v4303
    %6995 = vmatpush1.bf16.msra.mxu0 %v4302
    %6996 = vmatprep.subr.bf16.mxu0 %v4299
    %6997 = vmatpush1.bf16.msra.mxu0 %v4298
    %6998 = vmatprep.subr.bf16.mxu0 %v4295
    %6999 = vmatpush1.bf16.msra.mxu0 %v4294
    %7000 = vmatprep.subr.bf16.mxu0 %v4291
    %7001 = vmatpush1.bf16.msra.mxu0 %v4290
    %7002 = vmatprep.subr.bf16.mxu0 %v4287
    %7003 = vmatpush1.bf16.msra.mxu0 %v4286
    %7004 = vmatprep.subr.bf16.mxu0 %v4347
    %7005 = vmatpush2.bf16.msra.mxu0 %v4346
    %7006 = vmatprep.subr.bf16.mxu0 %v4343
    %7007 = vmatpush2.bf16.msra.mxu0 %v4342
    %7008 = vmatprep.subr.bf16.mxu0 %v4339
    %7009 = vmatpush2.bf16.msra.mxu0 %v4338
    %7010 = vmatprep.subr.bf16.mxu0 %v4335
    %7011 = vmatpush2.bf16.msra.mxu0 %v4334
    %7012 = vmatprep.subr.bf16.mxu0 %v4331
    %7013 = vmatpush2.bf16.msra.mxu0 %v4330
    %7014 = vmatprep.subr.bf16.mxu0 %v4327
    %7015 = vmatpush2.bf16.msra.mxu0 %v4326
    %7016 = vmatprep.subr.bf16.mxu0 %v4323
    %7017 = vmatpush2.bf16.msra.mxu0 %v4322
    %7018 = vmatprep.subr.bf16.mxu0 %v4319
    %7019 = vmatpush2.bf16.msra.mxu0 %v4318
    %7020 = vmatprep.mubr.bf16.mxu0 %v135
    %7021 = vmatmul.mubr.bf16.gmra.mxu0 %v134
    %v7022 = vpop.f32.mrf.mxu0
    %v7023 = vadd.f32 %v1203, %v7022
    %v7024 = vpop.f32.mrf.mxu0
    %v7025 = vadd.f32 %v1207, %v7024
    %v7026 = vpop.f32.mrf.mxu0
    %v7027 = vpop.f32.mrf.mxu0
    %7028 = vdwg.mxu0
    %7029 = vmatprep.subr.bf16.mxu0 %v4379
    %7030 = vmatpush1.bf16.msra.mxu0 %v4378
    %7031 = vmatprep.subr.bf16.mxu0 %v4375
    %7032 = vmatpush1.bf16.msra.mxu0 %v4374
    %7033 = vmatprep.subr.bf16.mxu0 %v4371
    %7034 = vmatpush1.bf16.msra.mxu0 %v4370
    %7035 = vmatprep.subr.bf16.mxu0 %v4367
    %7036 = vmatpush1.bf16.msra.mxu0 %v4366
    %7037 = vmatprep.subr.bf16.mxu0 %v4363
    %7038 = vmatpush1.bf16.msra.mxu0 %v4362
    %7039 = vmatprep.subr.bf16.mxu0 %v4359
    %7040 = vmatpush1.bf16.msra.mxu0 %v4358
    %7041 = vmatprep.subr.bf16.mxu0 %v4355
    %7042 = vmatpush1.bf16.msra.mxu0 %v4354
    %7043 = vmatprep.subr.bf16.mxu0 %v4351
    %7044 = vmatpush1.bf16.msra.mxu0 %v4350
    %7045 = vmatprep.subr.bf16.mxu0 %v4411
    %7046 = vmatpush2.bf16.msra.mxu0 %v4410
    %7047 = vmatprep.subr.bf16.mxu0 %v4407
    %7048 = vmatpush2.bf16.msra.mxu0 %v4406
    %7049 = vmatprep.subr.bf16.mxu0 %v4403
    %7050 = vmatpush2.bf16.msra.mxu0 %v4402
    %7051 = vmatprep.subr.bf16.mxu0 %v4399
    %7052 = vmatpush2.bf16.msra.mxu0 %v4398
    %7053 = vmatprep.subr.bf16.mxu0 %v4395
    %7054 = vmatpush2.bf16.msra.mxu0 %v4394
    %7055 = vmatprep.subr.bf16.mxu0 %v4391
    %7056 = vmatpush2.bf16.msra.mxu0 %v4390
    %7057 = vmatprep.subr.bf16.mxu0 %v4387
    %7058 = vmatpush2.bf16.msra.mxu0 %v4386
    %7059 = vmatprep.subr.bf16.mxu0 %v4383
    %7060 = vmatpush2.bf16.msra.mxu0 %v4382
    %7061 = vmatprep.mubr.bf16.mxu0 %v137
    %7062 = vmatmul.mubr.bf16.gmra.mxu0 %v136
    %v7063 = vpop.f32.mrf.mxu0
    %v7064 = vadd.f32 %v7023, %v7063
    %v7065 = vpop.f32.mrf.mxu0
    %v7066 = vadd.f32 %v7025, %v7065
    %v7067 = vpop.f32.mrf.mxu0
    %v7068 = vpop.f32.mrf.mxu0
    %7069 = vdwg.mxu0
    %7070 = vmatprep.subr.bf16.mxu0 %v4443
    %7071 = vmatpush1.bf16.msra.mxu0 %v4442
    %7072 = vmatprep.subr.bf16.mxu0 %v4439
    %7073 = vmatpush1.bf16.msra.mxu0 %v4438
    %7074 = vmatprep.subr.bf16.mxu0 %v4435
    %7075 = vmatpush1.bf16.msra.mxu0 %v4434
    %7076 = vmatprep.subr.bf16.mxu0 %v4431
    %7077 = vmatpush1.bf16.msra.mxu0 %v4430
    %7078 = vmatprep.subr.bf16.mxu0 %v4427
    %7079 = vmatpush1.bf16.msra.mxu0 %v4426
    %7080 = vmatprep.subr.bf16.mxu0 %v4423
    %7081 = vmatpush1.bf16.msra.mxu0 %v4422
    %7082 = vmatprep.subr.bf16.mxu0 %v4419
    %7083 = vmatpush1.bf16.msra.mxu0 %v4418
    %7084 = vmatprep.subr.bf16.mxu0 %v4415
    %7085 = vmatpush1.bf16.msra.mxu0 %v4414
    %7086 = vmatprep.subr.bf16.mxu0 %v4475
    %7087 = vmatpush2.bf16.msra.mxu0 %v4474
    %7088 = vmatprep.subr.bf16.mxu0 %v4471
    %7089 = vmatpush2.bf16.msra.mxu0 %v4470
    %7090 = vmatprep.subr.bf16.mxu0 %v4467
    %7091 = vmatpush2.bf16.msra.mxu0 %v4466
    %7092 = vmatprep.subr.bf16.mxu0 %v4463
    %7093 = vmatpush2.bf16.msra.mxu0 %v4462
    %7094 = vmatprep.subr.bf16.mxu0 %v4459
    %7095 = vmatpush2.bf16.msra.mxu0 %v4458
    %7096 = vmatprep.subr.bf16.mxu0 %v4455
    %7097 = vmatpush2.bf16.msra.mxu0 %v4454
    %7098 = vmatprep.subr.bf16.mxu0 %v4451
    %7099 = vmatpush2.bf16.msra.mxu0 %v4450
    %7100 = vmatprep.subr.bf16.mxu0 %v4447
    %7101 = vmatpush2.bf16.msra.mxu0 %v4446
    %7102 = vmatprep.mubr.bf16.mxu0 %v139
    %7103 = vmatmul.mubr.bf16.gmra.mxu0 %v138
    %v7104 = vpop.f32.mrf.mxu0
    %v7105 = vadd.f32 %v7064, %v7104
    %v7106 = vpop.f32.mrf.mxu0
    %v7107 = vadd.f32 %v7066, %v7106
    %v7108 = vpop.f32.mrf.mxu0
    %v7109 = vpop.f32.mrf.mxu0
    %7110 = vdwg.mxu0
    %7111 = vmatprep.subr.bf16.mxu0 %v4507
    %7112 = vmatpush1.bf16.msra.mxu0 %v4506
    %7113 = vmatprep.subr.bf16.mxu0 %v4503
    %7114 = vmatpush1.bf16.msra.mxu0 %v4502
    %7115 = vmatprep.subr.bf16.mxu0 %v4499
    %7116 = vmatpush1.bf16.msra.mxu0 %v4498
    %7117 = vmatprep.subr.bf16.mxu0 %v4495
    %7118 = vmatpush1.bf16.msra.mxu0 %v4494
    %7119 = vmatprep.subr.bf16.mxu0 %v4491
    %7120 = vmatpush1.bf16.msra.mxu0 %v4490
    %7121 = vmatprep.subr.bf16.mxu0 %v4487
    %7122 = vmatpush1.bf16.msra.mxu0 %v4486
    %7123 = vmatprep.subr.bf16.mxu0 %v4483
    %7124 = vmatpush1.bf16.msra.mxu0 %v4482
    %7125 = vmatprep.subr.bf16.mxu0 %v4479
    %7126 = vmatpush1.bf16.msra.mxu0 %v4478
    %7127 = vmatprep.subr.bf16.mxu0 %v4539
    %7128 = vmatpush2.bf16.msra.mxu0 %v4538
    %7129 = vmatprep.subr.bf16.mxu0 %v4535
    %7130 = vmatpush2.bf16.msra.mxu0 %v4534
    %7131 = vmatprep.subr.bf16.mxu0 %v4531
    %7132 = vmatpush2.bf16.msra.mxu0 %v4530
    %7133 = vmatprep.subr.bf16.mxu0 %v4527
    %7134 = vmatpush2.bf16.msra.mxu0 %v4526
    %7135 = vmatprep.subr.bf16.mxu0 %v4523
    %7136 = vmatpush2.bf16.msra.mxu0 %v4522
    %7137 = vmatprep.subr.bf16.mxu0 %v4519
    %7138 = vmatpush2.bf16.msra.mxu0 %v4518
    %7139 = vmatprep.subr.bf16.mxu0 %v4515
    %7140 = vmatpush2.bf16.msra.mxu0 %v4514
    %7141 = vmatprep.subr.bf16.mxu0 %v4511
    %7142 = vmatpush2.bf16.msra.mxu0 %v4510
    %7143 = vmatprep.mubr.bf16.mxu0 %v141
    %7144 = vmatmul.mubr.bf16.gmra.mxu0 %v140
    %v7145 = vpop.f32.mrf.mxu0
    %v7146 = vadd.f32 %v7105, %v7145
    %v7147 = vpop.f32.mrf.mxu0
    %v7148 = vadd.f32 %v7107, %v7147
    %v7149 = vpop.f32.mrf.mxu0
    %v7150 = vpop.f32.mrf.mxu0
    %7151 = vdwg.mxu0
    %7152 = vmatprep.subr.bf16.mxu0 %v4571
    %7153 = vmatpush1.bf16.msra.mxu0 %v4570
    %7154 = vmatprep.subr.bf16.mxu0 %v4567
    %7155 = vmatpush1.bf16.msra.mxu0 %v4566
    %7156 = vmatprep.subr.bf16.mxu0 %v4563
    %7157 = vmatpush1.bf16.msra.mxu0 %v4562
    %7158 = vmatprep.subr.bf16.mxu0 %v4559
    %7159 = vmatpush1.bf16.msra.mxu0 %v4558
    %7160 = vmatprep.subr.bf16.mxu0 %v4555
    %7161 = vmatpush1.bf16.msra.mxu0 %v4554
    %7162 = vmatprep.subr.bf16.mxu0 %v4551
    %7163 = vmatpush1.bf16.msra.mxu0 %v4550
    %7164 = vmatprep.subr.bf16.mxu0 %v4547
    %7165 = vmatpush1.bf16.msra.mxu0 %v4546
    %7166 = vmatprep.subr.bf16.mxu0 %v4543
    %7167 = vmatpush1.bf16.msra.mxu0 %v4542
    %7168 = vmatprep.subr.bf16.mxu0 %v4603
    %7169 = vmatpush2.bf16.msra.mxu0 %v4602
    %7170 = vmatprep.subr.bf16.mxu0 %v4599
    %7171 = vmatpush2.bf16.msra.mxu0 %v4598
    %7172 = vmatprep.subr.bf16.mxu0 %v4595
    %7173 = vmatpush2.bf16.msra.mxu0 %v4594
    %7174 = vmatprep.subr.bf16.mxu0 %v4591
    %7175 = vmatpush2.bf16.msra.mxu0 %v4590
    %7176 = vmatprep.subr.bf16.mxu0 %v4587
    %7177 = vmatpush2.bf16.msra.mxu0 %v4586
    %7178 = vmatprep.subr.bf16.mxu0 %v4583
    %7179 = vmatpush2.bf16.msra.mxu0 %v4582
    %7180 = vmatprep.subr.bf16.mxu0 %v4579
    %7181 = vmatpush2.bf16.msra.mxu0 %v4578
    %7182 = vmatprep.subr.bf16.mxu0 %v4575
    %7183 = vmatpush2.bf16.msra.mxu0 %v4574
    %7184 = vmatprep.mubr.bf16.mxu0 %v143
    %7185 = vmatmul.mubr.bf16.gmra.mxu0 %v142
    %v7186 = vpop.f32.mrf.mxu0
    %v7187 = vadd.f32 %v7146, %v7186
    %v7188 = vpop.f32.mrf.mxu0
    %v7189 = vadd.f32 %v7148, %v7188
    %v7190 = vpop.f32.mrf.mxu0
    %v7191 = vpop.f32.mrf.mxu0
    %7192 = vdwg.mxu0
    %7193 = vmatprep.subr.bf16.mxu0 %v4635
    %7194 = vmatpush1.bf16.msra.mxu0 %v4634
    %7195 = vmatprep.subr.bf16.mxu0 %v4631
    %7196 = vmatpush1.bf16.msra.mxu0 %v4630
    %7197 = vmatprep.subr.bf16.mxu0 %v4627
    %7198 = vmatpush1.bf16.msra.mxu0 %v4626
    %7199 = vmatprep.subr.bf16.mxu0 %v4623
    %7200 = vmatpush1.bf16.msra.mxu0 %v4622
    %7201 = vmatprep.subr.bf16.mxu0 %v4619
    %7202 = vmatpush1.bf16.msra.mxu0 %v4618
    %7203 = vmatprep.subr.bf16.mxu0 %v4615
    %7204 = vmatpush1.bf16.msra.mxu0 %v4614
    %7205 = vmatprep.subr.bf16.mxu0 %v4611
    %7206 = vmatpush1.bf16.msra.mxu0 %v4610
    %7207 = vmatprep.subr.bf16.mxu0 %v4607
    %7208 = vmatpush1.bf16.msra.mxu0 %v4606
    %7209 = vmatprep.subr.bf16.mxu0 %v4667
    %7210 = vmatpush2.bf16.msra.mxu0 %v4666
    %7211 = vmatprep.subr.bf16.mxu0 %v4663
    %7212 = vmatpush2.bf16.msra.mxu0 %v4662
    %7213 = vmatprep.subr.bf16.mxu0 %v4659
    %7214 = vmatpush2.bf16.msra.mxu0 %v4658
    %7215 = vmatprep.subr.bf16.mxu0 %v4655
    %7216 = vmatpush2.bf16.msra.mxu0 %v4654
    %7217 = vmatprep.subr.bf16.mxu0 %v4651
    %7218 = vmatpush2.bf16.msra.mxu0 %v4650
    %7219 = vmatprep.subr.bf16.mxu0 %v4647
    %7220 = vmatpush2.bf16.msra.mxu0 %v4646
    %7221 = vmatprep.subr.bf16.mxu0 %v4643
    %7222 = vmatpush2.bf16.msra.mxu0 %v4642
    %7223 = vmatprep.subr.bf16.mxu0 %v4639
    %7224 = vmatpush2.bf16.msra.mxu0 %v4638
    %7225 = vmatprep.mubr.bf16.mxu0 %v145
    %7226 = vmatmul.mubr.bf16.gmra.mxu0 %v144
    %v7227 = vpop.f32.mrf.mxu0
    %v7228 = vadd.f32 %v7187, %v7227
    %v7229 = vpop.f32.mrf.mxu0
    %v7230 = vadd.f32 %v7189, %v7229
    %v7231 = vpop.f32.mrf.mxu0
    %v7232 = vpop.f32.mrf.mxu0
    %7233 = vdwg.mxu0
    %7234 = vmatprep.subr.bf16.mxu0 %v4699
    %7235 = vmatpush1.bf16.msra.mxu0 %v4698
    %7236 = vmatprep.subr.bf16.mxu0 %v4695
    %7237 = vmatpush1.bf16.msra.mxu0 %v4694
    %7238 = vmatprep.subr.bf16.mxu0 %v4691
    %7239 = vmatpush1.bf16.msra.mxu0 %v4690
    %7240 = vmatprep.subr.bf16.mxu0 %v4687
    %7241 = vmatpush1.bf16.msra.mxu0 %v4686
    %7242 = vmatprep.subr.bf16.mxu0 %v4683
    %7243 = vmatpush1.bf16.msra.mxu0 %v4682
    %7244 = vmatprep.subr.bf16.mxu0 %v4679
    %7245 = vmatpush1.bf16.msra.mxu0 %v4678
    %7246 = vmatprep.subr.bf16.mxu0 %v4675
    %7247 = vmatpush1.bf16.msra.mxu0 %v4674
    %7248 = vmatprep.subr.bf16.mxu0 %v4671
    %7249 = vmatpush1.bf16.msra.mxu0 %v4670
    %7250 = vmatprep.subr.bf16.mxu0 %v4731
    %7251 = vmatpush2.bf16.msra.mxu0 %v4730
    %7252 = vmatprep.subr.bf16.mxu0 %v4727
    %7253 = vmatpush2.bf16.msra.mxu0 %v4726
    %7254 = vmatprep.subr.bf16.mxu0 %v4723
    %7255 = vmatpush2.bf16.msra.mxu0 %v4722
    %7256 = vmatprep.subr.bf16.mxu0 %v4719
    %7257 = vmatpush2.bf16.msra.mxu0 %v4718
    %7258 = vmatprep.subr.bf16.mxu0 %v4715
    %7259 = vmatpush2.bf16.msra.mxu0 %v4714
    %7260 = vmatprep.subr.bf16.mxu0 %v4711
    %7261 = vmatpush2.bf16.msra.mxu0 %v4710
    %7262 = vmatprep.subr.bf16.mxu0 %v4707
    %7263 = vmatpush2.bf16.msra.mxu0 %v4706
    %7264 = vmatprep.subr.bf16.mxu0 %v4703
    %7265 = vmatpush2.bf16.msra.mxu0 %v4702
    %7266 = vmatprep.mubr.bf16.mxu0 %v147
    %7267 = vmatmul.mubr.bf16.gmra.mxu0 %v146
    %v7268 = vpop.f32.mrf.mxu0
    %v7269 = vadd.f32 %v7228, %v7268
    %v7270 = vpop.f32.mrf.mxu0
    %v7271 = vadd.f32 %v7230, %v7270
    %v7272 = vpop.f32.mrf.mxu0
    %v7273 = vpop.f32.mrf.mxu0
    %7274 = vdwg.mxu0
    %7275 = vmatprep.subr.bf16.mxu0 %v4763
    %7276 = vmatpush1.bf16.msra.mxu0 %v4762
    %7277 = vmatprep.subr.bf16.mxu0 %v4759
    %7278 = vmatpush1.bf16.msra.mxu0 %v4758
    %7279 = vmatprep.subr.bf16.mxu0 %v4755
    %7280 = vmatpush1.bf16.msra.mxu0 %v4754
    %7281 = vmatprep.subr.bf16.mxu0 %v4751
    %7282 = vmatpush1.bf16.msra.mxu0 %v4750
    %7283 = vmatprep.subr.bf16.mxu0 %v4747
    %7284 = vmatpush1.bf16.msra.mxu0 %v4746
    %7285 = vmatprep.subr.bf16.mxu0 %v4743
    %7286 = vmatpush1.bf16.msra.mxu0 %v4742
    %7287 = vmatprep.subr.bf16.mxu0 %v4739
    %7288 = vmatpush1.bf16.msra.mxu0 %v4738
    %7289 = vmatprep.subr.bf16.mxu0 %v4735
    %7290 = vmatpush1.bf16.msra.mxu0 %v4734
    %7291 = vmatprep.subr.bf16.mxu0 %v4795
    %7292 = vmatpush2.bf16.msra.mxu0 %v4794
    %7293 = vmatprep.subr.bf16.mxu0 %v4791
    %7294 = vmatpush2.bf16.msra.mxu0 %v4790
    %7295 = vmatprep.subr.bf16.mxu0 %v4787
    %7296 = vmatpush2.bf16.msra.mxu0 %v4786
    %7297 = vmatprep.subr.bf16.mxu0 %v4783
    %7298 = vmatpush2.bf16.msra.mxu0 %v4782
    %7299 = vmatprep.subr.bf16.mxu0 %v4779
    %7300 = vmatpush2.bf16.msra.mxu0 %v4778
    %7301 = vmatprep.subr.bf16.mxu0 %v4775
    %7302 = vmatpush2.bf16.msra.mxu0 %v4774
    %7303 = vmatprep.subr.bf16.mxu0 %v4771
    %7304 = vmatpush2.bf16.msra.mxu0 %v4770
    %7305 = vmatprep.subr.bf16.mxu0 %v4767
    %7306 = vmatpush2.bf16.msra.mxu0 %v4766
    %7307 = vmatprep.mubr.bf16.mxu0 %v149
    %7308 = vmatmul.mubr.bf16.gmra.mxu0 %v148
    %v7309 = vpop.f32.mrf.mxu0
    %v7310 = vadd.f32 %v7269, %v7309
    %v7311 = vpop.f32.mrf.mxu0
    %v7312 = vadd.f32 %v7271, %v7311
    %v7313 = vpop.f32.mrf.mxu0
    %v7314 = vpop.f32.mrf.mxu0
    %7315 = vdwg.mxu0
    %7316 = vmatprep.subr.bf16.mxu0 %v4827
    %7317 = vmatpush1.bf16.msra.mxu0 %v4826
    %7318 = vmatprep.subr.bf16.mxu0 %v4823
    %7319 = vmatpush1.bf16.msra.mxu0 %v4822
    %7320 = vmatprep.subr.bf16.mxu0 %v4819
    %7321 = vmatpush1.bf16.msra.mxu0 %v4818
    %7322 = vmatprep.subr.bf16.mxu0 %v4815
    %7323 = vmatpush1.bf16.msra.mxu0 %v4814
    %7324 = vmatprep.subr.bf16.mxu0 %v4811
    %7325 = vmatpush1.bf16.msra.mxu0 %v4810
    %7326 = vmatprep.subr.bf16.mxu0 %v4807
    %7327 = vmatpush1.bf16.msra.mxu0 %v4806
    %7328 = vmatprep.subr.bf16.mxu0 %v4803
    %7329 = vmatpush1.bf16.msra.mxu0 %v4802
    %7330 = vmatprep.subr.bf16.mxu0 %v4799
    %7331 = vmatpush1.bf16.msra.mxu0 %v4798
    %7332 = vmatprep.subr.bf16.mxu0 %v4859
    %7333 = vmatpush2.bf16.msra.mxu0 %v4858
    %7334 = vmatprep.subr.bf16.mxu0 %v4855
    %7335 = vmatpush2.bf16.msra.mxu0 %v4854
    %7336 = vmatprep.subr.bf16.mxu0 %v4851
    %7337 = vmatpush2.bf16.msra.mxu0 %v4850
    %7338 = vmatprep.subr.bf16.mxu0 %v4847
    %7339 = vmatpush2.bf16.msra.mxu0 %v4846
    %7340 = vmatprep.subr.bf16.mxu0 %v4843
    %7341 = vmatpush2.bf16.msra.mxu0 %v4842
    %7342 = vmatprep.subr.bf16.mxu0 %v4839
    %7343 = vmatpush2.bf16.msra.mxu0 %v4838
    %7344 = vmatprep.subr.bf16.mxu0 %v4835
    %7345 = vmatpush2.bf16.msra.mxu0 %v4834
    %7346 = vmatprep.subr.bf16.mxu0 %v4831
    %7347 = vmatpush2.bf16.msra.mxu0 %v4830
    %7348 = vmatprep.mubr.bf16.mxu0 %v151
    %7349 = vmatmul.mubr.bf16.gmra.mxu0 %v150
    %v7350 = vpop.f32.mrf.mxu0
    %v7351 = vadd.f32 %v7310, %v7350
    %v7352 = vpop.f32.mrf.mxu0
    %v7353 = vadd.f32 %v7312, %v7352
    %v7354 = vpop.f32.mrf.mxu0
    %v7355 = vpop.f32.mrf.mxu0
    %7356 = vdwg.mxu0
    %7357 = vmatprep.subr.bf16.mxu0 %v4891
    %7358 = vmatpush1.bf16.msra.mxu0 %v4890
    %7359 = vmatprep.subr.bf16.mxu0 %v4887
    %7360 = vmatpush1.bf16.msra.mxu0 %v4886
    %7361 = vmatprep.subr.bf16.mxu0 %v4883
    %7362 = vmatpush1.bf16.msra.mxu0 %v4882
    %7363 = vmatprep.subr.bf16.mxu0 %v4879
    %7364 = vmatpush1.bf16.msra.mxu0 %v4878
    %7365 = vmatprep.subr.bf16.mxu0 %v4875
    %7366 = vmatpush1.bf16.msra.mxu0 %v4874
    %7367 = vmatprep.subr.bf16.mxu0 %v4871
    %7368 = vmatpush1.bf16.msra.mxu0 %v4870
    %7369 = vmatprep.subr.bf16.mxu0 %v4867
    %7370 = vmatpush1.bf16.msra.mxu0 %v4866
    %7371 = vmatprep.subr.bf16.mxu0 %v4863
    %7372 = vmatpush1.bf16.msra.mxu0 %v4862
    %7373 = vmatprep.subr.bf16.mxu0 %v4923
    %7374 = vmatpush2.bf16.msra.mxu0 %v4922
    %7375 = vmatprep.subr.bf16.mxu0 %v4919
    %7376 = vmatpush2.bf16.msra.mxu0 %v4918
    %7377 = vmatprep.subr.bf16.mxu0 %v4915
    %7378 = vmatpush2.bf16.msra.mxu0 %v4914
    %7379 = vmatprep.subr.bf16.mxu0 %v4911
    %7380 = vmatpush2.bf16.msra.mxu0 %v4910
    %7381 = vmatprep.subr.bf16.mxu0 %v4907
    %7382 = vmatpush2.bf16.msra.mxu0 %v4906
    %7383 = vmatprep.subr.bf16.mxu0 %v4903
    %7384 = vmatpush2.bf16.msra.mxu0 %v4902
    %7385 = vmatprep.subr.bf16.mxu0 %v4899
    %7386 = vmatpush2.bf16.msra.mxu0 %v4898
    %7387 = vmatprep.subr.bf16.mxu0 %v4895
    %7388 = vmatpush2.bf16.msra.mxu0 %v4894
    %7389 = vmatprep.mubr.bf16.mxu0 %v153
    %7390 = vmatmul.mubr.bf16.gmra.mxu0 %v152
    %v7391 = vpop.f32.mrf.mxu0
    %v7392 = vadd.f32 %v7351, %v7391
    %v7393 = vpop.f32.mrf.mxu0
    %v7394 = vadd.f32 %v7353, %v7393
    %v7395 = vpop.f32.mrf.mxu0
    %v7396 = vpop.f32.mrf.mxu0
    %7397 = vdwg.mxu0
    %7398 = vmatprep.subr.bf16.mxu0 %v4955
    %7399 = vmatpush1.bf16.msra.mxu0 %v4954
    %7400 = vmatprep.subr.bf16.mxu0 %v4951
    %7401 = vmatpush1.bf16.msra.mxu0 %v4950
    %7402 = vmatprep.subr.bf16.mxu0 %v4947
    %7403 = vmatpush1.bf16.msra.mxu0 %v4946
    %7404 = vmatprep.subr.bf16.mxu0 %v4943
    %7405 = vmatpush1.bf16.msra.mxu0 %v4942
    %7406 = vmatprep.subr.bf16.mxu0 %v4939
    %7407 = vmatpush1.bf16.msra.mxu0 %v4938
    %7408 = vmatprep.subr.bf16.mxu0 %v4935
    %7409 = vmatpush1.bf16.msra.mxu0 %v4934
    %7410 = vmatprep.subr.bf16.mxu0 %v4931
    %7411 = vmatpush1.bf16.msra.mxu0 %v4930
    %7412 = vmatprep.subr.bf16.mxu0 %v4927
    %7413 = vmatpush1.bf16.msra.mxu0 %v4926
    %7414 = vmatprep.subr.bf16.mxu0 %v4987
    %7415 = vmatpush2.bf16.msra.mxu0 %v4986
    %7416 = vmatprep.subr.bf16.mxu0 %v4983
    %7417 = vmatpush2.bf16.msra.mxu0 %v4982
    %7418 = vmatprep.subr.bf16.mxu0 %v4979
    %7419 = vmatpush2.bf16.msra.mxu0 %v4978
    %7420 = vmatprep.subr.bf16.mxu0 %v4975
    %7421 = vmatpush2.bf16.msra.mxu0 %v4974
    %7422 = vmatprep.subr.bf16.mxu0 %v4971
    %7423 = vmatpush2.bf16.msra.mxu0 %v4970
    %7424 = vmatprep.subr.bf16.mxu0 %v4967
    %7425 = vmatpush2.bf16.msra.mxu0 %v4966
    %7426 = vmatprep.subr.bf16.mxu0 %v4963
    %7427 = vmatpush2.bf16.msra.mxu0 %v4962
    %7428 = vmatprep.subr.bf16.mxu0 %v4959
    %7429 = vmatpush2.bf16.msra.mxu0 %v4958
    %7430 = vmatprep.mubr.bf16.mxu0 %v155
    %7431 = vmatmul.mubr.bf16.gmra.mxu0 %v154
    %v7432 = vpop.f32.mrf.mxu0
    %v7433 = vadd.f32 %v7392, %v7432
    %v7434 = vpop.f32.mrf.mxu0
    %v7435 = vadd.f32 %v7394, %v7434
    %v7436 = vpop.f32.mrf.mxu0
    %v7437 = vpop.f32.mrf.mxu0
    %7438 = vdwg.mxu0
    %7439 = vmatprep.subr.bf16.mxu0 %v5019
    %7440 = vmatpush1.bf16.msra.mxu0 %v5018
    %7441 = vmatprep.subr.bf16.mxu0 %v5015
    %7442 = vmatpush1.bf16.msra.mxu0 %v5014
    %7443 = vmatprep.subr.bf16.mxu0 %v5011
    %7444 = vmatpush1.bf16.msra.mxu0 %v5010
    %7445 = vmatprep.subr.bf16.mxu0 %v5007
    %7446 = vmatpush1.bf16.msra.mxu0 %v5006
    %7447 = vmatprep.subr.bf16.mxu0 %v5003
    %7448 = vmatpush1.bf16.msra.mxu0 %v5002
    %7449 = vmatprep.subr.bf16.mxu0 %v4999
    %7450 = vmatpush1.bf16.msra.mxu0 %v4998
    %7451 = vmatprep.subr.bf16.mxu0 %v4995
    %7452 = vmatpush1.bf16.msra.mxu0 %v4994
    %7453 = vmatprep.subr.bf16.mxu0 %v4991
    %7454 = vmatpush1.bf16.msra.mxu0 %v4990
    %7455 = vmatprep.subr.bf16.mxu0 %v5051
    %7456 = vmatpush2.bf16.msra.mxu0 %v5050
    %7457 = vmatprep.subr.bf16.mxu0 %v5047
    %7458 = vmatpush2.bf16.msra.mxu0 %v5046
    %7459 = vmatprep.subr.bf16.mxu0 %v5043
    %7460 = vmatpush2.bf16.msra.mxu0 %v5042
    %7461 = vmatprep.subr.bf16.mxu0 %v5039
    %7462 = vmatpush2.bf16.msra.mxu0 %v5038
    %7463 = vmatprep.subr.bf16.mxu0 %v5035
    %7464 = vmatpush2.bf16.msra.mxu0 %v5034
    %7465 = vmatprep.subr.bf16.mxu0 %v5031
    %7466 = vmatpush2.bf16.msra.mxu0 %v5030
    %7467 = vmatprep.subr.bf16.mxu0 %v5027
    %7468 = vmatpush2.bf16.msra.mxu0 %v5026
    %7469 = vmatprep.subr.bf16.mxu0 %v5023
    %7470 = vmatpush2.bf16.msra.mxu0 %v5022
    %7471 = vmatprep.mubr.bf16.mxu0 %v157
    %7472 = vmatmul.mubr.bf16.gmra.mxu0 %v156
    %v7473 = vpop.f32.mrf.mxu0
    %v7474 = vadd.f32 %v7433, %v7473
    %v7475 = vpop.f32.mrf.mxu0
    %v7476 = vadd.f32 %v7435, %v7475
    %v7477 = vpop.f32.mrf.mxu0
    %v7478 = vpop.f32.mrf.mxu0
    %7479 = vdwg.mxu0
    %7480 = vmatprep.subr.bf16.mxu0 %v5083
    %7481 = vmatpush1.bf16.msra.mxu0 %v5082
    %7482 = vmatprep.subr.bf16.mxu0 %v5079
    %7483 = vmatpush1.bf16.msra.mxu0 %v5078
    %7484 = vmatprep.subr.bf16.mxu0 %v5075
    %7485 = vmatpush1.bf16.msra.mxu0 %v5074
    %7486 = vmatprep.subr.bf16.mxu0 %v5071
    %7487 = vmatpush1.bf16.msra.mxu0 %v5070
    %7488 = vmatprep.subr.bf16.mxu0 %v5067
    %7489 = vmatpush1.bf16.msra.mxu0 %v5066
    %7490 = vmatprep.subr.bf16.mxu0 %v5063
    %7491 = vmatpush1.bf16.msra.mxu0 %v5062
    %7492 = vmatprep.subr.bf16.mxu0 %v5059
    %7493 = vmatpush1.bf16.msra.mxu0 %v5058
    %7494 = vmatprep.subr.bf16.mxu0 %v5055
    %7495 = vmatpush1.bf16.msra.mxu0 %v5054
    %7496 = vmatprep.subr.bf16.mxu0 %v5115
    %7497 = vmatpush2.bf16.msra.mxu0 %v5114
    %7498 = vmatprep.subr.bf16.mxu0 %v5111
    %7499 = vmatpush2.bf16.msra.mxu0 %v5110
    %7500 = vmatprep.subr.bf16.mxu0 %v5107
    %7501 = vmatpush2.bf16.msra.mxu0 %v5106
    %7502 = vmatprep.subr.bf16.mxu0 %v5103
    %7503 = vmatpush2.bf16.msra.mxu0 %v5102
    %7504 = vmatprep.subr.bf16.mxu0 %v5099
    %7505 = vmatpush2.bf16.msra.mxu0 %v5098
    %7506 = vmatprep.subr.bf16.mxu0 %v5095
    %7507 = vmatpush2.bf16.msra.mxu0 %v5094
    %7508 = vmatprep.subr.bf16.mxu0 %v5091
    %7509 = vmatpush2.bf16.msra.mxu0 %v5090
    %7510 = vmatprep.subr.bf16.mxu0 %v5087
    %7511 = vmatpush2.bf16.msra.mxu0 %v5086
    %7512 = vmatprep.mubr.bf16.mxu0 %v159
    %7513 = vmatmul.mubr.bf16.gmra.mxu0 %v158
    %v7514 = vpop.f32.mrf.mxu0
    %v7515 = vadd.f32 %v7474, %v7514
    %v7516 = vpop.f32.mrf.mxu0
    %v7517 = vadd.f32 %v7476, %v7516
    %v7518 = vpop.f32.mrf.mxu0
    %v7519 = vpop.f32.mrf.mxu0
    %7520 = vdwg.mxu0
    %7521 = vmatprep.subr.bf16.mxu0 %v5147
    %7522 = vmatpush1.bf16.msra.mxu0 %v5146
    %7523 = vmatprep.subr.bf16.mxu0 %v5143
    %7524 = vmatpush1.bf16.msra.mxu0 %v5142
    %7525 = vmatprep.subr.bf16.mxu0 %v5139
    %7526 = vmatpush1.bf16.msra.mxu0 %v5138
    %7527 = vmatprep.subr.bf16.mxu0 %v5135
    %7528 = vmatpush1.bf16.msra.mxu0 %v5134
    %7529 = vmatprep.subr.bf16.mxu0 %v5131
    %7530 = vmatpush1.bf16.msra.mxu0 %v5130
    %7531 = vmatprep.subr.bf16.mxu0 %v5127
    %7532 = vmatpush1.bf16.msra.mxu0 %v5126
    %7533 = vmatprep.subr.bf16.mxu0 %v5123
    %7534 = vmatpush1.bf16.msra.mxu0 %v5122
    %7535 = vmatprep.subr.bf16.mxu0 %v5119
    %7536 = vmatpush1.bf16.msra.mxu0 %v5118
    %7537 = vmatprep.subr.bf16.mxu0 %v5179
    %7538 = vmatpush2.bf16.msra.mxu0 %v5178
    %7539 = vmatprep.subr.bf16.mxu0 %v5175
    %7540 = vmatpush2.bf16.msra.mxu0 %v5174
    %7541 = vmatprep.subr.bf16.mxu0 %v5171
    %7542 = vmatpush2.bf16.msra.mxu0 %v5170
    %7543 = vmatprep.subr.bf16.mxu0 %v5167
    %7544 = vmatpush2.bf16.msra.mxu0 %v5166
    %7545 = vmatprep.subr.bf16.mxu0 %v5163
    %7546 = vmatpush2.bf16.msra.mxu0 %v5162
    %7547 = vmatprep.subr.bf16.mxu0 %v5159
    %7548 = vmatpush2.bf16.msra.mxu0 %v5158
    %7549 = vmatprep.subr.bf16.mxu0 %v5155
    %7550 = vmatpush2.bf16.msra.mxu0 %v5154
    %7551 = vmatprep.subr.bf16.mxu0 %v5151
    %7552 = vmatpush2.bf16.msra.mxu0 %v5150
    %7553 = vmatprep.mubr.bf16.mxu0 %v161
    %7554 = vmatmul.mubr.bf16.gmra.mxu0 %v160
    %v7555 = vpop.f32.mrf.mxu0
    %v7556 = vadd.f32 %v7515, %v7555
    %v7557 = vpop.f32.mrf.mxu0
    %v7558 = vadd.f32 %v7517, %v7557
    %v7559 = vpop.f32.mrf.mxu0
    %v7560 = vpop.f32.mrf.mxu0
    %7561 = vdwg.mxu0
    %7562 = vmatprep.subr.bf16.mxu0 %v5211
    %7563 = vmatpush1.bf16.msra.mxu0 %v5210
    %7564 = vmatprep.subr.bf16.mxu0 %v5207
    %7565 = vmatpush1.bf16.msra.mxu0 %v5206
    %7566 = vmatprep.subr.bf16.mxu0 %v5203
    %7567 = vmatpush1.bf16.msra.mxu0 %v5202
    %7568 = vmatprep.subr.bf16.mxu0 %v5199
    %7569 = vmatpush1.bf16.msra.mxu0 %v5198
    %7570 = vmatprep.subr.bf16.mxu0 %v5195
    %7571 = vmatpush1.bf16.msra.mxu0 %v5194
    %7572 = vmatprep.subr.bf16.mxu0 %v5191
    %7573 = vmatpush1.bf16.msra.mxu0 %v5190
    %7574 = vmatprep.subr.bf16.mxu0 %v5187
    %7575 = vmatpush1.bf16.msra.mxu0 %v5186
    %7576 = vmatprep.subr.bf16.mxu0 %v5183
    %7577 = vmatpush1.bf16.msra.mxu0 %v5182
    %7578 = vmatprep.subr.bf16.mxu0 %v5243
    %7579 = vmatpush2.bf16.msra.mxu0 %v5242
    %7580 = vmatprep.subr.bf16.mxu0 %v5239
    %7581 = vmatpush2.bf16.msra.mxu0 %v5238
    %7582 = vmatprep.subr.bf16.mxu0 %v5235
    %7583 = vmatpush2.bf16.msra.mxu0 %v5234
    %7584 = vmatprep.subr.bf16.mxu0 %v5231
    %7585 = vmatpush2.bf16.msra.mxu0 %v5230
    %7586 = vmatprep.subr.bf16.mxu0 %v5227
    %7587 = vmatpush2.bf16.msra.mxu0 %v5226
    %7588 = vmatprep.subr.bf16.mxu0 %v5223
    %7589 = vmatpush2.bf16.msra.mxu0 %v5222
    %7590 = vmatprep.subr.bf16.mxu0 %v5219
    %7591 = vmatpush2.bf16.msra.mxu0 %v5218
    %7592 = vmatprep.subr.bf16.mxu0 %v5215
    %7593 = vmatpush2.bf16.msra.mxu0 %v5214
    %7594 = vmatprep.mubr.bf16.mxu0 %v163
    %7595 = vmatmul.mubr.bf16.gmra.mxu0 %v162
    %v7596 = vpop.f32.mrf.mxu0
    %v7597 = vadd.f32 %v7556, %v7596
    %v7598 = vpop.f32.mrf.mxu0
    %v7599 = vadd.f32 %v7558, %v7598
    %v7600 = vpop.f32.mrf.mxu0
    %v7601 = vpop.f32.mrf.mxu0
    %7602 = vdwg.mxu0
    %7603 = vmatprep.subr.bf16.mxu0 %v5275
    %7604 = vmatpush1.bf16.msra.mxu0 %v5274
    %7605 = vmatprep.subr.bf16.mxu0 %v5271
    %7606 = vmatpush1.bf16.msra.mxu0 %v5270
    %7607 = vmatprep.subr.bf16.mxu0 %v5267
    %7608 = vmatpush1.bf16.msra.mxu0 %v5266
    %7609 = vmatprep.subr.bf16.mxu0 %v5263
    %7610 = vmatpush1.bf16.msra.mxu0 %v5262
    %7611 = vmatprep.subr.bf16.mxu0 %v5259
    %7612 = vmatpush1.bf16.msra.mxu0 %v5258
    %7613 = vmatprep.subr.bf16.mxu0 %v5255
    %7614 = vmatpush1.bf16.msra.mxu0 %v5254
    %7615 = vmatprep.subr.bf16.mxu0 %v5251
    %7616 = vmatpush1.bf16.msra.mxu0 %v5250
    %7617 = vmatprep.subr.bf16.mxu0 %v5247
    %7618 = vmatpush1.bf16.msra.mxu0 %v5246
    %7619 = vmatprep.subr.bf16.mxu0 %v5307
    %7620 = vmatpush2.bf16.msra.mxu0 %v5306
    %7621 = vmatprep.subr.bf16.mxu0 %v5303
    %7622 = vmatpush2.bf16.msra.mxu0 %v5302
    %7623 = vmatprep.subr.bf16.mxu0 %v5299
    %7624 = vmatpush2.bf16.msra.mxu0 %v5298
    %7625 = vmatprep.subr.bf16.mxu0 %v5295
    %7626 = vmatpush2.bf16.msra.mxu0 %v5294
    %7627 = vmatprep.subr.bf16.mxu0 %v5291
    %7628 = vmatpush2.bf16.msra.mxu0 %v5290
    %7629 = vmatprep.subr.bf16.mxu0 %v5287
    %7630 = vmatpush2.bf16.msra.mxu0 %v5286
    %7631 = vmatprep.subr.bf16.mxu0 %v5283
    %7632 = vmatpush2.bf16.msra.mxu0 %v5282
    %7633 = vmatprep.subr.bf16.mxu0 %v5279
    %7634 = vmatpush2.bf16.msra.mxu0 %v5278
    %7635 = vmatprep.mubr.bf16.mxu0 %v165
    %7636 = vmatmul.mubr.bf16.gmra.mxu0 %v164
    %v7637 = vpop.f32.mrf.mxu0
    %v7638 = vadd.f32 %v7597, %v7637
    %v7639 = vpop.f32.mrf.mxu0
    %v7640 = vadd.f32 %v7599, %v7639
    %v7641 = vpop.f32.mrf.mxu0
    %v7642 = vpop.f32.mrf.mxu0
    %7643 = vdwg.mxu0
    %vm7644 = vcmp.gt.f32.partialorder %v6982, 0.0
    %vm7645 = vcmp.gt.f32.partialorder %v6984, 0.0
    %vm7646 = vcmp.gt.f32.partialorder %v7638, 0.0
    %vm7647 = vcmp.gt.f32.partialorder %v7640, 0.0
    %v7648 = vmul.f32 %v6982, 0.2
    %v7649 = vmul.f32 %v6984, 0.2
    %v7650 = vmul.f32 %v7638, 0.2
    %v7651 = vmul.f32 %v7640, 0.2
    %v7652 = vsel %vm7644, %v6982, %v7648
    %v7653 = vsel %vm7645, %v6984, %v7649
    %v7654 = vsel %vm7646, %v7638, %v7650
    %v7655 = vsel %vm7647, %v7640, %v7651
    %v7656 = vpack.c.bf16 %v7652, %v7652
    %v7657 = vpack.c.bf16 %v7653, %v7653
    %v7658 = vpack.c.bf16 %v7654, %v7654
    %v7659 = vpack.c.bf16 %v7655, %v7655
    %v7660 = vld [vmem:[#allocation8] sm:$0xff]
    %v7661 = vld [vmem:[#allocation8 + $0x8] sm:$0xff]
    %v7662 = vld [vmem:[#allocation8 + $0x10] sm:$0xff]
    %v7663 = vld [vmem:[#allocation8 + $0x18] sm:$0xff]
    %v7664 = vld [vmem:[#allocation8 + $0x20] sm:$0xff]
    %v7665 = vld [vmem:[#allocation8 + $0x28] sm:$0xff]
    %v7666 = vld [vmem:[#allocation8 + $0x30] sm:$0xff]
    %v7667 = vld [vmem:[#allocation8 + $0x38] sm:$0xff]
    %v7668 = vld [vmem:[#allocation8 + $0x40] sm:$0xff]
    %v7669 = vld [vmem:[#allocation8 + $0x48] sm:$0xff]
    %v7670 = vld [vmem:[#allocation8 + $0x50] sm:$0xff]
    %v7671 = vld [vmem:[#allocation8 + $0x58] sm:$0xff]
    %v7672 = vld [vmem:[#allocation8 + $0x60] sm:$0xff]
    %v7673 = vld [vmem:[#allocation8 + $0x68] sm:$0xff]
    %v7674 = vld [vmem:[#allocation8 + $0x70] sm:$0xff]
    %v7675 = vld [vmem:[#allocation8 + $0x78] sm:$0xff]
    %v7676 = vld [vmem:[#allocation8 + $0x80] sm:$0xff]
    %v7677 = vld [vmem:[#allocation8 + $0x88] sm:$0xff]
    %v7678 = vld [vmem:[#allocation8 + $0x90] sm:$0xff]
    %v7679 = vld [vmem:[#allocation8 + $0x98] sm:$0xff]
    %v7680 = vld [vmem:[#allocation8 + $0xa0] sm:$0xff]
    %v7681 = vld [vmem:[#allocation8 + $0xa8] sm:$0xff]
    %v7682 = vld [vmem:[#allocation8 + $0xb0] sm:$0xff]
    %v7683 = vld [vmem:[#allocation8 + $0xb8] sm:$0xff]
    %v7684 = vld [vmem:[#allocation8 + $0xc0] sm:$0xff]
    %v7685 = vld [vmem:[#allocation8 + $0xc8] sm:$0xff]
    %v7686 = vld [vmem:[#allocation8 + $0xd0] sm:$0xff]
    %v7687 = vld [vmem:[#allocation8 + $0xd8] sm:$0xff]
    %v7688 = vld [vmem:[#allocation8 + $0xe0] sm:$0xff]
    %v7689 = vld [vmem:[#allocation8 + $0xe8] sm:$0xff]
    %v7690 = vld [vmem:[#allocation8 + $0xf0] sm:$0xff]
    %v7691 = vld [vmem:[#allocation8 + $0xf8] sm:$0xff]
    %v7692 = vld [vmem:[#allocation8 + $0x100] sm:$0xff]
    %v7693 = vld [vmem:[#allocation8 + $0x108] sm:$0xff]
    %v7694 = vld [vmem:[#allocation8 + $0x110] sm:$0xff]
    %v7695 = vld [vmem:[#allocation8 + $0x118] sm:$0xff]
    %v7696 = vld [vmem:[#allocation8 + $0x120] sm:$0xff]
    %v7697 = vld [vmem:[#allocation8 + $0x128] sm:$0xff]
    %v7698 = vld [vmem:[#allocation8 + $0x130] sm:$0xff]
    %v7699 = vld [vmem:[#allocation8 + $0x138] sm:$0xff]
    %v7700 = vld [vmem:[#allocation8 + $0x140] sm:$0xff]
    %v7701 = vld [vmem:[#allocation8 + $0x148] sm:$0xff]
    %v7702 = vld [vmem:[#allocation8 + $0x150] sm:$0xff]
    %v7703 = vld [vmem:[#allocation8 + $0x158] sm:$0xff]
    %v7704 = vld [vmem:[#allocation8 + $0x160] sm:$0xff]
    %v7705 = vld [vmem:[#allocation8 + $0x168] sm:$0xff]
    %v7706 = vld [vmem:[#allocation8 + $0x170] sm:$0xff]
    %v7707 = vld [vmem:[#allocation8 + $0x178] sm:$0xff]
    %v7708 = vld [vmem:[#allocation8 + $0x180] sm:$0xff]
    %v7709 = vld [vmem:[#allocation8 + $0x188] sm:$0xff]
    %v7710 = vld [vmem:[#allocation8 + $0x190] sm:$0xff]
    %v7711 = vld [vmem:[#allocation8 + $0x198] sm:$0xff]
    %v7712 = vld [vmem:[#allocation8 + $0x1a0] sm:$0xff]
    %v7713 = vld [vmem:[#allocation8 + $0x1a8] sm:$0xff]
    %v7714 = vld [vmem:[#allocation8 + $0x1b0] sm:$0xff]
    %v7715 = vld [vmem:[#allocation8 + $0x1b8] sm:$0xff]
    %v7716 = vld [vmem:[#allocation8 + $0x1c0] sm:$0xff]
    %v7717 = vld [vmem:[#allocation8 + $0x1c8] sm:$0xff]
    %v7718 = vld [vmem:[#allocation8 + $0x1d0] sm:$0xff]
    %v7719 = vld [vmem:[#allocation8 + $0x1d8] sm:$0xff]
    %v7720 = vld [vmem:[#allocation8 + $0x1e0] sm:$0xff]
    %v7721 = vld [vmem:[#allocation8 + $0x1e8] sm:$0xff]
    %v7722 = vld [vmem:[#allocation8 + $0x1f0] sm:$0xff]
    %v7723 = vld [vmem:[#allocation8 + $0x1f8] sm:$0xff]
    %v7724 = vld [vmem:[#allocation10] sm:$0x3]
    %v7726 = vlaneseq
    %v7727 = vshrl.u32 %v7726, 7
    %v7728 = vsub.s32 0, %v7727
    %v7729 = vrot.slane %v7724, %v7728
    %v7730 = vlaneseq
    %v7731 = vshrl.u32 %v7730, 7
    %v7732 = vsub.s32 1, %v7731
    %v7733 = vrot.slane %v7724, %v7732
    %v7800 = vunpack.c.l.b16 %v7660
    %v7801 = vunpack.c.h.b16 %v7660
    %v7802 = vunpack.c.l.b16 %v7661
    %v7803 = vunpack.c.h.b16 %v7661
    %v7804 = vunpack.c.l.b16 %v7662
    %v7805 = vunpack.c.h.b16 %v7662
    %v7806 = vunpack.c.l.b16 %v7663
    %v7807 = vunpack.c.h.b16 %v7663
    %v7808 = vunpack.c.l.b16 %v7664
    %v7809 = vunpack.c.h.b16 %v7664
    %v7810 = vunpack.c.l.b16 %v7665
    %v7811 = vunpack.c.h.b16 %v7665
    %v7812 = vunpack.c.l.b16 %v7666
    %v7813 = vunpack.c.h.b16 %v7666
    %v7814 = vunpack.c.l.b16 %v7667
    %v7815 = vunpack.c.h.b16 %v7667
    %v7816 = vunpack.c.l.b16 %v7668
    %v7817 = vunpack.c.h.b16 %v7668
    %v7818 = vunpack.c.l.b16 %v7669
    %v7819 = vunpack.c.h.b16 %v7669
    %v7820 = vunpack.c.l.b16 %v7670
    %v7821 = vunpack.c.h.b16 %v7670
    %v7822 = vunpack.c.l.b16 %v7671
    %v7823 = vunpack.c.h.b16 %v7671
    %v7824 = vunpack.c.l.b16 %v7672
    %v7825 = vunpack.c.h.b16 %v7672
    %v7826 = vunpack.c.l.b16 %v7673
    %v7827 = vunpack.c.h.b16 %v7673
    %v7828 = vunpack.c.l.b16 %v7674
    %v7829 = vunpack.c.h.b16 %v7674
    %v7830 = vunpack.c.l.b16 %v7675
    %v7831 = vunpack.c.h.b16 %v7675
    %v7832 = vunpack.c.l.b16 %v7676
    %v7833 = vunpack.c.h.b16 %v7676
    %v7834 = vunpack.c.l.b16 %v7677
    %v7835 = vunpack.c.h.b16 %v7677
    %v7836 = vunpack.c.l.b16 %v7678
    %v7837 = vunpack.c.h.b16 %v7678
    %v7838 = vunpack.c.l.b16 %v7679
    %v7839 = vunpack.c.h.b16 %v7679
    %v7840 = vunpack.c.l.b16 %v7680
    %v7841 = vunpack.c.h.b16 %v7680
    %v7842 = vunpack.c.l.b16 %v7681
    %v7843 = vunpack.c.h.b16 %v7681
    %v7844 = vunpack.c.l.b16 %v7682
    %v7845 = vunpack.c.h.b16 %v7682
    %v7846 = vunpack.c.l.b16 %v7683
    %v7847 = vunpack.c.h.b16 %v7683
    %v7848 = vunpack.c.l.b16 %v7684
    %v7849 = vunpack.c.h.b16 %v7684
    %v7850 = vunpack.c.l.b16 %v7685
    %v7851 = vunpack.c.h.b16 %v7685
    %v7852 = vunpack.c.l.b16 %v7686
    %v7853 = vunpack.c.h.b16 %v7686
    %v7854 = vunpack.c.l.b16 %v7687
    %v7855 = vunpack.c.h.b16 %v7687
    %v7856 = vunpack.c.l.b16 %v7688
    %v7857 = vunpack.c.h.b16 %v7688
    %v7858 = vunpack.c.l.b16 %v7689
    %v7859 = vunpack.c.h.b16 %v7689
    %v7860 = vunpack.c.l.b16 %v7690
    %v7861 = vunpack.c.h.b16 %v7690
    %v7862 = vunpack.c.l.b16 %v7691
    %v7863 = vunpack.c.h.b16 %v7691
    %v7864 = vunpack.c.l.b16 %v7692
    %v7865 = vunpack.c.h.b16 %v7692
    %v7866 = vunpack.c.l.b16 %v7693
    %v7867 = vunpack.c.h.b16 %v7693
    %v7868 = vunpack.c.l.b16 %v7694
    %v7869 = vunpack.c.h.b16 %v7694
    %v7870 = vunpack.c.l.b16 %v7695
    %v7871 = vunpack.c.h.b16 %v7695
    %v7872 = vunpack.c.l.b16 %v7696
    %v7873 = vunpack.c.h.b16 %v7696
    %v7874 = vunpack.c.l.b16 %v7697
    %v7875 = vunpack.c.h.b16 %v7697
    %v7876 = vunpack.c.l.b16 %v7698
    %v7877 = vunpack.c.h.b16 %v7698
    %v7878 = vunpack.c.l.b16 %v7699
    %v7879 = vunpack.c.h.b16 %v7699
    %v7880 = vunpack.c.l.b16 %v7700
    %v7881 = vunpack.c.h.b16 %v7700
    %v7882 = vunpack.c.l.b16 %v7701
    %v7883 = vunpack.c.h.b16 %v7701
    %v7884 = vunpack.c.l.b16 %v7702
    %v7885 = vunpack.c.h.b16 %v7702
    %v7886 = vunpack.c.l.b16 %v7703
    %v7887 = vunpack.c.h.b16 %v7703
    %v7888 = vunpack.c.l.b16 %v7704
    %v7889 = vunpack.c.h.b16 %v7704
    %v7890 = vunpack.c.l.b16 %v7705
    %v7891 = vunpack.c.h.b16 %v7705
    %v7892 = vunpack.c.l.b16 %v7706
    %v7893 = vunpack.c.h.b16 %v7706
    %v7894 = vunpack.c.l.b16 %v7707
    %v7895 = vunpack.c.h.b16 %v7707
    %v7896 = vunpack.c.l.b16 %v7708
    %v7897 = vunpack.c.h.b16 %v7708
    %v7898 = vunpack.c.l.b16 %v7709
    %v7899 = vunpack.c.h.b16 %v7709
    %v7900 = vunpack.c.l.b16 %v7710
    %v7901 = vunpack.c.h.b16 %v7710
    %v7902 = vunpack.c.l.b16 %v7711
    %v7903 = vunpack.c.h.b16 %v7711
    %v7904 = vunpack.c.l.b16 %v7712
    %v7905 = vunpack.c.h.b16 %v7712
    %v7906 = vunpack.c.l.b16 %v7713
    %v7907 = vunpack.c.h.b16 %v7713
    %v7908 = vunpack.c.l.b16 %v7714
    %v7909 = vunpack.c.h.b16 %v7714
    %v7910 = vunpack.c.l.b16 %v7715
    %v7911 = vunpack.c.h.b16 %v7715
    %v7912 = vunpack.c.l.b16 %v7716
    %v7913 = vunpack.c.h.b16 %v7716
    %v7914 = vunpack.c.l.b16 %v7717
    %v7915 = vunpack.c.h.b16 %v7717
    %v7916 = vunpack.c.l.b16 %v7718
    %v7917 = vunpack.c.h.b16 %v7718
    %v7918 = vunpack.c.l.b16 %v7719
    %v7919 = vunpack.c.h.b16 %v7719
    %v7920 = vunpack.c.l.b16 %v7720
    %v7921 = vunpack.c.h.b16 %v7720
    %v7922 = vunpack.c.l.b16 %v7721
    %v7923 = vunpack.c.h.b16 %v7721
    %v7924 = vunpack.c.l.b16 %v7722
    %v7925 = vunpack.c.h.b16 %v7722
    %v7926 = vunpack.c.l.b16 %v7723
    %v7927 = vunpack.c.h.b16 %v7723
    %v7928 = vpack.c.b16 %v7802, %v7800
    %v7929 = vpack.c.b16 %v7803, %v7801
    %v7930 = vpack.c.b16 %v7806, %v7804
    %v7931 = vpack.c.b16 %v7807, %v7805
    %v7932 = vpack.c.b16 %v7810, %v7808
    %v7933 = vpack.c.b16 %v7811, %v7809
    %v7934 = vpack.c.b16 %v7814, %v7812
    %v7935 = vpack.c.b16 %v7815, %v7813
    %v7936 = vpack.c.b16 %v7818, %v7816
    %v7937 = vpack.c.b16 %v7819, %v7817
    %v7938 = vpack.c.b16 %v7822, %v7820
    %v7939 = vpack.c.b16 %v7823, %v7821
    %v7940 = vpack.c.b16 %v7826, %v7824
    %v7941 = vpack.c.b16 %v7827, %v7825
    %v7942 = vpack.c.b16 %v7830, %v7828
    %v7943 = vpack.c.b16 %v7831, %v7829
    %v7944 = vpack.c.b16 %v7834, %v7832
    %v7945 = vpack.c.b16 %v7835, %v7833
    %v7946 = vpack.c.b16 %v7838, %v7836
    %v7947 = vpack.c.b16 %v7839, %v7837
    %v7948 = vpack.c.b16 %v7842, %v7840
    %v7949 = vpack.c.b16 %v7843, %v7841
    %v7950 = vpack.c.b16 %v7846, %v7844
    %v7951 = vpack.c.b16 %v7847, %v7845
    %v7952 = vpack.c.b16 %v7850, %v7848
    %v7953 = vpack.c.b16 %v7851, %v7849
    %v7954 = vpack.c.b16 %v7854, %v7852
    %v7955 = vpack.c.b16 %v7855, %v7853
    %v7956 = vpack.c.b16 %v7858, %v7856
    %v7957 = vpack.c.b16 %v7859, %v7857
    %v7958 = vpack.c.b16 %v7862, %v7860
    %v7959 = vpack.c.b16 %v7863, %v7861
    %v7960 = vpack.c.b16 %v7866, %v7864
    %v7961 = vpack.c.b16 %v7867, %v7865
    %v7962 = vpack.c.b16 %v7870, %v7868
    %v7963 = vpack.c.b16 %v7871, %v7869
    %v7964 = vpack.c.b16 %v7874, %v7872
    %v7965 = vpack.c.b16 %v7875, %v7873
    %v7966 = vpack.c.b16 %v7878, %v7876
    %v7967 = vpack.c.b16 %v7879, %v7877
    %v7968 = vpack.c.b16 %v7882, %v7880
    %v7969 = vpack.c.b16 %v7883, %v7881
    %v7970 = vpack.c.b16 %v7886, %v7884
    %v7971 = vpack.c.b16 %v7887, %v7885
    %v7972 = vpack.c.b16 %v7890, %v7888
    %v7973 = vpack.c.b16 %v7891, %v7889
    %v7974 = vpack.c.b16 %v7894, %v7892
    %v7975 = vpack.c.b16 %v7895, %v7893
    %v7976 = vpack.c.b16 %v7898, %v7896
    %v7977 = vpack.c.b16 %v7899, %v7897
    %v7978 = vpack.c.b16 %v7902, %v7900
    %v7979 = vpack.c.b16 %v7903, %v7901
    %v7980 = vpack.c.b16 %v7906, %v7904
    %v7981 = vpack.c.b16 %v7907, %v7905
    %v7982 = vpack.c.b16 %v7910, %v7908
    %v7983 = vpack.c.b16 %v7911, %v7909
    %v7984 = vpack.c.b16 %v7914, %v7912
    %v7985 = vpack.c.b16 %v7915, %v7913
    %v7986 = vpack.c.b16 %v7918, %v7916
    %v7987 = vpack.c.b16 %v7919, %v7917
    %v7988 = vpack.c.b16 %v7922, %v7920
    %v7989 = vpack.c.b16 %v7923, %v7921
    %v7990 = vpack.c.b16 %v7926, %v7924
    %v7991 = vpack.c.b16 %v7927, %v7925
    %8056 = vmatprep.subr.bf16.mxu0 %v7943
    %8057 = vmatpush1.bf16.msra.mxu0 %v7942
    %8058 = vmatprep.subr.bf16.mxu0 %v7941
    %8059 = vmatpush1.bf16.msra.mxu0 %v7940
    %8060 = vmatprep.subr.bf16.mxu0 %v7939
    %8061 = vmatpush1.bf16.msra.mxu0 %v7938
    %8062 = vmatprep.subr.bf16.mxu0 %v7937
    %8063 = vmatpush1.bf16.msra.mxu0 %v7936
    %8064 = vmatprep.subr.bf16.mxu0 %v7935
    %8065 = vmatpush1.bf16.msra.mxu0 %v7934
    %8066 = vmatprep.subr.bf16.mxu0 %v7933
    %8067 = vmatpush1.bf16.msra.mxu0 %v7932
    %8068 = vmatprep.subr.bf16.mxu0 %v7931
    %8069 = vmatpush1.bf16.msra.mxu0 %v7930
    %8070 = vmatprep.subr.bf16.mxu0 %v7929
    %8071 = vmatpush1.bf16.msra.mxu0 %v7928
    %8072 = vmatprep.subr.bf16.mxu0 %v7959
    %8073 = vmatpush2.bf16.msra.mxu0 %v7958
    %8074 = vmatprep.subr.bf16.mxu0 %v7957
    %8075 = vmatpush2.bf16.msra.mxu0 %v7956
    %8076 = vmatprep.subr.bf16.mxu0 %v7955
    %8077 = vmatpush2.bf16.msra.mxu0 %v7954
    %8078 = vmatprep.subr.bf16.mxu0 %v7953
    %8079 = vmatpush2.bf16.msra.mxu0 %v7952
    %8080 = vmatprep.subr.bf16.mxu0 %v7951
    %8081 = vmatpush2.bf16.msra.mxu0 %v7950
    %8082 = vmatprep.subr.bf16.mxu0 %v7949
    %8083 = vmatpush2.bf16.msra.mxu0 %v7948
    %8084 = vmatprep.subr.bf16.mxu0 %v7947
    %8085 = vmatpush2.bf16.msra.mxu0 %v7946
    %8086 = vmatprep.subr.bf16.mxu0 %v7945
    %8087 = vmatpush2.bf16.msra.mxu0 %v7944
    %8088 = vmatprep.mubr.bf16.mxu0 %v7657
    %8089 = vmatmul.mubr.bf16.gmra.mxu0 %v7656
    %v8090 = vpop.f32.mrf.mxu0
    %v8091 = vadd.f32 %v7729, %v8090
    %v8092 = vpop.f32.mrf.mxu0
    %v8093 = vadd.f32 %v7733, %v8092
    %v8094 = vpop.f32.mrf.mxu0
    %v8095 = vpop.f32.mrf.mxu0
    %8096 = vdwg.mxu0
    %8097 = vmatprep.subr.bf16.mxu0 %v7975
    %8098 = vmatpush1.bf16.msra.mxu0 %v7974
    %8099 = vmatprep.subr.bf16.mxu0 %v7973
    %8100 = vmatpush1.bf16.msra.mxu0 %v7972
    %8101 = vmatprep.subr.bf16.mxu0 %v7971
    %8102 = vmatpush1.bf16.msra.mxu0 %v7970
    %8103 = vmatprep.subr.bf16.mxu0 %v7969
    %8104 = vmatpush1.bf16.msra.mxu0 %v7968
    %8105 = vmatprep.subr.bf16.mxu0 %v7967
    %8106 = vmatpush1.bf16.msra.mxu0 %v7966
    %8107 = vmatprep.subr.bf16.mxu0 %v7965
    %8108 = vmatpush1.bf16.msra.mxu0 %v7964
    %8109 = vmatprep.subr.bf16.mxu0 %v7963
    %8110 = vmatpush1.bf16.msra.mxu0 %v7962
    %8111 = vmatprep.subr.bf16.mxu0 %v7961
    %8112 = vmatpush1.bf16.msra.mxu0 %v7960
    %8113 = vmatprep.subr.bf16.mxu0 %v7991
    %8114 = vmatpush2.bf16.msra.mxu0 %v7990
    %8115 = vmatprep.subr.bf16.mxu0 %v7989
    %8116 = vmatpush2.bf16.msra.mxu0 %v7988
    %8117 = vmatprep.subr.bf16.mxu0 %v7987
    %8118 = vmatpush2.bf16.msra.mxu0 %v7986
    %8119 = vmatprep.subr.bf16.mxu0 %v7985
    %8120 = vmatpush2.bf16.msra.mxu0 %v7984
    %8121 = vmatprep.subr.bf16.mxu0 %v7983
    %8122 = vmatpush2.bf16.msra.mxu0 %v7982
    %8123 = vmatprep.subr.bf16.mxu0 %v7981
    %8124 = vmatpush2.bf16.msra.mxu0 %v7980
    %8125 = vmatprep.subr.bf16.mxu0 %v7979
    %8126 = vmatpush2.bf16.msra.mxu0 %v7978
    %8127 = vmatprep.subr.bf16.mxu0 %v7977
    %8128 = vmatpush2.bf16.msra.mxu0 %v7976
    %8129 = vmatprep.mubr.bf16.mxu0 %v7659
    %8130 = vmatmul.mubr.bf16.gmra.mxu0 %v7658
    %v8131 = vpop.f32.mrf.mxu0
    %v8132 = vadd.f32 %v8091, %v8131
    %v8133 = vpop.f32.mrf.mxu0
    %v8134 = vadd.f32 %v8093, %v8133
    %v8135 = vpop.f32.mrf.mxu0
    %v8136 = vpop.f32.mrf.mxu0
    %8137 = vdwg.mxu0
    %vm8138 = vcmp.gt.f32.partialorder %v8132, 0.0
    %vm8139 = vcmp.gt.f32.partialorder %v8134, 0.0
    %v8140 = vmul.f32 %v8132, 0.2
    %v8141 = vmul.f32 %v8134, 0.2
    %v8142 = vsel %vm8138, %v8132, %v8140
    %v8143 = vsel %vm8139, %v8134, %v8141
    %v8144 = vld [vmem:[#allocation11] sm:$0x3]
    %v8146 = vlaneseq
    %v8147 = vshrl.u32 %v8146, 7
    %v8148 = vsub.s32 0, %v8147
    %v8149 = vrot.slane %v8144, %v8148
    %v8150 = vlaneseq
    %v8151 = vshrl.u32 %v8150, 7
    %v8152 = vsub.s32 1, %v8151
    %v8153 = vrot.slane %v8144, %v8152
    %v8156 = vmul.f32 %v8142, %v8149
    %v8157 = vmul.f32 %v8143, %v8153
    %v8158 = vadd.f32 %v8156, %v8157
    %8159 = vadd.xlane.f32.xlu0 %v8158
    %v8160 = vpop.xlane.xlu0 %8159
    %v8161 = vld [vmem:[#allocation2] sm:$0x1]
    %v8163 = vlaneseq
    %v8164 = vshrl.u32 %v8163, 7
    %v8165 = vsub.s32 0, %v8164
    %v8166 = vrot.slane %v8161, %v8165
    %v8168 = vadd.f32 %v8160, %v8166
    %vm8169 = vcmask 7168
    %8170 = vst.msk [vmem:[%s7] sm:$0xff] %vm8169, %v8168
    // Predicated region
    $region54: #{tpu_custom_call.1} parent=1 // pred_check
      _
    $region55: #{tpu_custom_call.1} parent=1 // pred_check_branch
      %8172 = sbr.rel (0) target = $region57
    $region56: #{tpu_custom_call.1} parent=1 // pred_region
      _
    $region57: #{tpu_custom_call.1} parent=1 // pred_fallthru
      _
    // Predicated region
    $region58: #{tpu_custom_call.1} parent=1 // pred_check
      _
    $region59: #{tpu_custom_call.1} parent=1 // pred_check_branch
      %8174 = sbr.rel (0) target = $region61
    $region60: #{tpu_custom_call.1} parent=1 // pred_region
      _
    $region61: #{tpu_custom_call.1} parent=1 // pred_fallthru
      _
    %8175 = vsyncpa [#allocation4], 1
    %8176 = vsyncpa [#allocation6], 1
    %8177 = vsyncpa [#allocation9], 1
    %8178 = vsyncpa [#allocation12], 1

</llo_original>
